<compile_context>
chip_gen: v6e
topology: v6e:2x2x1
jax: 0.10.0
libtpu: 0.0.40
codegen_flags: <defaults>
</compile_context>

<pallas_src>
import numpy as np
import jax
import jax.numpy as jnp
from jax import lax
from jax.experimental import pallas as pl
from jax.experimental.pallas import tpu as pltpu


NEG_SLOPE = 0.2  # LeakyReLU(0.2)


def _leaky(x):
    return jnp.where(x > 0, x, NEG_SLOPE * x)


def _avgpool2x2(y, B, H, W, C):
    """2x2 average pool on the VPU.

    y: (B*H*W, C) with rows ordered (b, h, w).  Returns (B*Hp, Wp, C).
    Uses only minor-dim-preserving reshapes and static slices (safe layouts).
    """
    Hp, Wp = H // 2, W // 2
    yw = y.reshape(B * H * Wp, 2, C)
    yw = yw[:, 0, :] + yw[:, 1, :]                 # pool over w -> (B*H*Wp, C)
    yh = yw.reshape(B * Hp, 2, Wp, C)
    yh = yh[:, 0, :, :] + yh[:, 1, :, :]           # pool over h -> (B*Hp, Wp, C)
    return 0.25 * yh


def _im2col_3x3(col_ref, a):
    """Scatter the 9 shifted taps of `a` (B,H,W,C) into col_ref (B,H,W,9*C).

    The zero padding of a 3x3 / pad=1 conv is realised by pre-zeroing the
    scratch and writing only the in-bounds window of each tap.  Returns the
    flattened (B*H*W, 9*C) im2col matrix (single MXU matmul per conv).
    """
    B, H, W, C = a.shape
    col_ref[...] = jnp.zeros(col_ref.shape, col_ref.dtype)
    for dh in range(3):
        for dw in range(3):
            t = dh * 3 + dw
            sh, sw = dh - 1, dw - 1
            dh0, dh1 = max(0, -sh), H - max(0, sh)   # destination window
            dw0, dw1 = max(0, -sw), W - max(0, sw)
            sh0, sh1 = max(0, sh), H + min(0, sh)    # source window
            sw0, sw1 = max(0, sw), W + min(0, sw)
            col_ref[:, dh0:dh1, dw0:dw1, t * C:(t + 1) * C] = (
                a[:, sh0:sh1, sw0:sw1, :].astype(col_ref.dtype))
    return col_ref[...].reshape(B * H * W, 9 * C)


def resblk_kernel(x_ref, w1_ref, b1_ref, w2_ref, b2_ref, wsc_ref, bsc_ref,
                  o_ref, col1_ref, col2_ref):
    # x_ref:   (B, H, W, Cin)  whole batch (NHWC), f32
    # w1_ref:  (9*Cin, Cout)   conv1 3x3 weights, im2col-flattened, bf16
    # w2_ref:  (9*Cout, Cout)  conv2 3x3 weights, im2col-flattened, bf16
    # wsc_ref: (Cin, Cout)     learned 1x1 shortcut, bf16
    # b*_ref:  (1, Cout)       biases, f32
    # col1/col2: VMEM im2col scratch (B, H, W, 9*Cin) / (B, H, W, 9*Cout), f32
    B, H, W, Cin = x_ref.shape
    Cout = wsc_ref.shape[1]
    Hp, Wp = H // 2, W // 2

    x = x_ref[...]                                  # (B, H, W, Cin) f32

    # ---- shortcut: pool first (1x1 conv and avg-pool commute), then 1x1 conv
    xp = _avgpool2x2(x.reshape(B * H * W, Cin), B, H, W, Cin)   # (B*Hp, Wp, Cin)
    xp = xp.reshape(B * Hp * Wp, Cin)
    sc = jnp.dot(xp.astype(jnp.bfloat16), wsc_ref[...],
                 preferred_element_type=jnp.float32) + bsc_ref[...]
    sc = sc.reshape(B * Hp, Wp, Cout)

    # ---- residual: pre-activation, conv1, act, conv2, pool (is_first=False) --
    a = _leaky(x)

    col1 = _im2col_3x3(col1_ref, a)                 # (B*H*W, 9*Cin)
    y1 = jnp.dot(col1.astype(jnp.bfloat16), w1_ref[...],
                 preferred_element_type=jnp.float32) + b1_ref[...]
    y1 = _leaky(y1)                                 # (B*H*W, Cout)

    col2 = _im2col_3x3(col2_ref, y1.reshape(B, H, W, Cout))     # (B*H*W, 9*Cout)
    y2 = jnp.dot(col2.astype(jnp.bfloat16), w2_ref[...],
                 preferred_element_type=jnp.float32) + b2_ref[...]

    res = _avgpool2x2(y2, B, H, W, Cout)            # (B*Hp, Wp, Cout)

    out = sc + res                                  # (B*Hp, Wp, Cout)
    o_ref[...] = out.reshape(B, Hp, Wp, Cout).astype(o_ref.dtype)


@jax.jit
def resblk_pallas(x_nchw, w1, b1, w2, b2, wsc, bsc):
    # x_nchw: (B, Cin, H, W)  ->  NHWC internally
    x = jnp.transpose(x_nchw, (0, 2, 3, 1)).astype(jnp.float32)
    B, H, W, Cin = x.shape
    Cout = wsc.shape[1]
    Hp, Wp = H // 2, W // 2

    # MXU operands in bf16 (accumulation stays f32 inside the kernel).
    w1f = w1.reshape(9 * Cin, Cout).astype(jnp.bfloat16)
    w2f = w2.reshape(9 * Cout, Cout).astype(jnp.bfloat16)
    wscf = wsc.astype(jnp.bfloat16)
    b1r = b1.reshape(1, Cout).astype(jnp.float32)
    b2r = b2.reshape(1, Cout).astype(jnp.float32)
    bscr = bsc.reshape(1, Cout).astype(jnp.float32)

    grid_spec = pltpu.PrefetchScalarGridSpec(
        num_scalar_prefetch=0,
        # Whole batch fused into one grid step (B is tiny; avoids per-step
        # pipeline overhead and grows the matmul M dim to B*H*W).  If B were
        # large, this axis would become a "parallel" batch grid axis instead.
        grid=(1,),
        in_specs=[
            pl.BlockSpec((B, H, W, Cin), lambda i: (0, 0, 0, 0)),
            pl.BlockSpec((9 * Cin, Cout), lambda i: (0, 0)),
            pl.BlockSpec((1, Cout), lambda i: (0, 0)),
            pl.BlockSpec((9 * Cout, Cout), lambda i: (0, 0)),
            pl.BlockSpec((1, Cout), lambda i: (0, 0)),
            pl.BlockSpec((Cin, Cout), lambda i: (0, 0)),
            pl.BlockSpec((1, Cout), lambda i: (0, 0)),
        ],
        out_specs=pl.BlockSpec((B, Hp, Wp, Cout), lambda i: (0, 0, 0, 0)),
        scratch_shapes=[
            pltpu.VMEM((B, H, W, 9 * Cin), jnp.float32),    # im2col for conv1
            pltpu.VMEM((B, H, W, 9 * Cout), jnp.float32),   # im2col for conv2
        ],
    )

    out_nhwc = pl.pallas_call(
        resblk_kernel,
        out_shape=jax.ShapeDtypeStruct((B, Hp, Wp, Cout), jnp.float32),
        grid_spec=grid_spec,
        compiler_params=pltpu.CompilerParams(
            dimension_semantics=("arbitrary",)),
    )(x, w1f, b1r, w2f, b2r, wscf, bscr)

    return jnp.transpose(out_nhwc, (0, 3, 1, 2))    # back to NCHW


# ----------------------------- pure-JAX reference -----------------------------
def resblk_ref(x_nchw, w1, b1, w2, b2, wsc, bsc):
    x = jnp.transpose(x_nchw, (0, 2, 3, 1)).astype(jnp.float32)  # NHWC
    Cin = x.shape[-1]
    Cout = wsc.shape[1]

    def conv(v, w_hwio, b, pad):
        y = lax.conv_general_dilated(
            v, w_hwio, window_strides=(1, 1),
            padding=[(pad, pad), (pad, pad)],
            dimension_numbers=("NHWC", "HWIO", "NHWC"))
        return y + b

    def avgpool2(v):
        B, H, W, C = v.shape
        return v.reshape(B, H // 2, 2, W // 2, 2, C).mean(axis=(2, 4))

    w1h = w1.reshape(3, 3, Cin, Cout)
    w2h = w2.reshape(3, 3, Cout, Cout)
    wsch = wsc.reshape(1, 1, Cin, Cout)

    sc = avgpool2(conv(x, wsch, bsc, 0))
    r = _leaky(x)
    r = _leaky(conv(r, w1h, b1, 1))
    r = conv(r, w2h, b2, 1)
    r = avgpool2(r)
    out = sc + r
    return jnp.transpose(out, (0, 3, 1, 2))


if __name__ == "__main__":
    B, Cin, Cout, H, W = 2, 4, 8, 16, 16

    key = jax.random.PRNGKey(0)
    kx, k1, k2, k3, k4, k5, k6 = jax.random.split(key, 7)

    x = jax.random.normal(kx, (B, Cin, H, W), jnp.float32)

    # deterministic synthetic parameters (HWIO-style, flattened 3x3 -> 9 taps)
    w1 = 0.1 * jax.random.normal(k1, (9, Cin, Cout), jnp.float32)
    b1 = 0.1 * jax.random.normal(k2, (Cout,), jnp.float32)
    w2 = 0.1 * jax.random.normal(k3, (9, Cout, Cout), jnp.float32)
    b2 = 0.1 * jax.random.normal(k4, (Cout,), jnp.float32)
    wsc = 0.1 * jax.random.normal(k5, (Cin, Cout), jnp.float32)
    bsc = 0.1 * jax.random.normal(k6, (Cout,), jnp.float32)

    out = resblk_pallas(x, w1, b1, w2, b2, wsc, bsc)
    out = jax.block_until_ready(out)

    ref = jax.block_until_ready(resblk_ref(x, w1, b1, w2, b2, wsc, bsc))
    # Tolerance accounts for bf16 MXU operands (f32 accumulation) vs f32 ref.
    np.testing.assert_allclose(np.asarray(out), np.asarray(ref),
                               rtol=1e-2, atol=1e-2)

    print("KERNEL_OK")
</pallas_src>

<mosaic_0001>
module attributes {stable_mosaic.version = 11 : i64} {
  func.func @resblk_kernel(%arg0: i32, %arg1: memref<2x16x16x4xf32, #tpu.memory_space<vmem>>, %arg2: memref<36x8xbf16, #tpu.memory_space<vmem>>, %arg3: memref<1x8xf32, #tpu.memory_space<vmem>>, %arg4: memref<72x8xbf16, #tpu.memory_space<vmem>>, %arg5: memref<1x8xf32, #tpu.memory_space<vmem>>, %arg6: memref<4x8xbf16, #tpu.memory_space<vmem>>, %arg7: memref<1x8xf32, #tpu.memory_space<vmem>>, %arg8: memref<2x8x8x8xf32, #tpu.memory_space<vmem>>, %arg9: memref<2x16x16x36xf32, #tpu.memory_space<vmem>>, %arg10: memref<2x16x16x72xf32, #tpu.memory_space<vmem>>) attributes {dimension_semantics = [#tpu.dimension_semantics<arbitrary>], iteration_bounds = array<i64: 1>, scalar_prefetch = 0 : i64, scratch_operands = 2 : i64, tpu.core_type = #tpu.core_type<tc>, window_params = [{pipeline_mode = #tpu.pipeline_mode<synchronous>, transform_indices = @transform_0, window_bounds = array<i64: 2, 16, 16, 4>}, {pipeline_mode = #tpu.pipeline_mode<synchronous>, transform_indices = @transform_1, window_bounds = array<i64: 36, 8>}, {pipeline_mode = #tpu.pipeline_mode<synchronous>, transform_indices = @transform_2, window_bounds = array<i64: 1, 8>}, {pipeline_mode = #tpu.pipeline_mode<synchronous>, transform_indices = @transform_3, window_bounds = array<i64: 72, 8>}, {pipeline_mode = #tpu.pipeline_mode<synchronous>, transform_indices = @transform_4, window_bounds = array<i64: 1, 8>}, {pipeline_mode = #tpu.pipeline_mode<synchronous>, transform_indices = @transform_5, window_bounds = array<i64: 4, 8>}, {pipeline_mode = #tpu.pipeline_mode<synchronous>, transform_indices = @transform_6, window_bounds = array<i64: 1, 8>}, {pipeline_mode = #tpu.pipeline_mode<synchronous>, transform_indices = @transform_7, window_bounds = array<i64: 2, 8, 8, 8>}]} {
    %c0 = arith.constant 0 : index
    %c0_0 = arith.constant 0 : index
    %c0_1 = arith.constant 0 : index
    %c0_2 = arith.constant 0 : index
    %0 = vector.load %arg1[%c0, %c0_0, %c0_1, %c0_2] : memref<2x16x16x4xf32, #tpu.memory_space<vmem>>, vector<2x16x16x4xf32>
    %1 = vector.shape_cast %0 : vector<2x16x16x4xf32> to vector<512x4xf32>
    %2 = vector.shape_cast %1 : vector<512x4xf32> to vector<256x2x4xf32>
    %3 = vector.extract_strided_slice %2 {offsets = [0, 0, 0], sizes = [256, 1, 4], strides = [1, 1, 1]} : vector<256x2x4xf32> to vector<256x1x4xf32>
    %4 = vector.shape_cast %3 : vector<256x1x4xf32> to vector<256x4xf32>
    %5 = vector.extract_strided_slice %2 {offsets = [0, 1, 0], sizes = [256, 1, 4], strides = [1, 1, 1]} : vector<256x2x4xf32> to vector<256x1x4xf32>
    %6 = vector.shape_cast %5 : vector<256x1x4xf32> to vector<256x4xf32>
    %7 = arith.addf %4, %6 : vector<256x4xf32>
    %8 = vector.shape_cast %7 : vector<256x4xf32> to vector<16x2x8x4xf32>
    %9 = vector.extract_strided_slice %8 {offsets = [0, 0, 0, 0], sizes = [16, 1, 8, 4], strides = [1, 1, 1, 1]} : vector<16x2x8x4xf32> to vector<16x1x8x4xf32>
    %10 = vector.shape_cast %9 : vector<16x1x8x4xf32> to vector<16x8x4xf32>
    %11 = vector.extract_strided_slice %8 {offsets = [0, 1, 0, 0], sizes = [16, 1, 8, 4], strides = [1, 1, 1, 1]} : vector<16x2x8x4xf32> to vector<16x1x8x4xf32>
    %12 = vector.shape_cast %11 : vector<16x1x8x4xf32> to vector<16x8x4xf32>
    %13 = arith.addf %10, %12 : vector<16x8x4xf32>
    %cst = arith.constant 2.500000e-01 : f32
    %14 = vector.broadcast %cst : f32 to vector<16x8x4xf32>
    %15 = arith.mulf %14, %13 : vector<16x8x4xf32>
    %16 = vector.shape_cast %15 : vector<16x8x4xf32> to vector<128x4xf32>
    %17 = arith.truncf %16 : vector<128x4xf32> to vector<128x4xbf16>
    %c0_3 = arith.constant 0 : index
    %c0_4 = arith.constant 0 : index
    %18 = vector.load %arg6[%c0_3, %c0_4] : memref<4x8xbf16, #tpu.memory_space<vmem>>, vector<4x8xbf16>
    %cst_5 = arith.constant dense<0.000000e+00> : vector<128x8xf32>
    %19 = tpu.matmul %17, %18, %cst_5 {dimension_numbers = #tpu.dot_dimension_numbers<[1], [0], [0], [1], [0, 0, 1, 1], [], []>} : vector<128x4xbf16>, vector<4x8xbf16>, vector<128x8xf32> -> vector<128x8xf32>
    %c0_6 = arith.constant 0 : index
    %c0_7 = arith.constant 0 : index
    %20 = vector.load %arg7[%c0_6, %c0_7] : memref<1x8xf32, #tpu.memory_space<vmem>>, vector<1x8xf32>
    %21 = vector.broadcast %20 : vector<1x8xf32> to vector<128x8xf32>
    %22 = arith.addf %19, %21 : vector<128x8xf32>
    %23 = vector.shape_cast %22 : vector<128x8xf32> to vector<16x8x8xf32>
    %cst_8 = arith.constant 0.000000e+00 : f32
    %24 = vector.broadcast %cst_8 : f32 to vector<2x16x16x4xf32>
    %25 = arith.cmpf ogt, %0, %24 : vector<2x16x16x4xf32>
    %cst_9 = arith.constant 2.000000e-01 : f32
    %26 = vector.broadcast %cst_9 : f32 to vector<2x16x16x4xf32>
    %27 = arith.mulf %26, %0 : vector<2x16x16x4xf32>
    %28 = arith.select %25, %0, %27 : vector<2x16x16x4xi1>, vector<2x16x16x4xf32>
    %cst_10 = arith.constant 0.000000e+00 : f32
    %29 = vector.broadcast %cst_10 : f32 to vector<2x16x16x36xf32>
    %c0_11 = arith.constant 0 : index
    %c0_12 = arith.constant 0 : index
    %c0_13 = arith.constant 0 : index
    %c0_14 = arith.constant 0 : index
    %30 = vector.load %arg9[%c0_11, %c0_12, %c0_13, %c0_14] : memref<2x16x16x36xf32, #tpu.memory_space<vmem>>, vector<2x16x16x36xf32>
    tpu.vector_store %arg9[%c0_11, %c0_12, %c0_13, %c0_14], %29 {strides = array<i32>} : memref<2x16x16x36xf32, #tpu.memory_space<vmem>>, vector<2x16x16x36xf32>,
    %31 = vector.extract_strided_slice %28 {offsets = [0, 0, 0, 0], sizes = [2, 15, 15, 4], strides = [1, 1, 1, 1]} : vector<2x16x16x4xf32> to vector<2x15x15x4xf32>
    %c0_15 = arith.constant 0 : index
    %c1 = arith.constant 1 : index
    %c1_16 = arith.constant 1 : index
    %c0_17 = arith.constant 0 : index
    %32 = vector.load %arg9[%c0_15, %c1, %c1_16, %c0_17] : memref<2x16x16x36xf32, #tpu.memory_space<vmem>>, vector<2x15x15x4xf32>
    tpu.vector_store %arg9[%c0_15, %c1, %c1_16, %c0_17], %31 {strides = array<i32>} : memref<2x16x16x36xf32, #tpu.memory_space<vmem>>, vector<2x15x15x4xf32>,
    %33 = vector.extract_strided_slice %28 {offsets = [0, 0, 0, 0], sizes = [2, 15, 16, 4], strides = [1, 1, 1, 1]} : vector<2x16x16x4xf32> to vector<2x15x16x4xf32>
    %c0_18 = arith.constant 0 : index
    %c1_19 = arith.constant 1 : index
    %c0_20 = arith.constant 0 : index
    %c4 = arith.constant 4 : index
    %34 = vector.load %arg9[%c0_18, %c1_19, %c0_20, %c4] : memref<2x16x16x36xf32, #tpu.memory_space<vmem>>, vector<2x15x16x4xf32>
    tpu.vector_store %arg9[%c0_18, %c1_19, %c0_20, %c4], %33 {strides = array<i32>} : memref<2x16x16x36xf32, #tpu.memory_space<vmem>>, vector<2x15x16x4xf32>,
    %35 = vector.extract_strided_slice %28 {offsets = [0, 0, 1, 0], sizes = [2, 15, 15, 4], strides = [1, 1, 1, 1]} : vector<2x16x16x4xf32> to vector<2x15x15x4xf32>
    %c0_21 = arith.constant 0 : index
    %c1_22 = arith.constant 1 : index
    %c0_23 = arith.constant 0 : index
    %c8 = arith.constant 8 : index
    %36 = vector.load %arg9[%c0_21, %c1_22, %c0_23, %c8] : memref<2x16x16x36xf32, #tpu.memory_space<vmem>>, vector<2x15x15x4xf32>
    tpu.vector_store %arg9[%c0_21, %c1_22, %c0_23, %c8], %35 {strides = array<i32>} : memref<2x16x16x36xf32, #tpu.memory_space<vmem>>, vector<2x15x15x4xf32>,
    %37 = vector.extract_strided_slice %28 {offsets = [0, 0, 0, 0], sizes = [2, 16, 15, 4], strides = [1, 1, 1, 1]} : vector<2x16x16x4xf32> to vector<2x16x15x4xf32>
    %c0_24 = arith.constant 0 : index
    %c0_25 = arith.constant 0 : index
    %c1_26 = arith.constant 1 : index
    %c12 = arith.constant 12 : index
    %38 = vector.load %arg9[%c0_24, %c0_25, %c1_26, %c12] : memref<2x16x16x36xf32, #tpu.memory_space<vmem>>, vector<2x16x15x4xf32>
    tpu.vector_store %arg9[%c0_24, %c0_25, %c1_26, %c12], %37 {strides = array<i32>} : memref<2x16x16x36xf32, #tpu.memory_space<vmem>>, vector<2x16x15x4xf32>,
    %c0_27 = arith.constant 0 : index
    %c0_28 = arith.constant 0 : index
    %c0_29 = arith.constant 0 : index
    %c16 = arith.constant 16 : index
    %39 = vector.load %arg9[%c0_27, %c0_28, %c0_29, %c16] : memref<2x16x16x36xf32, #tpu.memory_space<vmem>>, vector<2x16x16x4xf32>
    tpu.vector_store %arg9[%c0_27, %c0_28, %c0_29, %c16], %28 {strides = array<i32>} : memref<2x16x16x36xf32, #tpu.memory_space<vmem>>, vector<2x16x16x4xf32>,
    %40 = vector.extract_strided_slice %28 {offsets = [0, 0, 1, 0], sizes = [2, 16, 15, 4], strides = [1, 1, 1, 1]} : vector<2x16x16x4xf32> to vector<2x16x15x4xf32>
    %c0_30 = arith.constant 0 : index
    %c0_31 = arith.constant 0 : index
    %c0_32 = arith.constant 0 : index
    %c20 = arith.constant 20 : index
    %41 = vector.load %arg9[%c0_30, %c0_31, %c0_32, %c20] : memref<2x16x16x36xf32, #tpu.memory_space<vmem>>, vector<2x16x15x4xf32>
    tpu.vector_store %arg9[%c0_30, %c0_31, %c0_32, %c20], %40 {strides = array<i32>} : memref<2x16x16x36xf32, #tpu.memory_space<vmem>>, vector<2x16x15x4xf32>,
    %42 = vector.extract_strided_slice %28 {offsets = [0, 1, 0, 0], sizes = [2, 15, 15, 4], strides = [1, 1, 1, 1]} : vector<2x16x16x4xf32> to vector<2x15x15x4xf32>
    %c0_33 = arith.constant 0 : index
    %c0_34 = arith.constant 0 : index
    %c1_35 = arith.constant 1 : index
    %c24 = arith.constant 24 : index
    %43 = vector.load %arg9[%c0_33, %c0_34, %c1_35, %c24] : memref<2x16x16x36xf32, #tpu.memory_space<vmem>>, vector<2x15x15x4xf32>
    tpu.vector_store %arg9[%c0_33, %c0_34, %c1_35, %c24], %42 {strides = array<i32>} : memref<2x16x16x36xf32, #tpu.memory_space<vmem>>, vector<2x15x15x4xf32>,
    %44 = vector.extract_strided_slice %28 {offsets = [0, 1, 0, 0], sizes = [2, 15, 16, 4], strides = [1, 1, 1, 1]} : vector<2x16x16x4xf32> to vector<2x15x16x4xf32>
    %c0_36 = arith.constant 0 : index
    %c0_37 = arith.constant 0 : index
    %c0_38 = arith.constant 0 : index
    %c28 = arith.constant 28 : index
    %45 = vector.load %arg9[%c0_36, %c0_37, %c0_38, %c28] : memref<2x16x16x36xf32, #tpu.memory_space<vmem>>, vector<2x15x16x4xf32>
    tpu.vector_store %arg9[%c0_36, %c0_37, %c0_38, %c28], %44 {strides = array<i32>} : memref<2x16x16x36xf32, #tpu.memory_space<vmem>>, vector<2x15x16x4xf32>,
    %46 = vector.extract_strided_slice %28 {offsets = [0, 1, 1, 0], sizes = [2, 15, 15, 4], strides = [1, 1, 1, 1]} : vector<2x16x16x4xf32> to vector<2x15x15x4xf32>
    %c0_39 = arith.constant 0 : index
    %c0_40 = arith.constant 0 : index
    %c0_41 = arith.constant 0 : index
    %c32 = arith.constant 32 : index
    %47 = vector.load %arg9[%c0_39, %c0_40, %c0_41, %c32] : memref<2x16x16x36xf32, #tpu.memory_space<vmem>>, vector<2x15x15x4xf32>
    tpu.vector_store %arg9[%c0_39, %c0_40, %c0_41, %c32], %46 {strides = array<i32>} : memref<2x16x16x36xf32, #tpu.memory_space<vmem>>, vector<2x15x15x4xf32>,
    %c0_42 = arith.constant 0 : index
    %c0_43 = arith.constant 0 : index
    %c0_44 = arith.constant 0 : index
    %c0_45 = arith.constant 0 : index
    %48 = vector.load %arg9[%c0_42, %c0_43, %c0_44, %c0_45] : memref<2x16x16x36xf32, #tpu.memory_space<vmem>>, vector<2x16x16x36xf32>
    %49 = vector.shape_cast %48 : vector<2x16x16x36xf32> to vector<512x36xf32>
    %50 = arith.truncf %49 : vector<512x36xf32> to vector<512x36xbf16>
    %c0_46 = arith.constant 0 : index
    %c0_47 = arith.constant 0 : index
    %51 = vector.load %arg2[%c0_46, %c0_47] : memref<36x8xbf16, #tpu.memory_space<vmem>>, vector<36x8xbf16>
    %cst_48 = arith.constant dense<0.000000e+00> : vector<512x8xf32>
    %52 = tpu.matmul %50, %51, %cst_48 {dimension_numbers = #tpu.dot_dimension_numbers<[1], [0], [0], [1], [0, 0, 1, 1], [], []>} : vector<512x36xbf16>, vector<36x8xbf16>, vector<512x8xf32> -> vector<512x8xf32>
    %c0_49 = arith.constant 0 : index
    %c0_50 = arith.constant 0 : index
    %53 = vector.load %arg3[%c0_49, %c0_50] : memref<1x8xf32, #tpu.memory_space<vmem>>, vector<1x8xf32>
    %54 = vector.broadcast %53 : vector<1x8xf32> to vector<512x8xf32>
    %55 = arith.addf %52, %54 : vector<512x8xf32>
    %cst_51 = arith.constant 0.000000e+00 : f32
    %56 = vector.broadcast %cst_51 : f32 to vector<512x8xf32>
    %57 = arith.cmpf ogt, %55, %56 : vector<512x8xf32>
    %cst_52 = arith.constant 2.000000e-01 : f32
    %58 = vector.broadcast %cst_52 : f32 to vector<512x8xf32>
    %59 = arith.mulf %58, %55 : vector<512x8xf32>
    %60 = arith.select %57, %55, %59 : vector<512x8xi1>, vector<512x8xf32>
    %61 = vector.shape_cast %60 : vector<512x8xf32> to vector<2x16x16x8xf32>
    %cst_53 = arith.constant 0.000000e+00 : f32
    %62 = vector.broadcast %cst_53 : f32 to vector<2x16x16x72xf32>
    %c0_54 = arith.constant 0 : index
    %c0_55 = arith.constant 0 : index
    %c0_56 = arith.constant 0 : index
    %c0_57 = arith.constant 0 : index
    %63 = vector.load %arg10[%c0_54, %c0_55, %c0_56, %c0_57] : memref<2x16x16x72xf32, #tpu.memory_space<vmem>>, vector<2x16x16x72xf32>
    tpu.vector_store %arg10[%c0_54, %c0_55, %c0_56, %c0_57], %62 {strides = array<i32>} : memref<2x16x16x72xf32, #tpu.memory_space<vmem>>, vector<2x16x16x72xf32>,
    %64 = vector.extract_strided_slice %61 {offsets = [0, 0, 0, 0], sizes = [2, 15, 15, 8], strides = [1, 1, 1, 1]} : vector<2x16x16x8xf32> to vector<2x15x15x8xf32>
    %c0_58 = arith.constant 0 : index
    %c1_59 = arith.constant 1 : index
    %c1_60 = arith.constant 1 : index
    %c0_61 = arith.constant 0 : index
    %65 = vector.load %arg10[%c0_58, %c1_59, %c1_60, %c0_61] : memref<2x16x16x72xf32, #tpu.memory_space<vmem>>, vector<2x15x15x8xf32>
    tpu.vector_store %arg10[%c0_58, %c1_59, %c1_60, %c0_61], %64 {strides = array<i32>} : memref<2x16x16x72xf32, #tpu.memory_space<vmem>>, vector<2x15x15x8xf32>,
    %66 = vector.extract_strided_slice %61 {offsets = [0, 0, 0, 0], sizes = [2, 15, 16, 8], strides = [1, 1, 1, 1]} : vector<2x16x16x8xf32> to vector<2x15x16x8xf32>
    %c0_62 = arith.constant 0 : index
    %c1_63 = arith.constant 1 : index
    %c0_64 = arith.constant 0 : index
    %c8_65 = arith.constant 8 : index
    %67 = vector.load %arg10[%c0_62, %c1_63, %c0_64, %c8_65] : memref<2x16x16x72xf32, #tpu.memory_space<vmem>>, vector<2x15x16x8xf32>
    tpu.vector_store %arg10[%c0_62, %c1_63, %c0_64, %c8_65], %66 {strides = array<i32>} : memref<2x16x16x72xf32, #tpu.memory_space<vmem>>, vector<2x15x16x8xf32>,
    %68 = vector.extract_strided_slice %61 {offsets = [0, 0, 1, 0], sizes = [2, 15, 15, 8], strides = [1, 1, 1, 1]} : vector<2x16x16x8xf32> to vector<2x15x15x8xf32>
    %c0_66 = arith.constant 0 : index
    %c1_67 = arith.constant 1 : index
    %c0_68 = arith.constant 0 : index
    %c16_69 = arith.constant 16 : index
    %69 = vector.load %arg10[%c0_66, %c1_67, %c0_68, %c16_69] : memref<2x16x16x72xf32, #tpu.memory_space<vmem>>, vector<2x15x15x8xf32>
    tpu.vector_store %arg10[%c0_66, %c1_67, %c0_68, %c16_69], %68 {strides = array<i32>} : memref<2x16x16x72xf32, #tpu.memory_space<vmem>>, vector<2x15x15x8xf32>,
    %70 = vector.extract_strided_slice %61 {offsets = [0, 0, 0, 0], sizes = [2, 16, 15, 8], strides = [1, 1, 1, 1]} : vector<2x16x16x8xf32> to vector<2x16x15x8xf32>
    %c0_70 = arith.constant 0 : index
    %c0_71 = arith.constant 0 : index
    %c1_72 = arith.constant 1 : index
    %c24_73 = arith.constant 24 : index
    %71 = vector.load %arg10[%c0_70, %c0_71, %c1_72, %c24_73] : memref<2x16x16x72xf32, #tpu.memory_space<vmem>>, vector<2x16x15x8xf32>
    tpu.vector_store %arg10[%c0_70, %c0_71, %c1_72, %c24_73], %70 {strides = array<i32>} : memref<2x16x16x72xf32, #tpu.memory_space<vmem>>, vector<2x16x15x8xf32>,
    %c0_74 = arith.constant 0 : index
    %c0_75 = arith.constant 0 : index
    %c0_76 = arith.constant 0 : index
    %c32_77 = arith.constant 32 : index
    %72 = vector.load %arg10[%c0_74, %c0_75, %c0_76, %c32_77] : memref<2x16x16x72xf32, #tpu.memory_space<vmem>>, vector<2x16x16x8xf32>
    tpu.vector_store %arg10[%c0_74, %c0_75, %c0_76, %c32_77], %61 {strides = array<i32>} : memref<2x16x16x72xf32, #tpu.memory_space<vmem>>, vector<2x16x16x8xf32>,
    %73 = vector.extract_strided_slice %61 {offsets = [0, 0, 1, 0], sizes = [2, 16, 15, 8], strides = [1, 1, 1, 1]} : vector<2x16x16x8xf32> to vector<2x16x15x8xf32>
    %c0_78 = arith.constant 0 : index
    %c0_79 = arith.constant 0 : index
    %c0_80 = arith.constant 0 : index
    %c40 = arith.constant 40 : index
    %74 = vector.load %arg10[%c0_78, %c0_79, %c0_80, %c40] : memref<2x16x16x72xf32, #tpu.memory_space<vmem>>, vector<2x16x15x8xf32>
    tpu.vector_store %arg10[%c0_78, %c0_79, %c0_80, %c40], %73 {strides = array<i32>} : memref<2x16x16x72xf32, #tpu.memory_space<vmem>>, vector<2x16x15x8xf32>,
    %75 = vector.extract_strided_slice %61 {offsets = [0, 1, 0, 0], sizes = [2, 15, 15, 8], strides = [1, 1, 1, 1]} : vector<2x16x16x8xf32> to vector<2x15x15x8xf32>
    %c0_81 = arith.constant 0 : index
    %c0_82 = arith.constant 0 : index
    %c1_83 = arith.constant 1 : index
    %c48 = arith.constant 48 : index
    %76 = vector.load %arg10[%c0_81, %c0_82, %c1_83, %c48] : memref<2x16x16x72xf32, #tpu.memory_space<vmem>>, vector<2x15x15x8xf32>
    tpu.vector_store %arg10[%c0_81, %c0_82, %c1_83, %c48], %75 {strides = array<i32>} : memref<2x16x16x72xf32, #tpu.memory_space<vmem>>, vector<2x15x15x8xf32>,
    %77 = vector.extract_strided_slice %61 {offsets = [0, 1, 0, 0], sizes = [2, 15, 16, 8], strides = [1, 1, 1, 1]} : vector<2x16x16x8xf32> to vector<2x15x16x8xf32>
    %c0_84 = arith.constant 0 : index
    %c0_85 = arith.constant 0 : index
    %c0_86 = arith.constant 0 : index
    %c56 = arith.constant 56 : index
    %78 = vector.load %arg10[%c0_84, %c0_85, %c0_86, %c56] : memref<2x16x16x72xf32, #tpu.memory_space<vmem>>, vector<2x15x16x8xf32>
    tpu.vector_store %arg10[%c0_84, %c0_85, %c0_86, %c56], %77 {strides = array<i32>} : memref<2x16x16x72xf32, #tpu.memory_space<vmem>>, vector<2x15x16x8xf32>,
    %79 = vector.extract_strided_slice %61 {offsets = [0, 1, 1, 0], sizes = [2, 15, 15, 8], strides = [1, 1, 1, 1]} : vector<2x16x16x8xf32> to vector<2x15x15x8xf32>
    %c0_87 = arith.constant 0 : index
    %c0_88 = arith.constant 0 : index
    %c0_89 = arith.constant 0 : index
    %c64 = arith.constant 64 : index
    %80 = vector.load %arg10[%c0_87, %c0_88, %c0_89, %c64] : memref<2x16x16x72xf32, #tpu.memory_space<vmem>>, vector<2x15x15x8xf32>
    tpu.vector_store %arg10[%c0_87, %c0_88, %c0_89, %c64], %79 {strides = array<i32>} : memref<2x16x16x72xf32, #tpu.memory_space<vmem>>, vector<2x15x15x8xf32>,
    %c0_90 = arith.constant 0 : index
    %c0_91 = arith.constant 0 : index
    %c0_92 = arith.constant 0 : index
    %c0_93 = arith.constant 0 : index
    %81 = vector.load %arg10[%c0_90, %c0_91, %c0_92, %c0_93] : memref<2x16x16x72xf32, #tpu.memory_space<vmem>>, vector<2x16x16x72xf32>
    %82 = vector.shape_cast %81 : vector<2x16x16x72xf32> to vector<512x72xf32>
    %83 = arith.truncf %82 : vector<512x72xf32> to vector<512x72xbf16>
    %c0_94 = arith.constant 0 : index
    %c0_95 = arith.constant 0 : index
    %84 = vector.load %arg4[%c0_94, %c0_95] : memref<72x8xbf16, #tpu.memory_space<vmem>>, vector<72x8xbf16>
    %cst_96 = arith.constant dense<0.000000e+00> : vector<512x8xf32>
    %85 = tpu.matmul %83, %84, %cst_96 {dimension_numbers = #tpu.dot_dimension_numbers<[1], [0], [0], [1], [0, 0, 1, 1], [], []>} : vector<512x72xbf16>, vector<72x8xbf16>, vector<512x8xf32> -> vector<512x8xf32>
    %c0_97 = arith.constant 0 : index
    %c0_98 = arith.constant 0 : index
    %86 = vector.load %arg5[%c0_97, %c0_98] : memref<1x8xf32, #tpu.memory_space<vmem>>, vector<1x8xf32>
    %87 = vector.broadcast %86 : vector<1x8xf32> to vector<512x8xf32>
    %88 = arith.addf %85, %87 : vector<512x8xf32>
    %89 = vector.shape_cast %88 : vector<512x8xf32> to vector<256x2x8xf32>
    %90 = vector.extract_strided_slice %89 {offsets = [0, 0, 0], sizes = [256, 1, 8], strides = [1, 1, 1]} : vector<256x2x8xf32> to vector<256x1x8xf32>
    %91 = vector.shape_cast %90 : vector<256x1x8xf32> to vector<256x8xf32>
    %92 = vector.extract_strided_slice %89 {offsets = [0, 1, 0], sizes = [256, 1, 8], strides = [1, 1, 1]} : vector<256x2x8xf32> to vector<256x1x8xf32>
    %93 = vector.shape_cast %92 : vector<256x1x8xf32> to vector<256x8xf32>
    %94 = arith.addf %91, %93 : vector<256x8xf32>
    %95 = vector.shape_cast %94 : vector<256x8xf32> to vector<16x2x8x8xf32>
    %96 = vector.extract_strided_slice %95 {offsets = [0, 0, 0, 0], sizes = [16, 1, 8, 8], strides = [1, 1, 1, 1]} : vector<16x2x8x8xf32> to vector<16x1x8x8xf32>
    %97 = vector.shape_cast %96 : vector<16x1x8x8xf32> to vector<16x8x8xf32>
    %98 = vector.extract_strided_slice %95 {offsets = [0, 1, 0, 0], sizes = [16, 1, 8, 8], strides = [1, 1, 1, 1]} : vector<16x2x8x8xf32> to vector<16x1x8x8xf32>
    %99 = vector.shape_cast %98 : vector<16x1x8x8xf32> to vector<16x8x8xf32>
    %100 = arith.addf %97, %99 : vector<16x8x8xf32>
    %cst_99 = arith.constant 2.500000e-01 : f32
    %101 = vector.broadcast %cst_99 : f32 to vector<16x8x8xf32>
    %102 = arith.mulf %101, %100 : vector<16x8x8xf32>
    %103 = arith.addf %23, %102 : vector<16x8x8xf32>
    %104 = vector.shape_cast %103 : vector<16x8x8xf32> to vector<2x8x8x8xf32>
    %c0_100 = arith.constant 0 : index
    %c0_101 = arith.constant 0 : index
    %c0_102 = arith.constant 0 : index
    %c0_103 = arith.constant 0 : index
    %105 = vector.load %arg8[%c0_100, %c0_101, %c0_102, %c0_103] : memref<2x8x8x8xf32, #tpu.memory_space<vmem>>, vector<2x8x8x8xf32>
    tpu.vector_store %arg8[%c0_100, %c0_101, %c0_102, %c0_103], %104 {strides = array<i32>} : memref<2x8x8x8xf32, #tpu.memory_space<vmem>>, vector<2x8x8x8xf32>,
    return
  }
  func.func @transform_0(%arg0: i32) -> (i32, i32, i32, i32) {
    %c0_i32 = arith.constant 0 : i32
    %c0_i32_0 = arith.constant 0 : i32
    %c0_i32_1 = arith.constant 0 : i32
    %c0_i32_2 = arith.constant 0 : i32
    %c0_i32_3 = arith.constant 0 : i32
    return %c0_i32, %c0_i32_0, %c0_i32_1, %c0_i32_2 : i32, i32, i32, i32
  }
  func.func @transform_1(%arg0: i32) -> (i32, i32) {
    %c0_i32 = arith.constant 0 : i32
    %c0_i32_0 = arith.constant 0 : i32
    %c0_i32_1 = arith.constant 0 : i32
    return %c0_i32, %c0_i32_0 : i32, i32
  }
  func.func @transform_2(%arg0: i32) -> (i32, i32) {
    %c0_i32 = arith.constant 0 : i32
    %c0_i32_0 = arith.constant 0 : i32
    %c0_i32_1 = arith.constant 0 : i32
    return %c0_i32, %c0_i32_0 : i32, i32
  }
  func.func @transform_3(%arg0: i32) -> (i32, i32) {
    %c0_i32 = arith.constant 0 : i32
    %c0_i32_0 = arith.constant 0 : i32
    %c0_i32_1 = arith.constant 0 : i32
    return %c0_i32, %c0_i32_0 : i32, i32
  }
  func.func @transform_4(%arg0: i32) -> (i32, i32) {
    %c0_i32 = arith.constant 0 : i32
    %c0_i32_0 = arith.constant 0 : i32
    %c0_i32_1 = arith.constant 0 : i32
    return %c0_i32, %c0_i32_0 : i32, i32
  }
  func.func @transform_5(%arg0: i32) -> (i32, i32) {
    %c0_i32 = arith.constant 0 : i32
    %c0_i32_0 = arith.constant 0 : i32
    %c0_i32_1 = arith.constant 0 : i32
    return %c0_i32, %c0_i32_0 : i32, i32
  }
  func.func @transform_6(%arg0: i32) -> (i32, i32) {
    %c0_i32 = arith.constant 0 : i32
    %c0_i32_0 = arith.constant 0 : i32
    %c0_i32_1 = arith.constant 0 : i32
    return %c0_i32, %c0_i32_0 : i32, i32
  }
  func.func @transform_7(%arg0: i32) -> (i32, i32, i32, i32) {
    %c0_i32 = arith.constant 0 : i32
    %c0_i32_0 = arith.constant 0 : i32
    %c0_i32_1 = arith.constant 0 : i32
    %c0_i32_2 = arith.constant 0 : i32
    %c0_i32_3 = arith.constant 0 : i32
    return %c0_i32, %c0_i32_0, %c0_i32_1, %c0_i32_2 : i32, i32, i32, i32
  }
}

</mosaic_0001>

<llo_original>
// kernel: resblk_pallas.1
$region0: #{resblk_pallas.1}
  #allocation0 [shape = 'u32[]', space=smem, size = 0x4, offset = 0x4, fixed_abs, tag = 'smem constant byte address 0x4 - core index']
  #allocation1 [shape = 'u32[144,128]{1,0:T(1,128)}', space=vmem, size = 0x12000, scoped, tag = 'internal scratch']
  #allocation2 [shape = 'f32[2,16,16,36]{3,2,1,0:T(8,128)}', space=vmem, size = 0x40000, scoped, tag = 'scratch operand']
  #allocation3 [shape = 'f32[2,16,16,72]{3,2,1,0:T(8,128)}', space=vmem, size = 0x40000, scoped, tag = 'scratch operand']
  %s0 = inlined_call_operand.vmem [shape: f32[2,16,16,4], index: 0, kind: input, shape index: {}]
  %s1 = inlined_call_operand.vmem [shape: bf16[36,8], index: 1, kind: input, shape index: {}]
  %s2 = inlined_call_operand.vmem [shape: f32[1,8], index: 2, kind: input, shape index: {}]
  %s3 = inlined_call_operand.vmem [shape: bf16[72,8], index: 3, kind: input, shape index: {}]
  %s4 = inlined_call_operand.vmem [shape: f32[1,8], index: 4, kind: input, shape index: {}]
  %s5 = inlined_call_operand.vmem [shape: bf16[4,8], index: 5, kind: input, shape index: {}]
  %s6 = inlined_call_operand.vmem [shape: f32[1,8], index: 6, kind: input, shape index: {}]
  %s7 = inlined_call_operand.vmem [shape: f32[2,8,8,8], index: 7, kind: output, shape index: {}]
  %s8 = sld [smem:[#allocation0]]
  $region38: #{resblk_pallas.1} parent=0
    _
  %s10 = ssub.s32 1, %s8
  %s11 = scalar_select 0, %s10, %s8
  // Predicated region
  $region2: #{resblk_pallas.1} parent=0 // pred_check
    _
  $region3: #{resblk_pallas.1} parent=0 // pred_check_branch
    %13 = sbr.rel (0) target = $region5
  $region4: #{resblk_pallas.1} parent=0 // pred_region
    _
  $region5: #{resblk_pallas.1} parent=0 // pred_fallthru
    _
  // Predicated region
  $region6: #{resblk_pallas.1} parent=0 // pred_check
    _
  $region7: #{resblk_pallas.1} parent=0 // pred_check_branch
    %15 = sbr.rel (0) target = $region9
  $region8: #{resblk_pallas.1} parent=0 // pred_region
    _
  $region9: #{resblk_pallas.1} parent=0 // pred_fallthru
    _
  // Predicated region
  $region10: #{resblk_pallas.1} parent=0 // pred_check
    _
  $region11: #{resblk_pallas.1} parent=0 // pred_check_branch
    %17 = sbr.rel (0) target = $region13
  $region12: #{resblk_pallas.1} parent=0 // pred_region
    _
  $region13: #{resblk_pallas.1} parent=0 // pred_fallthru
    _
  // Predicated region
  $region14: #{resblk_pallas.1} parent=0 // pred_check
    _
  $region15: #{resblk_pallas.1} parent=0 // pred_check_branch
    %19 = sbr.rel (0) target = $region17
  $region16: #{resblk_pallas.1} parent=0 // pred_region
    _
  $region17: #{resblk_pallas.1} parent=0 // pred_fallthru
    _
  // Predicated region
  $region18: #{resblk_pallas.1} parent=0 // pred_check
    _
  $region19: #{resblk_pallas.1} parent=0 // pred_check_branch
    %21 = sbr.rel (0) target = $region21
  $region20: #{resblk_pallas.1} parent=0 // pred_region
    _
  $region21: #{resblk_pallas.1} parent=0 // pred_fallthru
    _
  // Predicated region
  $region22: #{resblk_pallas.1} parent=0 // pred_check
    _
  $region23: #{resblk_pallas.1} parent=0 // pred_check_branch
    %23 = sbr.rel (0) target = $region25
  $region24: #{resblk_pallas.1} parent=0 // pred_region
    _
  $region25: #{resblk_pallas.1} parent=0 // pred_fallthru
    _
  // Predicated region
  $region26: #{resblk_pallas.1} parent=0 // pred_check
    _
  $region27: #{resblk_pallas.1} parent=0 // pred_check_branch
    %25 = sbr.rel (0) target = $region29
  $region28: #{resblk_pallas.1} parent=0 // pred_region
    _
  $region29: #{resblk_pallas.1} parent=0 // pred_fallthru
    _
  %v27 = vld [vmem:[%s0] sm:$0xff]
  %v28 = vld [vmem:[%s0 + $0x8] sm:$0xff]
  %v29 = vld [vmem:[%s0 + $0x10] sm:$0xff]
  %v30 = vld [vmem:[%s0 + $0x18] sm:$0xff]
  %v31 = vld [vmem:[%s0 + $0x20] sm:$0xff]
  %v32 = vld [vmem:[%s0 + $0x28] sm:$0xff]
  %v33 = vld [vmem:[%s0 + $0x30] sm:$0xff]
  %v34 = vld [vmem:[%s0 + $0x38] sm:$0xff]
  %v35 = vld [vmem:[%s0 + $0x40] sm:$0xff]
  %v36 = vld [vmem:[%s0 + $0x48] sm:$0xff]
  %v37 = vld [vmem:[%s0 + $0x50] sm:$0xff]
  %v38 = vld [vmem:[%s0 + $0x58] sm:$0xff]
  %v39 = vld [vmem:[%s0 + $0x60] sm:$0xff]
  %v40 = vld [vmem:[%s0 + $0x68] sm:$0xff]
  %v41 = vld [vmem:[%s0 + $0x70] sm:$0xff]
  %v42 = vld [vmem:[%s0 + $0x78] sm:$0xff]
  %v43 = vld [vmem:[%s0 + $0x80] sm:$0xff]
  %v44 = vld [vmem:[%s0 + $0x88] sm:$0xff]
  %v45 = vld [vmem:[%s0 + $0x90] sm:$0xff]
  %v46 = vld [vmem:[%s0 + $0x98] sm:$0xff]
  %v47 = vld [vmem:[%s0 + $0xa0] sm:$0xff]
  %v48 = vld [vmem:[%s0 + $0xa8] sm:$0xff]
  %v49 = vld [vmem:[%s0 + $0xb0] sm:$0xff]
  %v50 = vld [vmem:[%s0 + $0xb8] sm:$0xff]
  %v51 = vld [vmem:[%s0 + $0xc0] sm:$0xff]
  %v52 = vld [vmem:[%s0 + $0xc8] sm:$0xff]
  %v53 = vld [vmem:[%s0 + $0xd0] sm:$0xff]
  %v54 = vld [vmem:[%s0 + $0xd8] sm:$0xff]
  %v55 = vld [vmem:[%s0 + $0xe0] sm:$0xff]
  %v56 = vld [vmem:[%s0 + $0xe8] sm:$0xff]
  %v57 = vld [vmem:[%s0 + $0xf0] sm:$0xff]
  %v58 = vld [vmem:[%s0 + $0xf8] sm:$0xff]
  %v59 = vld [vmem:[%s0 + $0x100] sm:$0xff]
  %v60 = vld [vmem:[%s0 + $0x108] sm:$0xff]
  %v61 = vld [vmem:[%s0 + $0x110] sm:$0xff]
  %v62 = vld [vmem:[%s0 + $0x118] sm:$0xff]
  %v63 = vld [vmem:[%s0 + $0x120] sm:$0xff]
  %v64 = vld [vmem:[%s0 + $0x128] sm:$0xff]
  %v65 = vld [vmem:[%s0 + $0x130] sm:$0xff]
  %v66 = vld [vmem:[%s0 + $0x138] sm:$0xff]
  %v67 = vld [vmem:[%s0 + $0x140] sm:$0xff]
  %v68 = vld [vmem:[%s0 + $0x148] sm:$0xff]
  %v69 = vld [vmem:[%s0 + $0x150] sm:$0xff]
  %v70 = vld [vmem:[%s0 + $0x158] sm:$0xff]
  %v71 = vld [vmem:[%s0 + $0x160] sm:$0xff]
  %v72 = vld [vmem:[%s0 + $0x168] sm:$0xff]
  %v73 = vld [vmem:[%s0 + $0x170] sm:$0xff]
  %v74 = vld [vmem:[%s0 + $0x178] sm:$0xff]
  %v75 = vld [vmem:[%s0 + $0x180] sm:$0xff]
  %v76 = vld [vmem:[%s0 + $0x188] sm:$0xff]
  %v77 = vld [vmem:[%s0 + $0x190] sm:$0xff]
  %v78 = vld [vmem:[%s0 + $0x198] sm:$0xff]
  %v79 = vld [vmem:[%s0 + $0x1a0] sm:$0xff]
  %v80 = vld [vmem:[%s0 + $0x1a8] sm:$0xff]
  %v81 = vld [vmem:[%s0 + $0x1b0] sm:$0xff]
  %v82 = vld [vmem:[%s0 + $0x1b8] sm:$0xff]
  %v83 = vld [vmem:[%s0 + $0x1c0] sm:$0xff]
  %v84 = vld [vmem:[%s0 + $0x1c8] sm:$0xff]
  %v85 = vld [vmem:[%s0 + $0x1d0] sm:$0xff]
  %v86 = vld [vmem:[%s0 + $0x1d8] sm:$0xff]
  %v87 = vld [vmem:[%s0 + $0x1e0] sm:$0xff]
  %v88 = vld [vmem:[%s0 + $0x1e8] sm:$0xff]
  %v89 = vld [vmem:[%s0 + $0x1f0] sm:$0xff]
  %v90 = vld [vmem:[%s0 + $0x1f8] sm:$0xff]
  %v155 = vcombine.high %v27, %v27
  %v157 = vunpack.c.l.s4 1983009808
  %v158 = vunpack.c.0.s8 %v157
  %v159 = vlaneseq
  %v160 = vshrl.u32 %v159, 7
  %v161 = vsub.s32 %v158, %v160
  %v162 = vrot.slane %v27, %v161
  %v164 = vunpack.c.l.s4 1983009808
  %v165 = vunpack.c.0.s8 %v164
  %v166 = vlaneseq
  %v167 = vshrl.u32 %v166, 7
  %v168 = vsub.s32 %v165, %v167
  %v169 = vrot.slane %v155, %v168
  %v170 = vcombine.high %v162, %v162
  %v171 = vcombine.high %v169, %v169
  %v172 = vcombine.high %v28, %v28
  %v174 = vunpack.c.l.s4 1983009808
  %v175 = vunpack.c.0.s8 %v174
  %v176 = vlaneseq
  %v177 = vshrl.u32 %v176, 7
  %v178 = vsub.s32 %v175, %v177
  %v179 = vrot.slane %v28, %v178
  %v181 = vunpack.c.l.s4 1983009808
  %v182 = vunpack.c.0.s8 %v181
  %v183 = vlaneseq
  %v184 = vshrl.u32 %v183, 7
  %v185 = vsub.s32 %v182, %v184
  %v186 = vrot.slane %v172, %v185
  %v187 = vcombine.high %v179, %v179
  %v188 = vcombine.high %v186, %v186
  %v189 = vcombine.high %v29, %v29
  %v191 = vunpack.c.l.s4 1983009808
  %v192 = vunpack.c.0.s8 %v191
  %v193 = vlaneseq
  %v194 = vshrl.u32 %v193, 7
  %v195 = vsub.s32 %v192, %v194
  %v196 = vrot.slane %v29, %v195
  %v198 = vunpack.c.l.s4 1983009808
  %v199 = vunpack.c.0.s8 %v198
  %v200 = vlaneseq
  %v201 = vshrl.u32 %v200, 7
  %v202 = vsub.s32 %v199, %v201
  %v203 = vrot.slane %v189, %v202
  %v204 = vcombine.high %v196, %v196
  %v205 = vcombine.high %v203, %v203
  %v206 = vcombine.high %v30, %v30
  %v208 = vunpack.c.l.s4 1983009808
  %v209 = vunpack.c.0.s8 %v208
  %v210 = vlaneseq
  %v211 = vshrl.u32 %v210, 7
  %v212 = vsub.s32 %v209, %v211
  %v213 = vrot.slane %v30, %v212
  %v215 = vunpack.c.l.s4 1983009808
  %v216 = vunpack.c.0.s8 %v215
  %v217 = vlaneseq
  %v218 = vshrl.u32 %v217, 7
  %v219 = vsub.s32 %v216, %v218
  %v220 = vrot.slane %v206, %v219
  %v221 = vcombine.high %v213, %v213
  %v222 = vcombine.high %v220, %v220
  %v223 = vcombine.high %v31, %v31
  %v225 = vunpack.c.l.s4 1983009808
  %v226 = vunpack.c.0.s8 %v225
  %v227 = vlaneseq
  %v228 = vshrl.u32 %v227, 7
  %v229 = vsub.s32 %v226, %v228
  %v230 = vrot.slane %v31, %v229
  %v232 = vunpack.c.l.s4 1983009808
  %v233 = vunpack.c.0.s8 %v232
  %v234 = vlaneseq
  %v235 = vshrl.u32 %v234, 7
  %v236 = vsub.s32 %v233, %v235
  %v237 = vrot.slane %v223, %v236
  %v238 = vcombine.high %v230, %v230
  %v239 = vcombine.high %v237, %v237
  %v240 = vcombine.high %v32, %v32
  %v242 = vunpack.c.l.s4 1983009808
  %v243 = vunpack.c.0.s8 %v242
  %v244 = vlaneseq
  %v245 = vshrl.u32 %v244, 7
  %v246 = vsub.s32 %v243, %v245
  %v247 = vrot.slane %v32, %v246
  %v249 = vunpack.c.l.s4 1983009808
  %v250 = vunpack.c.0.s8 %v249
  %v251 = vlaneseq
  %v252 = vshrl.u32 %v251, 7
  %v253 = vsub.s32 %v250, %v252
  %v254 = vrot.slane %v240, %v253
  %v255 = vcombine.high %v247, %v247
  %v256 = vcombine.high %v254, %v254
  %v257 = vcombine.high %v33, %v33
  %v259 = vunpack.c.l.s4 1983009808
  %v260 = vunpack.c.0.s8 %v259
  %v261 = vlaneseq
  %v262 = vshrl.u32 %v261, 7
  %v263 = vsub.s32 %v260, %v262
  %v264 = vrot.slane %v33, %v263
  %v266 = vunpack.c.l.s4 1983009808
  %v267 = vunpack.c.0.s8 %v266
  %v268 = vlaneseq
  %v269 = vshrl.u32 %v268, 7
  %v270 = vsub.s32 %v267, %v269
  %v271 = vrot.slane %v257, %v270
  %v272 = vcombine.high %v264, %v264
  %v273 = vcombine.high %v271, %v271
  %v274 = vcombine.high %v34, %v34
  %v276 = vunpack.c.l.s4 1983009808
  %v277 = vunpack.c.0.s8 %v276
  %v278 = vlaneseq
  %v279 = vshrl.u32 %v278, 7
  %v280 = vsub.s32 %v277, %v279
  %v281 = vrot.slane %v34, %v280
  %v283 = vunpack.c.l.s4 1983009808
  %v284 = vunpack.c.0.s8 %v283
  %v285 = vlaneseq
  %v286 = vshrl.u32 %v285, 7
  %v287 = vsub.s32 %v284, %v286
  %v288 = vrot.slane %v274, %v287
  %v289 = vcombine.high %v281, %v281
  %v290 = vcombine.high %v288, %v288
  %v291 = vcombine.high %v35, %v35
  %v293 = vunpack.c.l.s4 1983009808
  %v294 = vunpack.c.0.s8 %v293
  %v295 = vlaneseq
  %v296 = vshrl.u32 %v295, 7
  %v297 = vsub.s32 %v294, %v296
  %v298 = vrot.slane %v35, %v297
  %v300 = vunpack.c.l.s4 1983009808
  %v301 = vunpack.c.0.s8 %v300
  %v302 = vlaneseq
  %v303 = vshrl.u32 %v302, 7
  %v304 = vsub.s32 %v301, %v303
  %v305 = vrot.slane %v291, %v304
  %v306 = vcombine.high %v298, %v298
  %v307 = vcombine.high %v305, %v305
  %v308 = vcombine.high %v36, %v36
  %v310 = vunpack.c.l.s4 1983009808
  %v311 = vunpack.c.0.s8 %v310
  %v312 = vlaneseq
  %v313 = vshrl.u32 %v312, 7
  %v314 = vsub.s32 %v311, %v313
  %v315 = vrot.slane %v36, %v314
  %v317 = vunpack.c.l.s4 1983009808
  %v318 = vunpack.c.0.s8 %v317
  %v319 = vlaneseq
  %v320 = vshrl.u32 %v319, 7
  %v321 = vsub.s32 %v318, %v320
  %v322 = vrot.slane %v308, %v321
  %v323 = vcombine.high %v315, %v315
  %v324 = vcombine.high %v322, %v322
  %v325 = vcombine.high %v37, %v37
  %v327 = vunpack.c.l.s4 1983009808
  %v328 = vunpack.c.0.s8 %v327
  %v329 = vlaneseq
  %v330 = vshrl.u32 %v329, 7
  %v331 = vsub.s32 %v328, %v330
  %v332 = vrot.slane %v37, %v331
  %v334 = vunpack.c.l.s4 1983009808
  %v335 = vunpack.c.0.s8 %v334
  %v336 = vlaneseq
  %v337 = vshrl.u32 %v336, 7
  %v338 = vsub.s32 %v335, %v337
  %v339 = vrot.slane %v325, %v338
  %v340 = vcombine.high %v332, %v332
  %v341 = vcombine.high %v339, %v339
  %v342 = vcombine.high %v38, %v38
  %v344 = vunpack.c.l.s4 1983009808
  %v345 = vunpack.c.0.s8 %v344
  %v346 = vlaneseq
  %v347 = vshrl.u32 %v346, 7
  %v348 = vsub.s32 %v345, %v347
  %v349 = vrot.slane %v38, %v348
  %v351 = vunpack.c.l.s4 1983009808
  %v352 = vunpack.c.0.s8 %v351
  %v353 = vlaneseq
  %v354 = vshrl.u32 %v353, 7
  %v355 = vsub.s32 %v352, %v354
  %v356 = vrot.slane %v342, %v355
  %v357 = vcombine.high %v349, %v349
  %v358 = vcombine.high %v356, %v356
  %v359 = vcombine.high %v39, %v39
  %v361 = vunpack.c.l.s4 1983009808
  %v362 = vunpack.c.0.s8 %v361
  %v363 = vlaneseq
  %v364 = vshrl.u32 %v363, 7
  %v365 = vsub.s32 %v362, %v364
  %v366 = vrot.slane %v39, %v365
  %v368 = vunpack.c.l.s4 1983009808
  %v369 = vunpack.c.0.s8 %v368
  %v370 = vlaneseq
  %v371 = vshrl.u32 %v370, 7
  %v372 = vsub.s32 %v369, %v371
  %v373 = vrot.slane %v359, %v372
  %v374 = vcombine.high %v366, %v366
  %v375 = vcombine.high %v373, %v373
  %v376 = vcombine.high %v40, %v40
  %v378 = vunpack.c.l.s4 1983009808
  %v379 = vunpack.c.0.s8 %v378
  %v380 = vlaneseq
  %v381 = vshrl.u32 %v380, 7
  %v382 = vsub.s32 %v379, %v381
  %v383 = vrot.slane %v40, %v382
  %v385 = vunpack.c.l.s4 1983009808
  %v386 = vunpack.c.0.s8 %v385
  %v387 = vlaneseq
  %v388 = vshrl.u32 %v387, 7
  %v389 = vsub.s32 %v386, %v388
  %v390 = vrot.slane %v376, %v389
  %v391 = vcombine.high %v383, %v383
  %v392 = vcombine.high %v390, %v390
  %v393 = vcombine.high %v41, %v41
  %v395 = vunpack.c.l.s4 1983009808
  %v396 = vunpack.c.0.s8 %v395
  %v397 = vlaneseq
  %v398 = vshrl.u32 %v397, 7
  %v399 = vsub.s32 %v396, %v398
  %v400 = vrot.slane %v41, %v399
  %v402 = vunpack.c.l.s4 1983009808
  %v403 = vunpack.c.0.s8 %v402
  %v404 = vlaneseq
  %v405 = vshrl.u32 %v404, 7
  %v406 = vsub.s32 %v403, %v405
  %v407 = vrot.slane %v393, %v406
  %v408 = vcombine.high %v400, %v400
  %v409 = vcombine.high %v407, %v407
  %v410 = vcombine.high %v42, %v42
  %v412 = vunpack.c.l.s4 1983009808
  %v413 = vunpack.c.0.s8 %v412
  %v414 = vlaneseq
  %v415 = vshrl.u32 %v414, 7
  %v416 = vsub.s32 %v413, %v415
  %v417 = vrot.slane %v42, %v416
  %v419 = vunpack.c.l.s4 1983009808
  %v420 = vunpack.c.0.s8 %v419
  %v421 = vlaneseq
  %v422 = vshrl.u32 %v421, 7
  %v423 = vsub.s32 %v420, %v422
  %v424 = vrot.slane %v410, %v423
  %v425 = vcombine.high %v417, %v417
  %v426 = vcombine.high %v424, %v424
  %v427 = vcombine.high %v43, %v43
  %v429 = vunpack.c.l.s4 1983009808
  %v430 = vunpack.c.0.s8 %v429
  %v431 = vlaneseq
  %v432 = vshrl.u32 %v431, 7
  %v433 = vsub.s32 %v430, %v432
  %v434 = vrot.slane %v43, %v433
  %v436 = vunpack.c.l.s4 1983009808
  %v437 = vunpack.c.0.s8 %v436
  %v438 = vlaneseq
  %v439 = vshrl.u32 %v438, 7
  %v440 = vsub.s32 %v437, %v439
  %v441 = vrot.slane %v427, %v440
  %v442 = vcombine.high %v434, %v434
  %v443 = vcombine.high %v441, %v441
  %v444 = vcombine.high %v44, %v44
  %v446 = vunpack.c.l.s4 1983009808
  %v447 = vunpack.c.0.s8 %v446
  %v448 = vlaneseq
  %v449 = vshrl.u32 %v448, 7
  %v450 = vsub.s32 %v447, %v449
  %v451 = vrot.slane %v44, %v450
  %v453 = vunpack.c.l.s4 1983009808
  %v454 = vunpack.c.0.s8 %v453
  %v455 = vlaneseq
  %v456 = vshrl.u32 %v455, 7
  %v457 = vsub.s32 %v454, %v456
  %v458 = vrot.slane %v444, %v457
  %v459 = vcombine.high %v451, %v451
  %v460 = vcombine.high %v458, %v458
  %v461 = vcombine.high %v45, %v45
  %v463 = vunpack.c.l.s4 1983009808
  %v464 = vunpack.c.0.s8 %v463
  %v465 = vlaneseq
  %v466 = vshrl.u32 %v465, 7
  %v467 = vsub.s32 %v464, %v466
  %v468 = vrot.slane %v45, %v467
  %v470 = vunpack.c.l.s4 1983009808
  %v471 = vunpack.c.0.s8 %v470
  %v472 = vlaneseq
  %v473 = vshrl.u32 %v472, 7
  %v474 = vsub.s32 %v471, %v473
  %v475 = vrot.slane %v461, %v474
  %v476 = vcombine.high %v468, %v468
  %v477 = vcombine.high %v475, %v475
  %v478 = vcombine.high %v46, %v46
  %v480 = vunpack.c.l.s4 1983009808
  %v481 = vunpack.c.0.s8 %v480
  %v482 = vlaneseq
  %v483 = vshrl.u32 %v482, 7
  %v484 = vsub.s32 %v481, %v483
  %v485 = vrot.slane %v46, %v484
  %v487 = vunpack.c.l.s4 1983009808
  %v488 = vunpack.c.0.s8 %v487
  %v489 = vlaneseq
  %v490 = vshrl.u32 %v489, 7
  %v491 = vsub.s32 %v488, %v490
  %v492 = vrot.slane %v478, %v491
  %v493 = vcombine.high %v485, %v485
  %v494 = vcombine.high %v492, %v492
  %v495 = vcombine.high %v47, %v47
  %v497 = vunpack.c.l.s4 1983009808
  %v498 = vunpack.c.0.s8 %v497
  %v499 = vlaneseq
  %v500 = vshrl.u32 %v499, 7
  %v501 = vsub.s32 %v498, %v500
  %v502 = vrot.slane %v47, %v501
  %v504 = vunpack.c.l.s4 1983009808
  %v505 = vunpack.c.0.s8 %v504
  %v506 = vlaneseq
  %v507 = vshrl.u32 %v506, 7
  %v508 = vsub.s32 %v505, %v507
  %v509 = vrot.slane %v495, %v508
  %v510 = vcombine.high %v502, %v502
  %v511 = vcombine.high %v509, %v509
  %v512 = vcombine.high %v48, %v48
  %v514 = vunpack.c.l.s4 1983009808
  %v515 = vunpack.c.0.s8 %v514
  %v516 = vlaneseq
  %v517 = vshrl.u32 %v516, 7
  %v518 = vsub.s32 %v515, %v517
  %v519 = vrot.slane %v48, %v518
  %v521 = vunpack.c.l.s4 1983009808
  %v522 = vunpack.c.0.s8 %v521
  %v523 = vlaneseq
  %v524 = vshrl.u32 %v523, 7
  %v525 = vsub.s32 %v522, %v524
  %v526 = vrot.slane %v512, %v525
  %v527 = vcombine.high %v519, %v519
  %v528 = vcombine.high %v526, %v526
  %v529 = vcombine.high %v49, %v49
  %v531 = vunpack.c.l.s4 1983009808
  %v532 = vunpack.c.0.s8 %v531
  %v533 = vlaneseq
  %v534 = vshrl.u32 %v533, 7
  %v535 = vsub.s32 %v532, %v534
  %v536 = vrot.slane %v49, %v535
  %v538 = vunpack.c.l.s4 1983009808
  %v539 = vunpack.c.0.s8 %v538
  %v540 = vlaneseq
  %v541 = vshrl.u32 %v540, 7
  %v542 = vsub.s32 %v539, %v541
  %v543 = vrot.slane %v529, %v542
  %v544 = vcombine.high %v536, %v536
  %v545 = vcombine.high %v543, %v543
  %v546 = vcombine.high %v50, %v50
  %v548 = vunpack.c.l.s4 1983009808
  %v549 = vunpack.c.0.s8 %v548
  %v550 = vlaneseq
  %v551 = vshrl.u32 %v550, 7
  %v552 = vsub.s32 %v549, %v551
  %v553 = vrot.slane %v50, %v552
  %v555 = vunpack.c.l.s4 1983009808
  %v556 = vunpack.c.0.s8 %v555
  %v557 = vlaneseq
  %v558 = vshrl.u32 %v557, 7
  %v559 = vsub.s32 %v556, %v558
  %v560 = vrot.slane %v546, %v559
  %v561 = vcombine.high %v553, %v553
  %v562 = vcombine.high %v560, %v560
  %v563 = vcombine.high %v51, %v51
  %v565 = vunpack.c.l.s4 1983009808
  %v566 = vunpack.c.0.s8 %v565
  %v567 = vlaneseq
  %v568 = vshrl.u32 %v567, 7
  %v569 = vsub.s32 %v566, %v568
  %v570 = vrot.slane %v51, %v569
  %v572 = vunpack.c.l.s4 1983009808
  %v573 = vunpack.c.0.s8 %v572
  %v574 = vlaneseq
  %v575 = vshrl.u32 %v574, 7
  %v576 = vsub.s32 %v573, %v575
  %v577 = vrot.slane %v563, %v576
  %v578 = vcombine.high %v570, %v570
  %v579 = vcombine.high %v577, %v577
  %v580 = vcombine.high %v52, %v52
  %v582 = vunpack.c.l.s4 1983009808
  %v583 = vunpack.c.0.s8 %v582
  %v584 = vlaneseq
  %v585 = vshrl.u32 %v584, 7
  %v586 = vsub.s32 %v583, %v585
  %v587 = vrot.slane %v52, %v586
  %v589 = vunpack.c.l.s4 1983009808
  %v590 = vunpack.c.0.s8 %v589
  %v591 = vlaneseq
  %v592 = vshrl.u32 %v591, 7
  %v593 = vsub.s32 %v590, %v592
  %v594 = vrot.slane %v580, %v593
  %v595 = vcombine.high %v587, %v587
  %v596 = vcombine.high %v594, %v594
  %v597 = vcombine.high %v53, %v53
  %v599 = vunpack.c.l.s4 1983009808
  %v600 = vunpack.c.0.s8 %v599
  %v601 = vlaneseq
  %v602 = vshrl.u32 %v601, 7
  %v603 = vsub.s32 %v600, %v602
  %v604 = vrot.slane %v53, %v603
  %v606 = vunpack.c.l.s4 1983009808
  %v607 = vunpack.c.0.s8 %v606
  %v608 = vlaneseq
  %v609 = vshrl.u32 %v608, 7
  %v610 = vsub.s32 %v607, %v609
  %v611 = vrot.slane %v597, %v610
  %v612 = vcombine.high %v604, %v604
  %v613 = vcombine.high %v611, %v611
  %v614 = vcombine.high %v54, %v54
  %v616 = vunpack.c.l.s4 1983009808
  %v617 = vunpack.c.0.s8 %v616
  %v618 = vlaneseq
  %v619 = vshrl.u32 %v618, 7
  %v620 = vsub.s32 %v617, %v619
  %v621 = vrot.slane %v54, %v620
  %v623 = vunpack.c.l.s4 1983009808
  %v624 = vunpack.c.0.s8 %v623
  %v625 = vlaneseq
  %v626 = vshrl.u32 %v625, 7
  %v627 = vsub.s32 %v624, %v626
  %v628 = vrot.slane %v614, %v627
  %v629 = vcombine.high %v621, %v621
  %v630 = vcombine.high %v628, %v628
  %v631 = vcombine.high %v55, %v55
  %v633 = vunpack.c.l.s4 1983009808
  %v634 = vunpack.c.0.s8 %v633
  %v635 = vlaneseq
  %v636 = vshrl.u32 %v635, 7
  %v637 = vsub.s32 %v634, %v636
  %v638 = vrot.slane %v55, %v637
  %v640 = vunpack.c.l.s4 1983009808
  %v641 = vunpack.c.0.s8 %v640
  %v642 = vlaneseq
  %v643 = vshrl.u32 %v642, 7
  %v644 = vsub.s32 %v641, %v643
  %v645 = vrot.slane %v631, %v644
  %v646 = vcombine.high %v638, %v638
  %v647 = vcombine.high %v645, %v645
  %v648 = vcombine.high %v56, %v56
  %v650 = vunpack.c.l.s4 1983009808
  %v651 = vunpack.c.0.s8 %v650
  %v652 = vlaneseq
  %v653 = vshrl.u32 %v652, 7
  %v654 = vsub.s32 %v651, %v653
  %v655 = vrot.slane %v56, %v654
  %v657 = vunpack.c.l.s4 1983009808
  %v658 = vunpack.c.0.s8 %v657
  %v659 = vlaneseq
  %v660 = vshrl.u32 %v659, 7
  %v661 = vsub.s32 %v658, %v660
  %v662 = vrot.slane %v648, %v661
  %v663 = vcombine.high %v655, %v655
  %v664 = vcombine.high %v662, %v662
  %v665 = vcombine.high %v57, %v57
  %v667 = vunpack.c.l.s4 1983009808
  %v668 = vunpack.c.0.s8 %v667
  %v669 = vlaneseq
  %v670 = vshrl.u32 %v669, 7
  %v671 = vsub.s32 %v668, %v670
  %v672 = vrot.slane %v57, %v671
  %v674 = vunpack.c.l.s4 1983009808
  %v675 = vunpack.c.0.s8 %v674
  %v676 = vlaneseq
  %v677 = vshrl.u32 %v676, 7
  %v678 = vsub.s32 %v675, %v677
  %v679 = vrot.slane %v665, %v678
  %v680 = vcombine.high %v672, %v672
  %v681 = vcombine.high %v679, %v679
  %v682 = vcombine.high %v58, %v58
  %v684 = vunpack.c.l.s4 1983009808
  %v685 = vunpack.c.0.s8 %v684
  %v686 = vlaneseq
  %v687 = vshrl.u32 %v686, 7
  %v688 = vsub.s32 %v685, %v687
  %v689 = vrot.slane %v58, %v688
  %v691 = vunpack.c.l.s4 1983009808
  %v692 = vunpack.c.0.s8 %v691
  %v693 = vlaneseq
  %v694 = vshrl.u32 %v693, 7
  %v695 = vsub.s32 %v692, %v694
  %v696 = vrot.slane %v682, %v695
  %v697 = vcombine.high %v689, %v689
  %v698 = vcombine.high %v696, %v696
  %v699 = vcombine.high %v59, %v59
  %v701 = vunpack.c.l.s4 1983009808
  %v702 = vunpack.c.0.s8 %v701
  %v703 = vlaneseq
  %v704 = vshrl.u32 %v703, 7
  %v705 = vsub.s32 %v702, %v704
  %v706 = vrot.slane %v59, %v705
  %v708 = vunpack.c.l.s4 1983009808
  %v709 = vunpack.c.0.s8 %v708
  %v710 = vlaneseq
  %v711 = vshrl.u32 %v710, 7
  %v712 = vsub.s32 %v709, %v711
  %v713 = vrot.slane %v699, %v712
  %v714 = vcombine.high %v706, %v706
  %v715 = vcombine.high %v713, %v713
  %v716 = vcombine.high %v60, %v60
  %v718 = vunpack.c.l.s4 1983009808
  %v719 = vunpack.c.0.s8 %v718
  %v720 = vlaneseq
  %v721 = vshrl.u32 %v720, 7
  %v722 = vsub.s32 %v719, %v721
  %v723 = vrot.slane %v60, %v722
  %v725 = vunpack.c.l.s4 1983009808
  %v726 = vunpack.c.0.s8 %v725
  %v727 = vlaneseq
  %v728 = vshrl.u32 %v727, 7
  %v729 = vsub.s32 %v726, %v728
  %v730 = vrot.slane %v716, %v729
  %v731 = vcombine.high %v723, %v723
  %v732 = vcombine.high %v730, %v730
  %v733 = vcombine.high %v61, %v61
  %v735 = vunpack.c.l.s4 1983009808
  %v736 = vunpack.c.0.s8 %v735
  %v737 = vlaneseq
  %v738 = vshrl.u32 %v737, 7
  %v739 = vsub.s32 %v736, %v738
  %v740 = vrot.slane %v61, %v739
  %v742 = vunpack.c.l.s4 1983009808
  %v743 = vunpack.c.0.s8 %v742
  %v744 = vlaneseq
  %v745 = vshrl.u32 %v744, 7
  %v746 = vsub.s32 %v743, %v745
  %v747 = vrot.slane %v733, %v746
  %v748 = vcombine.high %v740, %v740
  %v749 = vcombine.high %v747, %v747
  %v750 = vcombine.high %v62, %v62
  %v752 = vunpack.c.l.s4 1983009808
  %v753 = vunpack.c.0.s8 %v752
  %v754 = vlaneseq
  %v755 = vshrl.u32 %v754, 7
  %v756 = vsub.s32 %v753, %v755
  %v757 = vrot.slane %v62, %v756
  %v759 = vunpack.c.l.s4 1983009808
  %v760 = vunpack.c.0.s8 %v759
  %v761 = vlaneseq
  %v762 = vshrl.u32 %v761, 7
  %v763 = vsub.s32 %v760, %v762
  %v764 = vrot.slane %v750, %v763
  %v765 = vcombine.high %v757, %v757
  %v766 = vcombine.high %v764, %v764
  %v767 = vcombine.high %v63, %v63
  %v769 = vunpack.c.l.s4 1983009808
  %v770 = vunpack.c.0.s8 %v769
  %v771 = vlaneseq
  %v772 = vshrl.u32 %v771, 7
  %v773 = vsub.s32 %v770, %v772
  %v774 = vrot.slane %v63, %v773
  %v776 = vunpack.c.l.s4 1983009808
  %v777 = vunpack.c.0.s8 %v776
  %v778 = vlaneseq
  %v779 = vshrl.u32 %v778, 7
  %v780 = vsub.s32 %v777, %v779
  %v781 = vrot.slane %v767, %v780
  %v782 = vcombine.high %v774, %v774
  %v783 = vcombine.high %v781, %v781
  %v784 = vcombine.high %v64, %v64
  %v786 = vunpack.c.l.s4 1983009808
  %v787 = vunpack.c.0.s8 %v786
  %v788 = vlaneseq
  %v789 = vshrl.u32 %v788, 7
  %v790 = vsub.s32 %v787, %v789
  %v791 = vrot.slane %v64, %v790
  %v793 = vunpack.c.l.s4 1983009808
  %v794 = vunpack.c.0.s8 %v793
  %v795 = vlaneseq
  %v796 = vshrl.u32 %v795, 7
  %v797 = vsub.s32 %v794, %v796
  %v798 = vrot.slane %v784, %v797
  %v799 = vcombine.high %v791, %v791
  %v800 = vcombine.high %v798, %v798
  %v801 = vcombine.high %v65, %v65
  %v803 = vunpack.c.l.s4 1983009808
  %v804 = vunpack.c.0.s8 %v803
  %v805 = vlaneseq
  %v806 = vshrl.u32 %v805, 7
  %v807 = vsub.s32 %v804, %v806
  %v808 = vrot.slane %v65, %v807
  %v810 = vunpack.c.l.s4 1983009808
  %v811 = vunpack.c.0.s8 %v810
  %v812 = vlaneseq
  %v813 = vshrl.u32 %v812, 7
  %v814 = vsub.s32 %v811, %v813
  %v815 = vrot.slane %v801, %v814
  %v816 = vcombine.high %v808, %v808
  %v817 = vcombine.high %v815, %v815
  %v818 = vcombine.high %v66, %v66
  %v820 = vunpack.c.l.s4 1983009808
  %v821 = vunpack.c.0.s8 %v820
  %v822 = vlaneseq
  %v823 = vshrl.u32 %v822, 7
  %v824 = vsub.s32 %v821, %v823
  %v825 = vrot.slane %v66, %v824
  %v827 = vunpack.c.l.s4 1983009808
  %v828 = vunpack.c.0.s8 %v827
  %v829 = vlaneseq
  %v830 = vshrl.u32 %v829, 7
  %v831 = vsub.s32 %v828, %v830
  %v832 = vrot.slane %v818, %v831
  %v833 = vcombine.high %v825, %v825
  %v834 = vcombine.high %v832, %v832
  %v835 = vcombine.high %v67, %v67
  %v837 = vunpack.c.l.s4 1983009808
  %v838 = vunpack.c.0.s8 %v837
  %v839 = vlaneseq
  %v840 = vshrl.u32 %v839, 7
  %v841 = vsub.s32 %v838, %v840
  %v842 = vrot.slane %v67, %v841
  %v844 = vunpack.c.l.s4 1983009808
  %v845 = vunpack.c.0.s8 %v844
  %v846 = vlaneseq
  %v847 = vshrl.u32 %v846, 7
  %v848 = vsub.s32 %v845, %v847
  %v849 = vrot.slane %v835, %v848
  %v850 = vcombine.high %v842, %v842
  %v851 = vcombine.high %v849, %v849
  %v852 = vcombine.high %v68, %v68
  %v854 = vunpack.c.l.s4 1983009808
  %v855 = vunpack.c.0.s8 %v854
  %v856 = vlaneseq
  %v857 = vshrl.u32 %v856, 7
  %v858 = vsub.s32 %v855, %v857
  %v859 = vrot.slane %v68, %v858
  %v861 = vunpack.c.l.s4 1983009808
  %v862 = vunpack.c.0.s8 %v861
  %v863 = vlaneseq
  %v864 = vshrl.u32 %v863, 7
  %v865 = vsub.s32 %v862, %v864
  %v866 = vrot.slane %v852, %v865
  %v867 = vcombine.high %v859, %v859
  %v868 = vcombine.high %v866, %v866
  %v869 = vcombine.high %v69, %v69
  %v871 = vunpack.c.l.s4 1983009808
  %v872 = vunpack.c.0.s8 %v871
  %v873 = vlaneseq
  %v874 = vshrl.u32 %v873, 7
  %v875 = vsub.s32 %v872, %v874
  %v876 = vrot.slane %v69, %v875
  %v878 = vunpack.c.l.s4 1983009808
  %v879 = vunpack.c.0.s8 %v878
  %v880 = vlaneseq
  %v881 = vshrl.u32 %v880, 7
  %v882 = vsub.s32 %v879, %v881
  %v883 = vrot.slane %v869, %v882
  %v884 = vcombine.high %v876, %v876
  %v885 = vcombine.high %v883, %v883
  %v886 = vcombine.high %v70, %v70
  %v888 = vunpack.c.l.s4 1983009808
  %v889 = vunpack.c.0.s8 %v888
  %v890 = vlaneseq
  %v891 = vshrl.u32 %v890, 7
  %v892 = vsub.s32 %v889, %v891
  %v893 = vrot.slane %v70, %v892
  %v895 = vunpack.c.l.s4 1983009808
  %v896 = vunpack.c.0.s8 %v895
  %v897 = vlaneseq
  %v898 = vshrl.u32 %v897, 7
  %v899 = vsub.s32 %v896, %v898
  %v900 = vrot.slane %v886, %v899
  %v901 = vcombine.high %v893, %v893
  %v902 = vcombine.high %v900, %v900
  %v903 = vcombine.high %v71, %v71
  %v905 = vunpack.c.l.s4 1983009808
  %v906 = vunpack.c.0.s8 %v905
  %v907 = vlaneseq
  %v908 = vshrl.u32 %v907, 7
  %v909 = vsub.s32 %v906, %v908
  %v910 = vrot.slane %v71, %v909
  %v912 = vunpack.c.l.s4 1983009808
  %v913 = vunpack.c.0.s8 %v912
  %v914 = vlaneseq
  %v915 = vshrl.u32 %v914, 7
  %v916 = vsub.s32 %v913, %v915
  %v917 = vrot.slane %v903, %v916
  %v918 = vcombine.high %v910, %v910
  %v919 = vcombine.high %v917, %v917
  %v920 = vcombine.high %v72, %v72
  %v922 = vunpack.c.l.s4 1983009808
  %v923 = vunpack.c.0.s8 %v922
  %v924 = vlaneseq
  %v925 = vshrl.u32 %v924, 7
  %v926 = vsub.s32 %v923, %v925
  %v927 = vrot.slane %v72, %v926
  %v929 = vunpack.c.l.s4 1983009808
  %v930 = vunpack.c.0.s8 %v929
  %v931 = vlaneseq
  %v932 = vshrl.u32 %v931, 7
  %v933 = vsub.s32 %v930, %v932
  %v934 = vrot.slane %v920, %v933
  %v935 = vcombine.high %v927, %v927
  %v936 = vcombine.high %v934, %v934
  %v937 = vcombine.high %v73, %v73
  %v939 = vunpack.c.l.s4 1983009808
  %v940 = vunpack.c.0.s8 %v939
  %v941 = vlaneseq
  %v942 = vshrl.u32 %v941, 7
  %v943 = vsub.s32 %v940, %v942
  %v944 = vrot.slane %v73, %v943
  %v946 = vunpack.c.l.s4 1983009808
  %v947 = vunpack.c.0.s8 %v946
  %v948 = vlaneseq
  %v949 = vshrl.u32 %v948, 7
  %v950 = vsub.s32 %v947, %v949
  %v951 = vrot.slane %v937, %v950
  %v952 = vcombine.high %v944, %v944
  %v953 = vcombine.high %v951, %v951
  %v954 = vcombine.high %v74, %v74
  %v956 = vunpack.c.l.s4 1983009808
  %v957 = vunpack.c.0.s8 %v956
  %v958 = vlaneseq
  %v959 = vshrl.u32 %v958, 7
  %v960 = vsub.s32 %v957, %v959
  %v961 = vrot.slane %v74, %v960
  %v963 = vunpack.c.l.s4 1983009808
  %v964 = vunpack.c.0.s8 %v963
  %v965 = vlaneseq
  %v966 = vshrl.u32 %v965, 7
  %v967 = vsub.s32 %v964, %v966
  %v968 = vrot.slane %v954, %v967
  %v969 = vcombine.high %v961, %v961
  %v970 = vcombine.high %v968, %v968
  %v971 = vcombine.high %v75, %v75
  %v973 = vunpack.c.l.s4 1983009808
  %v974 = vunpack.c.0.s8 %v973
  %v975 = vlaneseq
  %v976 = vshrl.u32 %v975, 7
  %v977 = vsub.s32 %v974, %v976
  %v978 = vrot.slane %v75, %v977
  %v980 = vunpack.c.l.s4 1983009808
  %v981 = vunpack.c.0.s8 %v980
  %v982 = vlaneseq
  %v983 = vshrl.u32 %v982, 7
  %v984 = vsub.s32 %v981, %v983
  %v985 = vrot.slane %v971, %v984
  %v986 = vcombine.high %v978, %v978
  %v987 = vcombine.high %v985, %v985
  %v988 = vcombine.high %v76, %v76
  %v990 = vunpack.c.l.s4 1983009808
  %v991 = vunpack.c.0.s8 %v990
  %v992 = vlaneseq
  %v993 = vshrl.u32 %v992, 7
  %v994 = vsub.s32 %v991, %v993
  %v995 = vrot.slane %v76, %v994
  %v997 = vunpack.c.l.s4 1983009808
  %v998 = vunpack.c.0.s8 %v997
  %v999 = vlaneseq
  %v1000 = vshrl.u32 %v999, 7
  %v1001 = vsub.s32 %v998, %v1000
  %v1002 = vrot.slane %v988, %v1001
  %v1003 = vcombine.high %v995, %v995
  %v1004 = vcombine.high %v1002, %v1002
  %v1005 = vcombine.high %v77, %v77
  %v1007 = vunpack.c.l.s4 1983009808
  %v1008 = vunpack.c.0.s8 %v1007
  %v1009 = vlaneseq
  %v1010 = vshrl.u32 %v1009, 7
  %v1011 = vsub.s32 %v1008, %v1010
  %v1012 = vrot.slane %v77, %v1011
  %v1014 = vunpack.c.l.s4 1983009808
  %v1015 = vunpack.c.0.s8 %v1014
  %v1016 = vlaneseq
  %v1017 = vshrl.u32 %v1016, 7
  %v1018 = vsub.s32 %v1015, %v1017
  %v1019 = vrot.slane %v1005, %v1018
  %v1020 = vcombine.high %v1012, %v1012
  %v1021 = vcombine.high %v1019, %v1019
  %v1022 = vcombine.high %v78, %v78
  %v1024 = vunpack.c.l.s4 1983009808
  %v1025 = vunpack.c.0.s8 %v1024
  %v1026 = vlaneseq
  %v1027 = vshrl.u32 %v1026, 7
  %v1028 = vsub.s32 %v1025, %v1027
  %v1029 = vrot.slane %v78, %v1028
  %v1031 = vunpack.c.l.s4 1983009808
  %v1032 = vunpack.c.0.s8 %v1031
  %v1033 = vlaneseq
  %v1034 = vshrl.u32 %v1033, 7
  %v1035 = vsub.s32 %v1032, %v1034
  %v1036 = vrot.slane %v1022, %v1035
  %v1037 = vcombine.high %v1029, %v1029
  %v1038 = vcombine.high %v1036, %v1036
  %v1039 = vcombine.high %v79, %v79
  %v1041 = vunpack.c.l.s4 1983009808
  %v1042 = vunpack.c.0.s8 %v1041
  %v1043 = vlaneseq
  %v1044 = vshrl.u32 %v1043, 7
  %v1045 = vsub.s32 %v1042, %v1044
  %v1046 = vrot.slane %v79, %v1045
  %v1048 = vunpack.c.l.s4 1983009808
  %v1049 = vunpack.c.0.s8 %v1048
  %v1050 = vlaneseq
  %v1051 = vshrl.u32 %v1050, 7
  %v1052 = vsub.s32 %v1049, %v1051
  %v1053 = vrot.slane %v1039, %v1052
  %v1054 = vcombine.high %v1046, %v1046
  %v1055 = vcombine.high %v1053, %v1053
  %v1056 = vcombine.high %v80, %v80
  %v1058 = vunpack.c.l.s4 1983009808
  %v1059 = vunpack.c.0.s8 %v1058
  %v1060 = vlaneseq
  %v1061 = vshrl.u32 %v1060, 7
  %v1062 = vsub.s32 %v1059, %v1061
  %v1063 = vrot.slane %v80, %v1062
  %v1065 = vunpack.c.l.s4 1983009808
  %v1066 = vunpack.c.0.s8 %v1065
  %v1067 = vlaneseq
  %v1068 = vshrl.u32 %v1067, 7
  %v1069 = vsub.s32 %v1066, %v1068
  %v1070 = vrot.slane %v1056, %v1069
  %v1071 = vcombine.high %v1063, %v1063
  %v1072 = vcombine.high %v1070, %v1070
  %v1073 = vcombine.high %v81, %v81
  %v1075 = vunpack.c.l.s4 1983009808
  %v1076 = vunpack.c.0.s8 %v1075
  %v1077 = vlaneseq
  %v1078 = vshrl.u32 %v1077, 7
  %v1079 = vsub.s32 %v1076, %v1078
  %v1080 = vrot.slane %v81, %v1079
  %v1082 = vunpack.c.l.s4 1983009808
  %v1083 = vunpack.c.0.s8 %v1082
  %v1084 = vlaneseq
  %v1085 = vshrl.u32 %v1084, 7
  %v1086 = vsub.s32 %v1083, %v1085
  %v1087 = vrot.slane %v1073, %v1086
  %v1088 = vcombine.high %v1080, %v1080
  %v1089 = vcombine.high %v1087, %v1087
  %v1090 = vcombine.high %v82, %v82
  %v1092 = vunpack.c.l.s4 1983009808
  %v1093 = vunpack.c.0.s8 %v1092
  %v1094 = vlaneseq
  %v1095 = vshrl.u32 %v1094, 7
  %v1096 = vsub.s32 %v1093, %v1095
  %v1097 = vrot.slane %v82, %v1096
  %v1099 = vunpack.c.l.s4 1983009808
  %v1100 = vunpack.c.0.s8 %v1099
  %v1101 = vlaneseq
  %v1102 = vshrl.u32 %v1101, 7
  %v1103 = vsub.s32 %v1100, %v1102
  %v1104 = vrot.slane %v1090, %v1103
  %v1105 = vcombine.high %v1097, %v1097
  %v1106 = vcombine.high %v1104, %v1104
  %v1107 = vcombine.high %v83, %v83
  %v1109 = vunpack.c.l.s4 1983009808
  %v1110 = vunpack.c.0.s8 %v1109
  %v1111 = vlaneseq
  %v1112 = vshrl.u32 %v1111, 7
  %v1113 = vsub.s32 %v1110, %v1112
  %v1114 = vrot.slane %v83, %v1113
  %v1116 = vunpack.c.l.s4 1983009808
  %v1117 = vunpack.c.0.s8 %v1116
  %v1118 = vlaneseq
  %v1119 = vshrl.u32 %v1118, 7
  %v1120 = vsub.s32 %v1117, %v1119
  %v1121 = vrot.slane %v1107, %v1120
  %v1122 = vcombine.high %v1114, %v1114
  %v1123 = vcombine.high %v1121, %v1121
  %v1124 = vcombine.high %v84, %v84
  %v1126 = vunpack.c.l.s4 1983009808
  %v1127 = vunpack.c.0.s8 %v1126
  %v1128 = vlaneseq
  %v1129 = vshrl.u32 %v1128, 7
  %v1130 = vsub.s32 %v1127, %v1129
  %v1131 = vrot.slane %v84, %v1130
  %v1133 = vunpack.c.l.s4 1983009808
  %v1134 = vunpack.c.0.s8 %v1133
  %v1135 = vlaneseq
  %v1136 = vshrl.u32 %v1135, 7
  %v1137 = vsub.s32 %v1134, %v1136
  %v1138 = vrot.slane %v1124, %v1137
  %v1139 = vcombine.high %v1131, %v1131
  %v1140 = vcombine.high %v1138, %v1138
  %v1141 = vcombine.high %v85, %v85
  %v1143 = vunpack.c.l.s4 1983009808
  %v1144 = vunpack.c.0.s8 %v1143
  %v1145 = vlaneseq
  %v1146 = vshrl.u32 %v1145, 7
  %v1147 = vsub.s32 %v1144, %v1146
  %v1148 = vrot.slane %v85, %v1147
  %v1150 = vunpack.c.l.s4 1983009808
  %v1151 = vunpack.c.0.s8 %v1150
  %v1152 = vlaneseq
  %v1153 = vshrl.u32 %v1152, 7
  %v1154 = vsub.s32 %v1151, %v1153
  %v1155 = vrot.slane %v1141, %v1154
  %v1156 = vcombine.high %v1148, %v1148
  %v1157 = vcombine.high %v1155, %v1155
  %v1158 = vcombine.high %v86, %v86
  %v1160 = vunpack.c.l.s4 1983009808
  %v1161 = vunpack.c.0.s8 %v1160
  %v1162 = vlaneseq
  %v1163 = vshrl.u32 %v1162, 7
  %v1164 = vsub.s32 %v1161, %v1163
  %v1165 = vrot.slane %v86, %v1164
  %v1167 = vunpack.c.l.s4 1983009808
  %v1168 = vunpack.c.0.s8 %v1167
  %v1169 = vlaneseq
  %v1170 = vshrl.u32 %v1169, 7
  %v1171 = vsub.s32 %v1168, %v1170
  %v1172 = vrot.slane %v1158, %v1171
  %v1173 = vcombine.high %v1165, %v1165
  %v1174 = vcombine.high %v1172, %v1172
  %v1175 = vcombine.high %v87, %v87
  %v1177 = vunpack.c.l.s4 1983009808
  %v1178 = vunpack.c.0.s8 %v1177
  %v1179 = vlaneseq
  %v1180 = vshrl.u32 %v1179, 7
  %v1181 = vsub.s32 %v1178, %v1180
  %v1182 = vrot.slane %v87, %v1181
  %v1184 = vunpack.c.l.s4 1983009808
  %v1185 = vunpack.c.0.s8 %v1184
  %v1186 = vlaneseq
  %v1187 = vshrl.u32 %v1186, 7
  %v1188 = vsub.s32 %v1185, %v1187
  %v1189 = vrot.slane %v1175, %v1188
  %v1190 = vcombine.high %v1182, %v1182
  %v1191 = vcombine.high %v1189, %v1189
  %v1192 = vcombine.high %v88, %v88
  %v1194 = vunpack.c.l.s4 1983009808
  %v1195 = vunpack.c.0.s8 %v1194
  %v1196 = vlaneseq
  %v1197 = vshrl.u32 %v1196, 7
  %v1198 = vsub.s32 %v1195, %v1197
  %v1199 = vrot.slane %v88, %v1198
  %v1201 = vunpack.c.l.s4 1983009808
  %v1202 = vunpack.c.0.s8 %v1201
  %v1203 = vlaneseq
  %v1204 = vshrl.u32 %v1203, 7
  %v1205 = vsub.s32 %v1202, %v1204
  %v1206 = vrot.slane %v1192, %v1205
  %v1207 = vcombine.high %v1199, %v1199
  %v1208 = vcombine.high %v1206, %v1206
  %v1209 = vcombine.high %v89, %v89
  %v1211 = vunpack.c.l.s4 1983009808
  %v1212 = vunpack.c.0.s8 %v1211
  %v1213 = vlaneseq
  %v1214 = vshrl.u32 %v1213, 7
  %v1215 = vsub.s32 %v1212, %v1214
  %v1216 = vrot.slane %v89, %v1215
  %v1218 = vunpack.c.l.s4 1983009808
  %v1219 = vunpack.c.0.s8 %v1218
  %v1220 = vlaneseq
  %v1221 = vshrl.u32 %v1220, 7
  %v1222 = vsub.s32 %v1219, %v1221
  %v1223 = vrot.slane %v1209, %v1222
  %v1224 = vcombine.high %v1216, %v1216
  %v1225 = vcombine.high %v1223, %v1223
  %v1226 = vcombine.high %v90, %v90
  %v1228 = vunpack.c.l.s4 1983009808
  %v1229 = vunpack.c.0.s8 %v1228
  %v1230 = vlaneseq
  %v1231 = vshrl.u32 %v1230, 7
  %v1232 = vsub.s32 %v1229, %v1231
  %v1233 = vrot.slane %v90, %v1232
  %v1235 = vunpack.c.l.s4 1983009808
  %v1236 = vunpack.c.0.s8 %v1235
  %v1237 = vlaneseq
  %v1238 = vshrl.u32 %v1237, 7
  %v1239 = vsub.s32 %v1236, %v1238
  %v1240 = vrot.slane %v1226, %v1239
  %v1241 = vcombine.high %v1233, %v1233
  %v1242 = vcombine.high %v1240, %v1240
  %v1499 = vrot.slane %v162, 7
  %v1500 = vrot.slane %v1499, 2
  %v1501 = vrot.slane %v170, 7
  %v1502 = vrot.slane %v1501, 2
  %v1503 = vrot.slane %v169, 7
  %v1504 = vrot.slane %v1503, 2
  %v1505 = vrot.slane %v171, 7
  %v1506 = vrot.slane %v1505, 2
  %v1507 = vrot.slane %v179, 7
  %v1508 = vrot.slane %v1507, 2
  %v1509 = vrot.slane %v187, 7
  %v1510 = vrot.slane %v1509, 2
  %v1511 = vrot.slane %v186, 7
  %v1512 = vrot.slane %v1511, 2
  %v1513 = vrot.slane %v188, 7
  %v1514 = vrot.slane %v1513, 2
  %v1515 = vrot.slane %v196, 7
  %v1516 = vrot.slane %v1515, 2
  %v1517 = vrot.slane %v204, 7
  %v1518 = vrot.slane %v1517, 2
  %v1519 = vrot.slane %v203, 7
  %v1520 = vrot.slane %v1519, 2
  %v1521 = vrot.slane %v205, 7
  %v1522 = vrot.slane %v1521, 2
  %v1523 = vrot.slane %v213, 7
  %v1524 = vrot.slane %v1523, 2
  %v1525 = vrot.slane %v221, 7
  %v1526 = vrot.slane %v1525, 2
  %v1527 = vrot.slane %v220, 7
  %v1528 = vrot.slane %v1527, 2
  %v1529 = vrot.slane %v222, 7
  %v1530 = vrot.slane %v1529, 2
  %v1531 = vrot.slane %v230, 7
  %v1532 = vrot.slane %v1531, 2
  %v1533 = vrot.slane %v238, 7
  %v1534 = vrot.slane %v1533, 2
  %v1535 = vrot.slane %v237, 7
  %v1536 = vrot.slane %v1535, 2
  %v1537 = vrot.slane %v239, 7
  %v1538 = vrot.slane %v1537, 2
  %v1539 = vrot.slane %v247, 7
  %v1540 = vrot.slane %v1539, 2
  %v1541 = vrot.slane %v255, 7
  %v1542 = vrot.slane %v1541, 2
  %v1543 = vrot.slane %v254, 7
  %v1544 = vrot.slane %v1543, 2
  %v1545 = vrot.slane %v256, 7
  %v1546 = vrot.slane %v1545, 2
  %v1547 = vrot.slane %v264, 7
  %v1548 = vrot.slane %v1547, 2
  %v1549 = vrot.slane %v272, 7
  %v1550 = vrot.slane %v1549, 2
  %v1551 = vrot.slane %v271, 7
  %v1552 = vrot.slane %v1551, 2
  %v1553 = vrot.slane %v273, 7
  %v1554 = vrot.slane %v1553, 2
  %v1555 = vrot.slane %v281, 7
  %v1556 = vrot.slane %v1555, 2
  %v1557 = vrot.slane %v289, 7
  %v1558 = vrot.slane %v1557, 2
  %v1559 = vrot.slane %v288, 7
  %v1560 = vrot.slane %v1559, 2
  %v1561 = vrot.slane %v290, 7
  %v1562 = vrot.slane %v1561, 2
  %v1563 = vrot.slane %v298, 7
  %v1564 = vrot.slane %v1563, 2
  %v1565 = vrot.slane %v306, 7
  %v1566 = vrot.slane %v1565, 2
  %v1567 = vrot.slane %v305, 7
  %v1568 = vrot.slane %v1567, 2
  %v1569 = vrot.slane %v307, 7
  %v1570 = vrot.slane %v1569, 2
  %v1571 = vrot.slane %v315, 7
  %v1572 = vrot.slane %v1571, 2
  %v1573 = vrot.slane %v323, 7
  %v1574 = vrot.slane %v1573, 2
  %v1575 = vrot.slane %v322, 7
  %v1576 = vrot.slane %v1575, 2
  %v1577 = vrot.slane %v324, 7
  %v1578 = vrot.slane %v1577, 2
  %v1579 = vrot.slane %v332, 7
  %v1580 = vrot.slane %v1579, 2
  %v1581 = vrot.slane %v340, 7
  %v1582 = vrot.slane %v1581, 2
  %v1583 = vrot.slane %v339, 7
  %v1584 = vrot.slane %v1583, 2
  %v1585 = vrot.slane %v341, 7
  %v1586 = vrot.slane %v1585, 2
  %v1587 = vrot.slane %v349, 7
  %v1588 = vrot.slane %v1587, 2
  %v1589 = vrot.slane %v357, 7
  %v1590 = vrot.slane %v1589, 2
  %v1591 = vrot.slane %v356, 7
  %v1592 = vrot.slane %v1591, 2
  %v1593 = vrot.slane %v358, 7
  %v1594 = vrot.slane %v1593, 2
  %v1595 = vrot.slane %v366, 7
  %v1596 = vrot.slane %v1595, 2
  %v1597 = vrot.slane %v374, 7
  %v1598 = vrot.slane %v1597, 2
  %v1599 = vrot.slane %v373, 7
  %v1600 = vrot.slane %v1599, 2
  %v1601 = vrot.slane %v375, 7
  %v1602 = vrot.slane %v1601, 2
  %v1603 = vrot.slane %v383, 7
  %v1604 = vrot.slane %v1603, 2
  %v1605 = vrot.slane %v391, 7
  %v1606 = vrot.slane %v1605, 2
  %v1607 = vrot.slane %v390, 7
  %v1608 = vrot.slane %v1607, 2
  %v1609 = vrot.slane %v392, 7
  %v1610 = vrot.slane %v1609, 2
  %v1611 = vrot.slane %v400, 7
  %v1612 = vrot.slane %v1611, 2
  %v1613 = vrot.slane %v408, 7
  %v1614 = vrot.slane %v1613, 2
  %v1615 = vrot.slane %v407, 7
  %v1616 = vrot.slane %v1615, 2
  %v1617 = vrot.slane %v409, 7
  %v1618 = vrot.slane %v1617, 2
  %v1619 = vrot.slane %v417, 7
  %v1620 = vrot.slane %v1619, 2
  %v1621 = vrot.slane %v425, 7
  %v1622 = vrot.slane %v1621, 2
  %v1623 = vrot.slane %v424, 7
  %v1624 = vrot.slane %v1623, 2
  %v1625 = vrot.slane %v426, 7
  %v1626 = vrot.slane %v1625, 2
  %v1627 = vrot.slane %v434, 7
  %v1628 = vrot.slane %v1627, 2
  %v1629 = vrot.slane %v442, 7
  %v1630 = vrot.slane %v1629, 2
  %v1631 = vrot.slane %v441, 7
  %v1632 = vrot.slane %v1631, 2
  %v1633 = vrot.slane %v443, 7
  %v1634 = vrot.slane %v1633, 2
  %v1635 = vrot.slane %v451, 7
  %v1636 = vrot.slane %v1635, 2
  %v1637 = vrot.slane %v459, 7
  %v1638 = vrot.slane %v1637, 2
  %v1639 = vrot.slane %v458, 7
  %v1640 = vrot.slane %v1639, 2
  %v1641 = vrot.slane %v460, 7
  %v1642 = vrot.slane %v1641, 2
  %v1643 = vrot.slane %v468, 7
  %v1644 = vrot.slane %v1643, 2
  %v1645 = vrot.slane %v476, 7
  %v1646 = vrot.slane %v1645, 2
  %v1647 = vrot.slane %v475, 7
  %v1648 = vrot.slane %v1647, 2
  %v1649 = vrot.slane %v477, 7
  %v1650 = vrot.slane %v1649, 2
  %v1651 = vrot.slane %v485, 7
  %v1652 = vrot.slane %v1651, 2
  %v1653 = vrot.slane %v493, 7
  %v1654 = vrot.slane %v1653, 2
  %v1655 = vrot.slane %v492, 7
  %v1656 = vrot.slane %v1655, 2
  %v1657 = vrot.slane %v494, 7
  %v1658 = vrot.slane %v1657, 2
  %v1659 = vrot.slane %v502, 7
  %v1660 = vrot.slane %v1659, 2
  %v1661 = vrot.slane %v510, 7
  %v1662 = vrot.slane %v1661, 2
  %v1663 = vrot.slane %v509, 7
  %v1664 = vrot.slane %v1663, 2
  %v1665 = vrot.slane %v511, 7
  %v1666 = vrot.slane %v1665, 2
  %v1667 = vrot.slane %v519, 7
  %v1668 = vrot.slane %v1667, 2
  %v1669 = vrot.slane %v527, 7
  %v1670 = vrot.slane %v1669, 2
  %v1671 = vrot.slane %v526, 7
  %v1672 = vrot.slane %v1671, 2
  %v1673 = vrot.slane %v528, 7
  %v1674 = vrot.slane %v1673, 2
  %v1675 = vrot.slane %v536, 7
  %v1676 = vrot.slane %v1675, 2
  %v1677 = vrot.slane %v544, 7
  %v1678 = vrot.slane %v1677, 2
  %v1679 = vrot.slane %v543, 7
  %v1680 = vrot.slane %v1679, 2
  %v1681 = vrot.slane %v545, 7
  %v1682 = vrot.slane %v1681, 2
  %v1683 = vrot.slane %v553, 7
  %v1684 = vrot.slane %v1683, 2
  %v1685 = vrot.slane %v561, 7
  %v1686 = vrot.slane %v1685, 2
  %v1687 = vrot.slane %v560, 7
  %v1688 = vrot.slane %v1687, 2
  %v1689 = vrot.slane %v562, 7
  %v1690 = vrot.slane %v1689, 2
  %v1691 = vrot.slane %v570, 7
  %v1692 = vrot.slane %v1691, 2
  %v1693 = vrot.slane %v578, 7
  %v1694 = vrot.slane %v1693, 2
  %v1695 = vrot.slane %v577, 7
  %v1696 = vrot.slane %v1695, 2
  %v1697 = vrot.slane %v579, 7
  %v1698 = vrot.slane %v1697, 2
  %v1699 = vrot.slane %v587, 7
  %v1700 = vrot.slane %v1699, 2
  %v1701 = vrot.slane %v595, 7
  %v1702 = vrot.slane %v1701, 2
  %v1703 = vrot.slane %v594, 7
  %v1704 = vrot.slane %v1703, 2
  %v1705 = vrot.slane %v596, 7
  %v1706 = vrot.slane %v1705, 2
  %v1707 = vrot.slane %v604, 7
  %v1708 = vrot.slane %v1707, 2
  %v1709 = vrot.slane %v612, 7
  %v1710 = vrot.slane %v1709, 2
  %v1711 = vrot.slane %v611, 7
  %v1712 = vrot.slane %v1711, 2
  %v1713 = vrot.slane %v613, 7
  %v1714 = vrot.slane %v1713, 2
  %v1715 = vrot.slane %v621, 7
  %v1716 = vrot.slane %v1715, 2
  %v1717 = vrot.slane %v629, 7
  %v1718 = vrot.slane %v1717, 2
  %v1719 = vrot.slane %v628, 7
  %v1720 = vrot.slane %v1719, 2
  %v1721 = vrot.slane %v630, 7
  %v1722 = vrot.slane %v1721, 2
  %v1723 = vrot.slane %v638, 7
  %v1724 = vrot.slane %v1723, 2
  %v1725 = vrot.slane %v646, 7
  %v1726 = vrot.slane %v1725, 2
  %v1727 = vrot.slane %v645, 7
  %v1728 = vrot.slane %v1727, 2
  %v1729 = vrot.slane %v647, 7
  %v1730 = vrot.slane %v1729, 2
  %v1731 = vrot.slane %v655, 7
  %v1732 = vrot.slane %v1731, 2
  %v1733 = vrot.slane %v663, 7
  %v1734 = vrot.slane %v1733, 2
  %v1735 = vrot.slane %v662, 7
  %v1736 = vrot.slane %v1735, 2
  %v1737 = vrot.slane %v664, 7
  %v1738 = vrot.slane %v1737, 2
  %v1739 = vrot.slane %v672, 7
  %v1740 = vrot.slane %v1739, 2
  %v1741 = vrot.slane %v680, 7
  %v1742 = vrot.slane %v1741, 2
  %v1743 = vrot.slane %v679, 7
  %v1744 = vrot.slane %v1743, 2
  %v1745 = vrot.slane %v681, 7
  %v1746 = vrot.slane %v1745, 2
  %v1747 = vrot.slane %v689, 7
  %v1748 = vrot.slane %v1747, 2
  %v1749 = vrot.slane %v697, 7
  %v1750 = vrot.slane %v1749, 2
  %v1751 = vrot.slane %v696, 7
  %v1752 = vrot.slane %v1751, 2
  %v1753 = vrot.slane %v698, 7
  %v1754 = vrot.slane %v1753, 2
  %v1755 = vrot.slane %v706, 7
  %v1756 = vrot.slane %v1755, 2
  %v1757 = vrot.slane %v714, 7
  %v1758 = vrot.slane %v1757, 2
  %v1759 = vrot.slane %v713, 7
  %v1760 = vrot.slane %v1759, 2
  %v1761 = vrot.slane %v715, 7
  %v1762 = vrot.slane %v1761, 2
  %v1763 = vrot.slane %v723, 7
  %v1764 = vrot.slane %v1763, 2
  %v1765 = vrot.slane %v731, 7
  %v1766 = vrot.slane %v1765, 2
  %v1767 = vrot.slane %v730, 7
  %v1768 = vrot.slane %v1767, 2
  %v1769 = vrot.slane %v732, 7
  %v1770 = vrot.slane %v1769, 2
  %v1771 = vrot.slane %v740, 7
  %v1772 = vrot.slane %v1771, 2
  %v1773 = vrot.slane %v748, 7
  %v1774 = vrot.slane %v1773, 2
  %v1775 = vrot.slane %v747, 7
  %v1776 = vrot.slane %v1775, 2
  %v1777 = vrot.slane %v749, 7
  %v1778 = vrot.slane %v1777, 2
  %v1779 = vrot.slane %v757, 7
  %v1780 = vrot.slane %v1779, 2
  %v1781 = vrot.slane %v765, 7
  %v1782 = vrot.slane %v1781, 2
  %v1783 = vrot.slane %v764, 7
  %v1784 = vrot.slane %v1783, 2
  %v1785 = vrot.slane %v766, 7
  %v1786 = vrot.slane %v1785, 2
  %v1787 = vrot.slane %v774, 7
  %v1788 = vrot.slane %v1787, 2
  %v1789 = vrot.slane %v782, 7
  %v1790 = vrot.slane %v1789, 2
  %v1791 = vrot.slane %v781, 7
  %v1792 = vrot.slane %v1791, 2
  %v1793 = vrot.slane %v783, 7
  %v1794 = vrot.slane %v1793, 2
  %v1795 = vrot.slane %v791, 7
  %v1796 = vrot.slane %v1795, 2
  %v1797 = vrot.slane %v799, 7
  %v1798 = vrot.slane %v1797, 2
  %v1799 = vrot.slane %v798, 7
  %v1800 = vrot.slane %v1799, 2
  %v1801 = vrot.slane %v800, 7
  %v1802 = vrot.slane %v1801, 2
  %v1803 = vrot.slane %v808, 7
  %v1804 = vrot.slane %v1803, 2
  %v1805 = vrot.slane %v816, 7
  %v1806 = vrot.slane %v1805, 2
  %v1807 = vrot.slane %v815, 7
  %v1808 = vrot.slane %v1807, 2
  %v1809 = vrot.slane %v817, 7
  %v1810 = vrot.slane %v1809, 2
  %v1811 = vrot.slane %v825, 7
  %v1812 = vrot.slane %v1811, 2
  %v1813 = vrot.slane %v833, 7
  %v1814 = vrot.slane %v1813, 2
  %v1815 = vrot.slane %v832, 7
  %v1816 = vrot.slane %v1815, 2
  %v1817 = vrot.slane %v834, 7
  %v1818 = vrot.slane %v1817, 2
  %v1819 = vrot.slane %v842, 7
  %v1820 = vrot.slane %v1819, 2
  %v1821 = vrot.slane %v850, 7
  %v1822 = vrot.slane %v1821, 2
  %v1823 = vrot.slane %v849, 7
  %v1824 = vrot.slane %v1823, 2
  %v1825 = vrot.slane %v851, 7
  %v1826 = vrot.slane %v1825, 2
  %v1827 = vrot.slane %v859, 7
  %v1828 = vrot.slane %v1827, 2
  %v1829 = vrot.slane %v867, 7
  %v1830 = vrot.slane %v1829, 2
  %v1831 = vrot.slane %v866, 7
  %v1832 = vrot.slane %v1831, 2
  %v1833 = vrot.slane %v868, 7
  %v1834 = vrot.slane %v1833, 2
  %v1835 = vrot.slane %v876, 7
  %v1836 = vrot.slane %v1835, 2
  %v1837 = vrot.slane %v884, 7
  %v1838 = vrot.slane %v1837, 2
  %v1839 = vrot.slane %v883, 7
  %v1840 = vrot.slane %v1839, 2
  %v1841 = vrot.slane %v885, 7
  %v1842 = vrot.slane %v1841, 2
  %v1843 = vrot.slane %v893, 7
  %v1844 = vrot.slane %v1843, 2
  %v1845 = vrot.slane %v901, 7
  %v1846 = vrot.slane %v1845, 2
  %v1847 = vrot.slane %v900, 7
  %v1848 = vrot.slane %v1847, 2
  %v1849 = vrot.slane %v902, 7
  %v1850 = vrot.slane %v1849, 2
  %v1851 = vrot.slane %v910, 7
  %v1852 = vrot.slane %v1851, 2
  %v1853 = vrot.slane %v918, 7
  %v1854 = vrot.slane %v1853, 2
  %v1855 = vrot.slane %v917, 7
  %v1856 = vrot.slane %v1855, 2
  %v1857 = vrot.slane %v919, 7
  %v1858 = vrot.slane %v1857, 2
  %v1859 = vrot.slane %v927, 7
  %v1860 = vrot.slane %v1859, 2
  %v1861 = vrot.slane %v935, 7
  %v1862 = vrot.slane %v1861, 2
  %v1863 = vrot.slane %v934, 7
  %v1864 = vrot.slane %v1863, 2
  %v1865 = vrot.slane %v936, 7
  %v1866 = vrot.slane %v1865, 2
  %v1867 = vrot.slane %v944, 7
  %v1868 = vrot.slane %v1867, 2
  %v1869 = vrot.slane %v952, 7
  %v1870 = vrot.slane %v1869, 2
  %v1871 = vrot.slane %v951, 7
  %v1872 = vrot.slane %v1871, 2
  %v1873 = vrot.slane %v953, 7
  %v1874 = vrot.slane %v1873, 2
  %v1875 = vrot.slane %v961, 7
  %v1876 = vrot.slane %v1875, 2
  %v1877 = vrot.slane %v969, 7
  %v1878 = vrot.slane %v1877, 2
  %v1879 = vrot.slane %v968, 7
  %v1880 = vrot.slane %v1879, 2
  %v1881 = vrot.slane %v970, 7
  %v1882 = vrot.slane %v1881, 2
  %v1883 = vrot.slane %v978, 7
  %v1884 = vrot.slane %v1883, 2
  %v1885 = vrot.slane %v986, 7
  %v1886 = vrot.slane %v1885, 2
  %v1887 = vrot.slane %v985, 7
  %v1888 = vrot.slane %v1887, 2
  %v1889 = vrot.slane %v987, 7
  %v1890 = vrot.slane %v1889, 2
  %v1891 = vrot.slane %v995, 7
  %v1892 = vrot.slane %v1891, 2
  %v1893 = vrot.slane %v1003, 7
  %v1894 = vrot.slane %v1893, 2
  %v1895 = vrot.slane %v1002, 7
  %v1896 = vrot.slane %v1895, 2
  %v1897 = vrot.slane %v1004, 7
  %v1898 = vrot.slane %v1897, 2
  %v1899 = vrot.slane %v1012, 7
  %v1900 = vrot.slane %v1899, 2
  %v1901 = vrot.slane %v1020, 7
  %v1902 = vrot.slane %v1901, 2
  %v1903 = vrot.slane %v1019, 7
  %v1904 = vrot.slane %v1903, 2
  %v1905 = vrot.slane %v1021, 7
  %v1906 = vrot.slane %v1905, 2
  %v1907 = vrot.slane %v1029, 7
  %v1908 = vrot.slane %v1907, 2
  %v1909 = vrot.slane %v1037, 7
  %v1910 = vrot.slane %v1909, 2
  %v1911 = vrot.slane %v1036, 7
  %v1912 = vrot.slane %v1911, 2
  %v1913 = vrot.slane %v1038, 7
  %v1914 = vrot.slane %v1913, 2
  %v1915 = vrot.slane %v1046, 7
  %v1916 = vrot.slane %v1915, 2
  %v1917 = vrot.slane %v1054, 7
  %v1918 = vrot.slane %v1917, 2
  %v1919 = vrot.slane %v1053, 7
  %v1920 = vrot.slane %v1919, 2
  %v1921 = vrot.slane %v1055, 7
  %v1922 = vrot.slane %v1921, 2
  %v1923 = vrot.slane %v1063, 7
  %v1924 = vrot.slane %v1923, 2
  %v1925 = vrot.slane %v1071, 7
  %v1926 = vrot.slane %v1925, 2
  %v1927 = vrot.slane %v1070, 7
  %v1928 = vrot.slane %v1927, 2
  %v1929 = vrot.slane %v1072, 7
  %v1930 = vrot.slane %v1929, 2
  %v1931 = vrot.slane %v1080, 7
  %v1932 = vrot.slane %v1931, 2
  %v1933 = vrot.slane %v1088, 7
  %v1934 = vrot.slane %v1933, 2
  %v1935 = vrot.slane %v1087, 7
  %v1936 = vrot.slane %v1935, 2
  %v1937 = vrot.slane %v1089, 7
  %v1938 = vrot.slane %v1937, 2
  %v1939 = vrot.slane %v1097, 7
  %v1940 = vrot.slane %v1939, 2
  %v1941 = vrot.slane %v1105, 7
  %v1942 = vrot.slane %v1941, 2
  %v1943 = vrot.slane %v1104, 7
  %v1944 = vrot.slane %v1943, 2
  %v1945 = vrot.slane %v1106, 7
  %v1946 = vrot.slane %v1945, 2
  %v1947 = vrot.slane %v1114, 7
  %v1948 = vrot.slane %v1947, 2
  %v1949 = vrot.slane %v1122, 7
  %v1950 = vrot.slane %v1949, 2
  %v1951 = vrot.slane %v1121, 7
  %v1952 = vrot.slane %v1951, 2
  %v1953 = vrot.slane %v1123, 7
  %v1954 = vrot.slane %v1953, 2
  %v1955 = vrot.slane %v1131, 7
  %v1956 = vrot.slane %v1955, 2
  %v1957 = vrot.slane %v1139, 7
  %v1958 = vrot.slane %v1957, 2
  %v1959 = vrot.slane %v1138, 7
  %v1960 = vrot.slane %v1959, 2
  %v1961 = vrot.slane %v1140, 7
  %v1962 = vrot.slane %v1961, 2
  %v1963 = vrot.slane %v1148, 7
  %v1964 = vrot.slane %v1963, 2
  %v1965 = vrot.slane %v1156, 7
  %v1966 = vrot.slane %v1965, 2
  %v1967 = vrot.slane %v1155, 7
  %v1968 = vrot.slane %v1967, 2
  %v1969 = vrot.slane %v1157, 7
  %v1970 = vrot.slane %v1969, 2
  %v1971 = vrot.slane %v1165, 7
  %v1972 = vrot.slane %v1971, 2
  %v1973 = vrot.slane %v1173, 7
  %v1974 = vrot.slane %v1973, 2
  %v1975 = vrot.slane %v1172, 7
  %v1976 = vrot.slane %v1975, 2
  %v1977 = vrot.slane %v1174, 7
  %v1978 = vrot.slane %v1977, 2
  %v1979 = vrot.slane %v1182, 7
  %v1980 = vrot.slane %v1979, 2
  %v1981 = vrot.slane %v1190, 7
  %v1982 = vrot.slane %v1981, 2
  %v1983 = vrot.slane %v1189, 7
  %v1984 = vrot.slane %v1983, 2
  %v1985 = vrot.slane %v1191, 7
  %v1986 = vrot.slane %v1985, 2
  %v1987 = vrot.slane %v1199, 7
  %v1988 = vrot.slane %v1987, 2
  %v1989 = vrot.slane %v1207, 7
  %v1990 = vrot.slane %v1989, 2
  %v1991 = vrot.slane %v1206, 7
  %v1992 = vrot.slane %v1991, 2
  %v1993 = vrot.slane %v1208, 7
  %v1994 = vrot.slane %v1993, 2
  %v1995 = vrot.slane %v1216, 7
  %v1996 = vrot.slane %v1995, 2
  %v1997 = vrot.slane %v1224, 7
  %v1998 = vrot.slane %v1997, 2
  %v1999 = vrot.slane %v1223, 7
  %v2000 = vrot.slane %v1999, 2
  %v2001 = vrot.slane %v1225, 7
  %v2002 = vrot.slane %v2001, 2
  %v2003 = vrot.slane %v1233, 7
  %v2004 = vrot.slane %v2003, 2
  %v2005 = vrot.slane %v1241, 7
  %v2006 = vrot.slane %v2005, 2
  %v2007 = vrot.slane %v1240, 7
  %v2008 = vrot.slane %v2007, 2
  %v2009 = vrot.slane %v1242, 7
  %v2010 = vrot.slane %v2009, 2
  %v2267 = vadd.f32 %v162, %v1500
  %v2268 = vadd.f32 %v170, %v1502
  %v2269 = vadd.f32 %v169, %v1504
  %v2270 = vadd.f32 %v171, %v1506
  %v2271 = vadd.f32 %v179, %v1508
  %v2272 = vadd.f32 %v187, %v1510
  %v2273 = vadd.f32 %v186, %v1512
  %v2274 = vadd.f32 %v188, %v1514
  %v2275 = vadd.f32 %v196, %v1516
  %v2276 = vadd.f32 %v204, %v1518
  %v2277 = vadd.f32 %v203, %v1520
  %v2278 = vadd.f32 %v205, %v1522
  %v2279 = vadd.f32 %v213, %v1524
  %v2280 = vadd.f32 %v221, %v1526
  %v2281 = vadd.f32 %v220, %v1528
  %v2282 = vadd.f32 %v222, %v1530
  %v2283 = vadd.f32 %v230, %v1532
  %v2284 = vadd.f32 %v238, %v1534
  %v2285 = vadd.f32 %v237, %v1536
  %v2286 = vadd.f32 %v239, %v1538
  %v2287 = vadd.f32 %v247, %v1540
  %v2288 = vadd.f32 %v255, %v1542
  %v2289 = vadd.f32 %v254, %v1544
  %v2290 = vadd.f32 %v256, %v1546
  %v2291 = vadd.f32 %v264, %v1548
  %v2292 = vadd.f32 %v272, %v1550
  %v2293 = vadd.f32 %v271, %v1552
  %v2294 = vadd.f32 %v273, %v1554
  %v2295 = vadd.f32 %v281, %v1556
  %v2296 = vadd.f32 %v289, %v1558
  %v2297 = vadd.f32 %v288, %v1560
  %v2298 = vadd.f32 %v290, %v1562
  %v2299 = vadd.f32 %v298, %v1564
  %v2300 = vadd.f32 %v306, %v1566
  %v2301 = vadd.f32 %v305, %v1568
  %v2302 = vadd.f32 %v307, %v1570
  %v2303 = vadd.f32 %v315, %v1572
  %v2304 = vadd.f32 %v323, %v1574
  %v2305 = vadd.f32 %v322, %v1576
  %v2306 = vadd.f32 %v324, %v1578
  %v2307 = vadd.f32 %v332, %v1580
  %v2308 = vadd.f32 %v340, %v1582
  %v2309 = vadd.f32 %v339, %v1584
  %v2310 = vadd.f32 %v341, %v1586
  %v2311 = vadd.f32 %v349, %v1588
  %v2312 = vadd.f32 %v357, %v1590
  %v2313 = vadd.f32 %v356, %v1592
  %v2314 = vadd.f32 %v358, %v1594
  %v2315 = vadd.f32 %v366, %v1596
  %v2316 = vadd.f32 %v374, %v1598
  %v2317 = vadd.f32 %v373, %v1600
  %v2318 = vadd.f32 %v375, %v1602
  %v2319 = vadd.f32 %v383, %v1604
  %v2320 = vadd.f32 %v391, %v1606
  %v2321 = vadd.f32 %v390, %v1608
  %v2322 = vadd.f32 %v392, %v1610
  %v2323 = vadd.f32 %v400, %v1612
  %v2324 = vadd.f32 %v408, %v1614
  %v2325 = vadd.f32 %v407, %v1616
  %v2326 = vadd.f32 %v409, %v1618
  %v2327 = vadd.f32 %v417, %v1620
  %v2328 = vadd.f32 %v425, %v1622
  %v2329 = vadd.f32 %v424, %v1624
  %v2330 = vadd.f32 %v426, %v1626
  %v2331 = vadd.f32 %v434, %v1628
  %v2332 = vadd.f32 %v442, %v1630
  %v2333 = vadd.f32 %v441, %v1632
  %v2334 = vadd.f32 %v443, %v1634
  %v2335 = vadd.f32 %v451, %v1636
  %v2336 = vadd.f32 %v459, %v1638
  %v2337 = vadd.f32 %v458, %v1640
  %v2338 = vadd.f32 %v460, %v1642
  %v2339 = vadd.f32 %v468, %v1644
  %v2340 = vadd.f32 %v476, %v1646
  %v2341 = vadd.f32 %v475, %v1648
  %v2342 = vadd.f32 %v477, %v1650
  %v2343 = vadd.f32 %v485, %v1652
  %v2344 = vadd.f32 %v493, %v1654
  %v2345 = vadd.f32 %v492, %v1656
  %v2346 = vadd.f32 %v494, %v1658
  %v2347 = vadd.f32 %v502, %v1660
  %v2348 = vadd.f32 %v510, %v1662
  %v2349 = vadd.f32 %v509, %v1664
  %v2350 = vadd.f32 %v511, %v1666
  %v2351 = vadd.f32 %v519, %v1668
  %v2352 = vadd.f32 %v527, %v1670
  %v2353 = vadd.f32 %v526, %v1672
  %v2354 = vadd.f32 %v528, %v1674
  %v2355 = vadd.f32 %v536, %v1676
  %v2356 = vadd.f32 %v544, %v1678
  %v2357 = vadd.f32 %v543, %v1680
  %v2358 = vadd.f32 %v545, %v1682
  %v2359 = vadd.f32 %v553, %v1684
  %v2360 = vadd.f32 %v561, %v1686
  %v2361 = vadd.f32 %v560, %v1688
  %v2362 = vadd.f32 %v562, %v1690
  %v2363 = vadd.f32 %v570, %v1692
  %v2364 = vadd.f32 %v578, %v1694
  %v2365 = vadd.f32 %v577, %v1696
  %v2366 = vadd.f32 %v579, %v1698
  %v2367 = vadd.f32 %v587, %v1700
  %v2368 = vadd.f32 %v595, %v1702
  %v2369 = vadd.f32 %v594, %v1704
  %v2370 = vadd.f32 %v596, %v1706
  %v2371 = vadd.f32 %v604, %v1708
  %v2372 = vadd.f32 %v612, %v1710
  %v2373 = vadd.f32 %v611, %v1712
  %v2374 = vadd.f32 %v613, %v1714
  %v2375 = vadd.f32 %v621, %v1716
  %v2376 = vadd.f32 %v629, %v1718
  %v2377 = vadd.f32 %v628, %v1720
  %v2378 = vadd.f32 %v630, %v1722
  %v2379 = vadd.f32 %v638, %v1724
  %v2380 = vadd.f32 %v646, %v1726
  %v2381 = vadd.f32 %v645, %v1728
  %v2382 = vadd.f32 %v647, %v1730
  %v2383 = vadd.f32 %v655, %v1732
  %v2384 = vadd.f32 %v663, %v1734
  %v2385 = vadd.f32 %v662, %v1736
  %v2386 = vadd.f32 %v664, %v1738
  %v2387 = vadd.f32 %v672, %v1740
  %v2388 = vadd.f32 %v680, %v1742
  %v2389 = vadd.f32 %v679, %v1744
  %v2390 = vadd.f32 %v681, %v1746
  %v2391 = vadd.f32 %v689, %v1748
  %v2392 = vadd.f32 %v697, %v1750
  %v2393 = vadd.f32 %v696, %v1752
  %v2394 = vadd.f32 %v698, %v1754
  %v2395 = vadd.f32 %v706, %v1756
  %v2396 = vadd.f32 %v714, %v1758
  %v2397 = vadd.f32 %v713, %v1760
  %v2398 = vadd.f32 %v715, %v1762
  %v2399 = vadd.f32 %v723, %v1764
  %v2400 = vadd.f32 %v731, %v1766
  %v2401 = vadd.f32 %v730, %v1768
  %v2402 = vadd.f32 %v732, %v1770
  %v2403 = vadd.f32 %v740, %v1772
  %v2404 = vadd.f32 %v748, %v1774
  %v2405 = vadd.f32 %v747, %v1776
  %v2406 = vadd.f32 %v749, %v1778
  %v2407 = vadd.f32 %v757, %v1780
  %v2408 = vadd.f32 %v765, %v1782
  %v2409 = vadd.f32 %v764, %v1784
  %v2410 = vadd.f32 %v766, %v1786
  %v2411 = vadd.f32 %v774, %v1788
  %v2412 = vadd.f32 %v782, %v1790
  %v2413 = vadd.f32 %v781, %v1792
  %v2414 = vadd.f32 %v783, %v1794
  %v2415 = vadd.f32 %v791, %v1796
  %v2416 = vadd.f32 %v799, %v1798
  %v2417 = vadd.f32 %v798, %v1800
  %v2418 = vadd.f32 %v800, %v1802
  %v2419 = vadd.f32 %v808, %v1804
  %v2420 = vadd.f32 %v816, %v1806
  %v2421 = vadd.f32 %v815, %v1808
  %v2422 = vadd.f32 %v817, %v1810
  %v2423 = vadd.f32 %v825, %v1812
  %v2424 = vadd.f32 %v833, %v1814
  %v2425 = vadd.f32 %v832, %v1816
  %v2426 = vadd.f32 %v834, %v1818
  %v2427 = vadd.f32 %v842, %v1820
  %v2428 = vadd.f32 %v850, %v1822
  %v2429 = vadd.f32 %v849, %v1824
  %v2430 = vadd.f32 %v851, %v1826
  %v2431 = vadd.f32 %v859, %v1828
  %v2432 = vadd.f32 %v867, %v1830
  %v2433 = vadd.f32 %v866, %v1832
  %v2434 = vadd.f32 %v868, %v1834
  %v2435 = vadd.f32 %v876, %v1836
  %v2436 = vadd.f32 %v884, %v1838
  %v2437 = vadd.f32 %v883, %v1840
  %v2438 = vadd.f32 %v885, %v1842
  %v2439 = vadd.f32 %v893, %v1844
  %v2440 = vadd.f32 %v901, %v1846
  %v2441 = vadd.f32 %v900, %v1848
  %v2442 = vadd.f32 %v902, %v1850
  %v2443 = vadd.f32 %v910, %v1852
  %v2444 = vadd.f32 %v918, %v1854
  %v2445 = vadd.f32 %v917, %v1856
  %v2446 = vadd.f32 %v919, %v1858
  %v2447 = vadd.f32 %v927, %v1860
  %v2448 = vadd.f32 %v935, %v1862
  %v2449 = vadd.f32 %v934, %v1864
  %v2450 = vadd.f32 %v936, %v1866
  %v2451 = vadd.f32 %v944, %v1868
  %v2452 = vadd.f32 %v952, %v1870
  %v2453 = vadd.f32 %v951, %v1872
  %v2454 = vadd.f32 %v953, %v1874
  %v2455 = vadd.f32 %v961, %v1876
  %v2456 = vadd.f32 %v969, %v1878
  %v2457 = vadd.f32 %v968, %v1880
  %v2458 = vadd.f32 %v970, %v1882
  %v2459 = vadd.f32 %v978, %v1884
  %v2460 = vadd.f32 %v986, %v1886
  %v2461 = vadd.f32 %v985, %v1888
  %v2462 = vadd.f32 %v987, %v1890
  %v2463 = vadd.f32 %v995, %v1892
  %v2464 = vadd.f32 %v1003, %v1894
  %v2465 = vadd.f32 %v1002, %v1896
  %v2466 = vadd.f32 %v1004, %v1898
  %v2467 = vadd.f32 %v1012, %v1900
  %v2468 = vadd.f32 %v1020, %v1902
  %v2469 = vadd.f32 %v1019, %v1904
  %v2470 = vadd.f32 %v1021, %v1906
  %v2471 = vadd.f32 %v1029, %v1908
  %v2472 = vadd.f32 %v1037, %v1910
  %v2473 = vadd.f32 %v1036, %v1912
  %v2474 = vadd.f32 %v1038, %v1914
  %v2475 = vadd.f32 %v1046, %v1916
  %v2476 = vadd.f32 %v1054, %v1918
  %v2477 = vadd.f32 %v1053, %v1920
  %v2478 = vadd.f32 %v1055, %v1922
  %v2479 = vadd.f32 %v1063, %v1924
  %v2480 = vadd.f32 %v1071, %v1926
  %v2481 = vadd.f32 %v1070, %v1928
  %v2482 = vadd.f32 %v1072, %v1930
  %v2483 = vadd.f32 %v1080, %v1932
  %v2484 = vadd.f32 %v1088, %v1934
  %v2485 = vadd.f32 %v1087, %v1936
  %v2486 = vadd.f32 %v1089, %v1938
  %v2487 = vadd.f32 %v1097, %v1940
  %v2488 = vadd.f32 %v1105, %v1942
  %v2489 = vadd.f32 %v1104, %v1944
  %v2490 = vadd.f32 %v1106, %v1946
  %v2491 = vadd.f32 %v1114, %v1948
  %v2492 = vadd.f32 %v1122, %v1950
  %v2493 = vadd.f32 %v1121, %v1952
  %v2494 = vadd.f32 %v1123, %v1954
  %v2495 = vadd.f32 %v1131, %v1956
  %v2496 = vadd.f32 %v1139, %v1958
  %v2497 = vadd.f32 %v1138, %v1960
  %v2498 = vadd.f32 %v1140, %v1962
  %v2499 = vadd.f32 %v1148, %v1964
  %v2500 = vadd.f32 %v1156, %v1966
  %v2501 = vadd.f32 %v1155, %v1968
  %v2502 = vadd.f32 %v1157, %v1970
  %v2503 = vadd.f32 %v1165, %v1972
  %v2504 = vadd.f32 %v1173, %v1974
  %v2505 = vadd.f32 %v1172, %v1976
  %v2506 = vadd.f32 %v1174, %v1978
  %v2507 = vadd.f32 %v1182, %v1980
  %v2508 = vadd.f32 %v1190, %v1982
  %v2509 = vadd.f32 %v1189, %v1984
  %v2510 = vadd.f32 %v1191, %v1986
  %v2511 = vadd.f32 %v1199, %v1988
  %v2512 = vadd.f32 %v1207, %v1990
  %v2513 = vadd.f32 %v1206, %v1992
  %v2514 = vadd.f32 %v1208, %v1994
  %v2515 = vadd.f32 %v1216, %v1996
  %v2516 = vadd.f32 %v1224, %v1998
  %v2517 = vadd.f32 %v1223, %v2000
  %v2518 = vadd.f32 %v1225, %v2002
  %v2519 = vadd.f32 %v1233, %v2004
  %v2520 = vadd.f32 %v1241, %v2006
  %v2521 = vadd.f32 %v1240, %v2008
  %v2522 = vadd.f32 %v1242, %v2010
  %v2523 = vadd.f32 %v2267, %v2275
  %v2524 = vadd.f32 %v2268, %v2276
  %v2525 = vadd.f32 %v2269, %v2277
  %v2526 = vadd.f32 %v2270, %v2278
  %v2527 = vadd.f32 %v2271, %v2279
  %v2528 = vadd.f32 %v2272, %v2280
  %v2529 = vadd.f32 %v2273, %v2281
  %v2530 = vadd.f32 %v2274, %v2282
  %v2531 = vadd.f32 %v2283, %v2291
  %v2532 = vadd.f32 %v2284, %v2292
  %v2533 = vadd.f32 %v2285, %v2293
  %v2534 = vadd.f32 %v2286, %v2294
  %v2535 = vadd.f32 %v2287, %v2295
  %v2536 = vadd.f32 %v2288, %v2296
  %v2537 = vadd.f32 %v2289, %v2297
  %v2538 = vadd.f32 %v2290, %v2298
  %v2539 = vadd.f32 %v2299, %v2307
  %v2540 = vadd.f32 %v2300, %v2308
  %v2541 = vadd.f32 %v2301, %v2309
  %v2542 = vadd.f32 %v2302, %v2310
  %v2543 = vadd.f32 %v2303, %v2311
  %v2544 = vadd.f32 %v2304, %v2312
  %v2545 = vadd.f32 %v2305, %v2313
  %v2546 = vadd.f32 %v2306, %v2314
  %v2547 = vadd.f32 %v2315, %v2323
  %v2548 = vadd.f32 %v2316, %v2324
  %v2549 = vadd.f32 %v2317, %v2325
  %v2550 = vadd.f32 %v2318, %v2326
  %v2551 = vadd.f32 %v2319, %v2327
  %v2552 = vadd.f32 %v2320, %v2328
  %v2553 = vadd.f32 %v2321, %v2329
  %v2554 = vadd.f32 %v2322, %v2330
  %v2555 = vadd.f32 %v2331, %v2339
  %v2556 = vadd.f32 %v2332, %v2340
  %v2557 = vadd.f32 %v2333, %v2341
  %v2558 = vadd.f32 %v2334, %v2342
  %v2559 = vadd.f32 %v2335, %v2343
  %v2560 = vadd.f32 %v2336, %v2344
  %v2561 = vadd.f32 %v2337, %v2345
  %v2562 = vadd.f32 %v2338, %v2346
  %v2563 = vadd.f32 %v2347, %v2355
  %v2564 = vadd.f32 %v2348, %v2356
  %v2565 = vadd.f32 %v2349, %v2357
  %v2566 = vadd.f32 %v2350, %v2358
  %v2567 = vadd.f32 %v2351, %v2359
  %v2568 = vadd.f32 %v2352, %v2360
  %v2569 = vadd.f32 %v2353, %v2361
  %v2570 = vadd.f32 %v2354, %v2362
  %v2571 = vadd.f32 %v2363, %v2371
  %v2572 = vadd.f32 %v2364, %v2372
  %v2573 = vadd.f32 %v2365, %v2373
  %v2574 = vadd.f32 %v2366, %v2374
  %v2575 = vadd.f32 %v2367, %v2375
  %v2576 = vadd.f32 %v2368, %v2376
  %v2577 = vadd.f32 %v2369, %v2377
  %v2578 = vadd.f32 %v2370, %v2378
  %v2579 = vadd.f32 %v2379, %v2387
  %v2580 = vadd.f32 %v2380, %v2388
  %v2581 = vadd.f32 %v2381, %v2389
  %v2582 = vadd.f32 %v2382, %v2390
  %v2583 = vadd.f32 %v2383, %v2391
  %v2584 = vadd.f32 %v2384, %v2392
  %v2585 = vadd.f32 %v2385, %v2393
  %v2586 = vadd.f32 %v2386, %v2394
  %v2587 = vadd.f32 %v2395, %v2403
  %v2588 = vadd.f32 %v2396, %v2404
  %v2589 = vadd.f32 %v2397, %v2405
  %v2590 = vadd.f32 %v2398, %v2406
  %v2591 = vadd.f32 %v2399, %v2407
  %v2592 = vadd.f32 %v2400, %v2408
  %v2593 = vadd.f32 %v2401, %v2409
  %v2594 = vadd.f32 %v2402, %v2410
  %v2595 = vadd.f32 %v2411, %v2419
  %v2596 = vadd.f32 %v2412, %v2420
  %v2597 = vadd.f32 %v2413, %v2421
  %v2598 = vadd.f32 %v2414, %v2422
  %v2599 = vadd.f32 %v2415, %v2423
  %v2600 = vadd.f32 %v2416, %v2424
  %v2601 = vadd.f32 %v2417, %v2425
  %v2602 = vadd.f32 %v2418, %v2426
  %v2603 = vadd.f32 %v2427, %v2435
  %v2604 = vadd.f32 %v2428, %v2436
  %v2605 = vadd.f32 %v2429, %v2437
  %v2606 = vadd.f32 %v2430, %v2438
  %v2607 = vadd.f32 %v2431, %v2439
  %v2608 = vadd.f32 %v2432, %v2440
  %v2609 = vadd.f32 %v2433, %v2441
  %v2610 = vadd.f32 %v2434, %v2442
  %v2611 = vadd.f32 %v2443, %v2451
  %v2612 = vadd.f32 %v2444, %v2452
  %v2613 = vadd.f32 %v2445, %v2453
  %v2614 = vadd.f32 %v2446, %v2454
  %v2615 = vadd.f32 %v2447, %v2455
  %v2616 = vadd.f32 %v2448, %v2456
  %v2617 = vadd.f32 %v2449, %v2457
  %v2618 = vadd.f32 %v2450, %v2458
  %v2619 = vadd.f32 %v2459, %v2467
  %v2620 = vadd.f32 %v2460, %v2468
  %v2621 = vadd.f32 %v2461, %v2469
  %v2622 = vadd.f32 %v2462, %v2470
  %v2623 = vadd.f32 %v2463, %v2471
  %v2624 = vadd.f32 %v2464, %v2472
  %v2625 = vadd.f32 %v2465, %v2473
  %v2626 = vadd.f32 %v2466, %v2474
  %v2627 = vadd.f32 %v2475, %v2483
  %v2628 = vadd.f32 %v2476, %v2484
  %v2629 = vadd.f32 %v2477, %v2485
  %v2630 = vadd.f32 %v2478, %v2486
  %v2631 = vadd.f32 %v2479, %v2487
  %v2632 = vadd.f32 %v2480, %v2488
  %v2633 = vadd.f32 %v2481, %v2489
  %v2634 = vadd.f32 %v2482, %v2490
  %v2635 = vadd.f32 %v2491, %v2499
  %v2636 = vadd.f32 %v2492, %v2500
  %v2637 = vadd.f32 %v2493, %v2501
  %v2638 = vadd.f32 %v2494, %v2502
  %v2639 = vadd.f32 %v2495, %v2503
  %v2640 = vadd.f32 %v2496, %v2504
  %v2641 = vadd.f32 %v2497, %v2505
  %v2642 = vadd.f32 %v2498, %v2506
  %v2643 = vadd.f32 %v2507, %v2515
  %v2644 = vadd.f32 %v2508, %v2516
  %v2645 = vadd.f32 %v2509, %v2517
  %v2646 = vadd.f32 %v2510, %v2518
  %v2647 = vadd.f32 %v2511, %v2519
  %v2648 = vadd.f32 %v2512, %v2520
  %v2649 = vadd.f32 %v2513, %v2521
  %v2650 = vadd.f32 %v2514, %v2522
  %v2651 = vmul.f32 %v2523, 0.25
  %v2652 = vmul.f32 %v2524, 0.25
  %v2653 = vmul.f32 %v2525, 0.25
  %v2654 = vmul.f32 %v2526, 0.25
  %v2655 = vmul.f32 %v2527, 0.25
  %v2656 = vmul.f32 %v2528, 0.25
  %v2657 = vmul.f32 %v2529, 0.25
  %v2658 = vmul.f32 %v2530, 0.25
  %v2659 = vmul.f32 %v2531, 0.25
  %v2660 = vmul.f32 %v2532, 0.25
  %v2661 = vmul.f32 %v2533, 0.25
  %v2662 = vmul.f32 %v2534, 0.25
  %v2663 = vmul.f32 %v2535, 0.25
  %v2664 = vmul.f32 %v2536, 0.25
  %v2665 = vmul.f32 %v2537, 0.25
  %v2666 = vmul.f32 %v2538, 0.25
  %v2667 = vmul.f32 %v2539, 0.25
  %v2668 = vmul.f32 %v2540, 0.25
  %v2669 = vmul.f32 %v2541, 0.25
  %v2670 = vmul.f32 %v2542, 0.25
  %v2671 = vmul.f32 %v2543, 0.25
  %v2672 = vmul.f32 %v2544, 0.25
  %v2673 = vmul.f32 %v2545, 0.25
  %v2674 = vmul.f32 %v2546, 0.25
  %v2675 = vmul.f32 %v2547, 0.25
  %v2676 = vmul.f32 %v2548, 0.25
  %v2677 = vmul.f32 %v2549, 0.25
  %v2678 = vmul.f32 %v2550, 0.25
  %v2679 = vmul.f32 %v2551, 0.25
  %v2680 = vmul.f32 %v2552, 0.25
  %v2681 = vmul.f32 %v2553, 0.25
  %v2682 = vmul.f32 %v2554, 0.25
  %v2683 = vmul.f32 %v2555, 0.25
  %v2684 = vmul.f32 %v2556, 0.25
  %v2685 = vmul.f32 %v2557, 0.25
  %v2686 = vmul.f32 %v2558, 0.25
  %v2687 = vmul.f32 %v2559, 0.25
  %v2688 = vmul.f32 %v2560, 0.25
  %v2689 = vmul.f32 %v2561, 0.25
  %v2690 = vmul.f32 %v2562, 0.25
  %v2691 = vmul.f32 %v2563, 0.25
  %v2692 = vmul.f32 %v2564, 0.25
  %v2693 = vmul.f32 %v2565, 0.25
  %v2694 = vmul.f32 %v2566, 0.25
  %v2695 = vmul.f32 %v2567, 0.25
  %v2696 = vmul.f32 %v2568, 0.25
  %v2697 = vmul.f32 %v2569, 0.25
  %v2698 = vmul.f32 %v2570, 0.25
  %v2699 = vmul.f32 %v2571, 0.25
  %v2700 = vmul.f32 %v2572, 0.25
  %v2701 = vmul.f32 %v2573, 0.25
  %v2702 = vmul.f32 %v2574, 0.25
  %v2703 = vmul.f32 %v2575, 0.25
  %v2704 = vmul.f32 %v2576, 0.25
  %v2705 = vmul.f32 %v2577, 0.25
  %v2706 = vmul.f32 %v2578, 0.25
  %v2707 = vmul.f32 %v2579, 0.25
  %v2708 = vmul.f32 %v2580, 0.25
  %v2709 = vmul.f32 %v2581, 0.25
  %v2710 = vmul.f32 %v2582, 0.25
  %v2711 = vmul.f32 %v2583, 0.25
  %v2712 = vmul.f32 %v2584, 0.25
  %v2713 = vmul.f32 %v2585, 0.25
  %v2714 = vmul.f32 %v2586, 0.25
  %v2715 = vmul.f32 %v2587, 0.25
  %v2716 = vmul.f32 %v2588, 0.25
  %v2717 = vmul.f32 %v2589, 0.25
  %v2718 = vmul.f32 %v2590, 0.25
  %v2719 = vmul.f32 %v2591, 0.25
  %v2720 = vmul.f32 %v2592, 0.25
  %v2721 = vmul.f32 %v2593, 0.25
  %v2722 = vmul.f32 %v2594, 0.25
  %v2723 = vmul.f32 %v2595, 0.25
  %v2724 = vmul.f32 %v2596, 0.25
  %v2725 = vmul.f32 %v2597, 0.25
  %v2726 = vmul.f32 %v2598, 0.25
  %v2727 = vmul.f32 %v2599, 0.25
  %v2728 = vmul.f32 %v2600, 0.25
  %v2729 = vmul.f32 %v2601, 0.25
  %v2730 = vmul.f32 %v2602, 0.25
  %v2731 = vmul.f32 %v2603, 0.25
  %v2732 = vmul.f32 %v2604, 0.25
  %v2733 = vmul.f32 %v2605, 0.25
  %v2734 = vmul.f32 %v2606, 0.25
  %v2735 = vmul.f32 %v2607, 0.25
  %v2736 = vmul.f32 %v2608, 0.25
  %v2737 = vmul.f32 %v2609, 0.25
  %v2738 = vmul.f32 %v2610, 0.25
  %v2739 = vmul.f32 %v2611, 0.25
  %v2740 = vmul.f32 %v2612, 0.25
  %v2741 = vmul.f32 %v2613, 0.25
  %v2742 = vmul.f32 %v2614, 0.25
  %v2743 = vmul.f32 %v2615, 0.25
  %v2744 = vmul.f32 %v2616, 0.25
  %v2745 = vmul.f32 %v2617, 0.25
  %v2746 = vmul.f32 %v2618, 0.25
  %v2747 = vmul.f32 %v2619, 0.25
  %v2748 = vmul.f32 %v2620, 0.25
  %v2749 = vmul.f32 %v2621, 0.25
  %v2750 = vmul.f32 %v2622, 0.25
  %v2751 = vmul.f32 %v2623, 0.25
  %v2752 = vmul.f32 %v2624, 0.25
  %v2753 = vmul.f32 %v2625, 0.25
  %v2754 = vmul.f32 %v2626, 0.25
  %v2755 = vmul.f32 %v2627, 0.25
  %v2756 = vmul.f32 %v2628, 0.25
  %v2757 = vmul.f32 %v2629, 0.25
  %v2758 = vmul.f32 %v2630, 0.25
  %v2759 = vmul.f32 %v2631, 0.25
  %v2760 = vmul.f32 %v2632, 0.25
  %v2761 = vmul.f32 %v2633, 0.25
  %v2762 = vmul.f32 %v2634, 0.25
  %v2763 = vmul.f32 %v2635, 0.25
  %v2764 = vmul.f32 %v2636, 0.25
  %v2765 = vmul.f32 %v2637, 0.25
  %v2766 = vmul.f32 %v2638, 0.25
  %v2767 = vmul.f32 %v2639, 0.25
  %v2768 = vmul.f32 %v2640, 0.25
  %v2769 = vmul.f32 %v2641, 0.25
  %v2770 = vmul.f32 %v2642, 0.25
  %v2771 = vmul.f32 %v2643, 0.25
  %v2772 = vmul.f32 %v2644, 0.25
  %v2773 = vmul.f32 %v2645, 0.25
  %v2774 = vmul.f32 %v2646, 0.25
  %v2775 = vmul.f32 %v2647, 0.25
  %v2776 = vmul.f32 %v2648, 0.25
  %v2777 = vmul.f32 %v2649, 0.25
  %v2778 = vmul.f32 %v2650, 0.25
  %v2779 = vpack.c.bf16 %v2651, %v2651
  %v2780 = vpack.c.bf16 %v2652, %v2652
  %v2781 = vpack.c.bf16 %v2653, %v2653
  %v2782 = vpack.c.bf16 %v2654, %v2654
  %v2783 = vpack.c.bf16 %v2655, %v2655
  %v2784 = vpack.c.bf16 %v2656, %v2656
  %v2785 = vpack.c.bf16 %v2657, %v2657
  %v2786 = vpack.c.bf16 %v2658, %v2658
  %v2787 = vpack.c.bf16 %v2659, %v2659
  %v2788 = vpack.c.bf16 %v2660, %v2660
  %v2789 = vpack.c.bf16 %v2661, %v2661
  %v2790 = vpack.c.bf16 %v2662, %v2662
  %v2791 = vpack.c.bf16 %v2663, %v2663
  %v2792 = vpack.c.bf16 %v2664, %v2664
  %v2793 = vpack.c.bf16 %v2665, %v2665
  %v2794 = vpack.c.bf16 %v2666, %v2666
  %v2795 = vpack.c.bf16 %v2667, %v2667
  %v2796 = vpack.c.bf16 %v2668, %v2668
  %v2797 = vpack.c.bf16 %v2669, %v2669
  %v2798 = vpack.c.bf16 %v2670, %v2670
  %v2799 = vpack.c.bf16 %v2671, %v2671
  %v2800 = vpack.c.bf16 %v2672, %v2672
  %v2801 = vpack.c.bf16 %v2673, %v2673
  %v2802 = vpack.c.bf16 %v2674, %v2674
  %v2803 = vpack.c.bf16 %v2675, %v2675
  %v2804 = vpack.c.bf16 %v2676, %v2676
  %v2805 = vpack.c.bf16 %v2677, %v2677
  %v2806 = vpack.c.bf16 %v2678, %v2678
  %v2807 = vpack.c.bf16 %v2679, %v2679
  %v2808 = vpack.c.bf16 %v2680, %v2680
  %v2809 = vpack.c.bf16 %v2681, %v2681
  %v2810 = vpack.c.bf16 %v2682, %v2682
  %v2811 = vpack.c.bf16 %v2683, %v2683
  %v2812 = vpack.c.bf16 %v2684, %v2684
  %v2813 = vpack.c.bf16 %v2685, %v2685
  %v2814 = vpack.c.bf16 %v2686, %v2686
  %v2815 = vpack.c.bf16 %v2687, %v2687
  %v2816 = vpack.c.bf16 %v2688, %v2688
  %v2817 = vpack.c.bf16 %v2689, %v2689
  %v2818 = vpack.c.bf16 %v2690, %v2690
  %v2819 = vpack.c.bf16 %v2691, %v2691
  %v2820 = vpack.c.bf16 %v2692, %v2692
  %v2821 = vpack.c.bf16 %v2693, %v2693
  %v2822 = vpack.c.bf16 %v2694, %v2694
  %v2823 = vpack.c.bf16 %v2695, %v2695
  %v2824 = vpack.c.bf16 %v2696, %v2696
  %v2825 = vpack.c.bf16 %v2697, %v2697
  %v2826 = vpack.c.bf16 %v2698, %v2698
  %v2827 = vpack.c.bf16 %v2699, %v2699
  %v2828 = vpack.c.bf16 %v2700, %v2700
  %v2829 = vpack.c.bf16 %v2701, %v2701
  %v2830 = vpack.c.bf16 %v2702, %v2702
  %v2831 = vpack.c.bf16 %v2703, %v2703
  %v2832 = vpack.c.bf16 %v2704, %v2704
  %v2833 = vpack.c.bf16 %v2705, %v2705
  %v2834 = vpack.c.bf16 %v2706, %v2706
  %v2835 = vpack.c.bf16 %v2707, %v2707
  %v2836 = vpack.c.bf16 %v2708, %v2708
  %v2837 = vpack.c.bf16 %v2709, %v2709
  %v2838 = vpack.c.bf16 %v2710, %v2710
  %v2839 = vpack.c.bf16 %v2711, %v2711
  %v2840 = vpack.c.bf16 %v2712, %v2712
  %v2841 = vpack.c.bf16 %v2713, %v2713
  %v2842 = vpack.c.bf16 %v2714, %v2714
  %v2843 = vpack.c.bf16 %v2715, %v2715
  %v2844 = vpack.c.bf16 %v2716, %v2716
  %v2845 = vpack.c.bf16 %v2717, %v2717
  %v2846 = vpack.c.bf16 %v2718, %v2718
  %v2847 = vpack.c.bf16 %v2719, %v2719
  %v2848 = vpack.c.bf16 %v2720, %v2720
  %v2849 = vpack.c.bf16 %v2721, %v2721
  %v2850 = vpack.c.bf16 %v2722, %v2722
  %v2851 = vpack.c.bf16 %v2723, %v2723
  %v2852 = vpack.c.bf16 %v2724, %v2724
  %v2853 = vpack.c.bf16 %v2725, %v2725
  %v2854 = vpack.c.bf16 %v2726, %v2726
  %v2855 = vpack.c.bf16 %v2727, %v2727
  %v2856 = vpack.c.bf16 %v2728, %v2728
  %v2857 = vpack.c.bf16 %v2729, %v2729
  %v2858 = vpack.c.bf16 %v2730, %v2730
  %v2859 = vpack.c.bf16 %v2731, %v2731
  %v2860 = vpack.c.bf16 %v2732, %v2732
  %v2861 = vpack.c.bf16 %v2733, %v2733
  %v2862 = vpack.c.bf16 %v2734, %v2734
  %v2863 = vpack.c.bf16 %v2735, %v2735
  %v2864 = vpack.c.bf16 %v2736, %v2736
  %v2865 = vpack.c.bf16 %v2737, %v2737
  %v2866 = vpack.c.bf16 %v2738, %v2738
  %v2867 = vpack.c.bf16 %v2739, %v2739
  %v2868 = vpack.c.bf16 %v2740, %v2740
  %v2869 = vpack.c.bf16 %v2741, %v2741
  %v2870 = vpack.c.bf16 %v2742, %v2742
  %v2871 = vpack.c.bf16 %v2743, %v2743
  %v2872 = vpack.c.bf16 %v2744, %v2744
  %v2873 = vpack.c.bf16 %v2745, %v2745
  %v2874 = vpack.c.bf16 %v2746, %v2746
  %v2875 = vpack.c.bf16 %v2747, %v2747
  %v2876 = vpack.c.bf16 %v2748, %v2748
  %v2877 = vpack.c.bf16 %v2749, %v2749
  %v2878 = vpack.c.bf16 %v2750, %v2750
  %v2879 = vpack.c.bf16 %v2751, %v2751
  %v2880 = vpack.c.bf16 %v2752, %v2752
  %v2881 = vpack.c.bf16 %v2753, %v2753
  %v2882 = vpack.c.bf16 %v2754, %v2754
  %v2883 = vpack.c.bf16 %v2755, %v2755
  %v2884 = vpack.c.bf16 %v2756, %v2756
  %v2885 = vpack.c.bf16 %v2757, %v2757
  %v2886 = vpack.c.bf16 %v2758, %v2758
  %v2887 = vpack.c.bf16 %v2759, %v2759
  %v2888 = vpack.c.bf16 %v2760, %v2760
  %v2889 = vpack.c.bf16 %v2761, %v2761
  %v2890 = vpack.c.bf16 %v2762, %v2762
  %v2891 = vpack.c.bf16 %v2763, %v2763
  %v2892 = vpack.c.bf16 %v2764, %v2764
  %v2893 = vpack.c.bf16 %v2765, %v2765
  %v2894 = vpack.c.bf16 %v2766, %v2766
  %v2895 = vpack.c.bf16 %v2767, %v2767
  %v2896 = vpack.c.bf16 %v2768, %v2768
  %v2897 = vpack.c.bf16 %v2769, %v2769
  %v2898 = vpack.c.bf16 %v2770, %v2770
  %v2899 = vpack.c.bf16 %v2771, %v2771
  %v2900 = vpack.c.bf16 %v2772, %v2772
  %v2901 = vpack.c.bf16 %v2773, %v2773
  %v2902 = vpack.c.bf16 %v2774, %v2774
  %v2903 = vpack.c.bf16 %v2775, %v2775
  %v2904 = vpack.c.bf16 %v2776, %v2776
  %v2905 = vpack.c.bf16 %v2777, %v2777
  %v2906 = vpack.c.bf16 %v2778, %v2778
  %v2907 = vld [vmem:[%s5] sm:$0x3]
  %v2908 = vld [vmem:[%s6] sm:$0x1]
  %v2910 = vlaneseq
  %v2911 = vshrl.u32 %v2910, 7
  %v2912 = vsub.s32 0, %v2911
  %v2913 = vrot.slane %v2908, %v2912
  %v3043 = vunpack.c.l.b16 %v2779
  %v3044 = vunpack.c.l.b16 %v2780
  %v3045 = vunpack.c.l.b16 %v2781
  %v3046 = vunpack.c.l.b16 %v2782
  %v3047 = vunpack.c.l.b16 %v2783
  %v3048 = vunpack.c.l.b16 %v2784
  %v3049 = vunpack.c.l.b16 %v2785
  %v3050 = vunpack.c.l.b16 %v2786
  %v3051 = vunpack.c.l.b16 %v2787
  %v3052 = vunpack.c.l.b16 %v2788
  %v3053 = vunpack.c.l.b16 %v2789
  %v3054 = vunpack.c.l.b16 %v2790
  %v3055 = vunpack.c.l.b16 %v2791
  %v3056 = vunpack.c.l.b16 %v2792
  %v3057 = vunpack.c.l.b16 %v2793
  %v3058 = vunpack.c.l.b16 %v2794
  %v3059 = vunpack.c.l.b16 %v2795
  %v3060 = vunpack.c.l.b16 %v2796
  %v3061 = vunpack.c.l.b16 %v2797
  %v3062 = vunpack.c.l.b16 %v2798
  %v3063 = vunpack.c.l.b16 %v2799
  %v3064 = vunpack.c.l.b16 %v2800
  %v3065 = vunpack.c.l.b16 %v2801
  %v3066 = vunpack.c.l.b16 %v2802
  %v3067 = vunpack.c.l.b16 %v2803
  %v3068 = vunpack.c.l.b16 %v2804
  %v3069 = vunpack.c.l.b16 %v2805
  %v3070 = vunpack.c.l.b16 %v2806
  %v3071 = vunpack.c.l.b16 %v2807
  %v3072 = vunpack.c.l.b16 %v2808
  %v3073 = vunpack.c.l.b16 %v2809
  %v3074 = vunpack.c.l.b16 %v2810
  %v3075 = vunpack.c.l.b16 %v2811
  %v3076 = vunpack.c.l.b16 %v2812
  %v3077 = vunpack.c.l.b16 %v2813
  %v3078 = vunpack.c.l.b16 %v2814
  %v3079 = vunpack.c.l.b16 %v2815
  %v3080 = vunpack.c.l.b16 %v2816
  %v3081 = vunpack.c.l.b16 %v2817
  %v3082 = vunpack.c.l.b16 %v2818
  %v3083 = vunpack.c.l.b16 %v2819
  %v3084 = vunpack.c.l.b16 %v2820
  %v3085 = vunpack.c.l.b16 %v2821
  %v3086 = vunpack.c.l.b16 %v2822
  %v3087 = vunpack.c.l.b16 %v2823
  %v3088 = vunpack.c.l.b16 %v2824
  %v3089 = vunpack.c.l.b16 %v2825
  %v3090 = vunpack.c.l.b16 %v2826
  %v3091 = vunpack.c.l.b16 %v2827
  %v3092 = vunpack.c.l.b16 %v2828
  %v3093 = vunpack.c.l.b16 %v2829
  %v3094 = vunpack.c.l.b16 %v2830
  %v3095 = vunpack.c.l.b16 %v2831
  %v3096 = vunpack.c.l.b16 %v2832
  %v3097 = vunpack.c.l.b16 %v2833
  %v3098 = vunpack.c.l.b16 %v2834
  %v3099 = vunpack.c.l.b16 %v2835
  %v3100 = vunpack.c.l.b16 %v2836
  %v3101 = vunpack.c.l.b16 %v2837
  %v3102 = vunpack.c.l.b16 %v2838
  %v3103 = vunpack.c.l.b16 %v2839
  %v3104 = vunpack.c.l.b16 %v2840
  %v3105 = vunpack.c.l.b16 %v2841
  %v3106 = vunpack.c.l.b16 %v2842
  %v3107 = vunpack.c.l.b16 %v2843
  %v3108 = vunpack.c.l.b16 %v2844
  %v3109 = vunpack.c.l.b16 %v2845
  %v3110 = vunpack.c.l.b16 %v2846
  %v3111 = vunpack.c.l.b16 %v2847
  %v3112 = vunpack.c.l.b16 %v2848
  %v3113 = vunpack.c.l.b16 %v2849
  %v3114 = vunpack.c.l.b16 %v2850
  %v3115 = vunpack.c.l.b16 %v2851
  %v3116 = vunpack.c.l.b16 %v2852
  %v3117 = vunpack.c.l.b16 %v2853
  %v3118 = vunpack.c.l.b16 %v2854
  %v3119 = vunpack.c.l.b16 %v2855
  %v3120 = vunpack.c.l.b16 %v2856
  %v3121 = vunpack.c.l.b16 %v2857
  %v3122 = vunpack.c.l.b16 %v2858
  %v3123 = vunpack.c.l.b16 %v2859
  %v3124 = vunpack.c.l.b16 %v2860
  %v3125 = vunpack.c.l.b16 %v2861
  %v3126 = vunpack.c.l.b16 %v2862
  %v3127 = vunpack.c.l.b16 %v2863
  %v3128 = vunpack.c.l.b16 %v2864
  %v3129 = vunpack.c.l.b16 %v2865
  %v3130 = vunpack.c.l.b16 %v2866
  %v3131 = vunpack.c.l.b16 %v2867
  %v3132 = vunpack.c.l.b16 %v2868
  %v3133 = vunpack.c.l.b16 %v2869
  %v3134 = vunpack.c.l.b16 %v2870
  %v3135 = vunpack.c.l.b16 %v2871
  %v3136 = vunpack.c.l.b16 %v2872
  %v3137 = vunpack.c.l.b16 %v2873
  %v3138 = vunpack.c.l.b16 %v2874
  %v3139 = vunpack.c.l.b16 %v2875
  %v3140 = vunpack.c.l.b16 %v2876
  %v3141 = vunpack.c.l.b16 %v2877
  %v3142 = vunpack.c.l.b16 %v2878
  %v3143 = vunpack.c.l.b16 %v2879
  %v3144 = vunpack.c.l.b16 %v2880
  %v3145 = vunpack.c.l.b16 %v2881
  %v3146 = vunpack.c.l.b16 %v2882
  %v3147 = vunpack.c.l.b16 %v2883
  %v3148 = vunpack.c.l.b16 %v2884
  %v3149 = vunpack.c.l.b16 %v2885
  %v3150 = vunpack.c.l.b16 %v2886
  %v3151 = vunpack.c.l.b16 %v2887
  %v3152 = vunpack.c.l.b16 %v2888
  %v3153 = vunpack.c.l.b16 %v2889
  %v3154 = vunpack.c.l.b16 %v2890
  %v3155 = vunpack.c.l.b16 %v2891
  %v3156 = vunpack.c.l.b16 %v2892
  %v3157 = vunpack.c.l.b16 %v2893
  %v3158 = vunpack.c.l.b16 %v2894
  %v3159 = vunpack.c.l.b16 %v2895
  %v3160 = vunpack.c.l.b16 %v2896
  %v3161 = vunpack.c.l.b16 %v2897
  %v3162 = vunpack.c.l.b16 %v2898
  %v3163 = vunpack.c.l.b16 %v2899
  %v3164 = vunpack.c.l.b16 %v2900
  %v3165 = vunpack.c.l.b16 %v2901
  %v3166 = vunpack.c.l.b16 %v2902
  %v3167 = vunpack.c.l.b16 %v2903
  %v3168 = vunpack.c.l.b16 %v2904
  %v3169 = vunpack.c.l.b16 %v2905
  %v3170 = vunpack.c.l.b16 %v2906
  %v3171 = vrot.slane %v3044, 7
  %vm3172 = vcmask 1041409
  %v3173 = vsel %vm3172, %v3171, %v3043
  %v3174 = vrot.slane %v3045, 6
  %vm3175 = vcmask 1042434
  %v3176 = vsel %vm3175, %v3174, %v3173
  %v3177 = vrot.slane %v3046, 5
  %vm3178 = vcmask 1043459
  %v3179 = vsel %vm3178, %v3177, %v3176
  %v3180 = vrot.slane %v3047, 4
  %vm3181 = vcmask 1044484
  %v3182 = vsel %vm3181, %v3180, %v3179
  %v3183 = vrot.slane %v3048, 3
  %vm3184 = vcmask 1045509
  %v3185 = vsel %vm3184, %v3183, %v3182
  %v3186 = vrot.slane %v3049, 2
  %vm3187 = vcmask 1046534
  %v3188 = vsel %vm3187, %v3186, %v3185
  %v3189 = vrot.slane %v3050, 1
  %vm3190 = vcmask 1047559
  %v3191 = vsel %vm3190, %v3189, %v3188
  %v3192 = vrot.slane %v3052, 7
  %v3193 = vsel %vm3172, %v3192, %v3051
  %v3194 = vrot.slane %v3053, 6
  %v3195 = vsel %vm3175, %v3194, %v3193
  %v3196 = vrot.slane %v3054, 5
  %v3197 = vsel %vm3178, %v3196, %v3195
  %v3198 = vrot.slane %v3055, 4
  %v3199 = vsel %vm3181, %v3198, %v3197
  %v3200 = vrot.slane %v3056, 3
  %v3201 = vsel %vm3184, %v3200, %v3199
  %v3202 = vrot.slane %v3057, 2
  %v3203 = vsel %vm3187, %v3202, %v3201
  %v3204 = vrot.slane %v3058, 1
  %v3205 = vsel %vm3190, %v3204, %v3203
  %v3206 = vrot.slane %v3060, 7
  %v3207 = vsel %vm3172, %v3206, %v3059
  %v3208 = vrot.slane %v3061, 6
  %v3209 = vsel %vm3175, %v3208, %v3207
  %v3210 = vrot.slane %v3062, 5
  %v3211 = vsel %vm3178, %v3210, %v3209
  %v3212 = vrot.slane %v3063, 4
  %v3213 = vsel %vm3181, %v3212, %v3211
  %v3214 = vrot.slane %v3064, 3
  %v3215 = vsel %vm3184, %v3214, %v3213
  %v3216 = vrot.slane %v3065, 2
  %v3217 = vsel %vm3187, %v3216, %v3215
  %v3218 = vrot.slane %v3066, 1
  %v3219 = vsel %vm3190, %v3218, %v3217
  %v3220 = vrot.slane %v3068, 7
  %v3221 = vsel %vm3172, %v3220, %v3067
  %v3222 = vrot.slane %v3069, 6
  %v3223 = vsel %vm3175, %v3222, %v3221
  %v3224 = vrot.slane %v3070, 5
  %v3225 = vsel %vm3178, %v3224, %v3223
  %v3226 = vrot.slane %v3071, 4
  %v3227 = vsel %vm3181, %v3226, %v3225
  %v3228 = vrot.slane %v3072, 3
  %v3229 = vsel %vm3184, %v3228, %v3227
  %v3230 = vrot.slane %v3073, 2
  %v3231 = vsel %vm3187, %v3230, %v3229
  %v3232 = vrot.slane %v3074, 1
  %v3233 = vsel %vm3190, %v3232, %v3231
  %v3234 = vrot.slane %v3076, 7
  %v3235 = vsel %vm3172, %v3234, %v3075
  %v3236 = vrot.slane %v3077, 6
  %v3237 = vsel %vm3175, %v3236, %v3235
  %v3238 = vrot.slane %v3078, 5
  %v3239 = vsel %vm3178, %v3238, %v3237
  %v3240 = vrot.slane %v3079, 4
  %v3241 = vsel %vm3181, %v3240, %v3239
  %v3242 = vrot.slane %v3080, 3
  %v3243 = vsel %vm3184, %v3242, %v3241
  %v3244 = vrot.slane %v3081, 2
  %v3245 = vsel %vm3187, %v3244, %v3243
  %v3246 = vrot.slane %v3082, 1
  %v3247 = vsel %vm3190, %v3246, %v3245
  %v3248 = vrot.slane %v3084, 7
  %v3249 = vsel %vm3172, %v3248, %v3083
  %v3250 = vrot.slane %v3085, 6
  %v3251 = vsel %vm3175, %v3250, %v3249
  %v3252 = vrot.slane %v3086, 5
  %v3253 = vsel %vm3178, %v3252, %v3251
  %v3254 = vrot.slane %v3087, 4
  %v3255 = vsel %vm3181, %v3254, %v3253
  %v3256 = vrot.slane %v3088, 3
  %v3257 = vsel %vm3184, %v3256, %v3255
  %v3258 = vrot.slane %v3089, 2
  %v3259 = vsel %vm3187, %v3258, %v3257
  %v3260 = vrot.slane %v3090, 1
  %v3261 = vsel %vm3190, %v3260, %v3259
  %v3262 = vrot.slane %v3092, 7
  %v3263 = vsel %vm3172, %v3262, %v3091
  %v3264 = vrot.slane %v3093, 6
  %v3265 = vsel %vm3175, %v3264, %v3263
  %v3266 = vrot.slane %v3094, 5
  %v3267 = vsel %vm3178, %v3266, %v3265
  %v3268 = vrot.slane %v3095, 4
  %v3269 = vsel %vm3181, %v3268, %v3267
  %v3270 = vrot.slane %v3096, 3
  %v3271 = vsel %vm3184, %v3270, %v3269
  %v3272 = vrot.slane %v3097, 2
  %v3273 = vsel %vm3187, %v3272, %v3271
  %v3274 = vrot.slane %v3098, 1
  %v3275 = vsel %vm3190, %v3274, %v3273
  %v3276 = vrot.slane %v3100, 7
  %v3277 = vsel %vm3172, %v3276, %v3099
  %v3278 = vrot.slane %v3101, 6
  %v3279 = vsel %vm3175, %v3278, %v3277
  %v3280 = vrot.slane %v3102, 5
  %v3281 = vsel %vm3178, %v3280, %v3279
  %v3282 = vrot.slane %v3103, 4
  %v3283 = vsel %vm3181, %v3282, %v3281
  %v3284 = vrot.slane %v3104, 3
  %v3285 = vsel %vm3184, %v3284, %v3283
  %v3286 = vrot.slane %v3105, 2
  %v3287 = vsel %vm3187, %v3286, %v3285
  %v3288 = vrot.slane %v3106, 1
  %v3289 = vsel %vm3190, %v3288, %v3287
  %v3290 = vrot.slane %v3108, 7
  %v3291 = vsel %vm3172, %v3290, %v3107
  %v3292 = vrot.slane %v3109, 6
  %v3293 = vsel %vm3175, %v3292, %v3291
  %v3294 = vrot.slane %v3110, 5
  %v3295 = vsel %vm3178, %v3294, %v3293
  %v3296 = vrot.slane %v3111, 4
  %v3297 = vsel %vm3181, %v3296, %v3295
  %v3298 = vrot.slane %v3112, 3
  %v3299 = vsel %vm3184, %v3298, %v3297
  %v3300 = vrot.slane %v3113, 2
  %v3301 = vsel %vm3187, %v3300, %v3299
  %v3302 = vrot.slane %v3114, 1
  %v3303 = vsel %vm3190, %v3302, %v3301
  %v3304 = vrot.slane %v3116, 7
  %v3305 = vsel %vm3172, %v3304, %v3115
  %v3306 = vrot.slane %v3117, 6
  %v3307 = vsel %vm3175, %v3306, %v3305
  %v3308 = vrot.slane %v3118, 5
  %v3309 = vsel %vm3178, %v3308, %v3307
  %v3310 = vrot.slane %v3119, 4
  %v3311 = vsel %vm3181, %v3310, %v3309
  %v3312 = vrot.slane %v3120, 3
  %v3313 = vsel %vm3184, %v3312, %v3311
  %v3314 = vrot.slane %v3121, 2
  %v3315 = vsel %vm3187, %v3314, %v3313
  %v3316 = vrot.slane %v3122, 1
  %v3317 = vsel %vm3190, %v3316, %v3315
  %v3318 = vrot.slane %v3124, 7
  %v3319 = vsel %vm3172, %v3318, %v3123
  %v3320 = vrot.slane %v3125, 6
  %v3321 = vsel %vm3175, %v3320, %v3319
  %v3322 = vrot.slane %v3126, 5
  %v3323 = vsel %vm3178, %v3322, %v3321
  %v3324 = vrot.slane %v3127, 4
  %v3325 = vsel %vm3181, %v3324, %v3323
  %v3326 = vrot.slane %v3128, 3
  %v3327 = vsel %vm3184, %v3326, %v3325
  %v3328 = vrot.slane %v3129, 2
  %v3329 = vsel %vm3187, %v3328, %v3327
  %v3330 = vrot.slane %v3130, 1
  %v3331 = vsel %vm3190, %v3330, %v3329
  %v3332 = vrot.slane %v3132, 7
  %v3333 = vsel %vm3172, %v3332, %v3131
  %v3334 = vrot.slane %v3133, 6
  %v3335 = vsel %vm3175, %v3334, %v3333
  %v3336 = vrot.slane %v3134, 5
  %v3337 = vsel %vm3178, %v3336, %v3335
  %v3338 = vrot.slane %v3135, 4
  %v3339 = vsel %vm3181, %v3338, %v3337
  %v3340 = vrot.slane %v3136, 3
  %v3341 = vsel %vm3184, %v3340, %v3339
  %v3342 = vrot.slane %v3137, 2
  %v3343 = vsel %vm3187, %v3342, %v3341
  %v3344 = vrot.slane %v3138, 1
  %v3345 = vsel %vm3190, %v3344, %v3343
  %v3346 = vrot.slane %v3140, 7
  %v3347 = vsel %vm3172, %v3346, %v3139
  %v3348 = vrot.slane %v3141, 6
  %v3349 = vsel %vm3175, %v3348, %v3347
  %v3350 = vrot.slane %v3142, 5
  %v3351 = vsel %vm3178, %v3350, %v3349
  %v3352 = vrot.slane %v3143, 4
  %v3353 = vsel %vm3181, %v3352, %v3351
  %v3354 = vrot.slane %v3144, 3
  %v3355 = vsel %vm3184, %v3354, %v3353
  %v3356 = vrot.slane %v3145, 2
  %v3357 = vsel %vm3187, %v3356, %v3355
  %v3358 = vrot.slane %v3146, 1
  %v3359 = vsel %vm3190, %v3358, %v3357
  %v3360 = vrot.slane %v3148, 7
  %v3361 = vsel %vm3172, %v3360, %v3147
  %v3362 = vrot.slane %v3149, 6
  %v3363 = vsel %vm3175, %v3362, %v3361
  %v3364 = vrot.slane %v3150, 5
  %v3365 = vsel %vm3178, %v3364, %v3363
  %v3366 = vrot.slane %v3151, 4
  %v3367 = vsel %vm3181, %v3366, %v3365
  %v3368 = vrot.slane %v3152, 3
  %v3369 = vsel %vm3184, %v3368, %v3367
  %v3370 = vrot.slane %v3153, 2
  %v3371 = vsel %vm3187, %v3370, %v3369
  %v3372 = vrot.slane %v3154, 1
  %v3373 = vsel %vm3190, %v3372, %v3371
  %v3374 = vrot.slane %v3156, 7
  %v3375 = vsel %vm3172, %v3374, %v3155
  %v3376 = vrot.slane %v3157, 6
  %v3377 = vsel %vm3175, %v3376, %v3375
  %v3378 = vrot.slane %v3158, 5
  %v3379 = vsel %vm3178, %v3378, %v3377
  %v3380 = vrot.slane %v3159, 4
  %v3381 = vsel %vm3181, %v3380, %v3379
  %v3382 = vrot.slane %v3160, 3
  %v3383 = vsel %vm3184, %v3382, %v3381
  %v3384 = vrot.slane %v3161, 2
  %v3385 = vsel %vm3187, %v3384, %v3383
  %v3386 = vrot.slane %v3162, 1
  %v3387 = vsel %vm3190, %v3386, %v3385
  %v3388 = vrot.slane %v3164, 7
  %v3389 = vsel %vm3172, %v3388, %v3163
  %v3390 = vrot.slane %v3165, 6
  %v3391 = vsel %vm3175, %v3390, %v3389
  %v3392 = vrot.slane %v3166, 5
  %v3393 = vsel %vm3178, %v3392, %v3391
  %v3394 = vrot.slane %v3167, 4
  %v3395 = vsel %vm3181, %v3394, %v3393
  %v3396 = vrot.slane %v3168, 3
  %v3397 = vsel %vm3184, %v3396, %v3395
  %v3398 = vrot.slane %v3169, 2
  %v3399 = vsel %vm3187, %v3398, %v3397
  %v3400 = vrot.slane %v3170, 1
  %v3401 = vsel %vm3190, %v3400, %v3399
  %v3402 = vpack.c.b16 %v3205, %v3191
  %v3403 = vpack.c.b16 %v3233, %v3219
  %v3404 = vpack.c.b16 %v3261, %v3247
  %v3405 = vpack.c.b16 %v3289, %v3275
  %v3406 = vpack.c.b16 %v3317, %v3303
  %v3407 = vpack.c.b16 %v3345, %v3331
  %v3408 = vpack.c.b16 %v3373, %v3359
  %v3409 = vpack.c.b16 %v3401, %v3387
  %vm3410 = vcmask 31744
  %v3412 = vsel %vm3410, %v3402, 0
  %v3415 = vsel %vm3410, %v3403, 0
  %v3418 = vsel %vm3410, %v3404, 0
  %v3421 = vsel %vm3410, %v3405, 0
  %v3424 = vsel %vm3410, %v3406, 0
  %v3427 = vsel %vm3410, %v3407, 0
  %v3430 = vsel %vm3410, %v3408, 0
  %v3433 = vsel %vm3410, %v3409, 0
  %vm3435 = vcmask 1041408
  %v3437 = vsel %vm3435, %v2907, 0
  %3439 = vmatprep.subr.bf16.mxu0 0
  %3440 = vmatpush1.bf16.msra.mxu0 0
  %3441 = vmatprep.subr.bf16.mxu0 0
  %3442 = vmatpush1.bf16.msra.mxu0 0
  %3443 = vmatprep.subr.bf16.mxu0 0
  %3444 = vmatpush1.bf16.msra.mxu0 0
  %3445 = vmatprep.subr.bf16.mxu0 0
  %3446 = vmatpush1.bf16.msra.mxu0 0
  %3447 = vmatprep.subr.bf16.mxu0 0
  %3448 = vmatpush1.bf16.msra.mxu0 0
  %3449 = vmatprep.subr.bf16.mxu0 0
  %3450 = vmatpush1.bf16.msra.mxu0 0
  %3451 = vmatprep.subr.bf16.mxu0 0
  %3452 = vmatpush1.bf16.msra.mxu0 0
  %3453 = vmatprep.subr.bf16.mxu0 0
  %3454 = vmatpush1.bf16.msra.mxu0 %v3437
  %3455 = vmatprep.subr.bf16.mxu0 0
  %3456 = vmatpush2.bf16.msra.mxu0 0
  %3457 = vmatprep.subr.bf16.mxu0 0
  %3458 = vmatpush2.bf16.msra.mxu0 0
  %3459 = vmatprep.subr.bf16.mxu0 0
  %3460 = vmatpush2.bf16.msra.mxu0 0
  %3461 = vmatprep.subr.bf16.mxu0 0
  %3462 = vmatpush2.bf16.msra.mxu0 0
  %3463 = vmatprep.subr.bf16.mxu0 0
  %3464 = vmatpush2.bf16.msra.mxu0 0
  %3465 = vmatprep.subr.bf16.mxu0 0
  %3466 = vmatpush2.bf16.msra.mxu0 0
  %3467 = vmatprep.subr.bf16.mxu0 0
  %3468 = vmatpush2.bf16.msra.mxu0 0
  %3469 = vmatprep.subr.bf16.mxu0 0
  %3470 = vmatpush2.bf16.msra.mxu0 0
  %3471 = vmatprep.mubr.bf16.mxu0 0
  %3472 = vmatmul.mubr.bf16.gmra.mxu0 %v3412
  %v3473 = vpop.f32.mrf.mxu0
  %v3474 = vadd.f32 %v2913, %v3473
  %v3475 = vpop.f32.mrf.mxu0
  %v3476 = vpop.f32.mrf.mxu0
  %v3477 = vadd.f32 %v2913, %v3476
  %v3478 = vpop.f32.mrf.mxu0
  %3479 = vmatprep.mubr.bf16.mxu0 0
  %3480 = vmatmul.mubr.bf16.gmra.mxu0 %v3415
  %v3481 = vpop.f32.mrf.mxu0
  %v3482 = vadd.f32 %v2913, %v3481
  %v3483 = vpop.f32.mrf.mxu0
  %v3484 = vpop.f32.mrf.mxu0
  %v3485 = vadd.f32 %v2913, %v3484
  %v3486 = vpop.f32.mrf.mxu0
  %3487 = vmatprep.mubr.bf16.mxu0 0
  %3488 = vmatmul.mubr.bf16.gmra.mxu0 %v3418
  %v3489 = vpop.f32.mrf.mxu0
  %v3490 = vadd.f32 %v2913, %v3489
  %v3491 = vpop.f32.mrf.mxu0
  %v3492 = vpop.f32.mrf.mxu0
  %v3493 = vadd.f32 %v2913, %v3492
  %v3494 = vpop.f32.mrf.mxu0
  %3495 = vmatprep.mubr.bf16.mxu0 0
  %3496 = vmatmul.mubr.bf16.gmra.mxu0 %v3421
  %v3497 = vpop.f32.mrf.mxu0
  %v3498 = vadd.f32 %v2913, %v3497
  %v3499 = vpop.f32.mrf.mxu0
  %v3500 = vpop.f32.mrf.mxu0
  %v3501 = vadd.f32 %v2913, %v3500
  %v3502 = vpop.f32.mrf.mxu0
  %3503 = vmatprep.mubr.bf16.mxu0 0
  %3504 = vmatmul.mubr.bf16.gmra.mxu0 %v3424
  %v3505 = vpop.f32.mrf.mxu0
  %v3506 = vadd.f32 %v2913, %v3505
  %v3507 = vpop.f32.mrf.mxu0
  %v3508 = vpop.f32.mrf.mxu0
  %v3509 = vadd.f32 %v2913, %v3508
  %v3510 = vpop.f32.mrf.mxu0
  %3511 = vmatprep.mubr.bf16.mxu0 0
  %3512 = vmatmul.mubr.bf16.gmra.mxu0 %v3427
  %v3513 = vpop.f32.mrf.mxu0
  %v3514 = vadd.f32 %v2913, %v3513
  %v3515 = vpop.f32.mrf.mxu0
  %v3516 = vpop.f32.mrf.mxu0
  %v3517 = vadd.f32 %v2913, %v3516
  %v3518 = vpop.f32.mrf.mxu0
  %3519 = vmatprep.mubr.bf16.mxu0 0
  %3520 = vmatmul.mubr.bf16.gmra.mxu0 %v3430
  %v3521 = vpop.f32.mrf.mxu0
  %v3522 = vadd.f32 %v2913, %v3521
  %v3523 = vpop.f32.mrf.mxu0
  %v3524 = vpop.f32.mrf.mxu0
  %v3525 = vadd.f32 %v2913, %v3524
  %v3526 = vpop.f32.mrf.mxu0
  %3527 = vmatprep.mubr.bf16.mxu0 0
  %3528 = vmatmul.mubr.bf16.gmra.mxu0 %v3433
  %v3529 = vpop.f32.mrf.mxu0
  %v3530 = vadd.f32 %v2913, %v3529
  %v3531 = vpop.f32.mrf.mxu0
  %v3532 = vpop.f32.mrf.mxu0
  %v3533 = vadd.f32 %v2913, %v3532
  %v3534 = vpop.f32.mrf.mxu0
  %3535 = vdwg.mxu0
  %vm3536 = vcmp.gt.f32.partialorder %v27, 0.0
  %vm3537 = vcmp.gt.f32.partialorder %v28, 0.0
  %vm3538 = vcmp.gt.f32.partialorder %v29, 0.0
  %vm3539 = vcmp.gt.f32.partialorder %v30, 0.0
  %vm3540 = vcmp.gt.f32.partialorder %v31, 0.0
  %vm3541 = vcmp.gt.f32.partialorder %v32, 0.0
  %vm3542 = vcmp.gt.f32.partialorder %v33, 0.0
  %vm3543 = vcmp.gt.f32.partialorder %v34, 0.0
  %vm3544 = vcmp.gt.f32.partialorder %v35, 0.0
  %vm3545 = vcmp.gt.f32.partialorder %v36, 0.0
  %vm3546 = vcmp.gt.f32.partialorder %v37, 0.0
  %vm3547 = vcmp.gt.f32.partialorder %v38, 0.0
  %vm3548 = vcmp.gt.f32.partialorder %v39, 0.0
  %vm3549 = vcmp.gt.f32.partialorder %v40, 0.0
  %vm3550 = vcmp.gt.f32.partialorder %v41, 0.0
  %vm3551 = vcmp.gt.f32.partialorder %v42, 0.0
  %vm3552 = vcmp.gt.f32.partialorder %v43, 0.0
  %vm3553 = vcmp.gt.f32.partialorder %v44, 0.0
  %vm3554 = vcmp.gt.f32.partialorder %v45, 0.0
  %vm3555 = vcmp.gt.f32.partialorder %v46, 0.0
  %vm3556 = vcmp.gt.f32.partialorder %v47, 0.0
  %vm3557 = vcmp.gt.f32.partialorder %v48, 0.0
  %vm3558 = vcmp.gt.f32.partialorder %v49, 0.0
  %vm3559 = vcmp.gt.f32.partialorder %v50, 0.0
  %vm3560 = vcmp.gt.f32.partialorder %v51, 0.0
  %vm3561 = vcmp.gt.f32.partialorder %v52, 0.0
  %vm3562 = vcmp.gt.f32.partialorder %v53, 0.0
  %vm3563 = vcmp.gt.f32.partialorder %v54, 0.0
  %vm3564 = vcmp.gt.f32.partialorder %v55, 0.0
  %vm3565 = vcmp.gt.f32.partialorder %v56, 0.0
  %vm3566 = vcmp.gt.f32.partialorder %v57, 0.0
  %vm3567 = vcmp.gt.f32.partialorder %v58, 0.0
  %vm3568 = vcmp.gt.f32.partialorder %v59, 0.0
  %vm3569 = vcmp.gt.f32.partialorder %v60, 0.0
  %vm3570 = vcmp.gt.f32.partialorder %v61, 0.0
  %vm3571 = vcmp.gt.f32.partialorder %v62, 0.0
  %vm3572 = vcmp.gt.f32.partialorder %v63, 0.0
  %vm3573 = vcmp.gt.f32.partialorder %v64, 0.0
  %vm3574 = vcmp.gt.f32.partialorder %v65, 0.0
  %vm3575 = vcmp.gt.f32.partialorder %v66, 0.0
  %vm3576 = vcmp.gt.f32.partialorder %v67, 0.0
  %vm3577 = vcmp.gt.f32.partialorder %v68, 0.0
  %vm3578 = vcmp.gt.f32.partialorder %v69, 0.0
  %vm3579 = vcmp.gt.f32.partialorder %v70, 0.0
  %vm3580 = vcmp.gt.f32.partialorder %v71, 0.0
  %vm3581 = vcmp.gt.f32.partialorder %v72, 0.0
  %vm3582 = vcmp.gt.f32.partialorder %v73, 0.0
  %vm3583 = vcmp.gt.f32.partialorder %v74, 0.0
  %vm3584 = vcmp.gt.f32.partialorder %v75, 0.0
  %vm3585 = vcmp.gt.f32.partialorder %v76, 0.0
  %vm3586 = vcmp.gt.f32.partialorder %v77, 0.0
  %vm3587 = vcmp.gt.f32.partialorder %v78, 0.0
  %vm3588 = vcmp.gt.f32.partialorder %v79, 0.0
  %vm3589 = vcmp.gt.f32.partialorder %v80, 0.0
  %vm3590 = vcmp.gt.f32.partialorder %v81, 0.0
  %vm3591 = vcmp.gt.f32.partialorder %v82, 0.0
  %vm3592 = vcmp.gt.f32.partialorder %v83, 0.0
  %vm3593 = vcmp.gt.f32.partialorder %v84, 0.0
  %vm3594 = vcmp.gt.f32.partialorder %v85, 0.0
  %vm3595 = vcmp.gt.f32.partialorder %v86, 0.0
  %vm3596 = vcmp.gt.f32.partialorder %v87, 0.0
  %vm3597 = vcmp.gt.f32.partialorder %v88, 0.0
  %vm3598 = vcmp.gt.f32.partialorder %v89, 0.0
  %vm3599 = vcmp.gt.f32.partialorder %v90, 0.0
  %v3600 = vmul.f32 %v27, 0.2
  %v3601 = vmul.f32 %v28, 0.2
  %v3602 = vmul.f32 %v29, 0.2
  %v3603 = vmul.f32 %v30, 0.2
  %v3604 = vmul.f32 %v31, 0.2
  %v3605 = vmul.f32 %v32, 0.2
  %v3606 = vmul.f32 %v33, 0.2
  %v3607 = vmul.f32 %v34, 0.2
  %v3608 = vmul.f32 %v35, 0.2
  %v3609 = vmul.f32 %v36, 0.2
  %v3610 = vmul.f32 %v37, 0.2
  %v3611 = vmul.f32 %v38, 0.2
  %v3612 = vmul.f32 %v39, 0.2
  %v3613 = vmul.f32 %v40, 0.2
  %v3614 = vmul.f32 %v41, 0.2
  %v3615 = vmul.f32 %v42, 0.2
  %v3616 = vmul.f32 %v43, 0.2
  %v3617 = vmul.f32 %v44, 0.2
  %v3618 = vmul.f32 %v45, 0.2
  %v3619 = vmul.f32 %v46, 0.2
  %v3620 = vmul.f32 %v47, 0.2
  %v3621 = vmul.f32 %v48, 0.2
  %v3622 = vmul.f32 %v49, 0.2
  %v3623 = vmul.f32 %v50, 0.2
  %v3624 = vmul.f32 %v51, 0.2
  %v3625 = vmul.f32 %v52, 0.2
  %v3626 = vmul.f32 %v53, 0.2
  %v3627 = vmul.f32 %v54, 0.2
  %v3628 = vmul.f32 %v55, 0.2
  %v3629 = vmul.f32 %v56, 0.2
  %v3630 = vmul.f32 %v57, 0.2
  %v3631 = vmul.f32 %v58, 0.2
  %v3632 = vmul.f32 %v59, 0.2
  %v3633 = vmul.f32 %v60, 0.2
  %v3634 = vmul.f32 %v61, 0.2
  %v3635 = vmul.f32 %v62, 0.2
  %v3636 = vmul.f32 %v63, 0.2
  %v3637 = vmul.f32 %v64, 0.2
  %v3638 = vmul.f32 %v65, 0.2
  %v3639 = vmul.f32 %v66, 0.2
  %v3640 = vmul.f32 %v67, 0.2
  %v3641 = vmul.f32 %v68, 0.2
  %v3642 = vmul.f32 %v69, 0.2
  %v3643 = vmul.f32 %v70, 0.2
  %v3644 = vmul.f32 %v71, 0.2
  %v3645 = vmul.f32 %v72, 0.2
  %v3646 = vmul.f32 %v73, 0.2
  %v3647 = vmul.f32 %v74, 0.2
  %v3648 = vmul.f32 %v75, 0.2
  %v3649 = vmul.f32 %v76, 0.2
  %v3650 = vmul.f32 %v77, 0.2
  %v3651 = vmul.f32 %v78, 0.2
  %v3652 = vmul.f32 %v79, 0.2
  %v3653 = vmul.f32 %v80, 0.2
  %v3654 = vmul.f32 %v81, 0.2
  %v3655 = vmul.f32 %v82, 0.2
  %v3656 = vmul.f32 %v83, 0.2
  %v3657 = vmul.f32 %v84, 0.2
  %v3658 = vmul.f32 %v85, 0.2
  %v3659 = vmul.f32 %v86, 0.2
  %v3660 = vmul.f32 %v87, 0.2
  %v3661 = vmul.f32 %v88, 0.2
  %v3662 = vmul.f32 %v89, 0.2
  %v3663 = vmul.f32 %v90, 0.2
  %v3664 = vsel %vm3536, %v27, %v3600
  %v3665 = vsel %vm3537, %v28, %v3601
  %v3666 = vsel %vm3538, %v29, %v3602
  %v3667 = vsel %vm3539, %v30, %v3603
  %v3668 = vsel %vm3540, %v31, %v3604
  %v3669 = vsel %vm3541, %v32, %v3605
  %v3670 = vsel %vm3542, %v33, %v3606
  %v3671 = vsel %vm3543, %v34, %v3607
  %v3672 = vsel %vm3544, %v35, %v3608
  %v3673 = vsel %vm3545, %v36, %v3609
  %v3674 = vsel %vm3546, %v37, %v3610
  %v3675 = vsel %vm3547, %v38, %v3611
  %v3676 = vsel %vm3548, %v39, %v3612
  %v3677 = vsel %vm3549, %v40, %v3613
  %v3678 = vsel %vm3550, %v41, %v3614
  %v3679 = vsel %vm3551, %v42, %v3615
  %v3680 = vsel %vm3552, %v43, %v3616
  %v3681 = vsel %vm3553, %v44, %v3617
  %v3682 = vsel %vm3554, %v45, %v3618
  %v3683 = vsel %vm3555, %v46, %v3619
  %v3684 = vsel %vm3556, %v47, %v3620
  %v3685 = vsel %vm3557, %v48, %v3621
  %v3686 = vsel %vm3558, %v49, %v3622
  %v3687 = vsel %vm3559, %v50, %v3623
  %v3688 = vsel %vm3560, %v51, %v3624
  %v3689 = vsel %vm3561, %v52, %v3625
  %v3690 = vsel %vm3562, %v53, %v3626
  %v3691 = vsel %vm3563, %v54, %v3627
  %v3692 = vsel %vm3564, %v55, %v3628
  %v3693 = vsel %vm3565, %v56, %v3629
  %v3694 = vsel %vm3566, %v57, %v3630
  %v3695 = vsel %vm3567, %v58, %v3631
  %v3696 = vsel %vm3568, %v59, %v3632
  %v3697 = vsel %vm3569, %v60, %v3633
  %v3698 = vsel %vm3570, %v61, %v3634
  %v3699 = vsel %vm3571, %v62, %v3635
  %v3700 = vsel %vm3572, %v63, %v3636
  %v3701 = vsel %vm3573, %v64, %v3637
  %v3702 = vsel %vm3574, %v65, %v3638
  %v3703 = vsel %vm3575, %v66, %v3639
  %v3704 = vsel %vm3576, %v67, %v3640
  %v3705 = vsel %vm3577, %v68, %v3641
  %v3706 = vsel %vm3578, %v69, %v3642
  %v3707 = vsel %vm3579, %v70, %v3643
  %v3708 = vsel %vm3580, %v71, %v3644
  %v3709 = vsel %vm3581, %v72, %v3645
  %v3710 = vsel %vm3582, %v73, %v3646
  %v3711 = vsel %vm3583, %v74, %v3647
  %v3712 = vsel %vm3584, %v75, %v3648
  %v3713 = vsel %vm3585, %v76, %v3649
  %v3714 = vsel %vm3586, %v77, %v3650
  %v3715 = vsel %vm3587, %v78, %v3651
  %v3716 = vsel %vm3588, %v79, %v3652
  %v3717 = vsel %vm3589, %v80, %v3653
  %v3718 = vsel %vm3590, %v81, %v3654
  %v3719 = vsel %vm3591, %v82, %v3655
  %v3720 = vsel %vm3592, %v83, %v3656
  %v3721 = vsel %vm3593, %v84, %v3657
  %v3722 = vsel %vm3594, %v85, %v3658
  %v3723 = vsel %vm3595, %v86, %v3659
  %v3724 = vsel %vm3596, %v87, %v3660
  %v3725 = vsel %vm3597, %v88, %v3661
  %v3726 = vsel %vm3598, %v89, %v3662
  %v3727 = vsel %vm3599, %v90, %v3663
  %vm3728 = vcmask 293888
  %3729 = vst.msk [vmem:[#allocation2] sm:$0xff] %vm3728, 0.0
  %3730 = vst.msk [vmem:[#allocation2 + $0x8] sm:$0xff] %vm3728, 0.0
  %3731 = vst.msk [vmem:[#allocation2 + $0x10] sm:$0xff] %vm3728, 0.0
  %3732 = vst.msk [vmem:[#allocation2 + $0x18] sm:$0xff] %vm3728, 0.0
  %3733 = vst.msk [vmem:[#allocation2 + $0x20] sm:$0xff] %vm3728, 0.0
  %3734 = vst.msk [vmem:[#allocation2 + $0x28] sm:$0xff] %vm3728, 0.0
  %3735 = vst.msk [vmem:[#allocation2 + $0x30] sm:$0xff] %vm3728, 0.0
  %3736 = vst.msk [vmem:[#allocation2 + $0x38] sm:$0xff] %vm3728, 0.0
  %3737 = vst.msk [vmem:[#allocation2 + $0x40] sm:$0xff] %vm3728, 0.0
  %3738 = vst.msk [vmem:[#allocation2 + $0x48] sm:$0xff] %vm3728, 0.0
  %3739 = vst.msk [vmem:[#allocation2 + $0x50] sm:$0xff] %vm3728, 0.0
  %3740 = vst.msk [vmem:[#allocation2 + $0x58] sm:$0xff] %vm3728, 0.0
  %3741 = vst.msk [vmem:[#allocation2 + $0x60] sm:$0xff] %vm3728, 0.0
  %3742 = vst.msk [vmem:[#allocation2 + $0x68] sm:$0xff] %vm3728, 0.0
  %3743 = vst.msk [vmem:[#allocation2 + $0x70] sm:$0xff] %vm3728, 0.0
  %3744 = vst.msk [vmem:[#allocation2 + $0x78] sm:$0xff] %vm3728, 0.0
  %3745 = vst.msk [vmem:[#allocation2 + $0x80] sm:$0xff] %vm3728, 0.0
  %3746 = vst.msk [vmem:[#allocation2 + $0x88] sm:$0xff] %vm3728, 0.0
  %3747 = vst.msk [vmem:[#allocation2 + $0x90] sm:$0xff] %vm3728, 0.0
  %3748 = vst.msk [vmem:[#allocation2 + $0x98] sm:$0xff] %vm3728, 0.0
  %3749 = vst.msk [vmem:[#allocation2 + $0xa0] sm:$0xff] %vm3728, 0.0
  %3750 = vst.msk [vmem:[#allocation2 + $0xa8] sm:$0xff] %vm3728, 0.0
  %3751 = vst.msk [vmem:[#allocation2 + $0xb0] sm:$0xff] %vm3728, 0.0
  %3752 = vst.msk [vmem:[#allocation2 + $0xb8] sm:$0xff] %vm3728, 0.0
  %3753 = vst.msk [vmem:[#allocation2 + $0xc0] sm:$0xff] %vm3728, 0.0
  %3754 = vst.msk [vmem:[#allocation2 + $0xc8] sm:$0xff] %vm3728, 0.0
  %3755 = vst.msk [vmem:[#allocation2 + $0xd0] sm:$0xff] %vm3728, 0.0
  %3756 = vst.msk [vmem:[#allocation2 + $0xd8] sm:$0xff] %vm3728, 0.0
  %3757 = vst.msk [vmem:[#allocation2 + $0xe0] sm:$0xff] %vm3728, 0.0
  %3758 = vst.msk [vmem:[#allocation2 + $0xe8] sm:$0xff] %vm3728, 0.0
  %3759 = vst.msk [vmem:[#allocation2 + $0xf0] sm:$0xff] %vm3728, 0.0
  %3760 = vst.msk [vmem:[#allocation2 + $0xf8] sm:$0xff] %vm3728, 0.0
  %3761 = vst.msk [vmem:[#allocation2 + $0x100] sm:$0xff] %vm3728, 0.0
  %3762 = vst.msk [vmem:[#allocation2 + $0x108] sm:$0xff] %vm3728, 0.0
  %3763 = vst.msk [vmem:[#allocation2 + $0x110] sm:$0xff] %vm3728, 0.0
  %3764 = vst.msk [vmem:[#allocation2 + $0x118] sm:$0xff] %vm3728, 0.0
  %3765 = vst.msk [vmem:[#allocation2 + $0x120] sm:$0xff] %vm3728, 0.0
  %3766 = vst.msk [vmem:[#allocation2 + $0x128] sm:$0xff] %vm3728, 0.0
  %3767 = vst.msk [vmem:[#allocation2 + $0x130] sm:$0xff] %vm3728, 0.0
  %3768 = vst.msk [vmem:[#allocation2 + $0x138] sm:$0xff] %vm3728, 0.0
  %3769 = vst.msk [vmem:[#allocation2 + $0x140] sm:$0xff] %vm3728, 0.0
  %3770 = vst.msk [vmem:[#allocation2 + $0x148] sm:$0xff] %vm3728, 0.0
  %3771 = vst.msk [vmem:[#allocation2 + $0x150] sm:$0xff] %vm3728, 0.0
  %3772 = vst.msk [vmem:[#allocation2 + $0x158] sm:$0xff] %vm3728, 0.0
  %3773 = vst.msk [vmem:[#allocation2 + $0x160] sm:$0xff] %vm3728, 0.0
  %3774 = vst.msk [vmem:[#allocation2 + $0x168] sm:$0xff] %vm3728, 0.0
  %3775 = vst.msk [vmem:[#allocation2 + $0x170] sm:$0xff] %vm3728, 0.0
  %3776 = vst.msk [vmem:[#allocation2 + $0x178] sm:$0xff] %vm3728, 0.0
  %3777 = vst.msk [vmem:[#allocation2 + $0x180] sm:$0xff] %vm3728, 0.0
  %3778 = vst.msk [vmem:[#allocation2 + $0x188] sm:$0xff] %vm3728, 0.0
  %3779 = vst.msk [vmem:[#allocation2 + $0x190] sm:$0xff] %vm3728, 0.0
  %3780 = vst.msk [vmem:[#allocation2 + $0x198] sm:$0xff] %vm3728, 0.0
  %3781 = vst.msk [vmem:[#allocation2 + $0x1a0] sm:$0xff] %vm3728, 0.0
  %3782 = vst.msk [vmem:[#allocation2 + $0x1a8] sm:$0xff] %vm3728, 0.0
  %3783 = vst.msk [vmem:[#allocation2 + $0x1b0] sm:$0xff] %vm3728, 0.0
  %3784 = vst.msk [vmem:[#allocation2 + $0x1b8] sm:$0xff] %vm3728, 0.0
  %3785 = vst.msk [vmem:[#allocation2 + $0x1c0] sm:$0xff] %vm3728, 0.0
  %3786 = vst.msk [vmem:[#allocation2 + $0x1c8] sm:$0xff] %vm3728, 0.0
  %3787 = vst.msk [vmem:[#allocation2 + $0x1d0] sm:$0xff] %vm3728, 0.0
  %3788 = vst.msk [vmem:[#allocation2 + $0x1d8] sm:$0xff] %vm3728, 0.0
  %3789 = vst.msk [vmem:[#allocation2 + $0x1e0] sm:$0xff] %vm3728, 0.0
  %3790 = vst.msk [vmem:[#allocation2 + $0x1e8] sm:$0xff] %vm3728, 0.0
  %3791 = vst.msk [vmem:[#allocation2 + $0x1f0] sm:$0xff] %vm3728, 0.0
  %3792 = vst.msk [vmem:[#allocation2 + $0x1f8] sm:$0xff] %vm3728, 0.0
  %s3793 = scalar_lea.vmem [#allocation2], 16
  %3794 = vst.msk [vmem:[%s3793 + $0x1] sm:$0xff] %vm3410, %v3664
  %vm3795 = vcmask 30720
  %3796 = vst.msk [vmem:[%s3793 + $0x9] sm:$0x7f] %vm3795, %v3665
  %3797 = vst.msk [vmem:[%s3793 + $0x11] sm:$0xff] %vm3410, %v3666
  %3798 = vst.msk [vmem:[%s3793 + $0x19] sm:$0x7f] %vm3795, %v3667
  %3799 = vst.msk [vmem:[%s3793 + $0x21] sm:$0xff] %vm3410, %v3668
  %3800 = vst.msk [vmem:[%s3793 + $0x29] sm:$0x7f] %vm3795, %v3669
  %3801 = vst.msk [vmem:[%s3793 + $0x31] sm:$0xff] %vm3410, %v3670
  %3802 = vst.msk [vmem:[%s3793 + $0x39] sm:$0x7f] %vm3795, %v3671
  %3803 = vst.msk [vmem:[%s3793 + $0x41] sm:$0xff] %vm3410, %v3672
  %3804 = vst.msk [vmem:[%s3793 + $0x49] sm:$0x7f] %vm3795, %v3673
  %3805 = vst.msk [vmem:[%s3793 + $0x51] sm:$0xff] %vm3410, %v3674
  %3806 = vst.msk [vmem:[%s3793 + $0x59] sm:$0x7f] %vm3795, %v3675
  %3807 = vst.msk [vmem:[%s3793 + $0x61] sm:$0xff] %vm3410, %v3676
  %3808 = vst.msk [vmem:[%s3793 + $0x69] sm:$0x7f] %vm3795, %v3677
  %3809 = vst.msk [vmem:[%s3793 + $0x71] sm:$0xff] %vm3410, %v3678
  %3810 = vst.msk [vmem:[%s3793 + $0x79] sm:$0x7f] %vm3795, %v3679
  %3811 = vst.msk [vmem:[%s3793 + $0x81] sm:$0xff] %vm3410, %v3680
  %3812 = vst.msk [vmem:[%s3793 + $0x89] sm:$0x7f] %vm3795, %v3681
  %3813 = vst.msk [vmem:[%s3793 + $0x91] sm:$0xff] %vm3410, %v3682
  %3814 = vst.msk [vmem:[%s3793 + $0x99] sm:$0x7f] %vm3795, %v3683
  %3815 = vst.msk [vmem:[%s3793 + $0xa1] sm:$0xff] %vm3410, %v3684
  %3816 = vst.msk [vmem:[%s3793 + $0xa9] sm:$0x7f] %vm3795, %v3685
  %3817 = vst.msk [vmem:[%s3793 + $0xb1] sm:$0xff] %vm3410, %v3686
  %3818 = vst.msk [vmem:[%s3793 + $0xb9] sm:$0x7f] %vm3795, %v3687
  %3819 = vst.msk [vmem:[%s3793 + $0xc1] sm:$0xff] %vm3410, %v3688
  %3820 = vst.msk [vmem:[%s3793 + $0xc9] sm:$0x7f] %vm3795, %v3689
  %3821 = vst.msk [vmem:[%s3793 + $0xd1] sm:$0xff] %vm3410, %v3690
  %3822 = vst.msk [vmem:[%s3793 + $0xd9] sm:$0x7f] %vm3795, %v3691
  %3823 = vst.msk [vmem:[%s3793 + $0xe1] sm:$0xff] %vm3410, %v3692
  %3824 = vst.msk [vmem:[%s3793 + $0xe9] sm:$0x7f] %vm3795, %v3693
  %3825 = vst.msk [vmem:[%s3793 + $0x101] sm:$0xff] %vm3410, %v3696
  %3826 = vst.msk [vmem:[%s3793 + $0x109] sm:$0x7f] %vm3795, %v3697
  %3827 = vst.msk [vmem:[%s3793 + $0x111] sm:$0xff] %vm3410, %v3698
  %3828 = vst.msk [vmem:[%s3793 + $0x119] sm:$0x7f] %vm3795, %v3699
  %3829 = vst.msk [vmem:[%s3793 + $0x121] sm:$0xff] %vm3410, %v3700
  %3830 = vst.msk [vmem:[%s3793 + $0x129] sm:$0x7f] %vm3795, %v3701
  %3831 = vst.msk [vmem:[%s3793 + $0x131] sm:$0xff] %vm3410, %v3702
  %3832 = vst.msk [vmem:[%s3793 + $0x139] sm:$0x7f] %vm3795, %v3703
  %3833 = vst.msk [vmem:[%s3793 + $0x141] sm:$0xff] %vm3410, %v3704
  %3834 = vst.msk [vmem:[%s3793 + $0x149] sm:$0x7f] %vm3795, %v3705
  %3835 = vst.msk [vmem:[%s3793 + $0x151] sm:$0xff] %vm3410, %v3706
  %3836 = vst.msk [vmem:[%s3793 + $0x159] sm:$0x7f] %vm3795, %v3707
  %3837 = vst.msk [vmem:[%s3793 + $0x161] sm:$0xff] %vm3410, %v3708
  %3838 = vst.msk [vmem:[%s3793 + $0x169] sm:$0x7f] %vm3795, %v3709
  %3839 = vst.msk [vmem:[%s3793 + $0x171] sm:$0xff] %vm3410, %v3710
  %3840 = vst.msk [vmem:[%s3793 + $0x179] sm:$0x7f] %vm3795, %v3711
  %3841 = vst.msk [vmem:[%s3793 + $0x181] sm:$0xff] %vm3410, %v3712
  %3842 = vst.msk [vmem:[%s3793 + $0x189] sm:$0x7f] %vm3795, %v3713
  %3843 = vst.msk [vmem:[%s3793 + $0x191] sm:$0xff] %vm3410, %v3714
  %3844 = vst.msk [vmem:[%s3793 + $0x199] sm:$0x7f] %vm3795, %v3715
  %3845 = vst.msk [vmem:[%s3793 + $0x1a1] sm:$0xff] %vm3410, %v3716
  %3846 = vst.msk [vmem:[%s3793 + $0x1a9] sm:$0x7f] %vm3795, %v3717
  %3847 = vst.msk [vmem:[%s3793 + $0x1b1] sm:$0xff] %vm3410, %v3718
  %3848 = vst.msk [vmem:[%s3793 + $0x1b9] sm:$0x7f] %vm3795, %v3719
  %3849 = vst.msk [vmem:[%s3793 + $0x1c1] sm:$0xff] %vm3410, %v3720
  %3850 = vst.msk [vmem:[%s3793 + $0x1c9] sm:$0x7f] %vm3795, %v3721
  %3851 = vst.msk [vmem:[%s3793 + $0x1d1] sm:$0xff] %vm3410, %v3722
  %3852 = vst.msk [vmem:[%s3793 + $0x1d9] sm:$0x7f] %vm3795, %v3723
  %3853 = vst.msk [vmem:[%s3793 + $0x1e1] sm:$0xff] %vm3410, %v3724
  %3854 = vst.msk [vmem:[%s3793 + $0x1e9] sm:$0x7f] %vm3795, %v3725
  %3915 = vrot.lane.b32.xlu0 %v3664, 4
  %v3916 = vpop.permute.xlu0 %3915
  %3917 = vrot.lane.b32.xlu0 %v3665, 4
  %v3918 = vpop.permute.xlu0 %3917
  %3919 = vrot.lane.b32.xlu0 %v3666, 4
  %v3920 = vpop.permute.xlu0 %3919
  %3921 = vrot.lane.b32.xlu0 %v3667, 4
  %v3922 = vpop.permute.xlu0 %3921
  %3923 = vrot.lane.b32.xlu0 %v3668, 4
  %v3924 = vpop.permute.xlu0 %3923
  %3925 = vrot.lane.b32.xlu0 %v3669, 4
  %v3926 = vpop.permute.xlu0 %3925
  %3927 = vrot.lane.b32.xlu0 %v3670, 4
  %v3928 = vpop.permute.xlu0 %3927
  %3929 = vrot.lane.b32.xlu0 %v3671, 4
  %v3930 = vpop.permute.xlu0 %3929
  %3931 = vrot.lane.b32.xlu0 %v3672, 4
  %v3932 = vpop.permute.xlu0 %3931
  %3933 = vrot.lane.b32.xlu0 %v3673, 4
  %v3934 = vpop.permute.xlu0 %3933
  %3935 = vrot.lane.b32.xlu0 %v3674, 4
  %v3936 = vpop.permute.xlu0 %3935
  %3937 = vrot.lane.b32.xlu0 %v3675, 4
  %v3938 = vpop.permute.xlu0 %3937
  %3939 = vrot.lane.b32.xlu0 %v3676, 4
  %v3940 = vpop.permute.xlu0 %3939
  %3941 = vrot.lane.b32.xlu0 %v3677, 4
  %v3942 = vpop.permute.xlu0 %3941
  %3943 = vrot.lane.b32.xlu0 %v3678, 4
  %v3944 = vpop.permute.xlu0 %3943
  %3945 = vrot.lane.b32.xlu0 %v3679, 4
  %v3946 = vpop.permute.xlu0 %3945
  %3947 = vrot.lane.b32.xlu0 %v3680, 4
  %v3948 = vpop.permute.xlu0 %3947
  %3949 = vrot.lane.b32.xlu0 %v3681, 4
  %v3950 = vpop.permute.xlu0 %3949
  %3951 = vrot.lane.b32.xlu0 %v3682, 4
  %v3952 = vpop.permute.xlu0 %3951
  %3953 = vrot.lane.b32.xlu0 %v3683, 4
  %v3954 = vpop.permute.xlu0 %3953
  %3955 = vrot.lane.b32.xlu0 %v3684, 4
  %v3956 = vpop.permute.xlu0 %3955
  %3957 = vrot.lane.b32.xlu0 %v3685, 4
  %v3958 = vpop.permute.xlu0 %3957
  %3959 = vrot.lane.b32.xlu0 %v3686, 4
  %v3960 = vpop.permute.xlu0 %3959
  %3961 = vrot.lane.b32.xlu0 %v3687, 4
  %v3962 = vpop.permute.xlu0 %3961
  %3963 = vrot.lane.b32.xlu0 %v3688, 4
  %v3964 = vpop.permute.xlu0 %3963
  %3965 = vrot.lane.b32.xlu0 %v3689, 4
  %v3966 = vpop.permute.xlu0 %3965
  %3967 = vrot.lane.b32.xlu0 %v3690, 4
  %v3968 = vpop.permute.xlu0 %3967
  %3969 = vrot.lane.b32.xlu0 %v3691, 4
  %v3970 = vpop.permute.xlu0 %3969
  %3971 = vrot.lane.b32.xlu0 %v3692, 4
  %v3972 = vpop.permute.xlu0 %3971
  %3973 = vrot.lane.b32.xlu0 %v3693, 4
  %v3974 = vpop.permute.xlu0 %3973
  %3975 = vrot.lane.b32.xlu0 %v3696, 4
  %v3976 = vpop.permute.xlu0 %3975
  %3977 = vrot.lane.b32.xlu0 %v3697, 4
  %v3978 = vpop.permute.xlu0 %3977
  %3979 = vrot.lane.b32.xlu0 %v3698, 4
  %v3980 = vpop.permute.xlu0 %3979
  %3981 = vrot.lane.b32.xlu0 %v3699, 4
  %v3982 = vpop.permute.xlu0 %3981
  %3983 = vrot.lane.b32.xlu0 %v3700, 4
  %v3984 = vpop.permute.xlu0 %3983
  %3985 = vrot.lane.b32.xlu0 %v3701, 4
  %v3986 = vpop.permute.xlu0 %3985
  %3987 = vrot.lane.b32.xlu0 %v3702, 4
  %v3988 = vpop.permute.xlu0 %3987
  %3989 = vrot.lane.b32.xlu0 %v3703, 4
  %v3990 = vpop.permute.xlu0 %3989
  %3991 = vrot.lane.b32.xlu0 %v3704, 4
  %v3992 = vpop.permute.xlu0 %3991
  %3993 = vrot.lane.b32.xlu0 %v3705, 4
  %v3994 = vpop.permute.xlu0 %3993
  %3995 = vrot.lane.b32.xlu0 %v3706, 4
  %v3996 = vpop.permute.xlu0 %3995
  %3997 = vrot.lane.b32.xlu0 %v3707, 4
  %v3998 = vpop.permute.xlu0 %3997
  %3999 = vrot.lane.b32.xlu0 %v3708, 4
  %v4000 = vpop.permute.xlu0 %3999
  %4001 = vrot.lane.b32.xlu0 %v3709, 4
  %v4002 = vpop.permute.xlu0 %4001
  %4003 = vrot.lane.b32.xlu0 %v3710, 4
  %v4004 = vpop.permute.xlu0 %4003
  %4005 = vrot.lane.b32.xlu0 %v3711, 4
  %v4006 = vpop.permute.xlu0 %4005
  %4007 = vrot.lane.b32.xlu0 %v3712, 4
  %v4008 = vpop.permute.xlu0 %4007
  %4009 = vrot.lane.b32.xlu0 %v3713, 4
  %v4010 = vpop.permute.xlu0 %4009
  %4011 = vrot.lane.b32.xlu0 %v3714, 4
  %v4012 = vpop.permute.xlu0 %4011
  %4013 = vrot.lane.b32.xlu0 %v3715, 4
  %v4014 = vpop.permute.xlu0 %4013
  %4015 = vrot.lane.b32.xlu0 %v3716, 4
  %v4016 = vpop.permute.xlu0 %4015
  %4017 = vrot.lane.b32.xlu0 %v3717, 4
  %v4018 = vpop.permute.xlu0 %4017
  %4019 = vrot.lane.b32.xlu0 %v3718, 4
  %v4020 = vpop.permute.xlu0 %4019
  %4021 = vrot.lane.b32.xlu0 %v3719, 4
  %v4022 = vpop.permute.xlu0 %4021
  %4023 = vrot.lane.b32.xlu0 %v3720, 4
  %v4024 = vpop.permute.xlu0 %4023
  %4025 = vrot.lane.b32.xlu0 %v3721, 4
  %v4026 = vpop.permute.xlu0 %4025
  %4027 = vrot.lane.b32.xlu0 %v3722, 4
  %v4028 = vpop.permute.xlu0 %4027
  %4029 = vrot.lane.b32.xlu0 %v3723, 4
  %v4030 = vpop.permute.xlu0 %4029
  %4031 = vrot.lane.b32.xlu0 %v3724, 4
  %v4032 = vpop.permute.xlu0 %4031
  %4033 = vrot.lane.b32.xlu0 %v3725, 4
  %v4034 = vpop.permute.xlu0 %4033
  %vm4095 = vcmask 64544
  %4096 = vst.msk [vmem:[%s3793] sm:$0xff] %vm4095, %v3916
  %4097 = vst.msk [vmem:[%s3793 + $0x8] sm:$0xff] %vm4095, %v3918
  %4098 = vst.msk [vmem:[%s3793 + $0x10] sm:$0xff] %vm4095, %v3920
  %4099 = vst.msk [vmem:[%s3793 + $0x18] sm:$0xff] %vm4095, %v3922
  %4100 = vst.msk [vmem:[%s3793 + $0x20] sm:$0xff] %vm4095, %v3924
  %4101 = vst.msk [vmem:[%s3793 + $0x28] sm:$0xff] %vm4095, %v3926
  %4102 = vst.msk [vmem:[%s3793 + $0x30] sm:$0xff] %vm4095, %v3928
  %4103 = vst.msk [vmem:[%s3793 + $0x38] sm:$0xff] %vm4095, %v3930
  %4104 = vst.msk [vmem:[%s3793 + $0x40] sm:$0xff] %vm4095, %v3932
  %4105 = vst.msk [vmem:[%s3793 + $0x48] sm:$0xff] %vm4095, %v3934
  %4106 = vst.msk [vmem:[%s3793 + $0x50] sm:$0xff] %vm4095, %v3936
  %4107 = vst.msk [vmem:[%s3793 + $0x58] sm:$0xff] %vm4095, %v3938
  %4108 = vst.msk [vmem:[%s3793 + $0x60] sm:$0xff] %vm4095, %v3940
  %4109 = vst.msk [vmem:[%s3793 + $0x68] sm:$0xff] %vm4095, %v3942
  %4110 = vst.msk [vmem:[%s3793 + $0x70] sm:$0xff] %vm4095, %v3944
  %4111 = vst.msk [vmem:[%s3793 + $0x78] sm:$0xff] %vm4095, %v3946
  %4112 = vst.msk [vmem:[%s3793 + $0x80] sm:$0xff] %vm4095, %v3948
  %4113 = vst.msk [vmem:[%s3793 + $0x88] sm:$0xff] %vm4095, %v3950
  %4114 = vst.msk [vmem:[%s3793 + $0x90] sm:$0xff] %vm4095, %v3952
  %4115 = vst.msk [vmem:[%s3793 + $0x98] sm:$0xff] %vm4095, %v3954
  %4116 = vst.msk [vmem:[%s3793 + $0xa0] sm:$0xff] %vm4095, %v3956
  %4117 = vst.msk [vmem:[%s3793 + $0xa8] sm:$0xff] %vm4095, %v3958
  %4118 = vst.msk [vmem:[%s3793 + $0xb0] sm:$0xff] %vm4095, %v3960
  %4119 = vst.msk [vmem:[%s3793 + $0xb8] sm:$0xff] %vm4095, %v3962
  %4120 = vst.msk [vmem:[%s3793 + $0xc0] sm:$0xff] %vm4095, %v3964
  %4121 = vst.msk [vmem:[%s3793 + $0xc8] sm:$0xff] %vm4095, %v3966
  %4122 = vst.msk [vmem:[%s3793 + $0xd0] sm:$0xff] %vm4095, %v3968
  %4123 = vst.msk [vmem:[%s3793 + $0xd8] sm:$0xff] %vm4095, %v3970
  %4124 = vst.msk [vmem:[%s3793 + $0xe0] sm:$0xff] %vm4095, %v3972
  %4125 = vst.msk [vmem:[%s3793 + $0xe8] sm:$0xff] %vm4095, %v3974
  %4126 = vst.msk [vmem:[%s3793 + $0x100] sm:$0xff] %vm4095, %v3976
  %4127 = vst.msk [vmem:[%s3793 + $0x108] sm:$0xff] %vm4095, %v3978
  %4128 = vst.msk [vmem:[%s3793 + $0x110] sm:$0xff] %vm4095, %v3980
  %4129 = vst.msk [vmem:[%s3793 + $0x118] sm:$0xff] %vm4095, %v3982
  %4130 = vst.msk [vmem:[%s3793 + $0x120] sm:$0xff] %vm4095, %v3984
  %4131 = vst.msk [vmem:[%s3793 + $0x128] sm:$0xff] %vm4095, %v3986
  %4132 = vst.msk [vmem:[%s3793 + $0x130] sm:$0xff] %vm4095, %v3988
  %4133 = vst.msk [vmem:[%s3793 + $0x138] sm:$0xff] %vm4095, %v3990
  %4134 = vst.msk [vmem:[%s3793 + $0x140] sm:$0xff] %vm4095, %v3992
  %4135 = vst.msk [vmem:[%s3793 + $0x148] sm:$0xff] %vm4095, %v3994
  %4136 = vst.msk [vmem:[%s3793 + $0x150] sm:$0xff] %vm4095, %v3996
  %4137 = vst.msk [vmem:[%s3793 + $0x158] sm:$0xff] %vm4095, %v3998
  %4138 = vst.msk [vmem:[%s3793 + $0x160] sm:$0xff] %vm4095, %v4000
  %4139 = vst.msk [vmem:[%s3793 + $0x168] sm:$0xff] %vm4095, %v4002
  %4140 = vst.msk [vmem:[%s3793 + $0x170] sm:$0xff] %vm4095, %v4004
  %4141 = vst.msk [vmem:[%s3793 + $0x178] sm:$0xff] %vm4095, %v4006
  %4142 = vst.msk [vmem:[%s3793 + $0x180] sm:$0xff] %vm4095, %v4008
  %4143 = vst.msk [vmem:[%s3793 + $0x188] sm:$0xff] %vm4095, %v4010
  %4144 = vst.msk [vmem:[%s3793 + $0x190] sm:$0xff] %vm4095, %v4012
  %4145 = vst.msk [vmem:[%s3793 + $0x198] sm:$0xff] %vm4095, %v4014
  %4146 = vst.msk [vmem:[%s3793 + $0x1a0] sm:$0xff] %vm4095, %v4016
  %4147 = vst.msk [vmem:[%s3793 + $0x1a8] sm:$0xff] %vm4095, %v4018
  %4148 = vst.msk [vmem:[%s3793 + $0x1b0] sm:$0xff] %vm4095, %v4020
  %4149 = vst.msk [vmem:[%s3793 + $0x1b8] sm:$0xff] %vm4095, %v4022
  %4150 = vst.msk [vmem:[%s3793 + $0x1c0] sm:$0xff] %vm4095, %v4024
  %4151 = vst.msk [vmem:[%s3793 + $0x1c8] sm:$0xff] %vm4095, %v4026
  %4152 = vst.msk [vmem:[%s3793 + $0x1d0] sm:$0xff] %vm4095, %v4028
  %4153 = vst.msk [vmem:[%s3793 + $0x1d8] sm:$0xff] %vm4095, %v4030
  %4154 = vst.msk [vmem:[%s3793 + $0x1e0] sm:$0xff] %vm4095, %v4032
  %4155 = vst.msk [vmem:[%s3793 + $0x1e8] sm:$0xff] %vm4095, %v4034
  %4156 = vrot.lane.b32.xlu0 %v3664, 8
  %v4157 = vpop.permute.xlu0 %4156
  %4158 = vrot.lane.b32.xlu0 %v3665, 8
  %v4159 = vpop.permute.xlu0 %4158
  %4160 = vrot.lane.b32.xlu0 %v3666, 8
  %v4161 = vpop.permute.xlu0 %4160
  %4162 = vrot.lane.b32.xlu0 %v3667, 8
  %v4163 = vpop.permute.xlu0 %4162
  %4164 = vrot.lane.b32.xlu0 %v3668, 8
  %v4165 = vpop.permute.xlu0 %4164
  %4166 = vrot.lane.b32.xlu0 %v3669, 8
  %v4167 = vpop.permute.xlu0 %4166
  %4168 = vrot.lane.b32.xlu0 %v3670, 8
  %v4169 = vpop.permute.xlu0 %4168
  %4170 = vrot.lane.b32.xlu0 %v3671, 8
  %v4171 = vpop.permute.xlu0 %4170
  %4172 = vrot.lane.b32.xlu0 %v3672, 8
  %v4173 = vpop.permute.xlu0 %4172
  %4174 = vrot.lane.b32.xlu0 %v3673, 8
  %v4175 = vpop.permute.xlu0 %4174
  %4176 = vrot.lane.b32.xlu0 %v3674, 8
  %v4177 = vpop.permute.xlu0 %4176
  %4178 = vrot.lane.b32.xlu0 %v3675, 8
  %v4179 = vpop.permute.xlu0 %4178
  %4180 = vrot.lane.b32.xlu0 %v3676, 8
  %v4181 = vpop.permute.xlu0 %4180
  %4182 = vrot.lane.b32.xlu0 %v3677, 8
  %v4183 = vpop.permute.xlu0 %4182
  %4184 = vrot.lane.b32.xlu0 %v3678, 8
  %v4185 = vpop.permute.xlu0 %4184
  %4186 = vrot.lane.b32.xlu0 %v3679, 8
  %v4187 = vpop.permute.xlu0 %4186
  %4188 = vrot.lane.b32.xlu0 %v3680, 8
  %v4189 = vpop.permute.xlu0 %4188
  %4190 = vrot.lane.b32.xlu0 %v3681, 8
  %v4191 = vpop.permute.xlu0 %4190
  %4192 = vrot.lane.b32.xlu0 %v3682, 8
  %v4193 = vpop.permute.xlu0 %4192
  %4194 = vrot.lane.b32.xlu0 %v3683, 8
  %v4195 = vpop.permute.xlu0 %4194
  %4196 = vrot.lane.b32.xlu0 %v3684, 8
  %v4197 = vpop.permute.xlu0 %4196
  %4198 = vrot.lane.b32.xlu0 %v3685, 8
  %v4199 = vpop.permute.xlu0 %4198
  %4200 = vrot.lane.b32.xlu0 %v3686, 8
  %v4201 = vpop.permute.xlu0 %4200
  %4202 = vrot.lane.b32.xlu0 %v3687, 8
  %v4203 = vpop.permute.xlu0 %4202
  %4204 = vrot.lane.b32.xlu0 %v3688, 8
  %v4205 = vpop.permute.xlu0 %4204
  %4206 = vrot.lane.b32.xlu0 %v3689, 8
  %v4207 = vpop.permute.xlu0 %4206
  %4208 = vrot.lane.b32.xlu0 %v3690, 8
  %v4209 = vpop.permute.xlu0 %4208
  %4210 = vrot.lane.b32.xlu0 %v3691, 8
  %v4211 = vpop.permute.xlu0 %4210
  %4212 = vrot.lane.b32.xlu0 %v3692, 8
  %v4213 = vpop.permute.xlu0 %4212
  %4214 = vrot.lane.b32.xlu0 %v3693, 8
  %v4215 = vpop.permute.xlu0 %4214
  %4216 = vrot.lane.b32.xlu0 %v3696, 8
  %v4217 = vpop.permute.xlu0 %4216
  %4218 = vrot.lane.b32.xlu0 %v3697, 8
  %v4219 = vpop.permute.xlu0 %4218
  %4220 = vrot.lane.b32.xlu0 %v3698, 8
  %v4221 = vpop.permute.xlu0 %4220
  %4222 = vrot.lane.b32.xlu0 %v3699, 8
  %v4223 = vpop.permute.xlu0 %4222
  %4224 = vrot.lane.b32.xlu0 %v3700, 8
  %v4225 = vpop.permute.xlu0 %4224
  %4226 = vrot.lane.b32.xlu0 %v3701, 8
  %v4227 = vpop.permute.xlu0 %4226
  %4228 = vrot.lane.b32.xlu0 %v3702, 8
  %v4229 = vpop.permute.xlu0 %4228
  %4230 = vrot.lane.b32.xlu0 %v3703, 8
  %v4231 = vpop.permute.xlu0 %4230
  %4232 = vrot.lane.b32.xlu0 %v3704, 8
  %v4233 = vpop.permute.xlu0 %4232
  %4234 = vrot.lane.b32.xlu0 %v3705, 8
  %v4235 = vpop.permute.xlu0 %4234
  %4236 = vrot.lane.b32.xlu0 %v3706, 8
  %v4237 = vpop.permute.xlu0 %4236
  %4238 = vrot.lane.b32.xlu0 %v3707, 8
  %v4239 = vpop.permute.xlu0 %4238
  %4240 = vrot.lane.b32.xlu0 %v3708, 8
  %v4241 = vpop.permute.xlu0 %4240
  %4242 = vrot.lane.b32.xlu0 %v3709, 8
  %v4243 = vpop.permute.xlu0 %4242
  %4244 = vrot.lane.b32.xlu0 %v3710, 8
  %v4245 = vpop.permute.xlu0 %4244
  %4246 = vrot.lane.b32.xlu0 %v3711, 8
  %v4247 = vpop.permute.xlu0 %4246
  %4248 = vrot.lane.b32.xlu0 %v3712, 8
  %v4249 = vpop.permute.xlu0 %4248
  %4250 = vrot.lane.b32.xlu0 %v3713, 8
  %v4251 = vpop.permute.xlu0 %4250
  %4252 = vrot.lane.b32.xlu0 %v3714, 8
  %v4253 = vpop.permute.xlu0 %4252
  %4254 = vrot.lane.b32.xlu0 %v3715, 8
  %v4255 = vpop.permute.xlu0 %4254
  %4256 = vrot.lane.b32.xlu0 %v3716, 8
  %v4257 = vpop.permute.xlu0 %4256
  %4258 = vrot.lane.b32.xlu0 %v3717, 8
  %v4259 = vpop.permute.xlu0 %4258
  %4260 = vrot.lane.b32.xlu0 %v3718, 8
  %v4261 = vpop.permute.xlu0 %4260
  %4262 = vrot.lane.b32.xlu0 %v3719, 8
  %v4263 = vpop.permute.xlu0 %4262
  %4264 = vrot.lane.b32.xlu0 %v3720, 8
  %v4265 = vpop.permute.xlu0 %4264
  %4266 = vrot.lane.b32.xlu0 %v3721, 8
  %v4267 = vpop.permute.xlu0 %4266
  %4268 = vrot.lane.b32.xlu0 %v3722, 8
  %v4269 = vpop.permute.xlu0 %4268
  %4270 = vrot.lane.b32.xlu0 %v3723, 8
  %v4271 = vpop.permute.xlu0 %4270
  %4272 = vrot.lane.b32.xlu0 %v3724, 8
  %v4273 = vpop.permute.xlu0 %4272
  %4274 = vrot.lane.b32.xlu0 %v3725, 8
  %v4275 = vpop.permute.xlu0 %4274
  %vm4336 = vcmask 97345
  %4337 = vst.msk [vmem:[%s3793 - $0x1] sm:$0xfe] %vm4336, %v4157
  %vm4338 = vcmask 97344
  %4339 = vst.msk [vmem:[%s3793 + $0x7] sm:$0xff] %vm4338, %v4159
  %4340 = vst.msk [vmem:[%s3793 + $0xf] sm:$0xfe] %vm4336, %v4161
  %4341 = vst.msk [vmem:[%s3793 + $0x17] sm:$0xff] %vm4338, %v4163
  %4342 = vst.msk [vmem:[%s3793 + $0x1f] sm:$0xfe] %vm4336, %v4165
  %4343 = vst.msk [vmem:[%s3793 + $0x27] sm:$0xff] %vm4338, %v4167
  %4344 = vst.msk [vmem:[%s3793 + $0x2f] sm:$0xfe] %vm4336, %v4169
  %4345 = vst.msk [vmem:[%s3793 + $0x37] sm:$0xff] %vm4338, %v4171
  %4346 = vst.msk [vmem:[%s3793 + $0x3f] sm:$0xfe] %vm4336, %v4173
  %4347 = vst.msk [vmem:[%s3793 + $0x47] sm:$0xff] %vm4338, %v4175
  %4348 = vst.msk [vmem:[%s3793 + $0x4f] sm:$0xfe] %vm4336, %v4177
  %4349 = vst.msk [vmem:[%s3793 + $0x57] sm:$0xff] %vm4338, %v4179
  %4350 = vst.msk [vmem:[%s3793 + $0x5f] sm:$0xfe] %vm4336, %v4181
  %4351 = vst.msk [vmem:[%s3793 + $0x67] sm:$0xff] %vm4338, %v4183
  %4352 = vst.msk [vmem:[%s3793 + $0x6f] sm:$0xfe] %vm4336, %v4185
  %4353 = vst.msk [vmem:[%s3793 + $0x77] sm:$0xff] %vm4338, %v4187
  %4354 = vst.msk [vmem:[%s3793 + $0x7f] sm:$0xfe] %vm4336, %v4189
  %4355 = vst.msk [vmem:[%s3793 + $0x87] sm:$0xff] %vm4338, %v4191
  %4356 = vst.msk [vmem:[%s3793 + $0x8f] sm:$0xfe] %vm4336, %v4193
  %4357 = vst.msk [vmem:[%s3793 + $0x97] sm:$0xff] %vm4338, %v4195
  %4358 = vst.msk [vmem:[%s3793 + $0x9f] sm:$0xfe] %vm4336, %v4197
  %4359 = vst.msk [vmem:[%s3793 + $0xa7] sm:$0xff] %vm4338, %v4199
  %4360 = vst.msk [vmem:[%s3793 + $0xaf] sm:$0xfe] %vm4336, %v4201
  %4361 = vst.msk [vmem:[%s3793 + $0xb7] sm:$0xff] %vm4338, %v4203
  %4362 = vst.msk [vmem:[%s3793 + $0xbf] sm:$0xfe] %vm4336, %v4205
  %4363 = vst.msk [vmem:[%s3793 + $0xc7] sm:$0xff] %vm4338, %v4207
  %4364 = vst.msk [vmem:[%s3793 + $0xcf] sm:$0xfe] %vm4336, %v4209
  %4365 = vst.msk [vmem:[%s3793 + $0xd7] sm:$0xff] %vm4338, %v4211
  %4366 = vst.msk [vmem:[%s3793 + $0xdf] sm:$0xfe] %vm4336, %v4213
  %4367 = vst.msk [vmem:[%s3793 + $0xe7] sm:$0xff] %vm4338, %v4215
  %4368 = vst.msk [vmem:[%s3793 + $0xff] sm:$0xfe] %vm4336, %v4217
  %4369 = vst.msk [vmem:[%s3793 + $0x107] sm:$0xff] %vm4338, %v4219
  %4370 = vst.msk [vmem:[%s3793 + $0x10f] sm:$0xfe] %vm4336, %v4221
  %4371 = vst.msk [vmem:[%s3793 + $0x117] sm:$0xff] %vm4338, %v4223
  %4372 = vst.msk [vmem:[%s3793 + $0x11f] sm:$0xfe] %vm4336, %v4225
  %4373 = vst.msk [vmem:[%s3793 + $0x127] sm:$0xff] %vm4338, %v4227
  %4374 = vst.msk [vmem:[%s3793 + $0x12f] sm:$0xfe] %vm4336, %v4229
  %4375 = vst.msk [vmem:[%s3793 + $0x137] sm:$0xff] %vm4338, %v4231
  %4376 = vst.msk [vmem:[%s3793 + $0x13f] sm:$0xfe] %vm4336, %v4233
  %4377 = vst.msk [vmem:[%s3793 + $0x147] sm:$0xff] %vm4338, %v4235
  %4378 = vst.msk [vmem:[%s3793 + $0x14f] sm:$0xfe] %vm4336, %v4237
  %4379 = vst.msk [vmem:[%s3793 + $0x157] sm:$0xff] %vm4338, %v4239
  %4380 = vst.msk [vmem:[%s3793 + $0x15f] sm:$0xfe] %vm4336, %v4241
  %4381 = vst.msk [vmem:[%s3793 + $0x167] sm:$0xff] %vm4338, %v4243
  %4382 = vst.msk [vmem:[%s3793 + $0x16f] sm:$0xfe] %vm4336, %v4245
  %4383 = vst.msk [vmem:[%s3793 + $0x177] sm:$0xff] %vm4338, %v4247
  %4384 = vst.msk [vmem:[%s3793 + $0x17f] sm:$0xfe] %vm4336, %v4249
  %4385 = vst.msk [vmem:[%s3793 + $0x187] sm:$0xff] %vm4338, %v4251
  %4386 = vst.msk [vmem:[%s3793 + $0x18f] sm:$0xfe] %vm4336, %v4253
  %4387 = vst.msk [vmem:[%s3793 + $0x197] sm:$0xff] %vm4338, %v4255
  %4388 = vst.msk [vmem:[%s3793 + $0x19f] sm:$0xfe] %vm4336, %v4257
  %4389 = vst.msk [vmem:[%s3793 + $0x1a7] sm:$0xff] %vm4338, %v4259
  %4390 = vst.msk [vmem:[%s3793 + $0x1af] sm:$0xfe] %vm4336, %v4261
  %4391 = vst.msk [vmem:[%s3793 + $0x1b7] sm:$0xff] %vm4338, %v4263
  %4392 = vst.msk [vmem:[%s3793 + $0x1bf] sm:$0xfe] %vm4336, %v4265
  %4393 = vst.msk [vmem:[%s3793 + $0x1c7] sm:$0xff] %vm4338, %v4267
  %4394 = vst.msk [vmem:[%s3793 + $0x1cf] sm:$0xfe] %vm4336, %v4269
  %4395 = vst.msk [vmem:[%s3793 + $0x1d7] sm:$0xff] %vm4338, %v4271
  %4396 = vst.msk [vmem:[%s3793 + $0x1df] sm:$0xfe] %vm4336, %v4273
  %4397 = vst.msk [vmem:[%s3793 + $0x1e7] sm:$0xff] %vm4338, %v4275
  %4402 = vrot.lane.b32.xlu0 %v3664, 12
  %v4403 = vpop.permute.xlu0 %4402
  %4404 = vrot.lane.b32.xlu0 %v3665, 12
  %v4405 = vpop.permute.xlu0 %4404
  %4406 = vrot.lane.b32.xlu0 %v3666, 12
  %v4407 = vpop.permute.xlu0 %4406
  %4408 = vrot.lane.b32.xlu0 %v3667, 12
  %v4409 = vpop.permute.xlu0 %4408
  %4410 = vrot.lane.b32.xlu0 %v3668, 12
  %v4411 = vpop.permute.xlu0 %4410
  %4412 = vrot.lane.b32.xlu0 %v3669, 12
  %v4413 = vpop.permute.xlu0 %4412
  %4414 = vrot.lane.b32.xlu0 %v3670, 12
  %v4415 = vpop.permute.xlu0 %4414
  %4416 = vrot.lane.b32.xlu0 %v3671, 12
  %v4417 = vpop.permute.xlu0 %4416
  %4418 = vrot.lane.b32.xlu0 %v3672, 12
  %v4419 = vpop.permute.xlu0 %4418
  %4420 = vrot.lane.b32.xlu0 %v3673, 12
  %v4421 = vpop.permute.xlu0 %4420
  %4422 = vrot.lane.b32.xlu0 %v3674, 12
  %v4423 = vpop.permute.xlu0 %4422
  %4424 = vrot.lane.b32.xlu0 %v3675, 12
  %v4425 = vpop.permute.xlu0 %4424
  %4426 = vrot.lane.b32.xlu0 %v3676, 12
  %v4427 = vpop.permute.xlu0 %4426
  %4428 = vrot.lane.b32.xlu0 %v3677, 12
  %v4429 = vpop.permute.xlu0 %4428
  %4430 = vrot.lane.b32.xlu0 %v3678, 12
  %v4431 = vpop.permute.xlu0 %4430
  %4432 = vrot.lane.b32.xlu0 %v3679, 12
  %v4433 = vpop.permute.xlu0 %4432
  %4434 = vrot.lane.b32.xlu0 %v3680, 12
  %v4435 = vpop.permute.xlu0 %4434
  %4436 = vrot.lane.b32.xlu0 %v3681, 12
  %v4437 = vpop.permute.xlu0 %4436
  %4438 = vrot.lane.b32.xlu0 %v3682, 12
  %v4439 = vpop.permute.xlu0 %4438
  %4440 = vrot.lane.b32.xlu0 %v3683, 12
  %v4441 = vpop.permute.xlu0 %4440
  %4442 = vrot.lane.b32.xlu0 %v3684, 12
  %v4443 = vpop.permute.xlu0 %4442
  %4444 = vrot.lane.b32.xlu0 %v3685, 12
  %v4445 = vpop.permute.xlu0 %4444
  %4446 = vrot.lane.b32.xlu0 %v3686, 12
  %v4447 = vpop.permute.xlu0 %4446
  %4448 = vrot.lane.b32.xlu0 %v3687, 12
  %v4449 = vpop.permute.xlu0 %4448
  %4450 = vrot.lane.b32.xlu0 %v3688, 12
  %v4451 = vpop.permute.xlu0 %4450
  %4452 = vrot.lane.b32.xlu0 %v3689, 12
  %v4453 = vpop.permute.xlu0 %4452
  %4454 = vrot.lane.b32.xlu0 %v3690, 12
  %v4455 = vpop.permute.xlu0 %4454
  %4456 = vrot.lane.b32.xlu0 %v3691, 12
  %v4457 = vpop.permute.xlu0 %4456
  %4458 = vrot.lane.b32.xlu0 %v3692, 12
  %v4459 = vpop.permute.xlu0 %4458
  %4460 = vrot.lane.b32.xlu0 %v3693, 12
  %v4461 = vpop.permute.xlu0 %4460
  %4462 = vrot.lane.b32.xlu0 %v3694, 12
  %v4463 = vpop.permute.xlu0 %4462
  %4464 = vrot.lane.b32.xlu0 %v3695, 12
  %v4465 = vpop.permute.xlu0 %4464
  %4466 = vrot.lane.b32.xlu0 %v3696, 12
  %v4467 = vpop.permute.xlu0 %4466
  %4468 = vrot.lane.b32.xlu0 %v3697, 12
  %v4469 = vpop.permute.xlu0 %4468
  %4470 = vrot.lane.b32.xlu0 %v3698, 12
  %v4471 = vpop.permute.xlu0 %4470
  %4472 = vrot.lane.b32.xlu0 %v3699, 12
  %v4473 = vpop.permute.xlu0 %4472
  %4474 = vrot.lane.b32.xlu0 %v3700, 12
  %v4475 = vpop.permute.xlu0 %4474
  %4476 = vrot.lane.b32.xlu0 %v3701, 12
  %v4477 = vpop.permute.xlu0 %4476
  %4478 = vrot.lane.b32.xlu0 %v3702, 12
  %v4479 = vpop.permute.xlu0 %4478
  %4480 = vrot.lane.b32.xlu0 %v3703, 12
  %v4481 = vpop.permute.xlu0 %4480
  %4482 = vrot.lane.b32.xlu0 %v3704, 12
  %v4483 = vpop.permute.xlu0 %4482
  %4484 = vrot.lane.b32.xlu0 %v3705, 12
  %v4485 = vpop.permute.xlu0 %4484
  %4486 = vrot.lane.b32.xlu0 %v3706, 12
  %v4487 = vpop.permute.xlu0 %4486
  %4488 = vrot.lane.b32.xlu0 %v3707, 12
  %v4489 = vpop.permute.xlu0 %4488
  %4490 = vrot.lane.b32.xlu0 %v3708, 12
  %v4491 = vpop.permute.xlu0 %4490
  %4492 = vrot.lane.b32.xlu0 %v3709, 12
  %v4493 = vpop.permute.xlu0 %4492
  %4494 = vrot.lane.b32.xlu0 %v3710, 12
  %v4495 = vpop.permute.xlu0 %4494
  %4496 = vrot.lane.b32.xlu0 %v3711, 12
  %v4497 = vpop.permute.xlu0 %4496
  %4498 = vrot.lane.b32.xlu0 %v3712, 12
  %v4499 = vpop.permute.xlu0 %4498
  %4500 = vrot.lane.b32.xlu0 %v3713, 12
  %v4501 = vpop.permute.xlu0 %4500
  %4502 = vrot.lane.b32.xlu0 %v3714, 12
  %v4503 = vpop.permute.xlu0 %4502
  %4504 = vrot.lane.b32.xlu0 %v3715, 12
  %v4505 = vpop.permute.xlu0 %4504
  %4506 = vrot.lane.b32.xlu0 %v3716, 12
  %v4507 = vpop.permute.xlu0 %4506
  %4508 = vrot.lane.b32.xlu0 %v3717, 12
  %v4509 = vpop.permute.xlu0 %4508
  %4510 = vrot.lane.b32.xlu0 %v3718, 12
  %v4511 = vpop.permute.xlu0 %4510
  %4512 = vrot.lane.b32.xlu0 %v3719, 12
  %v4513 = vpop.permute.xlu0 %4512
  %4514 = vrot.lane.b32.xlu0 %v3720, 12
  %v4515 = vpop.permute.xlu0 %4514
  %4516 = vrot.lane.b32.xlu0 %v3721, 12
  %v4517 = vpop.permute.xlu0 %4516
  %4518 = vrot.lane.b32.xlu0 %v3722, 12
  %v4519 = vpop.permute.xlu0 %4518
  %4520 = vrot.lane.b32.xlu0 %v3723, 12
  %v4521 = vpop.permute.xlu0 %4520
  %4522 = vrot.lane.b32.xlu0 %v3724, 12
  %v4523 = vpop.permute.xlu0 %4522
  %4524 = vrot.lane.b32.xlu0 %v3725, 12
  %v4525 = vpop.permute.xlu0 %4524
  %4526 = vrot.lane.b32.xlu0 %v3726, 12
  %v4527 = vpop.permute.xlu0 %4526
  %4528 = vrot.lane.b32.xlu0 %v3727, 12
  %v4529 = vpop.permute.xlu0 %4528
  %vm4594 = vcmask 130144
  %4595 = vst.msk [vmem:[#allocation2 + $0x1] sm:$0xff] %vm4594, %v4403
  %vm4596 = vcmask 129120
  %4597 = vst.msk [vmem:[#allocation2 + $0x9] sm:$0x7f] %vm4596, %v4405
  %4598 = vst.msk [vmem:[#allocation2 + $0x11] sm:$0xff] %vm4594, %v4407
  %4599 = vst.msk [vmem:[#allocation2 + $0x19] sm:$0x7f] %vm4596, %v4409
  %4600 = vst.msk [vmem:[#allocation2 + $0x21] sm:$0xff] %vm4594, %v4411
  %4601 = vst.msk [vmem:[#allocation2 + $0x29] sm:$0x7f] %vm4596, %v4413
  %4602 = vst.msk [vmem:[#allocation2 + $0x31] sm:$0xff] %vm4594, %v4415
  %4603 = vst.msk [vmem:[#allocation2 + $0x39] sm:$0x7f] %vm4596, %v4417
  %4604 = vst.msk [vmem:[#allocation2 + $0x41] sm:$0xff] %vm4594, %v4419
  %4605 = vst.msk [vmem:[#allocation2 + $0x49] sm:$0x7f] %vm4596, %v4421
  %4606 = vst.msk [vmem:[#allocation2 + $0x51] sm:$0xff] %vm4594, %v4423
  %4607 = vst.msk [vmem:[#allocation2 + $0x59] sm:$0x7f] %vm4596, %v4425
  %4608 = vst.msk [vmem:[#allocation2 + $0x61] sm:$0xff] %vm4594, %v4427
  %4609 = vst.msk [vmem:[#allocation2 + $0x69] sm:$0x7f] %vm4596, %v4429
  %4610 = vst.msk [vmem:[#allocation2 + $0x71] sm:$0xff] %vm4594, %v4431
  %4611 = vst.msk [vmem:[#allocation2 + $0x79] sm:$0x7f] %vm4596, %v4433
  %4612 = vst.msk [vmem:[#allocation2 + $0x81] sm:$0xff] %vm4594, %v4435
  %4613 = vst.msk [vmem:[#allocation2 + $0x89] sm:$0x7f] %vm4596, %v4437
  %4614 = vst.msk [vmem:[#allocation2 + $0x91] sm:$0xff] %vm4594, %v4439
  %4615 = vst.msk [vmem:[#allocation2 + $0x99] sm:$0x7f] %vm4596, %v4441
  %4616 = vst.msk [vmem:[#allocation2 + $0xa1] sm:$0xff] %vm4594, %v4443
  %4617 = vst.msk [vmem:[#allocation2 + $0xa9] sm:$0x7f] %vm4596, %v4445
  %4618 = vst.msk [vmem:[#allocation2 + $0xb1] sm:$0xff] %vm4594, %v4447
  %4619 = vst.msk [vmem:[#allocation2 + $0xb9] sm:$0x7f] %vm4596, %v4449
  %4620 = vst.msk [vmem:[#allocation2 + $0xc1] sm:$0xff] %vm4594, %v4451
  %4621 = vst.msk [vmem:[#allocation2 + $0xc9] sm:$0x7f] %vm4596, %v4453
  %4622 = vst.msk [vmem:[#allocation2 + $0xd1] sm:$0xff] %vm4594, %v4455
  %4623 = vst.msk [vmem:[#allocation2 + $0xd9] sm:$0x7f] %vm4596, %v4457
  %4624 = vst.msk [vmem:[#allocation2 + $0xe1] sm:$0xff] %vm4594, %v4459
  %4625 = vst.msk [vmem:[#allocation2 + $0xe9] sm:$0x7f] %vm4596, %v4461
  %4626 = vst.msk [vmem:[#allocation2 + $0xf1] sm:$0xff] %vm4594, %v4463
  %4627 = vst.msk [vmem:[#allocation2 + $0xf9] sm:$0x7f] %vm4596, %v4465
  %4628 = vst.msk [vmem:[#allocation2 + $0x101] sm:$0xff] %vm4594, %v4467
  %4629 = vst.msk [vmem:[#allocation2 + $0x109] sm:$0x7f] %vm4596, %v4469
  %4630 = vst.msk [vmem:[#allocation2 + $0x111] sm:$0xff] %vm4594, %v4471
  %4631 = vst.msk [vmem:[#allocation2 + $0x119] sm:$0x7f] %vm4596, %v4473
  %4632 = vst.msk [vmem:[#allocation2 + $0x121] sm:$0xff] %vm4594, %v4475
  %4633 = vst.msk [vmem:[#allocation2 + $0x129] sm:$0x7f] %vm4596, %v4477
  %4634 = vst.msk [vmem:[#allocation2 + $0x131] sm:$0xff] %vm4594, %v4479
  %4635 = vst.msk [vmem:[#allocation2 + $0x139] sm:$0x7f] %vm4596, %v4481
  %4636 = vst.msk [vmem:[#allocation2 + $0x141] sm:$0xff] %vm4594, %v4483
  %4637 = vst.msk [vmem:[#allocation2 + $0x149] sm:$0x7f] %vm4596, %v4485
  %4638 = vst.msk [vmem:[#allocation2 + $0x151] sm:$0xff] %vm4594, %v4487
  %4639 = vst.msk [vmem:[#allocation2 + $0x159] sm:$0x7f] %vm4596, %v4489
  %4640 = vst.msk [vmem:[#allocation2 + $0x161] sm:$0xff] %vm4594, %v4491
  %4641 = vst.msk [vmem:[#allocation2 + $0x169] sm:$0x7f] %vm4596, %v4493
  %4642 = vst.msk [vmem:[#allocation2 + $0x171] sm:$0xff] %vm4594, %v4495
  %4643 = vst.msk [vmem:[#allocation2 + $0x179] sm:$0x7f] %vm4596, %v4497
  %4644 = vst.msk [vmem:[#allocation2 + $0x181] sm:$0xff] %vm4594, %v4499
  %4645 = vst.msk [vmem:[#allocation2 + $0x189] sm:$0x7f] %vm4596, %v4501
  %4646 = vst.msk [vmem:[#allocation2 + $0x191] sm:$0xff] %vm4594, %v4503
  %4647 = vst.msk [vmem:[#allocation2 + $0x199] sm:$0x7f] %vm4596, %v4505
  %4648 = vst.msk [vmem:[#allocation2 + $0x1a1] sm:$0xff] %vm4594, %v4507
  %4649 = vst.msk [vmem:[#allocation2 + $0x1a9] sm:$0x7f] %vm4596, %v4509
  %4650 = vst.msk [vmem:[#allocation2 + $0x1b1] sm:$0xff] %vm4594, %v4511
  %4651 = vst.msk [vmem:[#allocation2 + $0x1b9] sm:$0x7f] %vm4596, %v4513
  %4652 = vst.msk [vmem:[#allocation2 + $0x1c1] sm:$0xff] %vm4594, %v4515
  %4653 = vst.msk [vmem:[#allocation2 + $0x1c9] sm:$0x7f] %vm4596, %v4517
  %4654 = vst.msk [vmem:[#allocation2 + $0x1d1] sm:$0xff] %vm4594, %v4519
  %4655 = vst.msk [vmem:[#allocation2 + $0x1d9] sm:$0x7f] %vm4596, %v4521
  %4656 = vst.msk [vmem:[#allocation2 + $0x1e1] sm:$0xff] %vm4594, %v4523
  %4657 = vst.msk [vmem:[#allocation2 + $0x1e9] sm:$0x7f] %vm4596, %v4525
  %4658 = vst.msk [vmem:[#allocation2 + $0x1f1] sm:$0xff] %vm4594, %v4527
  %4659 = vst.msk [vmem:[#allocation2 + $0x1f9] sm:$0x7f] %vm4596, %v4529
  %4660 = vrot.lane.b32.xlu0 %v3664, 16
  %v4661 = vpop.permute.xlu0 %4660
  %4662 = vrot.lane.b32.xlu0 %v3665, 16
  %v4663 = vpop.permute.xlu0 %4662
  %4664 = vrot.lane.b32.xlu0 %v3666, 16
  %v4665 = vpop.permute.xlu0 %4664
  %4666 = vrot.lane.b32.xlu0 %v3667, 16
  %v4667 = vpop.permute.xlu0 %4666
  %4668 = vrot.lane.b32.xlu0 %v3668, 16
  %v4669 = vpop.permute.xlu0 %4668
  %4670 = vrot.lane.b32.xlu0 %v3669, 16
  %v4671 = vpop.permute.xlu0 %4670
  %4672 = vrot.lane.b32.xlu0 %v3670, 16
  %v4673 = vpop.permute.xlu0 %4672
  %4674 = vrot.lane.b32.xlu0 %v3671, 16
  %v4675 = vpop.permute.xlu0 %4674
  %4676 = vrot.lane.b32.xlu0 %v3672, 16
  %v4677 = vpop.permute.xlu0 %4676
  %4678 = vrot.lane.b32.xlu0 %v3673, 16
  %v4679 = vpop.permute.xlu0 %4678
  %4680 = vrot.lane.b32.xlu0 %v3674, 16
  %v4681 = vpop.permute.xlu0 %4680
  %4682 = vrot.lane.b32.xlu0 %v3675, 16
  %v4683 = vpop.permute.xlu0 %4682
  %4684 = vrot.lane.b32.xlu0 %v3676, 16
  %v4685 = vpop.permute.xlu0 %4684
  %4686 = vrot.lane.b32.xlu0 %v3677, 16
  %v4687 = vpop.permute.xlu0 %4686
  %4688 = vrot.lane.b32.xlu0 %v3678, 16
  %v4689 = vpop.permute.xlu0 %4688
  %4690 = vrot.lane.b32.xlu0 %v3679, 16
  %v4691 = vpop.permute.xlu0 %4690
  %4692 = vrot.lane.b32.xlu0 %v3680, 16
  %v4693 = vpop.permute.xlu0 %4692
  %4694 = vrot.lane.b32.xlu0 %v3681, 16
  %v4695 = vpop.permute.xlu0 %4694
  %4696 = vrot.lane.b32.xlu0 %v3682, 16
  %v4697 = vpop.permute.xlu0 %4696
  %4698 = vrot.lane.b32.xlu0 %v3683, 16
  %v4699 = vpop.permute.xlu0 %4698
  %4700 = vrot.lane.b32.xlu0 %v3684, 16
  %v4701 = vpop.permute.xlu0 %4700
  %4702 = vrot.lane.b32.xlu0 %v3685, 16
  %v4703 = vpop.permute.xlu0 %4702
  %4704 = vrot.lane.b32.xlu0 %v3686, 16
  %v4705 = vpop.permute.xlu0 %4704
  %4706 = vrot.lane.b32.xlu0 %v3687, 16
  %v4707 = vpop.permute.xlu0 %4706
  %4708 = vrot.lane.b32.xlu0 %v3688, 16
  %v4709 = vpop.permute.xlu0 %4708
  %4710 = vrot.lane.b32.xlu0 %v3689, 16
  %v4711 = vpop.permute.xlu0 %4710
  %4712 = vrot.lane.b32.xlu0 %v3690, 16
  %v4713 = vpop.permute.xlu0 %4712
  %4714 = vrot.lane.b32.xlu0 %v3691, 16
  %v4715 = vpop.permute.xlu0 %4714
  %4716 = vrot.lane.b32.xlu0 %v3692, 16
  %v4717 = vpop.permute.xlu0 %4716
  %4718 = vrot.lane.b32.xlu0 %v3693, 16
  %v4719 = vpop.permute.xlu0 %4718
  %4720 = vrot.lane.b32.xlu0 %v3694, 16
  %v4721 = vpop.permute.xlu0 %4720
  %4722 = vrot.lane.b32.xlu0 %v3695, 16
  %v4723 = vpop.permute.xlu0 %4722
  %4724 = vrot.lane.b32.xlu0 %v3696, 16
  %v4725 = vpop.permute.xlu0 %4724
  %4726 = vrot.lane.b32.xlu0 %v3697, 16
  %v4727 = vpop.permute.xlu0 %4726
  %4728 = vrot.lane.b32.xlu0 %v3698, 16
  %v4729 = vpop.permute.xlu0 %4728
  %4730 = vrot.lane.b32.xlu0 %v3699, 16
  %v4731 = vpop.permute.xlu0 %4730
  %4732 = vrot.lane.b32.xlu0 %v3700, 16
  %v4733 = vpop.permute.xlu0 %4732
  %4734 = vrot.lane.b32.xlu0 %v3701, 16
  %v4735 = vpop.permute.xlu0 %4734
  %4736 = vrot.lane.b32.xlu0 %v3702, 16
  %v4737 = vpop.permute.xlu0 %4736
  %4738 = vrot.lane.b32.xlu0 %v3703, 16
  %v4739 = vpop.permute.xlu0 %4738
  %4740 = vrot.lane.b32.xlu0 %v3704, 16
  %v4741 = vpop.permute.xlu0 %4740
  %4742 = vrot.lane.b32.xlu0 %v3705, 16
  %v4743 = vpop.permute.xlu0 %4742
  %4744 = vrot.lane.b32.xlu0 %v3706, 16
  %v4745 = vpop.permute.xlu0 %4744
  %4746 = vrot.lane.b32.xlu0 %v3707, 16
  %v4747 = vpop.permute.xlu0 %4746
  %4748 = vrot.lane.b32.xlu0 %v3708, 16
  %v4749 = vpop.permute.xlu0 %4748
  %4750 = vrot.lane.b32.xlu0 %v3709, 16
  %v4751 = vpop.permute.xlu0 %4750
  %4752 = vrot.lane.b32.xlu0 %v3710, 16
  %v4753 = vpop.permute.xlu0 %4752
  %4754 = vrot.lane.b32.xlu0 %v3711, 16
  %v4755 = vpop.permute.xlu0 %4754
  %4756 = vrot.lane.b32.xlu0 %v3712, 16
  %v4757 = vpop.permute.xlu0 %4756
  %4758 = vrot.lane.b32.xlu0 %v3713, 16
  %v4759 = vpop.permute.xlu0 %4758
  %4760 = vrot.lane.b32.xlu0 %v3714, 16
  %v4761 = vpop.permute.xlu0 %4760
  %4762 = vrot.lane.b32.xlu0 %v3715, 16
  %v4763 = vpop.permute.xlu0 %4762
  %4764 = vrot.lane.b32.xlu0 %v3716, 16
  %v4765 = vpop.permute.xlu0 %4764
  %4766 = vrot.lane.b32.xlu0 %v3717, 16
  %v4767 = vpop.permute.xlu0 %4766
  %4768 = vrot.lane.b32.xlu0 %v3718, 16
  %v4769 = vpop.permute.xlu0 %4768
  %4770 = vrot.lane.b32.xlu0 %v3719, 16
  %v4771 = vpop.permute.xlu0 %4770
  %4772 = vrot.lane.b32.xlu0 %v3720, 16
  %v4773 = vpop.permute.xlu0 %4772
  %4774 = vrot.lane.b32.xlu0 %v3721, 16
  %v4775 = vpop.permute.xlu0 %4774
  %4776 = vrot.lane.b32.xlu0 %v3722, 16
  %v4777 = vpop.permute.xlu0 %4776
  %4778 = vrot.lane.b32.xlu0 %v3723, 16
  %v4779 = vpop.permute.xlu0 %4778
  %4780 = vrot.lane.b32.xlu0 %v3724, 16
  %v4781 = vpop.permute.xlu0 %4780
  %4782 = vrot.lane.b32.xlu0 %v3725, 16
  %v4783 = vpop.permute.xlu0 %4782
  %4784 = vrot.lane.b32.xlu0 %v3726, 16
  %v4785 = vpop.permute.xlu0 %4784
  %4786 = vrot.lane.b32.xlu0 %v3727, 16
  %v4787 = vpop.permute.xlu0 %4786
  %vm4852 = vcmask 162944
  %4853 = vst.msk [vmem:[#allocation2] sm:$0xff] %vm4852, %v4661
  %4854 = vst.msk [vmem:[#allocation2 + $0x8] sm:$0xff] %vm4852, %v4663
  %4855 = vst.msk [vmem:[#allocation2 + $0x10] sm:$0xff] %vm4852, %v4665
  %4856 = vst.msk [vmem:[#allocation2 + $0x18] sm:$0xff] %vm4852, %v4667
  %4857 = vst.msk [vmem:[#allocation2 + $0x20] sm:$0xff] %vm4852, %v4669
  %4858 = vst.msk [vmem:[#allocation2 + $0x28] sm:$0xff] %vm4852, %v4671
  %4859 = vst.msk [vmem:[#allocation2 + $0x30] sm:$0xff] %vm4852, %v4673
  %4860 = vst.msk [vmem:[#allocation2 + $0x38] sm:$0xff] %vm4852, %v4675
  %4861 = vst.msk [vmem:[#allocation2 + $0x40] sm:$0xff] %vm4852, %v4677
  %4862 = vst.msk [vmem:[#allocation2 + $0x48] sm:$0xff] %vm4852, %v4679
  %4863 = vst.msk [vmem:[#allocation2 + $0x50] sm:$0xff] %vm4852, %v4681
  %4864 = vst.msk [vmem:[#allocation2 + $0x58] sm:$0xff] %vm4852, %v4683
  %4865 = vst.msk [vmem:[#allocation2 + $0x60] sm:$0xff] %vm4852, %v4685
  %4866 = vst.msk [vmem:[#allocation2 + $0x68] sm:$0xff] %vm4852, %v4687
  %4867 = vst.msk [vmem:[#allocation2 + $0x70] sm:$0xff] %vm4852, %v4689
  %4868 = vst.msk [vmem:[#allocation2 + $0x78] sm:$0xff] %vm4852, %v4691
  %4869 = vst.msk [vmem:[#allocation2 + $0x80] sm:$0xff] %vm4852, %v4693
  %4870 = vst.msk [vmem:[#allocation2 + $0x88] sm:$0xff] %vm4852, %v4695
  %4871 = vst.msk [vmem:[#allocation2 + $0x90] sm:$0xff] %vm4852, %v4697
  %4872 = vst.msk [vmem:[#allocation2 + $0x98] sm:$0xff] %vm4852, %v4699
  %4873 = vst.msk [vmem:[#allocation2 + $0xa0] sm:$0xff] %vm4852, %v4701
  %4874 = vst.msk [vmem:[#allocation2 + $0xa8] sm:$0xff] %vm4852, %v4703
  %4875 = vst.msk [vmem:[#allocation2 + $0xb0] sm:$0xff] %vm4852, %v4705
  %4876 = vst.msk [vmem:[#allocation2 + $0xb8] sm:$0xff] %vm4852, %v4707
  %4877 = vst.msk [vmem:[#allocation2 + $0xc0] sm:$0xff] %vm4852, %v4709
  %4878 = vst.msk [vmem:[#allocation2 + $0xc8] sm:$0xff] %vm4852, %v4711
  %4879 = vst.msk [vmem:[#allocation2 + $0xd0] sm:$0xff] %vm4852, %v4713
  %4880 = vst.msk [vmem:[#allocation2 + $0xd8] sm:$0xff] %vm4852, %v4715
  %4881 = vst.msk [vmem:[#allocation2 + $0xe0] sm:$0xff] %vm4852, %v4717
  %4882 = vst.msk [vmem:[#allocation2 + $0xe8] sm:$0xff] %vm4852, %v4719
  %4883 = vst.msk [vmem:[#allocation2 + $0xf0] sm:$0xff] %vm4852, %v4721
  %4884 = vst.msk [vmem:[#allocation2 + $0xf8] sm:$0xff] %vm4852, %v4723
  %4885 = vst.msk [vmem:[#allocation2 + $0x100] sm:$0xff] %vm4852, %v4725
  %4886 = vst.msk [vmem:[#allocation2 + $0x108] sm:$0xff] %vm4852, %v4727
  %4887 = vst.msk [vmem:[#allocation2 + $0x110] sm:$0xff] %vm4852, %v4729
  %4888 = vst.msk [vmem:[#allocation2 + $0x118] sm:$0xff] %vm4852, %v4731
  %4889 = vst.msk [vmem:[#allocation2 + $0x120] sm:$0xff] %vm4852, %v4733
  %4890 = vst.msk [vmem:[#allocation2 + $0x128] sm:$0xff] %vm4852, %v4735
  %4891 = vst.msk [vmem:[#allocation2 + $0x130] sm:$0xff] %vm4852, %v4737
  %4892 = vst.msk [vmem:[#allocation2 + $0x138] sm:$0xff] %vm4852, %v4739
  %4893 = vst.msk [vmem:[#allocation2 + $0x140] sm:$0xff] %vm4852, %v4741
  %4894 = vst.msk [vmem:[#allocation2 + $0x148] sm:$0xff] %vm4852, %v4743
  %4895 = vst.msk [vmem:[#allocation2 + $0x150] sm:$0xff] %vm4852, %v4745
  %4896 = vst.msk [vmem:[#allocation2 + $0x158] sm:$0xff] %vm4852, %v4747
  %4897 = vst.msk [vmem:[#allocation2 + $0x160] sm:$0xff] %vm4852, %v4749
  %4898 = vst.msk [vmem:[#allocation2 + $0x168] sm:$0xff] %vm4852, %v4751
  %4899 = vst.msk [vmem:[#allocation2 + $0x170] sm:$0xff] %vm4852, %v4753
  %4900 = vst.msk [vmem:[#allocation2 + $0x178] sm:$0xff] %vm4852, %v4755
  %4901 = vst.msk [vmem:[#allocation2 + $0x180] sm:$0xff] %vm4852, %v4757
  %4902 = vst.msk [vmem:[#allocation2 + $0x188] sm:$0xff] %vm4852, %v4759
  %4903 = vst.msk [vmem:[#allocation2 + $0x190] sm:$0xff] %vm4852, %v4761
  %4904 = vst.msk [vmem:[#allocation2 + $0x198] sm:$0xff] %vm4852, %v4763
  %4905 = vst.msk [vmem:[#allocation2 + $0x1a0] sm:$0xff] %vm4852, %v4765
  %4906 = vst.msk [vmem:[#allocation2 + $0x1a8] sm:$0xff] %vm4852, %v4767
  %4907 = vst.msk [vmem:[#allocation2 + $0x1b0] sm:$0xff] %vm4852, %v4769
  %4908 = vst.msk [vmem:[#allocation2 + $0x1b8] sm:$0xff] %vm4852, %v4771
  %4909 = vst.msk [vmem:[#allocation2 + $0x1c0] sm:$0xff] %vm4852, %v4773
  %4910 = vst.msk [vmem:[#allocation2 + $0x1c8] sm:$0xff] %vm4852, %v4775
  %4911 = vst.msk [vmem:[#allocation2 + $0x1d0] sm:$0xff] %vm4852, %v4777
  %4912 = vst.msk [vmem:[#allocation2 + $0x1d8] sm:$0xff] %vm4852, %v4779
  %4913 = vst.msk [vmem:[#allocation2 + $0x1e0] sm:$0xff] %vm4852, %v4781
  %4914 = vst.msk [vmem:[#allocation2 + $0x1e8] sm:$0xff] %vm4852, %v4783
  %4915 = vst.msk [vmem:[#allocation2 + $0x1f0] sm:$0xff] %vm4852, %v4785
  %4916 = vst.msk [vmem:[#allocation2 + $0x1f8] sm:$0xff] %vm4852, %v4787
  %4917 = vrot.lane.b32.xlu0 %v3664, 20
  %v4918 = vpop.permute.xlu0 %4917
  %4919 = vrot.lane.b32.xlu0 %v3665, 20
  %v4920 = vpop.permute.xlu0 %4919
  %4921 = vrot.lane.b32.xlu0 %v3666, 20
  %v4922 = vpop.permute.xlu0 %4921
  %4923 = vrot.lane.b32.xlu0 %v3667, 20
  %v4924 = vpop.permute.xlu0 %4923
  %4925 = vrot.lane.b32.xlu0 %v3668, 20
  %v4926 = vpop.permute.xlu0 %4925
  %4927 = vrot.lane.b32.xlu0 %v3669, 20
  %v4928 = vpop.permute.xlu0 %4927
  %4929 = vrot.lane.b32.xlu0 %v3670, 20
  %v4930 = vpop.permute.xlu0 %4929
  %4931 = vrot.lane.b32.xlu0 %v3671, 20
  %v4932 = vpop.permute.xlu0 %4931
  %4933 = vrot.lane.b32.xlu0 %v3672, 20
  %v4934 = vpop.permute.xlu0 %4933
  %4935 = vrot.lane.b32.xlu0 %v3673, 20
  %v4936 = vpop.permute.xlu0 %4935
  %4937 = vrot.lane.b32.xlu0 %v3674, 20
  %v4938 = vpop.permute.xlu0 %4937
  %4939 = vrot.lane.b32.xlu0 %v3675, 20
  %v4940 = vpop.permute.xlu0 %4939
  %4941 = vrot.lane.b32.xlu0 %v3676, 20
  %v4942 = vpop.permute.xlu0 %4941
  %4943 = vrot.lane.b32.xlu0 %v3677, 20
  %v4944 = vpop.permute.xlu0 %4943
  %4945 = vrot.lane.b32.xlu0 %v3678, 20
  %v4946 = vpop.permute.xlu0 %4945
  %4947 = vrot.lane.b32.xlu0 %v3679, 20
  %v4948 = vpop.permute.xlu0 %4947
  %4949 = vrot.lane.b32.xlu0 %v3680, 20
  %v4950 = vpop.permute.xlu0 %4949
  %4951 = vrot.lane.b32.xlu0 %v3681, 20
  %v4952 = vpop.permute.xlu0 %4951
  %4953 = vrot.lane.b32.xlu0 %v3682, 20
  %v4954 = vpop.permute.xlu0 %4953
  %4955 = vrot.lane.b32.xlu0 %v3683, 20
  %v4956 = vpop.permute.xlu0 %4955
  %4957 = vrot.lane.b32.xlu0 %v3684, 20
  %v4958 = vpop.permute.xlu0 %4957
  %4959 = vrot.lane.b32.xlu0 %v3685, 20
  %v4960 = vpop.permute.xlu0 %4959
  %4961 = vrot.lane.b32.xlu0 %v3686, 20
  %v4962 = vpop.permute.xlu0 %4961
  %4963 = vrot.lane.b32.xlu0 %v3687, 20
  %v4964 = vpop.permute.xlu0 %4963
  %4965 = vrot.lane.b32.xlu0 %v3688, 20
  %v4966 = vpop.permute.xlu0 %4965
  %4967 = vrot.lane.b32.xlu0 %v3689, 20
  %v4968 = vpop.permute.xlu0 %4967
  %4969 = vrot.lane.b32.xlu0 %v3690, 20
  %v4970 = vpop.permute.xlu0 %4969
  %4971 = vrot.lane.b32.xlu0 %v3691, 20
  %v4972 = vpop.permute.xlu0 %4971
  %4973 = vrot.lane.b32.xlu0 %v3692, 20
  %v4974 = vpop.permute.xlu0 %4973
  %4975 = vrot.lane.b32.xlu0 %v3693, 20
  %v4976 = vpop.permute.xlu0 %4975
  %4977 = vrot.lane.b32.xlu0 %v3694, 20
  %v4978 = vpop.permute.xlu0 %4977
  %4979 = vrot.lane.b32.xlu0 %v3695, 20
  %v4980 = vpop.permute.xlu0 %4979
  %4981 = vrot.lane.b32.xlu0 %v3696, 20
  %v4982 = vpop.permute.xlu0 %4981
  %4983 = vrot.lane.b32.xlu0 %v3697, 20
  %v4984 = vpop.permute.xlu0 %4983
  %4985 = vrot.lane.b32.xlu0 %v3698, 20
  %v4986 = vpop.permute.xlu0 %4985
  %4987 = vrot.lane.b32.xlu0 %v3699, 20
  %v4988 = vpop.permute.xlu0 %4987
  %4989 = vrot.lane.b32.xlu0 %v3700, 20
  %v4990 = vpop.permute.xlu0 %4989
  %4991 = vrot.lane.b32.xlu0 %v3701, 20
  %v4992 = vpop.permute.xlu0 %4991
  %4993 = vrot.lane.b32.xlu0 %v3702, 20
  %v4994 = vpop.permute.xlu0 %4993
  %4995 = vrot.lane.b32.xlu0 %v3703, 20
  %v4996 = vpop.permute.xlu0 %4995
  %4997 = vrot.lane.b32.xlu0 %v3704, 20
  %v4998 = vpop.permute.xlu0 %4997
  %4999 = vrot.lane.b32.xlu0 %v3705, 20
  %v5000 = vpop.permute.xlu0 %4999
  %5001 = vrot.lane.b32.xlu0 %v3706, 20
  %v5002 = vpop.permute.xlu0 %5001
  %5003 = vrot.lane.b32.xlu0 %v3707, 20
  %v5004 = vpop.permute.xlu0 %5003
  %5005 = vrot.lane.b32.xlu0 %v3708, 20
  %v5006 = vpop.permute.xlu0 %5005
  %5007 = vrot.lane.b32.xlu0 %v3709, 20
  %v5008 = vpop.permute.xlu0 %5007
  %5009 = vrot.lane.b32.xlu0 %v3710, 20
  %v5010 = vpop.permute.xlu0 %5009
  %5011 = vrot.lane.b32.xlu0 %v3711, 20
  %v5012 = vpop.permute.xlu0 %5011
  %5013 = vrot.lane.b32.xlu0 %v3712, 20
  %v5014 = vpop.permute.xlu0 %5013
  %5015 = vrot.lane.b32.xlu0 %v3713, 20
  %v5016 = vpop.permute.xlu0 %5015
  %5017 = vrot.lane.b32.xlu0 %v3714, 20
  %v5018 = vpop.permute.xlu0 %5017
  %5019 = vrot.lane.b32.xlu0 %v3715, 20
  %v5020 = vpop.permute.xlu0 %5019
  %5021 = vrot.lane.b32.xlu0 %v3716, 20
  %v5022 = vpop.permute.xlu0 %5021
  %5023 = vrot.lane.b32.xlu0 %v3717, 20
  %v5024 = vpop.permute.xlu0 %5023
  %5025 = vrot.lane.b32.xlu0 %v3718, 20
  %v5026 = vpop.permute.xlu0 %5025
  %5027 = vrot.lane.b32.xlu0 %v3719, 20
  %v5028 = vpop.permute.xlu0 %5027
  %5029 = vrot.lane.b32.xlu0 %v3720, 20
  %v5030 = vpop.permute.xlu0 %5029
  %5031 = vrot.lane.b32.xlu0 %v3721, 20
  %v5032 = vpop.permute.xlu0 %5031
  %5033 = vrot.lane.b32.xlu0 %v3722, 20
  %v5034 = vpop.permute.xlu0 %5033
  %5035 = vrot.lane.b32.xlu0 %v3723, 20
  %v5036 = vpop.permute.xlu0 %5035
  %5037 = vrot.lane.b32.xlu0 %v3724, 20
  %v5038 = vpop.permute.xlu0 %5037
  %5039 = vrot.lane.b32.xlu0 %v3725, 20
  %v5040 = vpop.permute.xlu0 %5039
  %5041 = vrot.lane.b32.xlu0 %v3726, 20
  %v5042 = vpop.permute.xlu0 %5041
  %5043 = vrot.lane.b32.xlu0 %v3727, 20
  %v5044 = vpop.permute.xlu0 %5043
  %vm5109 = vcmask 195745
  %5110 = vst.msk [vmem:[#allocation2 - $0x1] sm:$0xfe] %vm5109, %v4918
  %vm5111 = vcmask 195744
  %5112 = vst.msk [vmem:[#allocation2 + $0x7] sm:$0xff] %vm5111, %v4920
  %5113 = vst.msk [vmem:[#allocation2 + $0xf] sm:$0xfe] %vm5109, %v4922
  %5114 = vst.msk [vmem:[#allocation2 + $0x17] sm:$0xff] %vm5111, %v4924
  %5115 = vst.msk [vmem:[#allocation2 + $0x1f] sm:$0xfe] %vm5109, %v4926
  %5116 = vst.msk [vmem:[#allocation2 + $0x27] sm:$0xff] %vm5111, %v4928
  %5117 = vst.msk [vmem:[#allocation2 + $0x2f] sm:$0xfe] %vm5109, %v4930
  %5118 = vst.msk [vmem:[#allocation2 + $0x37] sm:$0xff] %vm5111, %v4932
  %5119 = vst.msk [vmem:[#allocation2 + $0x3f] sm:$0xfe] %vm5109, %v4934
  %5120 = vst.msk [vmem:[#allocation2 + $0x47] sm:$0xff] %vm5111, %v4936
  %5121 = vst.msk [vmem:[#allocation2 + $0x4f] sm:$0xfe] %vm5109, %v4938
  %5122 = vst.msk [vmem:[#allocation2 + $0x57] sm:$0xff] %vm5111, %v4940
  %5123 = vst.msk [vmem:[#allocation2 + $0x5f] sm:$0xfe] %vm5109, %v4942
  %5124 = vst.msk [vmem:[#allocation2 + $0x67] sm:$0xff] %vm5111, %v4944
  %5125 = vst.msk [vmem:[#allocation2 + $0x6f] sm:$0xfe] %vm5109, %v4946
  %5126 = vst.msk [vmem:[#allocation2 + $0x77] sm:$0xff] %vm5111, %v4948
  %5127 = vst.msk [vmem:[#allocation2 + $0x7f] sm:$0xfe] %vm5109, %v4950
  %5128 = vst.msk [vmem:[#allocation2 + $0x87] sm:$0xff] %vm5111, %v4952
  %5129 = vst.msk [vmem:[#allocation2 + $0x8f] sm:$0xfe] %vm5109, %v4954
  %5130 = vst.msk [vmem:[#allocation2 + $0x97] sm:$0xff] %vm5111, %v4956
  %5131 = vst.msk [vmem:[#allocation2 + $0x9f] sm:$0xfe] %vm5109, %v4958
  %5132 = vst.msk [vmem:[#allocation2 + $0xa7] sm:$0xff] %vm5111, %v4960
  %5133 = vst.msk [vmem:[#allocation2 + $0xaf] sm:$0xfe] %vm5109, %v4962
  %5134 = vst.msk [vmem:[#allocation2 + $0xb7] sm:$0xff] %vm5111, %v4964
  %5135 = vst.msk [vmem:[#allocation2 + $0xbf] sm:$0xfe] %vm5109, %v4966
  %5136 = vst.msk [vmem:[#allocation2 + $0xc7] sm:$0xff] %vm5111, %v4968
  %5137 = vst.msk [vmem:[#allocation2 + $0xcf] sm:$0xfe] %vm5109, %v4970
  %5138 = vst.msk [vmem:[#allocation2 + $0xd7] sm:$0xff] %vm5111, %v4972
  %5139 = vst.msk [vmem:[#allocation2 + $0xdf] sm:$0xfe] %vm5109, %v4974
  %5140 = vst.msk [vmem:[#allocation2 + $0xe7] sm:$0xff] %vm5111, %v4976
  %5141 = vst.msk [vmem:[#allocation2 + $0xef] sm:$0xfe] %vm5109, %v4978
  %5142 = vst.msk [vmem:[#allocation2 + $0xf7] sm:$0xff] %vm5111, %v4980
  %5143 = vst.msk [vmem:[#allocation2 + $0xff] sm:$0xfe] %vm5109, %v4982
  %5144 = vst.msk [vmem:[#allocation2 + $0x107] sm:$0xff] %vm5111, %v4984
  %5145 = vst.msk [vmem:[#allocation2 + $0x10f] sm:$0xfe] %vm5109, %v4986
  %5146 = vst.msk [vmem:[#allocation2 + $0x117] sm:$0xff] %vm5111, %v4988
  %5147 = vst.msk [vmem:[#allocation2 + $0x11f] sm:$0xfe] %vm5109, %v4990
  %5148 = vst.msk [vmem:[#allocation2 + $0x127] sm:$0xff] %vm5111, %v4992
  %5149 = vst.msk [vmem:[#allocation2 + $0x12f] sm:$0xfe] %vm5109, %v4994
  %5150 = vst.msk [vmem:[#allocation2 + $0x137] sm:$0xff] %vm5111, %v4996
  %5151 = vst.msk [vmem:[#allocation2 + $0x13f] sm:$0xfe] %vm5109, %v4998
  %5152 = vst.msk [vmem:[#allocation2 + $0x147] sm:$0xff] %vm5111, %v5000
  %5153 = vst.msk [vmem:[#allocation2 + $0x14f] sm:$0xfe] %vm5109, %v5002
  %5154 = vst.msk [vmem:[#allocation2 + $0x157] sm:$0xff] %vm5111, %v5004
  %5155 = vst.msk [vmem:[#allocation2 + $0x15f] sm:$0xfe] %vm5109, %v5006
  %5156 = vst.msk [vmem:[#allocation2 + $0x167] sm:$0xff] %vm5111, %v5008
  %5157 = vst.msk [vmem:[#allocation2 + $0x16f] sm:$0xfe] %vm5109, %v5010
  %5158 = vst.msk [vmem:[#allocation2 + $0x177] sm:$0xff] %vm5111, %v5012
  %5159 = vst.msk [vmem:[#allocation2 + $0x17f] sm:$0xfe] %vm5109, %v5014
  %5160 = vst.msk [vmem:[#allocation2 + $0x187] sm:$0xff] %vm5111, %v5016
  %5161 = vst.msk [vmem:[#allocation2 + $0x18f] sm:$0xfe] %vm5109, %v5018
  %5162 = vst.msk [vmem:[#allocation2 + $0x197] sm:$0xff] %vm5111, %v5020
  %5163 = vst.msk [vmem:[#allocation2 + $0x19f] sm:$0xfe] %vm5109, %v5022
  %5164 = vst.msk [vmem:[#allocation2 + $0x1a7] sm:$0xff] %vm5111, %v5024
  %5165 = vst.msk [vmem:[#allocation2 + $0x1af] sm:$0xfe] %vm5109, %v5026
  %5166 = vst.msk [vmem:[#allocation2 + $0x1b7] sm:$0xff] %vm5111, %v5028
  %5167 = vst.msk [vmem:[#allocation2 + $0x1bf] sm:$0xfe] %vm5109, %v5030
  %5168 = vst.msk [vmem:[#allocation2 + $0x1c7] sm:$0xff] %vm5111, %v5032
  %5169 = vst.msk [vmem:[#allocation2 + $0x1cf] sm:$0xfe] %vm5109, %v5034
  %5170 = vst.msk [vmem:[#allocation2 + $0x1d7] sm:$0xff] %vm5111, %v5036
  %5171 = vst.msk [vmem:[#allocation2 + $0x1df] sm:$0xfe] %vm5109, %v5038
  %5172 = vst.msk [vmem:[#allocation2 + $0x1e7] sm:$0xff] %vm5111, %v5040
  %5173 = vst.msk [vmem:[#allocation2 + $0x1ef] sm:$0xfe] %vm5109, %v5042
  %5174 = vst.msk [vmem:[#allocation2 + $0x1f7] sm:$0xff] %vm5111, %v5044
  %5175 = vrot.lane.b32.xlu0 %v3666, 24
  %v5176 = vpop.permute.xlu0 %5175
  %5177 = vrot.lane.b32.xlu0 %v3667, 24
  %v5178 = vpop.permute.xlu0 %5177
  %5179 = vrot.lane.b32.xlu0 %v3668, 24
  %v5180 = vpop.permute.xlu0 %5179
  %5181 = vrot.lane.b32.xlu0 %v3669, 24
  %v5182 = vpop.permute.xlu0 %5181
  %5183 = vrot.lane.b32.xlu0 %v3670, 24
  %v5184 = vpop.permute.xlu0 %5183
  %5185 = vrot.lane.b32.xlu0 %v3671, 24
  %v5186 = vpop.permute.xlu0 %5185
  %5187 = vrot.lane.b32.xlu0 %v3672, 24
  %v5188 = vpop.permute.xlu0 %5187
  %5189 = vrot.lane.b32.xlu0 %v3673, 24
  %v5190 = vpop.permute.xlu0 %5189
  %5191 = vrot.lane.b32.xlu0 %v3674, 24
  %v5192 = vpop.permute.xlu0 %5191
  %5193 = vrot.lane.b32.xlu0 %v3675, 24
  %v5194 = vpop.permute.xlu0 %5193
  %5195 = vrot.lane.b32.xlu0 %v3676, 24
  %v5196 = vpop.permute.xlu0 %5195
  %5197 = vrot.lane.b32.xlu0 %v3677, 24
  %v5198 = vpop.permute.xlu0 %5197
  %5199 = vrot.lane.b32.xlu0 %v3678, 24
  %v5200 = vpop.permute.xlu0 %5199
  %5201 = vrot.lane.b32.xlu0 %v3679, 24
  %v5202 = vpop.permute.xlu0 %5201
  %5203 = vrot.lane.b32.xlu0 %v3680, 24
  %v5204 = vpop.permute.xlu0 %5203
  %5205 = vrot.lane.b32.xlu0 %v3681, 24
  %v5206 = vpop.permute.xlu0 %5205
  %5207 = vrot.lane.b32.xlu0 %v3682, 24
  %v5208 = vpop.permute.xlu0 %5207
  %5209 = vrot.lane.b32.xlu0 %v3683, 24
  %v5210 = vpop.permute.xlu0 %5209
  %5211 = vrot.lane.b32.xlu0 %v3684, 24
  %v5212 = vpop.permute.xlu0 %5211
  %5213 = vrot.lane.b32.xlu0 %v3685, 24
  %v5214 = vpop.permute.xlu0 %5213
  %5215 = vrot.lane.b32.xlu0 %v3686, 24
  %v5216 = vpop.permute.xlu0 %5215
  %5217 = vrot.lane.b32.xlu0 %v3687, 24
  %v5218 = vpop.permute.xlu0 %5217
  %5219 = vrot.lane.b32.xlu0 %v3688, 24
  %v5220 = vpop.permute.xlu0 %5219
  %5221 = vrot.lane.b32.xlu0 %v3689, 24
  %v5222 = vpop.permute.xlu0 %5221
  %5223 = vrot.lane.b32.xlu0 %v3690, 24
  %v5224 = vpop.permute.xlu0 %5223
  %5225 = vrot.lane.b32.xlu0 %v3691, 24
  %v5226 = vpop.permute.xlu0 %5225
  %5227 = vrot.lane.b32.xlu0 %v3692, 24
  %v5228 = vpop.permute.xlu0 %5227
  %5229 = vrot.lane.b32.xlu0 %v3693, 24
  %v5230 = vpop.permute.xlu0 %5229
  %5231 = vrot.lane.b32.xlu0 %v3694, 24
  %v5232 = vpop.permute.xlu0 %5231
  %5233 = vrot.lane.b32.xlu0 %v3695, 24
  %v5234 = vpop.permute.xlu0 %5233
  %5235 = vrot.lane.b32.xlu0 %v3698, 24
  %v5236 = vpop.permute.xlu0 %5235
  %5237 = vrot.lane.b32.xlu0 %v3699, 24
  %v5238 = vpop.permute.xlu0 %5237
  %5239 = vrot.lane.b32.xlu0 %v3700, 24
  %v5240 = vpop.permute.xlu0 %5239
  %5241 = vrot.lane.b32.xlu0 %v3701, 24
  %v5242 = vpop.permute.xlu0 %5241
  %5243 = vrot.lane.b32.xlu0 %v3702, 24
  %v5244 = vpop.permute.xlu0 %5243
  %5245 = vrot.lane.b32.xlu0 %v3703, 24
  %v5246 = vpop.permute.xlu0 %5245
  %5247 = vrot.lane.b32.xlu0 %v3704, 24
  %v5248 = vpop.permute.xlu0 %5247
  %5249 = vrot.lane.b32.xlu0 %v3705, 24
  %v5250 = vpop.permute.xlu0 %5249
  %5251 = vrot.lane.b32.xlu0 %v3706, 24
  %v5252 = vpop.permute.xlu0 %5251
  %5253 = vrot.lane.b32.xlu0 %v3707, 24
  %v5254 = vpop.permute.xlu0 %5253
  %5255 = vrot.lane.b32.xlu0 %v3708, 24
  %v5256 = vpop.permute.xlu0 %5255
  %5257 = vrot.lane.b32.xlu0 %v3709, 24
  %v5258 = vpop.permute.xlu0 %5257
  %5259 = vrot.lane.b32.xlu0 %v3710, 24
  %v5260 = vpop.permute.xlu0 %5259
  %5261 = vrot.lane.b32.xlu0 %v3711, 24
  %v5262 = vpop.permute.xlu0 %5261
  %5263 = vrot.lane.b32.xlu0 %v3712, 24
  %v5264 = vpop.permute.xlu0 %5263
  %5265 = vrot.lane.b32.xlu0 %v3713, 24
  %v5266 = vpop.permute.xlu0 %5265
  %5267 = vrot.lane.b32.xlu0 %v3714, 24
  %v5268 = vpop.permute.xlu0 %5267
  %5269 = vrot.lane.b32.xlu0 %v3715, 24
  %v5270 = vpop.permute.xlu0 %5269
  %5271 = vrot.lane.b32.xlu0 %v3716, 24
  %v5272 = vpop.permute.xlu0 %5271
  %5273 = vrot.lane.b32.xlu0 %v3717, 24
  %v5274 = vpop.permute.xlu0 %5273
  %5275 = vrot.lane.b32.xlu0 %v3718, 24
  %v5276 = vpop.permute.xlu0 %5275
  %5277 = vrot.lane.b32.xlu0 %v3719, 24
  %v5278 = vpop.permute.xlu0 %5277
  %5279 = vrot.lane.b32.xlu0 %v3720, 24
  %v5280 = vpop.permute.xlu0 %5279
  %5281 = vrot.lane.b32.xlu0 %v3721, 24
  %v5282 = vpop.permute.xlu0 %5281
  %5283 = vrot.lane.b32.xlu0 %v3722, 24
  %v5284 = vpop.permute.xlu0 %5283
  %5285 = vrot.lane.b32.xlu0 %v3723, 24
  %v5286 = vpop.permute.xlu0 %5285
  %5287 = vrot.lane.b32.xlu0 %v3724, 24
  %v5288 = vpop.permute.xlu0 %5287
  %5289 = vrot.lane.b32.xlu0 %v3725, 24
  %v5290 = vpop.permute.xlu0 %5289
  %5291 = vrot.lane.b32.xlu0 %v3726, 24
  %v5292 = vpop.permute.xlu0 %5291
  %5293 = vrot.lane.b32.xlu0 %v3727, 24
  %v5294 = vpop.permute.xlu0 %5293
  %vm5355 = vcmask 228544
  %5356 = vst.msk [vmem:[#allocation2 + $0x1] sm:$0xff] %vm5355, %v5176
  %vm5357 = vcmask 227520
  %5358 = vst.msk [vmem:[#allocation2 + $0x9] sm:$0x7f] %vm5357, %v5178
  %5359 = vst.msk [vmem:[#allocation2 + $0x11] sm:$0xff] %vm5355, %v5180
  %5360 = vst.msk [vmem:[#allocation2 + $0x19] sm:$0x7f] %vm5357, %v5182
  %5361 = vst.msk [vmem:[#allocation2 + $0x21] sm:$0xff] %vm5355, %v5184
  %5362 = vst.msk [vmem:[#allocation2 + $0x29] sm:$0x7f] %vm5357, %v5186
  %5363 = vst.msk [vmem:[#allocation2 + $0x31] sm:$0xff] %vm5355, %v5188
  %5364 = vst.msk [vmem:[#allocation2 + $0x39] sm:$0x7f] %vm5357, %v5190
  %5365 = vst.msk [vmem:[#allocation2 + $0x41] sm:$0xff] %vm5355, %v5192
  %5366 = vst.msk [vmem:[#allocation2 + $0x49] sm:$0x7f] %vm5357, %v5194
  %5367 = vst.msk [vmem:[#allocation2 + $0x51] sm:$0xff] %vm5355, %v5196
  %5368 = vst.msk [vmem:[#allocation2 + $0x59] sm:$0x7f] %vm5357, %v5198
  %5369 = vst.msk [vmem:[#allocation2 + $0x61] sm:$0xff] %vm5355, %v5200
  %5370 = vst.msk [vmem:[#allocation2 + $0x69] sm:$0x7f] %vm5357, %v5202
  %5371 = vst.msk [vmem:[#allocation2 + $0x71] sm:$0xff] %vm5355, %v5204
  %5372 = vst.msk [vmem:[#allocation2 + $0x79] sm:$0x7f] %vm5357, %v5206
  %5373 = vst.msk [vmem:[#allocation2 + $0x81] sm:$0xff] %vm5355, %v5208
  %5374 = vst.msk [vmem:[#allocation2 + $0x89] sm:$0x7f] %vm5357, %v5210
  %5375 = vst.msk [vmem:[#allocation2 + $0x91] sm:$0xff] %vm5355, %v5212
  %5376 = vst.msk [vmem:[#allocation2 + $0x99] sm:$0x7f] %vm5357, %v5214
  %5377 = vst.msk [vmem:[#allocation2 + $0xa1] sm:$0xff] %vm5355, %v5216
  %5378 = vst.msk [vmem:[#allocation2 + $0xa9] sm:$0x7f] %vm5357, %v5218
  %5379 = vst.msk [vmem:[#allocation2 + $0xb1] sm:$0xff] %vm5355, %v5220
  %5380 = vst.msk [vmem:[#allocation2 + $0xb9] sm:$0x7f] %vm5357, %v5222
  %5381 = vst.msk [vmem:[#allocation2 + $0xc1] sm:$0xff] %vm5355, %v5224
  %5382 = vst.msk [vmem:[#allocation2 + $0xc9] sm:$0x7f] %vm5357, %v5226
  %5383 = vst.msk [vmem:[#allocation2 + $0xd1] sm:$0xff] %vm5355, %v5228
  %5384 = vst.msk [vmem:[#allocation2 + $0xd9] sm:$0x7f] %vm5357, %v5230
  %5385 = vst.msk [vmem:[#allocation2 + $0xe1] sm:$0xff] %vm5355, %v5232
  %5386 = vst.msk [vmem:[#allocation2 + $0xe9] sm:$0x7f] %vm5357, %v5234
  %5387 = vst.msk [vmem:[#allocation2 + $0x101] sm:$0xff] %vm5355, %v5236
  %5388 = vst.msk [vmem:[#allocation2 + $0x109] sm:$0x7f] %vm5357, %v5238
  %5389 = vst.msk [vmem:[#allocation2 + $0x111] sm:$0xff] %vm5355, %v5240
  %5390 = vst.msk [vmem:[#allocation2 + $0x119] sm:$0x7f] %vm5357, %v5242
  %5391 = vst.msk [vmem:[#allocation2 + $0x121] sm:$0xff] %vm5355, %v5244
  %5392 = vst.msk [vmem:[#allocation2 + $0x129] sm:$0x7f] %vm5357, %v5246
  %5393 = vst.msk [vmem:[#allocation2 + $0x131] sm:$0xff] %vm5355, %v5248
  %5394 = vst.msk [vmem:[#allocation2 + $0x139] sm:$0x7f] %vm5357, %v5250
  %5395 = vst.msk [vmem:[#allocation2 + $0x141] sm:$0xff] %vm5355, %v5252
  %5396 = vst.msk [vmem:[#allocation2 + $0x149] sm:$0x7f] %vm5357, %v5254
  %5397 = vst.msk [vmem:[#allocation2 + $0x151] sm:$0xff] %vm5355, %v5256
  %5398 = vst.msk [vmem:[#allocation2 + $0x159] sm:$0x7f] %vm5357, %v5258
  %5399 = vst.msk [vmem:[#allocation2 + $0x161] sm:$0xff] %vm5355, %v5260
  %5400 = vst.msk [vmem:[#allocation2 + $0x169] sm:$0x7f] %vm5357, %v5262
  %5401 = vst.msk [vmem:[#allocation2 + $0x171] sm:$0xff] %vm5355, %v5264
  %5402 = vst.msk [vmem:[#allocation2 + $0x179] sm:$0x7f] %vm5357, %v5266
  %5403 = vst.msk [vmem:[#allocation2 + $0x181] sm:$0xff] %vm5355, %v5268
  %5404 = vst.msk [vmem:[#allocation2 + $0x189] sm:$0x7f] %vm5357, %v5270
  %5405 = vst.msk [vmem:[#allocation2 + $0x191] sm:$0xff] %vm5355, %v5272
  %5406 = vst.msk [vmem:[#allocation2 + $0x199] sm:$0x7f] %vm5357, %v5274
  %5407 = vst.msk [vmem:[#allocation2 + $0x1a1] sm:$0xff] %vm5355, %v5276
  %5408 = vst.msk [vmem:[#allocation2 + $0x1a9] sm:$0x7f] %vm5357, %v5278
  %5409 = vst.msk [vmem:[#allocation2 + $0x1b1] sm:$0xff] %vm5355, %v5280
  %5410 = vst.msk [vmem:[#allocation2 + $0x1b9] sm:$0x7f] %vm5357, %v5282
  %5411 = vst.msk [vmem:[#allocation2 + $0x1c1] sm:$0xff] %vm5355, %v5284
  %5412 = vst.msk [vmem:[#allocation2 + $0x1c9] sm:$0x7f] %vm5357, %v5286
  %5413 = vst.msk [vmem:[#allocation2 + $0x1d1] sm:$0xff] %vm5355, %v5288
  %5414 = vst.msk [vmem:[#allocation2 + $0x1d9] sm:$0x7f] %vm5357, %v5290
  %5415 = vst.msk [vmem:[#allocation2 + $0x1e1] sm:$0xff] %vm5355, %v5292
  %5416 = vst.msk [vmem:[#allocation2 + $0x1e9] sm:$0x7f] %vm5357, %v5294
  %5417 = vrot.lane.b32.xlu0 %v3666, 28
  %v5418 = vpop.permute.xlu0 %5417
  %5419 = vrot.lane.b32.xlu0 %v3667, 28
  %v5420 = vpop.permute.xlu0 %5419
  %5421 = vrot.lane.b32.xlu0 %v3668, 28
  %v5422 = vpop.permute.xlu0 %5421
  %5423 = vrot.lane.b32.xlu0 %v3669, 28
  %v5424 = vpop.permute.xlu0 %5423
  %5425 = vrot.lane.b32.xlu0 %v3670, 28
  %v5426 = vpop.permute.xlu0 %5425
  %5427 = vrot.lane.b32.xlu0 %v3671, 28
  %v5428 = vpop.permute.xlu0 %5427
  %5429 = vrot.lane.b32.xlu0 %v3672, 28
  %v5430 = vpop.permute.xlu0 %5429
  %5431 = vrot.lane.b32.xlu0 %v3673, 28
  %v5432 = vpop.permute.xlu0 %5431
  %5433 = vrot.lane.b32.xlu0 %v3674, 28
  %v5434 = vpop.permute.xlu0 %5433
  %5435 = vrot.lane.b32.xlu0 %v3675, 28
  %v5436 = vpop.permute.xlu0 %5435
  %5437 = vrot.lane.b32.xlu0 %v3676, 28
  %v5438 = vpop.permute.xlu0 %5437
  %5439 = vrot.lane.b32.xlu0 %v3677, 28
  %v5440 = vpop.permute.xlu0 %5439
  %5441 = vrot.lane.b32.xlu0 %v3678, 28
  %v5442 = vpop.permute.xlu0 %5441
  %5443 = vrot.lane.b32.xlu0 %v3679, 28
  %v5444 = vpop.permute.xlu0 %5443
  %5445 = vrot.lane.b32.xlu0 %v3680, 28
  %v5446 = vpop.permute.xlu0 %5445
  %5447 = vrot.lane.b32.xlu0 %v3681, 28
  %v5448 = vpop.permute.xlu0 %5447
  %5449 = vrot.lane.b32.xlu0 %v3682, 28
  %v5450 = vpop.permute.xlu0 %5449
  %5451 = vrot.lane.b32.xlu0 %v3683, 28
  %v5452 = vpop.permute.xlu0 %5451
  %5453 = vrot.lane.b32.xlu0 %v3684, 28
  %v5454 = vpop.permute.xlu0 %5453
  %5455 = vrot.lane.b32.xlu0 %v3685, 28
  %v5456 = vpop.permute.xlu0 %5455
  %5457 = vrot.lane.b32.xlu0 %v3686, 28
  %v5458 = vpop.permute.xlu0 %5457
  %5459 = vrot.lane.b32.xlu0 %v3687, 28
  %v5460 = vpop.permute.xlu0 %5459
  %5461 = vrot.lane.b32.xlu0 %v3688, 28
  %v5462 = vpop.permute.xlu0 %5461
  %5463 = vrot.lane.b32.xlu0 %v3689, 28
  %v5464 = vpop.permute.xlu0 %5463
  %5465 = vrot.lane.b32.xlu0 %v3690, 28
  %v5466 = vpop.permute.xlu0 %5465
  %5467 = vrot.lane.b32.xlu0 %v3691, 28
  %v5468 = vpop.permute.xlu0 %5467
  %5469 = vrot.lane.b32.xlu0 %v3692, 28
  %v5470 = vpop.permute.xlu0 %5469
  %5471 = vrot.lane.b32.xlu0 %v3693, 28
  %v5472 = vpop.permute.xlu0 %5471
  %5473 = vrot.lane.b32.xlu0 %v3694, 28
  %v5474 = vpop.permute.xlu0 %5473
  %5475 = vrot.lane.b32.xlu0 %v3695, 28
  %v5476 = vpop.permute.xlu0 %5475
  %5477 = vrot.lane.b32.xlu0 %v3698, 28
  %v5478 = vpop.permute.xlu0 %5477
  %5479 = vrot.lane.b32.xlu0 %v3699, 28
  %v5480 = vpop.permute.xlu0 %5479
  %5481 = vrot.lane.b32.xlu0 %v3700, 28
  %v5482 = vpop.permute.xlu0 %5481
  %5483 = vrot.lane.b32.xlu0 %v3701, 28
  %v5484 = vpop.permute.xlu0 %5483
  %5485 = vrot.lane.b32.xlu0 %v3702, 28
  %v5486 = vpop.permute.xlu0 %5485
  %5487 = vrot.lane.b32.xlu0 %v3703, 28
  %v5488 = vpop.permute.xlu0 %5487
  %5489 = vrot.lane.b32.xlu0 %v3704, 28
  %v5490 = vpop.permute.xlu0 %5489
  %5491 = vrot.lane.b32.xlu0 %v3705, 28
  %v5492 = vpop.permute.xlu0 %5491
  %5493 = vrot.lane.b32.xlu0 %v3706, 28
  %v5494 = vpop.permute.xlu0 %5493
  %5495 = vrot.lane.b32.xlu0 %v3707, 28
  %v5496 = vpop.permute.xlu0 %5495
  %5497 = vrot.lane.b32.xlu0 %v3708, 28
  %v5498 = vpop.permute.xlu0 %5497
  %5499 = vrot.lane.b32.xlu0 %v3709, 28
  %v5500 = vpop.permute.xlu0 %5499
  %5501 = vrot.lane.b32.xlu0 %v3710, 28
  %v5502 = vpop.permute.xlu0 %5501
  %5503 = vrot.lane.b32.xlu0 %v3711, 28
  %v5504 = vpop.permute.xlu0 %5503
  %5505 = vrot.lane.b32.xlu0 %v3712, 28
  %v5506 = vpop.permute.xlu0 %5505
  %5507 = vrot.lane.b32.xlu0 %v3713, 28
  %v5508 = vpop.permute.xlu0 %5507
  %5509 = vrot.lane.b32.xlu0 %v3714, 28
  %v5510 = vpop.permute.xlu0 %5509
  %5511 = vrot.lane.b32.xlu0 %v3715, 28
  %v5512 = vpop.permute.xlu0 %5511
  %5513 = vrot.lane.b32.xlu0 %v3716, 28
  %v5514 = vpop.permute.xlu0 %5513
  %5515 = vrot.lane.b32.xlu0 %v3717, 28
  %v5516 = vpop.permute.xlu0 %5515
  %5517 = vrot.lane.b32.xlu0 %v3718, 28
  %v5518 = vpop.permute.xlu0 %5517
  %5519 = vrot.lane.b32.xlu0 %v3719, 28
  %v5520 = vpop.permute.xlu0 %5519
  %5521 = vrot.lane.b32.xlu0 %v3720, 28
  %v5522 = vpop.permute.xlu0 %5521
  %5523 = vrot.lane.b32.xlu0 %v3721, 28
  %v5524 = vpop.permute.xlu0 %5523
  %5525 = vrot.lane.b32.xlu0 %v3722, 28
  %v5526 = vpop.permute.xlu0 %5525
  %5527 = vrot.lane.b32.xlu0 %v3723, 28
  %v5528 = vpop.permute.xlu0 %5527
  %5529 = vrot.lane.b32.xlu0 %v3724, 28
  %v5530 = vpop.permute.xlu0 %5529
  %5531 = vrot.lane.b32.xlu0 %v3725, 28
  %v5532 = vpop.permute.xlu0 %5531
  %5533 = vrot.lane.b32.xlu0 %v3726, 28
  %v5534 = vpop.permute.xlu0 %5533
  %5535 = vrot.lane.b32.xlu0 %v3727, 28
  %v5536 = vpop.permute.xlu0 %5535
  %vm5597 = vcmask 261344
  %5598 = vst.msk [vmem:[#allocation2] sm:$0xff] %vm5597, %v5418
  %5599 = vst.msk [vmem:[#allocation2 + $0x8] sm:$0xff] %vm5597, %v5420
  %5600 = vst.msk [vmem:[#allocation2 + $0x10] sm:$0xff] %vm5597, %v5422
  %5601 = vst.msk [vmem:[#allocation2 + $0x18] sm:$0xff] %vm5597, %v5424
  %5602 = vst.msk [vmem:[#allocation2 + $0x20] sm:$0xff] %vm5597, %v5426
  %5603 = vst.msk [vmem:[#allocation2 + $0x28] sm:$0xff] %vm5597, %v5428
  %5604 = vst.msk [vmem:[#allocation2 + $0x30] sm:$0xff] %vm5597, %v5430
  %5605 = vst.msk [vmem:[#allocation2 + $0x38] sm:$0xff] %vm5597, %v5432
  %5606 = vst.msk [vmem:[#allocation2 + $0x40] sm:$0xff] %vm5597, %v5434
  %5607 = vst.msk [vmem:[#allocation2 + $0x48] sm:$0xff] %vm5597, %v5436
  %5608 = vst.msk [vmem:[#allocation2 + $0x50] sm:$0xff] %vm5597, %v5438
  %5609 = vst.msk [vmem:[#allocation2 + $0x58] sm:$0xff] %vm5597, %v5440
  %5610 = vst.msk [vmem:[#allocation2 + $0x60] sm:$0xff] %vm5597, %v5442
  %5611 = vst.msk [vmem:[#allocation2 + $0x68] sm:$0xff] %vm5597, %v5444
  %5612 = vst.msk [vmem:[#allocation2 + $0x70] sm:$0xff] %vm5597, %v5446
  %5613 = vst.msk [vmem:[#allocation2 + $0x78] sm:$0xff] %vm5597, %v5448
  %5614 = vst.msk [vmem:[#allocation2 + $0x80] sm:$0xff] %vm5597, %v5450
  %5615 = vst.msk [vmem:[#allocation2 + $0x88] sm:$0xff] %vm5597, %v5452
  %5616 = vst.msk [vmem:[#allocation2 + $0x90] sm:$0xff] %vm5597, %v5454
  %5617 = vst.msk [vmem:[#allocation2 + $0x98] sm:$0xff] %vm5597, %v5456
  %5618 = vst.msk [vmem:[#allocation2 + $0xa0] sm:$0xff] %vm5597, %v5458
  %5619 = vst.msk [vmem:[#allocation2 + $0xa8] sm:$0xff] %vm5597, %v5460
  %5620 = vst.msk [vmem:[#allocation2 + $0xb0] sm:$0xff] %vm5597, %v5462
  %5621 = vst.msk [vmem:[#allocation2 + $0xb8] sm:$0xff] %vm5597, %v5464
  %5622 = vst.msk [vmem:[#allocation2 + $0xc0] sm:$0xff] %vm5597, %v5466
  %5623 = vst.msk [vmem:[#allocation2 + $0xc8] sm:$0xff] %vm5597, %v5468
  %5624 = vst.msk [vmem:[#allocation2 + $0xd0] sm:$0xff] %vm5597, %v5470
  %5625 = vst.msk [vmem:[#allocation2 + $0xd8] sm:$0xff] %vm5597, %v5472
  %5626 = vst.msk [vmem:[#allocation2 + $0xe0] sm:$0xff] %vm5597, %v5474
  %5627 = vst.msk [vmem:[#allocation2 + $0xe8] sm:$0xff] %vm5597, %v5476
  %5628 = vst.msk [vmem:[#allocation2 + $0x100] sm:$0xff] %vm5597, %v5478
  %5629 = vst.msk [vmem:[#allocation2 + $0x108] sm:$0xff] %vm5597, %v5480
  %5630 = vst.msk [vmem:[#allocation2 + $0x110] sm:$0xff] %vm5597, %v5482
  %5631 = vst.msk [vmem:[#allocation2 + $0x118] sm:$0xff] %vm5597, %v5484
  %5632 = vst.msk [vmem:[#allocation2 + $0x120] sm:$0xff] %vm5597, %v5486
  %5633 = vst.msk [vmem:[#allocation2 + $0x128] sm:$0xff] %vm5597, %v5488
  %5634 = vst.msk [vmem:[#allocation2 + $0x130] sm:$0xff] %vm5597, %v5490
  %5635 = vst.msk [vmem:[#allocation2 + $0x138] sm:$0xff] %vm5597, %v5492
  %5636 = vst.msk [vmem:[#allocation2 + $0x140] sm:$0xff] %vm5597, %v5494
  %5637 = vst.msk [vmem:[#allocation2 + $0x148] sm:$0xff] %vm5597, %v5496
  %5638 = vst.msk [vmem:[#allocation2 + $0x150] sm:$0xff] %vm5597, %v5498
  %5639 = vst.msk [vmem:[#allocation2 + $0x158] sm:$0xff] %vm5597, %v5500
  %5640 = vst.msk [vmem:[#allocation2 + $0x160] sm:$0xff] %vm5597, %v5502
  %5641 = vst.msk [vmem:[#allocation2 + $0x168] sm:$0xff] %vm5597, %v5504
  %5642 = vst.msk [vmem:[#allocation2 + $0x170] sm:$0xff] %vm5597, %v5506
  %5643 = vst.msk [vmem:[#allocation2 + $0x178] sm:$0xff] %vm5597, %v5508
  %5644 = vst.msk [vmem:[#allocation2 + $0x180] sm:$0xff] %vm5597, %v5510
  %5645 = vst.msk [vmem:[#allocation2 + $0x188] sm:$0xff] %vm5597, %v5512
  %5646 = vst.msk [vmem:[#allocation2 + $0x190] sm:$0xff] %vm5597, %v5514
  %5647 = vst.msk [vmem:[#allocation2 + $0x198] sm:$0xff] %vm5597, %v5516
  %5648 = vst.msk [vmem:[#allocation2 + $0x1a0] sm:$0xff] %vm5597, %v5518
  %5649 = vst.msk [vmem:[#allocation2 + $0x1a8] sm:$0xff] %vm5597, %v5520
  %5650 = vst.msk [vmem:[#allocation2 + $0x1b0] sm:$0xff] %vm5597, %v5522
  %5651 = vst.msk [vmem:[#allocation2 + $0x1b8] sm:$0xff] %vm5597, %v5524
  %5652 = vst.msk [vmem:[#allocation2 + $0x1c0] sm:$0xff] %vm5597, %v5526
  %5653 = vst.msk [vmem:[#allocation2 + $0x1c8] sm:$0xff] %vm5597, %v5528
  %5654 = vst.msk [vmem:[#allocation2 + $0x1d0] sm:$0xff] %vm5597, %v5530
  %5655 = vst.msk [vmem:[#allocation2 + $0x1d8] sm:$0xff] %vm5597, %v5532
  %5656 = vst.msk [vmem:[#allocation2 + $0x1e0] sm:$0xff] %vm5597, %v5534
  %5657 = vst.msk [vmem:[#allocation2 + $0x1e8] sm:$0xff] %vm5597, %v5536
  %5658 = vrot.lane.b32.xlu0 %v3666, 32
  %v5659 = vpop.permute.xlu0 %5658
  %5660 = vrot.lane.b32.xlu0 %v3667, 32
  %v5661 = vpop.permute.xlu0 %5660
  %5662 = vrot.lane.b32.xlu0 %v3668, 32
  %v5663 = vpop.permute.xlu0 %5662
  %5664 = vrot.lane.b32.xlu0 %v3669, 32
  %v5665 = vpop.permute.xlu0 %5664
  %5666 = vrot.lane.b32.xlu0 %v3670, 32
  %v5667 = vpop.permute.xlu0 %5666
  %5668 = vrot.lane.b32.xlu0 %v3671, 32
  %v5669 = vpop.permute.xlu0 %5668
  %5670 = vrot.lane.b32.xlu0 %v3672, 32
  %v5671 = vpop.permute.xlu0 %5670
  %5672 = vrot.lane.b32.xlu0 %v3673, 32
  %v5673 = vpop.permute.xlu0 %5672
  %5674 = vrot.lane.b32.xlu0 %v3674, 32
  %v5675 = vpop.permute.xlu0 %5674
  %5676 = vrot.lane.b32.xlu0 %v3675, 32
  %v5677 = vpop.permute.xlu0 %5676
  %5678 = vrot.lane.b32.xlu0 %v3676, 32
  %v5679 = vpop.permute.xlu0 %5678
  %5680 = vrot.lane.b32.xlu0 %v3677, 32
  %v5681 = vpop.permute.xlu0 %5680
  %5682 = vrot.lane.b32.xlu0 %v3678, 32
  %v5683 = vpop.permute.xlu0 %5682
  %5684 = vrot.lane.b32.xlu0 %v3679, 32
  %v5685 = vpop.permute.xlu0 %5684
  %5686 = vrot.lane.b32.xlu0 %v3680, 32
  %v5687 = vpop.permute.xlu0 %5686
  %5688 = vrot.lane.b32.xlu0 %v3681, 32
  %v5689 = vpop.permute.xlu0 %5688
  %5690 = vrot.lane.b32.xlu0 %v3682, 32
  %v5691 = vpop.permute.xlu0 %5690
  %5692 = vrot.lane.b32.xlu0 %v3683, 32
  %v5693 = vpop.permute.xlu0 %5692
  %5694 = vrot.lane.b32.xlu0 %v3684, 32
  %v5695 = vpop.permute.xlu0 %5694
  %5696 = vrot.lane.b32.xlu0 %v3685, 32
  %v5697 = vpop.permute.xlu0 %5696
  %5698 = vrot.lane.b32.xlu0 %v3686, 32
  %v5699 = vpop.permute.xlu0 %5698
  %5700 = vrot.lane.b32.xlu0 %v3687, 32
  %v5701 = vpop.permute.xlu0 %5700
  %5702 = vrot.lane.b32.xlu0 %v3688, 32
  %v5703 = vpop.permute.xlu0 %5702
  %5704 = vrot.lane.b32.xlu0 %v3689, 32
  %v5705 = vpop.permute.xlu0 %5704
  %5706 = vrot.lane.b32.xlu0 %v3690, 32
  %v5707 = vpop.permute.xlu0 %5706
  %5708 = vrot.lane.b32.xlu0 %v3691, 32
  %v5709 = vpop.permute.xlu0 %5708
  %5710 = vrot.lane.b32.xlu0 %v3692, 32
  %v5711 = vpop.permute.xlu0 %5710
  %5712 = vrot.lane.b32.xlu0 %v3693, 32
  %v5713 = vpop.permute.xlu0 %5712
  %5714 = vrot.lane.b32.xlu0 %v3694, 32
  %v5715 = vpop.permute.xlu0 %5714
  %5716 = vrot.lane.b32.xlu0 %v3695, 32
  %v5717 = vpop.permute.xlu0 %5716
  %5718 = vrot.lane.b32.xlu0 %v3698, 32
  %v5719 = vpop.permute.xlu0 %5718
  %5720 = vrot.lane.b32.xlu0 %v3699, 32
  %v5721 = vpop.permute.xlu0 %5720
  %5722 = vrot.lane.b32.xlu0 %v3700, 32
  %v5723 = vpop.permute.xlu0 %5722
  %5724 = vrot.lane.b32.xlu0 %v3701, 32
  %v5725 = vpop.permute.xlu0 %5724
  %5726 = vrot.lane.b32.xlu0 %v3702, 32
  %v5727 = vpop.permute.xlu0 %5726
  %5728 = vrot.lane.b32.xlu0 %v3703, 32
  %v5729 = vpop.permute.xlu0 %5728
  %5730 = vrot.lane.b32.xlu0 %v3704, 32
  %v5731 = vpop.permute.xlu0 %5730
  %5732 = vrot.lane.b32.xlu0 %v3705, 32
  %v5733 = vpop.permute.xlu0 %5732
  %5734 = vrot.lane.b32.xlu0 %v3706, 32
  %v5735 = vpop.permute.xlu0 %5734
  %5736 = vrot.lane.b32.xlu0 %v3707, 32
  %v5737 = vpop.permute.xlu0 %5736
  %5738 = vrot.lane.b32.xlu0 %v3708, 32
  %v5739 = vpop.permute.xlu0 %5738
  %5740 = vrot.lane.b32.xlu0 %v3709, 32
  %v5741 = vpop.permute.xlu0 %5740
  %5742 = vrot.lane.b32.xlu0 %v3710, 32
  %v5743 = vpop.permute.xlu0 %5742
  %5744 = vrot.lane.b32.xlu0 %v3711, 32
  %v5745 = vpop.permute.xlu0 %5744
  %5746 = vrot.lane.b32.xlu0 %v3712, 32
  %v5747 = vpop.permute.xlu0 %5746
  %5748 = vrot.lane.b32.xlu0 %v3713, 32
  %v5749 = vpop.permute.xlu0 %5748
  %5750 = vrot.lane.b32.xlu0 %v3714, 32
  %v5751 = vpop.permute.xlu0 %5750
  %5752 = vrot.lane.b32.xlu0 %v3715, 32
  %v5753 = vpop.permute.xlu0 %5752
  %5754 = vrot.lane.b32.xlu0 %v3716, 32
  %v5755 = vpop.permute.xlu0 %5754
  %5756 = vrot.lane.b32.xlu0 %v3717, 32
  %v5757 = vpop.permute.xlu0 %5756
  %5758 = vrot.lane.b32.xlu0 %v3718, 32
  %v5759 = vpop.permute.xlu0 %5758
  %5760 = vrot.lane.b32.xlu0 %v3719, 32
  %v5761 = vpop.permute.xlu0 %5760
  %5762 = vrot.lane.b32.xlu0 %v3720, 32
  %v5763 = vpop.permute.xlu0 %5762
  %5764 = vrot.lane.b32.xlu0 %v3721, 32
  %v5765 = vpop.permute.xlu0 %5764
  %5766 = vrot.lane.b32.xlu0 %v3722, 32
  %v5767 = vpop.permute.xlu0 %5766
  %5768 = vrot.lane.b32.xlu0 %v3723, 32
  %v5769 = vpop.permute.xlu0 %5768
  %5770 = vrot.lane.b32.xlu0 %v3724, 32
  %v5771 = vpop.permute.xlu0 %5770
  %5772 = vrot.lane.b32.xlu0 %v3725, 32
  %v5773 = vpop.permute.xlu0 %5772
  %5774 = vrot.lane.b32.xlu0 %v3726, 32
  %v5775 = vpop.permute.xlu0 %5774
  %5776 = vrot.lane.b32.xlu0 %v3727, 32
  %v5777 = vpop.permute.xlu0 %5776
  %vm5838 = vcmask 294145
  %5839 = vst.msk [vmem:[#allocation2 - $0x1] sm:$0xfe] %vm5838, %v5659
  %vm5840 = vcmask 294144
  %5841 = vst.msk [vmem:[#allocation2 + $0x7] sm:$0xff] %vm5840, %v5661
  %5842 = vst.msk [vmem:[#allocation2 + $0xf] sm:$0xfe] %vm5838, %v5663
  %5843 = vst.msk [vmem:[#allocation2 + $0x17] sm:$0xff] %vm5840, %v5665
  %5844 = vst.msk [vmem:[#allocation2 + $0x1f] sm:$0xfe] %vm5838, %v5667
  %5845 = vst.msk [vmem:[#allocation2 + $0x27] sm:$0xff] %vm5840, %v5669
  %5846 = vst.msk [vmem:[#allocation2 + $0x2f] sm:$0xfe] %vm5838, %v5671
  %5847 = vst.msk [vmem:[#allocation2 + $0x37] sm:$0xff] %vm5840, %v5673
  %5848 = vst.msk [vmem:[#allocation2 + $0x3f] sm:$0xfe] %vm5838, %v5675
  %5849 = vst.msk [vmem:[#allocation2 + $0x47] sm:$0xff] %vm5840, %v5677
  %5850 = vst.msk [vmem:[#allocation2 + $0x4f] sm:$0xfe] %vm5838, %v5679
  %5851 = vst.msk [vmem:[#allocation2 + $0x57] sm:$0xff] %vm5840, %v5681
  %5852 = vst.msk [vmem:[#allocation2 + $0x5f] sm:$0xfe] %vm5838, %v5683
  %5853 = vst.msk [vmem:[#allocation2 + $0x67] sm:$0xff] %vm5840, %v5685
  %5854 = vst.msk [vmem:[#allocation2 + $0x6f] sm:$0xfe] %vm5838, %v5687
  %5855 = vst.msk [vmem:[#allocation2 + $0x77] sm:$0xff] %vm5840, %v5689
  %5856 = vst.msk [vmem:[#allocation2 + $0x7f] sm:$0xfe] %vm5838, %v5691
  %5857 = vst.msk [vmem:[#allocation2 + $0x87] sm:$0xff] %vm5840, %v5693
  %5858 = vst.msk [vmem:[#allocation2 + $0x8f] sm:$0xfe] %vm5838, %v5695
  %5859 = vst.msk [vmem:[#allocation2 + $0x97] sm:$0xff] %vm5840, %v5697
  %5860 = vst.msk [vmem:[#allocation2 + $0x9f] sm:$0xfe] %vm5838, %v5699
  %5861 = vst.msk [vmem:[#allocation2 + $0xa7] sm:$0xff] %vm5840, %v5701
  %5862 = vst.msk [vmem:[#allocation2 + $0xaf] sm:$0xfe] %vm5838, %v5703
  %5863 = vst.msk [vmem:[#allocation2 + $0xb7] sm:$0xff] %vm5840, %v5705
  %5864 = vst.msk [vmem:[#allocation2 + $0xbf] sm:$0xfe] %vm5838, %v5707
  %5865 = vst.msk [vmem:[#allocation2 + $0xc7] sm:$0xff] %vm5840, %v5709
  %5866 = vst.msk [vmem:[#allocation2 + $0xcf] sm:$0xfe] %vm5838, %v5711
  %5867 = vst.msk [vmem:[#allocation2 + $0xd7] sm:$0xff] %vm5840, %v5713
  %5868 = vst.msk [vmem:[#allocation2 + $0xdf] sm:$0xfe] %vm5838, %v5715
  %5869 = vst.msk [vmem:[#allocation2 + $0xe7] sm:$0xff] %vm5840, %v5717
  %5870 = vst.msk [vmem:[#allocation2 + $0xff] sm:$0xfe] %vm5838, %v5719
  %5871 = vst.msk [vmem:[#allocation2 + $0x107] sm:$0xff] %vm5840, %v5721
  %5872 = vst.msk [vmem:[#allocation2 + $0x10f] sm:$0xfe] %vm5838, %v5723
  %5873 = vst.msk [vmem:[#allocation2 + $0x117] sm:$0xff] %vm5840, %v5725
  %5874 = vst.msk [vmem:[#allocation2 + $0x11f] sm:$0xfe] %vm5838, %v5727
  %5875 = vst.msk [vmem:[#allocation2 + $0x127] sm:$0xff] %vm5840, %v5729
  %5876 = vst.msk [vmem:[#allocation2 + $0x12f] sm:$0xfe] %vm5838, %v5731
  %5877 = vst.msk [vmem:[#allocation2 + $0x137] sm:$0xff] %vm5840, %v5733
  %5878 = vst.msk [vmem:[#allocation2 + $0x13f] sm:$0xfe] %vm5838, %v5735
  %5879 = vst.msk [vmem:[#allocation2 + $0x147] sm:$0xff] %vm5840, %v5737
  %5880 = vst.msk [vmem:[#allocation2 + $0x14f] sm:$0xfe] %vm5838, %v5739
  %5881 = vst.msk [vmem:[#allocation2 + $0x157] sm:$0xff] %vm5840, %v5741
  %5882 = vst.msk [vmem:[#allocation2 + $0x15f] sm:$0xfe] %vm5838, %v5743
  %5883 = vst.msk [vmem:[#allocation2 + $0x167] sm:$0xff] %vm5840, %v5745
  %5884 = vst.msk [vmem:[#allocation2 + $0x16f] sm:$0xfe] %vm5838, %v5747
  %5885 = vst.msk [vmem:[#allocation2 + $0x177] sm:$0xff] %vm5840, %v5749
  %5886 = vst.msk [vmem:[#allocation2 + $0x17f] sm:$0xfe] %vm5838, %v5751
  %5887 = vst.msk [vmem:[#allocation2 + $0x187] sm:$0xff] %vm5840, %v5753
  %5888 = vst.msk [vmem:[#allocation2 + $0x18f] sm:$0xfe] %vm5838, %v5755
  %5889 = vst.msk [vmem:[#allocation2 + $0x197] sm:$0xff] %vm5840, %v5757
  %5890 = vst.msk [vmem:[#allocation2 + $0x19f] sm:$0xfe] %vm5838, %v5759
  %5891 = vst.msk [vmem:[#allocation2 + $0x1a7] sm:$0xff] %vm5840, %v5761
  %5892 = vst.msk [vmem:[#allocation2 + $0x1af] sm:$0xfe] %vm5838, %v5763
  %5893 = vst.msk [vmem:[#allocation2 + $0x1b7] sm:$0xff] %vm5840, %v5765
  %5894 = vst.msk [vmem:[#allocation2 + $0x1bf] sm:$0xfe] %vm5838, %v5767
  %5895 = vst.msk [vmem:[#allocation2 + $0x1c7] sm:$0xff] %vm5840, %v5769
  %5896 = vst.msk [vmem:[#allocation2 + $0x1cf] sm:$0xfe] %vm5838, %v5771
  %5897 = vst.msk [vmem:[#allocation2 + $0x1d7] sm:$0xff] %vm5840, %v5773
  %5898 = vst.msk [vmem:[#allocation2 + $0x1df] sm:$0xfe] %vm5838, %v5775
  %5899 = vst.msk [vmem:[#allocation2 + $0x1e7] sm:$0xff] %vm5840, %v5777
  %v5900 = vld [vmem:[#allocation2] sm:$0xff]
  %v5901 = vld [vmem:[#allocation2 + $0x8] sm:$0xff]
  %v5902 = vld [vmem:[#allocation2 + $0x10] sm:$0xff]
  %v5903 = vld [vmem:[#allocation2 + $0x18] sm:$0xff]
  %v5904 = vld [vmem:[#allocation2 + $0x20] sm:$0xff]
  %v5905 = vld [vmem:[#allocation2 + $0x28] sm:$0xff]
  %v5906 = vld [vmem:[#allocation2 + $0x30] sm:$0xff]
  %v5907 = vld [vmem:[#allocation2 + $0x38] sm:$0xff]
  %v5908 = vld [vmem:[#allocation2 + $0x40] sm:$0xff]
  %v5909 = vld [vmem:[#allocation2 + $0x48] sm:$0xff]
  %v5910 = vld [vmem:[#allocation2 + $0x50] sm:$0xff]
  %v5911 = vld [vmem:[#allocation2 + $0x58] sm:$0xff]
  %v5912 = vld [vmem:[#allocation2 + $0x60] sm:$0xff]
  %v5913 = vld [vmem:[#allocation2 + $0x68] sm:$0xff]
  %v5914 = vld [vmem:[#allocation2 + $0x70] sm:$0xff]
  %v5915 = vld [vmem:[#allocation2 + $0x78] sm:$0xff]
  %v5916 = vld [vmem:[#allocation2 + $0x80] sm:$0xff]
  %v5917 = vld [vmem:[#allocation2 + $0x88] sm:$0xff]
  %v5918 = vld [vmem:[#allocation2 + $0x90] sm:$0xff]
  %v5919 = vld [vmem:[#allocation2 + $0x98] sm:$0xff]
  %v5920 = vld [vmem:[#allocation2 + $0xa0] sm:$0xff]
  %v5921 = vld [vmem:[#allocation2 + $0xa8] sm:$0xff]
  %v5922 = vld [vmem:[#allocation2 + $0xb0] sm:$0xff]
  %v5923 = vld [vmem:[#allocation2 + $0xb8] sm:$0xff]
  %v5924 = vld [vmem:[#allocation2 + $0xc0] sm:$0xff]
  %v5925 = vld [vmem:[#allocation2 + $0xc8] sm:$0xff]
  %v5926 = vld [vmem:[#allocation2 + $0xd0] sm:$0xff]
  %v5927 = vld [vmem:[#allocation2 + $0xd8] sm:$0xff]
  %v5928 = vld [vmem:[#allocation2 + $0xe0] sm:$0xff]
  %v5929 = vld [vmem:[#allocation2 + $0xe8] sm:$0xff]
  %v5930 = vld [vmem:[#allocation2 + $0xf0] sm:$0xff]
  %v5931 = vld [vmem:[#allocation2 + $0xf8] sm:$0xff]
  %v5932 = vld [vmem:[#allocation2 + $0x100] sm:$0xff]
  %v5933 = vld [vmem:[#allocation2 + $0x108] sm:$0xff]
  %v5934 = vld [vmem:[#allocation2 + $0x110] sm:$0xff]
  %v5935 = vld [vmem:[#allocation2 + $0x118] sm:$0xff]
  %v5936 = vld [vmem:[#allocation2 + $0x120] sm:$0xff]
  %v5937 = vld [vmem:[#allocation2 + $0x128] sm:$0xff]
  %v5938 = vld [vmem:[#allocation2 + $0x130] sm:$0xff]
  %v5939 = vld [vmem:[#allocation2 + $0x138] sm:$0xff]
  %v5940 = vld [vmem:[#allocation2 + $0x140] sm:$0xff]
  %v5941 = vld [vmem:[#allocation2 + $0x148] sm:$0xff]
  %v5942 = vld [vmem:[#allocation2 + $0x150] sm:$0xff]
  %v5943 = vld [vmem:[#allocation2 + $0x158] sm:$0xff]
  %v5944 = vld [vmem:[#allocation2 + $0x160] sm:$0xff]
  %v5945 = vld [vmem:[#allocation2 + $0x168] sm:$0xff]
  %v5946 = vld [vmem:[#allocation2 + $0x170] sm:$0xff]
  %v5947 = vld [vmem:[#allocation2 + $0x178] sm:$0xff]
  %v5948 = vld [vmem:[#allocation2 + $0x180] sm:$0xff]
  %v5949 = vld [vmem:[#allocation2 + $0x188] sm:$0xff]
  %v5950 = vld [vmem:[#allocation2 + $0x190] sm:$0xff]
  %v5951 = vld [vmem:[#allocation2 + $0x198] sm:$0xff]
  %v5952 = vld [vmem:[#allocation2 + $0x1a0] sm:$0xff]
  %v5953 = vld [vmem:[#allocation2 + $0x1a8] sm:$0xff]
  %v5954 = vld [vmem:[#allocation2 + $0x1b0] sm:$0xff]
  %v5955 = vld [vmem:[#allocation2 + $0x1b8] sm:$0xff]
  %v5956 = vld [vmem:[#allocation2 + $0x1c0] sm:$0xff]
  %v5957 = vld [vmem:[#allocation2 + $0x1c8] sm:$0xff]
  %v5958 = vld [vmem:[#allocation2 + $0x1d0] sm:$0xff]
  %v5959 = vld [vmem:[#allocation2 + $0x1d8] sm:$0xff]
  %v5960 = vld [vmem:[#allocation2 + $0x1e0] sm:$0xff]
  %v5961 = vld [vmem:[#allocation2 + $0x1e8] sm:$0xff]
  %v5962 = vld [vmem:[#allocation2 + $0x1f0] sm:$0xff]
  %v5963 = vld [vmem:[#allocation2 + $0x1f8] sm:$0xff]
  %v5964 = vpack.c.bf16 %v5901, %v5900
  %v5965 = vpack.c.bf16 %v5903, %v5902
  %v5966 = vpack.c.bf16 %v5905, %v5904
  %v5967 = vpack.c.bf16 %v5907, %v5906
  %v5968 = vpack.c.bf16 %v5909, %v5908
  %v5969 = vpack.c.bf16 %v5911, %v5910
  %v5970 = vpack.c.bf16 %v5913, %v5912
  %v5971 = vpack.c.bf16 %v5915, %v5914
  %v5972 = vpack.c.bf16 %v5917, %v5916
  %v5973 = vpack.c.bf16 %v5919, %v5918
  %v5974 = vpack.c.bf16 %v5921, %v5920
  %v5975 = vpack.c.bf16 %v5923, %v5922
  %v5976 = vpack.c.bf16 %v5925, %v5924
  %v5977 = vpack.c.bf16 %v5927, %v5926
  %v5978 = vpack.c.bf16 %v5929, %v5928
  %v5979 = vpack.c.bf16 %v5931, %v5930
  %v5980 = vpack.c.bf16 %v5933, %v5932
  %v5981 = vpack.c.bf16 %v5935, %v5934
  %v5982 = vpack.c.bf16 %v5937, %v5936
  %v5983 = vpack.c.bf16 %v5939, %v5938
  %v5984 = vpack.c.bf16 %v5941, %v5940
  %v5985 = vpack.c.bf16 %v5943, %v5942
  %v5986 = vpack.c.bf16 %v5945, %v5944
  %v5987 = vpack.c.bf16 %v5947, %v5946
  %v5988 = vpack.c.bf16 %v5949, %v5948
  %v5989 = vpack.c.bf16 %v5951, %v5950
  %v5990 = vpack.c.bf16 %v5953, %v5952
  %v5991 = vpack.c.bf16 %v5955, %v5954
  %v5992 = vpack.c.bf16 %v5957, %v5956
  %v5993 = vpack.c.bf16 %v5959, %v5958
  %v5994 = vpack.c.bf16 %v5961, %v5960
  %v5995 = vpack.c.bf16 %v5963, %v5962
  %v5996 = vld [vmem:[%s1] sm:$0xf]
  %v5997 = vld [vmem:[%s1 + $0x4] sm:$0xf]
  %v5998 = vld [vmem:[%s1 + $0x8] sm:$0xf]
  %v5999 = vld [vmem:[%s1 + $0xc] sm:$0xf]
  %v6000 = vld [vmem:[%s1 + $0x10] sm:$0x3]
  %v6001 = vld [vmem:[%s2] sm:$0x1]
  %v6003 = vlaneseq
  %v6004 = vshrl.u32 %v6003, 7
  %v6005 = vsub.s32 0, %v6004
  %v6006 = vrot.slane %v6001, %v6005
  %v6013 = vunpack.c.l.b16 %v5996
  %v6014 = vunpack.c.l.b16 %v5997
  %v6015 = vunpack.c.l.b16 %v5998
  %v6016 = vunpack.c.l.b16 %v5999
  %v6017 = vunpack.c.l.b16 %v6000
  %v6018 = vpack.c.b16 %v6014, %v6013
  %v6019 = vpack.c.b16 %v6016, %v6015
  %v6020 = vpack.c.b16 %v6017, %v6017
  %v6024 = vsel %vm3728, %v5964, 0
  %v6027 = vsel %vm3728, %v5965, 0
  %v6030 = vsel %vm3728, %v5966, 0
  %v6033 = vsel %vm3728, %v5967, 0
  %v6036 = vsel %vm3728, %v5968, 0
  %v6039 = vsel %vm3728, %v5969, 0
  %v6042 = vsel %vm3728, %v5970, 0
  %v6045 = vsel %vm3728, %v5971, 0
  %v6048 = vsel %vm3728, %v5972, 0
  %v6051 = vsel %vm3728, %v5973, 0
  %v6054 = vsel %vm3728, %v5974, 0
  %v6057 = vsel %vm3728, %v5975, 0
  %v6060 = vsel %vm3728, %v5976, 0
  %v6063 = vsel %vm3728, %v5977, 0
  %v6066 = vsel %vm3728, %v5978, 0
  %v6069 = vsel %vm3728, %v5979, 0
  %v6072 = vsel %vm3728, %v5980, 0
  %v6075 = vsel %vm3728, %v5981, 0
  %v6078 = vsel %vm3728, %v5982, 0
  %v6081 = vsel %vm3728, %v5983, 0
  %v6084 = vsel %vm3728, %v5984, 0
  %v6087 = vsel %vm3728, %v5985, 0
  %v6090 = vsel %vm3728, %v5986, 0
  %v6093 = vsel %vm3728, %v5987, 0
  %v6096 = vsel %vm3728, %v5988, 0
  %v6099 = vsel %vm3728, %v5989, 0
  %v6102 = vsel %vm3728, %v5990, 0
  %v6105 = vsel %vm3728, %v5991, 0
  %v6108 = vsel %vm3728, %v5992, 0
  %v6111 = vsel %vm3728, %v5993, 0
  %v6114 = vsel %vm3728, %v5994, 0
  %v6117 = vsel %vm3728, %v5995, 0
  %v6120 = vsel %vm3435, %v6020, 0
  %6122 = vmatprep.subr.bf16.mxu0 0
  %6123 = vmatpush1.bf16.msra.mxu0 0
  %6124 = vmatprep.subr.bf16.mxu0 0
  %6125 = vmatpush1.bf16.msra.mxu0 0
  %6126 = vmatprep.subr.bf16.mxu0 0
  %6127 = vmatpush1.bf16.msra.mxu0 0
  %6128 = vmatprep.subr.bf16.mxu0 0
  %6129 = vmatpush1.bf16.msra.mxu0 0
  %6130 = vmatprep.subr.bf16.mxu0 0
  %6131 = vmatpush1.bf16.msra.mxu0 0
  %6132 = vmatprep.subr.bf16.mxu0 0
  %6133 = vmatpush1.bf16.msra.mxu0 %v6120
  %6134 = vmatprep.subr.bf16.mxu0 0
  %6135 = vmatpush1.bf16.msra.mxu0 %v6019
  %6136 = vmatprep.subr.bf16.mxu0 0
  %6137 = vmatpush1.bf16.msra.mxu0 %v6018
  %6138 = vmatprep.subr.bf16.mxu0 0
  %6139 = vmatpush2.bf16.msra.mxu0 0
  %6140 = vmatprep.subr.bf16.mxu0 0
  %6141 = vmatpush2.bf16.msra.mxu0 0
  %6142 = vmatprep.subr.bf16.mxu0 0
  %6143 = vmatpush2.bf16.msra.mxu0 0
  %6144 = vmatprep.subr.bf16.mxu0 0
  %6145 = vmatpush2.bf16.msra.mxu0 0
  %6146 = vmatprep.subr.bf16.mxu0 0
  %6147 = vmatpush2.bf16.msra.mxu0 0
  %6148 = vmatprep.subr.bf16.mxu0 0
  %6149 = vmatpush2.bf16.msra.mxu0 0
  %6150 = vmatprep.subr.bf16.mxu0 0
  %6151 = vmatpush2.bf16.msra.mxu0 0
  %6152 = vmatprep.subr.bf16.mxu0 0
  %6153 = vmatpush2.bf16.msra.mxu0 0
  %6154 = vmatprep.mubr.bf16.mxu0 0
  %6155 = vmatmul.mubr.bf16.gmra.mxu0 %v6024
  %v6156 = vpop.f32.mrf.mxu0
  %v6157 = vadd.f32 %v6006, %v6156
  %v6158 = vpop.f32.mrf.mxu0
  %v6159 = vpop.f32.mrf.mxu0
  %v6160 = vadd.f32 %v6006, %v6159
  %v6161 = vpop.f32.mrf.mxu0
  %6162 = vmatprep.mubr.bf16.mxu0 0
  %6163 = vmatmul.mubr.bf16.gmra.mxu0 %v6027
  %v6164 = vpop.f32.mrf.mxu0
  %v6165 = vadd.f32 %v6006, %v6164
  %v6166 = vpop.f32.mrf.mxu0
  %v6167 = vpop.f32.mrf.mxu0
  %v6168 = vadd.f32 %v6006, %v6167
  %v6169 = vpop.f32.mrf.mxu0
  %6170 = vmatprep.mubr.bf16.mxu0 0
  %6171 = vmatmul.mubr.bf16.gmra.mxu0 %v6030
  %v6172 = vpop.f32.mrf.mxu0
  %v6173 = vadd.f32 %v6006, %v6172
  %v6174 = vpop.f32.mrf.mxu0
  %v6175 = vpop.f32.mrf.mxu0
  %v6176 = vadd.f32 %v6006, %v6175
  %v6177 = vpop.f32.mrf.mxu0
  %6178 = vmatprep.mubr.bf16.mxu0 0
  %6179 = vmatmul.mubr.bf16.gmra.mxu0 %v6033
  %v6180 = vpop.f32.mrf.mxu0
  %v6181 = vadd.f32 %v6006, %v6180
  %v6182 = vpop.f32.mrf.mxu0
  %v6183 = vpop.f32.mrf.mxu0
  %v6184 = vadd.f32 %v6006, %v6183
  %v6185 = vpop.f32.mrf.mxu0
  %6186 = vmatprep.mubr.bf16.mxu0 0
  %6187 = vmatmul.mubr.bf16.gmra.mxu0 %v6036
  %v6188 = vpop.f32.mrf.mxu0
  %v6189 = vadd.f32 %v6006, %v6188
  %v6190 = vpop.f32.mrf.mxu0
  %v6191 = vpop.f32.mrf.mxu0
  %v6192 = vadd.f32 %v6006, %v6191
  %v6193 = vpop.f32.mrf.mxu0
  %6194 = vmatprep.mubr.bf16.mxu0 0
  %6195 = vmatmul.mubr.bf16.gmra.mxu0 %v6039
  %v6196 = vpop.f32.mrf.mxu0
  %v6197 = vadd.f32 %v6006, %v6196
  %v6198 = vpop.f32.mrf.mxu0
  %v6199 = vpop.f32.mrf.mxu0
  %v6200 = vadd.f32 %v6006, %v6199
  %v6201 = vpop.f32.mrf.mxu0
  %6202 = vmatprep.mubr.bf16.mxu0 0
  %6203 = vmatmul.mubr.bf16.gmra.mxu0 %v6042
  %v6204 = vpop.f32.mrf.mxu0
  %v6205 = vadd.f32 %v6006, %v6204
  %v6206 = vpop.f32.mrf.mxu0
  %v6207 = vpop.f32.mrf.mxu0
  %v6208 = vadd.f32 %v6006, %v6207
  %v6209 = vpop.f32.mrf.mxu0
  %6210 = vmatprep.mubr.bf16.mxu0 0
  %6211 = vmatmul.mubr.bf16.gmra.mxu0 %v6045
  %v6212 = vpop.f32.mrf.mxu0
  %v6213 = vadd.f32 %v6006, %v6212
  %v6214 = vpop.f32.mrf.mxu0
  %v6215 = vpop.f32.mrf.mxu0
  %v6216 = vadd.f32 %v6006, %v6215
  %v6217 = vpop.f32.mrf.mxu0
  %6218 = vmatprep.mubr.bf16.mxu0 0
  %6219 = vmatmul.mubr.bf16.gmra.mxu0 %v6048
  %v6220 = vpop.f32.mrf.mxu0
  %v6221 = vadd.f32 %v6006, %v6220
  %v6222 = vpop.f32.mrf.mxu0
  %v6223 = vpop.f32.mrf.mxu0
  %v6224 = vadd.f32 %v6006, %v6223
  %v6225 = vpop.f32.mrf.mxu0
  %6226 = vmatprep.mubr.bf16.mxu0 0
  %6227 = vmatmul.mubr.bf16.gmra.mxu0 %v6051
  %v6228 = vpop.f32.mrf.mxu0
  %v6229 = vadd.f32 %v6006, %v6228
  %v6230 = vpop.f32.mrf.mxu0
  %v6231 = vpop.f32.mrf.mxu0
  %v6232 = vadd.f32 %v6006, %v6231
  %v6233 = vpop.f32.mrf.mxu0
  %6234 = vmatprep.mubr.bf16.mxu0 0
  %6235 = vmatmul.mubr.bf16.gmra.mxu0 %v6054
  %v6236 = vpop.f32.mrf.mxu0
  %v6237 = vadd.f32 %v6006, %v6236
  %v6238 = vpop.f32.mrf.mxu0
  %v6239 = vpop.f32.mrf.mxu0
  %v6240 = vadd.f32 %v6006, %v6239
  %v6241 = vpop.f32.mrf.mxu0
  %6242 = vmatprep.mubr.bf16.mxu0 0
  %6243 = vmatmul.mubr.bf16.gmra.mxu0 %v6057
  %v6244 = vpop.f32.mrf.mxu0
  %v6245 = vadd.f32 %v6006, %v6244
  %v6246 = vpop.f32.mrf.mxu0
  %v6247 = vpop.f32.mrf.mxu0
  %v6248 = vadd.f32 %v6006, %v6247
  %v6249 = vpop.f32.mrf.mxu0
  %6250 = vmatprep.mubr.bf16.mxu0 0
  %6251 = vmatmul.mubr.bf16.gmra.mxu0 %v6060
  %v6252 = vpop.f32.mrf.mxu0
  %v6253 = vadd.f32 %v6006, %v6252
  %v6254 = vpop.f32.mrf.mxu0
  %v6255 = vpop.f32.mrf.mxu0
  %v6256 = vadd.f32 %v6006, %v6255
  %v6257 = vpop.f32.mrf.mxu0
  %6258 = vmatprep.mubr.bf16.mxu0 0
  %6259 = vmatmul.mubr.bf16.gmra.mxu0 %v6063
  %v6260 = vpop.f32.mrf.mxu0
  %v6261 = vadd.f32 %v6006, %v6260
  %v6262 = vpop.f32.mrf.mxu0
  %v6263 = vpop.f32.mrf.mxu0
  %v6264 = vadd.f32 %v6006, %v6263
  %v6265 = vpop.f32.mrf.mxu0
  %6266 = vmatprep.mubr.bf16.mxu0 0
  %6267 = vmatmul.mubr.bf16.gmra.mxu0 %v6066
  %v6268 = vpop.f32.mrf.mxu0
  %v6269 = vadd.f32 %v6006, %v6268
  %v6270 = vpop.f32.mrf.mxu0
  %v6271 = vpop.f32.mrf.mxu0
  %v6272 = vadd.f32 %v6006, %v6271
  %v6273 = vpop.f32.mrf.mxu0
  %6274 = vmatprep.mubr.bf16.mxu0 0
  %6275 = vmatmul.mubr.bf16.gmra.mxu0 %v6069
  %v6276 = vpop.f32.mrf.mxu0
  %v6277 = vadd.f32 %v6006, %v6276
  %v6278 = vpop.f32.mrf.mxu0
  %v6279 = vpop.f32.mrf.mxu0
  %v6280 = vadd.f32 %v6006, %v6279
  %v6281 = vpop.f32.mrf.mxu0
  %6282 = vmatprep.mubr.bf16.mxu0 0
  %6283 = vmatmul.mubr.bf16.gmra.mxu0 %v6072
  %v6284 = vpop.f32.mrf.mxu0
  %v6285 = vadd.f32 %v6006, %v6284
  %v6286 = vpop.f32.mrf.mxu0
  %v6287 = vpop.f32.mrf.mxu0
  %v6288 = vadd.f32 %v6006, %v6287
  %v6289 = vpop.f32.mrf.mxu0
  %6290 = vmatprep.mubr.bf16.mxu0 0
  %6291 = vmatmul.mubr.bf16.gmra.mxu0 %v6075
  %v6292 = vpop.f32.mrf.mxu0
  %v6293 = vadd.f32 %v6006, %v6292
  %v6294 = vpop.f32.mrf.mxu0
  %v6295 = vpop.f32.mrf.mxu0
  %v6296 = vadd.f32 %v6006, %v6295
  %v6297 = vpop.f32.mrf.mxu0
  %6298 = vmatprep.mubr.bf16.mxu0 0
  %6299 = vmatmul.mubr.bf16.gmra.mxu0 %v6078
  %v6300 = vpop.f32.mrf.mxu0
  %v6301 = vadd.f32 %v6006, %v6300
  %v6302 = vpop.f32.mrf.mxu0
  %v6303 = vpop.f32.mrf.mxu0
  %v6304 = vadd.f32 %v6006, %v6303
  %v6305 = vpop.f32.mrf.mxu0
  %6306 = vmatprep.mubr.bf16.mxu0 0
  %6307 = vmatmul.mubr.bf16.gmra.mxu0 %v6081
  %v6308 = vpop.f32.mrf.mxu0
  %v6309 = vadd.f32 %v6006, %v6308
  %v6310 = vpop.f32.mrf.mxu0
  %v6311 = vpop.f32.mrf.mxu0
  %v6312 = vadd.f32 %v6006, %v6311
  %v6313 = vpop.f32.mrf.mxu0
  %6314 = vmatprep.mubr.bf16.mxu0 0
  %6315 = vmatmul.mubr.bf16.gmra.mxu0 %v6084
  %v6316 = vpop.f32.mrf.mxu0
  %v6317 = vadd.f32 %v6006, %v6316
  %v6318 = vpop.f32.mrf.mxu0
  %v6319 = vpop.f32.mrf.mxu0
  %v6320 = vadd.f32 %v6006, %v6319
  %v6321 = vpop.f32.mrf.mxu0
  %6322 = vmatprep.mubr.bf16.mxu0 0
  %6323 = vmatmul.mubr.bf16.gmra.mxu0 %v6087
  %v6324 = vpop.f32.mrf.mxu0
  %v6325 = vadd.f32 %v6006, %v6324
  %v6326 = vpop.f32.mrf.mxu0
  %v6327 = vpop.f32.mrf.mxu0
  %v6328 = vadd.f32 %v6006, %v6327
  %v6329 = vpop.f32.mrf.mxu0
  %6330 = vmatprep.mubr.bf16.mxu0 0
  %6331 = vmatmul.mubr.bf16.gmra.mxu0 %v6090
  %v6332 = vpop.f32.mrf.mxu0
  %v6333 = vadd.f32 %v6006, %v6332
  %v6334 = vpop.f32.mrf.mxu0
  %v6335 = vpop.f32.mrf.mxu0
  %v6336 = vadd.f32 %v6006, %v6335
  %v6337 = vpop.f32.mrf.mxu0
  %6338 = vmatprep.mubr.bf16.mxu0 0
  %6339 = vmatmul.mubr.bf16.gmra.mxu0 %v6093
  %v6340 = vpop.f32.mrf.mxu0
  %v6341 = vadd.f32 %v6006, %v6340
  %v6342 = vpop.f32.mrf.mxu0
  %v6343 = vpop.f32.mrf.mxu0
  %v6344 = vadd.f32 %v6006, %v6343
  %v6345 = vpop.f32.mrf.mxu0
  %6346 = vmatprep.mubr.bf16.mxu0 0
  %6347 = vmatmul.mubr.bf16.gmra.mxu0 %v6096
  %v6348 = vpop.f32.mrf.mxu0
  %v6349 = vadd.f32 %v6006, %v6348
  %v6350 = vpop.f32.mrf.mxu0
  %v6351 = vpop.f32.mrf.mxu0
  %v6352 = vadd.f32 %v6006, %v6351
  %v6353 = vpop.f32.mrf.mxu0
  %6354 = vmatprep.mubr.bf16.mxu0 0
  %6355 = vmatmul.mubr.bf16.gmra.mxu0 %v6099
  %v6356 = vpop.f32.mrf.mxu0
  %v6357 = vadd.f32 %v6006, %v6356
  %v6358 = vpop.f32.mrf.mxu0
  %v6359 = vpop.f32.mrf.mxu0
  %v6360 = vadd.f32 %v6006, %v6359
  %v6361 = vpop.f32.mrf.mxu0
  %6362 = vmatprep.mubr.bf16.mxu0 0
  %6363 = vmatmul.mubr.bf16.gmra.mxu0 %v6102
  %v6364 = vpop.f32.mrf.mxu0
  %v6365 = vadd.f32 %v6006, %v6364
  %v6366 = vpop.f32.mrf.mxu0
  %v6367 = vpop.f32.mrf.mxu0
  %v6368 = vadd.f32 %v6006, %v6367
  %v6369 = vpop.f32.mrf.mxu0
  %6370 = vmatprep.mubr.bf16.mxu0 0
  %6371 = vmatmul.mubr.bf16.gmra.mxu0 %v6105
  %v6372 = vpop.f32.mrf.mxu0
  %v6373 = vadd.f32 %v6006, %v6372
  %v6374 = vpop.f32.mrf.mxu0
  %v6375 = vpop.f32.mrf.mxu0
  %v6376 = vadd.f32 %v6006, %v6375
  %v6377 = vpop.f32.mrf.mxu0
  %6378 = vmatprep.mubr.bf16.mxu0 0
  %6379 = vmatmul.mubr.bf16.gmra.mxu0 %v6108
  %v6380 = vpop.f32.mrf.mxu0
  %v6381 = vadd.f32 %v6006, %v6380
  %v6382 = vpop.f32.mrf.mxu0
  %v6383 = vpop.f32.mrf.mxu0
  %v6384 = vadd.f32 %v6006, %v6383
  %v6385 = vpop.f32.mrf.mxu0
  %6386 = vmatprep.mubr.bf16.mxu0 0
  %6387 = vmatmul.mubr.bf16.gmra.mxu0 %v6111
  %v6388 = vpop.f32.mrf.mxu0
  %v6389 = vadd.f32 %v6006, %v6388
  %v6390 = vpop.f32.mrf.mxu0
  %v6391 = vpop.f32.mrf.mxu0
  %v6392 = vadd.f32 %v6006, %v6391
  %v6393 = vpop.f32.mrf.mxu0
  %6394 = vmatprep.mubr.bf16.mxu0 0
  %6395 = vmatmul.mubr.bf16.gmra.mxu0 %v6114
  %v6396 = vpop.f32.mrf.mxu0
  %v6397 = vadd.f32 %v6006, %v6396
  %v6398 = vpop.f32.mrf.mxu0
  %v6399 = vpop.f32.mrf.mxu0
  %v6400 = vadd.f32 %v6006, %v6399
  %v6401 = vpop.f32.mrf.mxu0
  %6402 = vmatprep.mubr.bf16.mxu0 0
  %6403 = vmatmul.mubr.bf16.gmra.mxu0 %v6117
  %v6404 = vpop.f32.mrf.mxu0
  %v6405 = vadd.f32 %v6006, %v6404
  %v6406 = vpop.f32.mrf.mxu0
  %v6407 = vpop.f32.mrf.mxu0
  %v6408 = vadd.f32 %v6006, %v6407
  %v6409 = vpop.f32.mrf.mxu0
  %6410 = vdwg.mxu0
  %vm6411 = vcmp.gt.f32.partialorder %v6157, 0.0
  %vm6412 = vcmp.gt.f32.partialorder %v6160, 0.0
  %vm6413 = vcmp.gt.f32.partialorder %v6165, 0.0
  %vm6414 = vcmp.gt.f32.partialorder %v6168, 0.0
  %vm6415 = vcmp.gt.f32.partialorder %v6173, 0.0
  %vm6416 = vcmp.gt.f32.partialorder %v6176, 0.0
  %vm6417 = vcmp.gt.f32.partialorder %v6181, 0.0
  %vm6418 = vcmp.gt.f32.partialorder %v6184, 0.0
  %vm6419 = vcmp.gt.f32.partialorder %v6189, 0.0
  %vm6420 = vcmp.gt.f32.partialorder %v6192, 0.0
  %vm6421 = vcmp.gt.f32.partialorder %v6197, 0.0
  %vm6422 = vcmp.gt.f32.partialorder %v6200, 0.0
  %vm6423 = vcmp.gt.f32.partialorder %v6205, 0.0
  %vm6424 = vcmp.gt.f32.partialorder %v6208, 0.0
  %vm6425 = vcmp.gt.f32.partialorder %v6213, 0.0
  %vm6426 = vcmp.gt.f32.partialorder %v6216, 0.0
  %vm6427 = vcmp.gt.f32.partialorder %v6221, 0.0
  %vm6428 = vcmp.gt.f32.partialorder %v6224, 0.0
  %vm6429 = vcmp.gt.f32.partialorder %v6229, 0.0
  %vm6430 = vcmp.gt.f32.partialorder %v6232, 0.0
  %vm6431 = vcmp.gt.f32.partialorder %v6237, 0.0
  %vm6432 = vcmp.gt.f32.partialorder %v6240, 0.0
  %vm6433 = vcmp.gt.f32.partialorder %v6245, 0.0
  %vm6434 = vcmp.gt.f32.partialorder %v6248, 0.0
  %vm6435 = vcmp.gt.f32.partialorder %v6253, 0.0
  %vm6436 = vcmp.gt.f32.partialorder %v6256, 0.0
  %vm6437 = vcmp.gt.f32.partialorder %v6261, 0.0
  %vm6438 = vcmp.gt.f32.partialorder %v6264, 0.0
  %vm6439 = vcmp.gt.f32.partialorder %v6269, 0.0
  %vm6440 = vcmp.gt.f32.partialorder %v6272, 0.0
  %vm6441 = vcmp.gt.f32.partialorder %v6277, 0.0
  %vm6442 = vcmp.gt.f32.partialorder %v6280, 0.0
  %vm6443 = vcmp.gt.f32.partialorder %v6285, 0.0
  %vm6444 = vcmp.gt.f32.partialorder %v6288, 0.0
  %vm6445 = vcmp.gt.f32.partialorder %v6293, 0.0
  %vm6446 = vcmp.gt.f32.partialorder %v6296, 0.0
  %vm6447 = vcmp.gt.f32.partialorder %v6301, 0.0
  %vm6448 = vcmp.gt.f32.partialorder %v6304, 0.0
  %vm6449 = vcmp.gt.f32.partialorder %v6309, 0.0
  %vm6450 = vcmp.gt.f32.partialorder %v6312, 0.0
  %vm6451 = vcmp.gt.f32.partialorder %v6317, 0.0
  %vm6452 = vcmp.gt.f32.partialorder %v6320, 0.0
  %vm6453 = vcmp.gt.f32.partialorder %v6325, 0.0
  %vm6454 = vcmp.gt.f32.partialorder %v6328, 0.0
  %vm6455 = vcmp.gt.f32.partialorder %v6333, 0.0
  %vm6456 = vcmp.gt.f32.partialorder %v6336, 0.0
  %vm6457 = vcmp.gt.f32.partialorder %v6341, 0.0
  %vm6458 = vcmp.gt.f32.partialorder %v6344, 0.0
  %vm6459 = vcmp.gt.f32.partialorder %v6349, 0.0
  %vm6460 = vcmp.gt.f32.partialorder %v6352, 0.0
  %vm6461 = vcmp.gt.f32.partialorder %v6357, 0.0
  %vm6462 = vcmp.gt.f32.partialorder %v6360, 0.0
  %vm6463 = vcmp.gt.f32.partialorder %v6365, 0.0
  %vm6464 = vcmp.gt.f32.partialorder %v6368, 0.0
  %vm6465 = vcmp.gt.f32.partialorder %v6373, 0.0
  %vm6466 = vcmp.gt.f32.partialorder %v6376, 0.0
  %vm6467 = vcmp.gt.f32.partialorder %v6381, 0.0
  %vm6468 = vcmp.gt.f32.partialorder %v6384, 0.0
  %vm6469 = vcmp.gt.f32.partialorder %v6389, 0.0
  %vm6470 = vcmp.gt.f32.partialorder %v6392, 0.0
  %vm6471 = vcmp.gt.f32.partialorder %v6397, 0.0
  %vm6472 = vcmp.gt.f32.partialorder %v6400, 0.0
  %vm6473 = vcmp.gt.f32.partialorder %v6405, 0.0
  %vm6474 = vcmp.gt.f32.partialorder %v6408, 0.0
  %v6475 = vmul.f32 %v6157, 0.2
  %v6476 = vmul.f32 %v6160, 0.2
  %v6477 = vmul.f32 %v6165, 0.2
  %v6478 = vmul.f32 %v6168, 0.2
  %v6479 = vmul.f32 %v6173, 0.2
  %v6480 = vmul.f32 %v6176, 0.2
  %v6481 = vmul.f32 %v6181, 0.2
  %v6482 = vmul.f32 %v6184, 0.2
  %v6483 = vmul.f32 %v6189, 0.2
  %v6484 = vmul.f32 %v6192, 0.2
  %v6485 = vmul.f32 %v6197, 0.2
  %v6486 = vmul.f32 %v6200, 0.2
  %v6487 = vmul.f32 %v6205, 0.2
  %v6488 = vmul.f32 %v6208, 0.2
  %v6489 = vmul.f32 %v6213, 0.2
  %v6490 = vmul.f32 %v6216, 0.2
  %v6491 = vmul.f32 %v6221, 0.2
  %v6492 = vmul.f32 %v6224, 0.2
  %v6493 = vmul.f32 %v6229, 0.2
  %v6494 = vmul.f32 %v6232, 0.2
  %v6495 = vmul.f32 %v6237, 0.2
  %v6496 = vmul.f32 %v6240, 0.2
  %v6497 = vmul.f32 %v6245, 0.2
  %v6498 = vmul.f32 %v6248, 0.2
  %v6499 = vmul.f32 %v6253, 0.2
  %v6500 = vmul.f32 %v6256, 0.2
  %v6501 = vmul.f32 %v6261, 0.2
  %v6502 = vmul.f32 %v6264, 0.2
  %v6503 = vmul.f32 %v6269, 0.2
  %v6504 = vmul.f32 %v6272, 0.2
  %v6505 = vmul.f32 %v6277, 0.2
  %v6506 = vmul.f32 %v6280, 0.2
  %v6507 = vmul.f32 %v6285, 0.2
  %v6508 = vmul.f32 %v6288, 0.2
  %v6509 = vmul.f32 %v6293, 0.2
  %v6510 = vmul.f32 %v6296, 0.2
  %v6511 = vmul.f32 %v6301, 0.2
  %v6512 = vmul.f32 %v6304, 0.2
  %v6513 = vmul.f32 %v6309, 0.2
  %v6514 = vmul.f32 %v6312, 0.2
  %v6515 = vmul.f32 %v6317, 0.2
  %v6516 = vmul.f32 %v6320, 0.2
  %v6517 = vmul.f32 %v6325, 0.2
  %v6518 = vmul.f32 %v6328, 0.2
  %v6519 = vmul.f32 %v6333, 0.2
  %v6520 = vmul.f32 %v6336, 0.2
  %v6521 = vmul.f32 %v6341, 0.2
  %v6522 = vmul.f32 %v6344, 0.2
  %v6523 = vmul.f32 %v6349, 0.2
  %v6524 = vmul.f32 %v6352, 0.2
  %v6525 = vmul.f32 %v6357, 0.2
  %v6526 = vmul.f32 %v6360, 0.2
  %v6527 = vmul.f32 %v6365, 0.2
  %v6528 = vmul.f32 %v6368, 0.2
  %v6529 = vmul.f32 %v6373, 0.2
  %v6530 = vmul.f32 %v6376, 0.2
  %v6531 = vmul.f32 %v6381, 0.2
  %v6532 = vmul.f32 %v6384, 0.2
  %v6533 = vmul.f32 %v6389, 0.2
  %v6534 = vmul.f32 %v6392, 0.2
  %v6535 = vmul.f32 %v6397, 0.2
  %v6536 = vmul.f32 %v6400, 0.2
  %v6537 = vmul.f32 %v6405, 0.2
  %v6538 = vmul.f32 %v6408, 0.2
  %v6539 = vsel %vm6411, %v6157, %v6475
  %v6540 = vsel %vm6412, %v6160, %v6476
  %v6541 = vsel %vm6413, %v6165, %v6477
  %v6542 = vsel %vm6414, %v6168, %v6478
  %v6543 = vsel %vm6415, %v6173, %v6479
  %v6544 = vsel %vm6416, %v6176, %v6480
  %v6545 = vsel %vm6417, %v6181, %v6481
  %v6546 = vsel %vm6418, %v6184, %v6482
  %v6547 = vsel %vm6419, %v6189, %v6483
  %v6548 = vsel %vm6420, %v6192, %v6484
  %v6549 = vsel %vm6421, %v6197, %v6485
  %v6550 = vsel %vm6422, %v6200, %v6486
  %v6551 = vsel %vm6423, %v6205, %v6487
  %v6552 = vsel %vm6424, %v6208, %v6488
  %v6553 = vsel %vm6425, %v6213, %v6489
  %v6554 = vsel %vm6426, %v6216, %v6490
  %v6555 = vsel %vm6427, %v6221, %v6491
  %v6556 = vsel %vm6428, %v6224, %v6492
  %v6557 = vsel %vm6429, %v6229, %v6493
  %v6558 = vsel %vm6430, %v6232, %v6494
  %v6559 = vsel %vm6431, %v6237, %v6495
  %v6560 = vsel %vm6432, %v6240, %v6496
  %v6561 = vsel %vm6433, %v6245, %v6497
  %v6562 = vsel %vm6434, %v6248, %v6498
  %v6563 = vsel %vm6435, %v6253, %v6499
  %v6564 = vsel %vm6436, %v6256, %v6500
  %v6565 = vsel %vm6437, %v6261, %v6501
  %v6566 = vsel %vm6438, %v6264, %v6502
  %v6567 = vsel %vm6439, %v6269, %v6503
  %v6568 = vsel %vm6440, %v6272, %v6504
  %v6569 = vsel %vm6441, %v6277, %v6505
  %v6570 = vsel %vm6442, %v6280, %v6506
  %v6571 = vsel %vm6443, %v6285, %v6507
  %v6572 = vsel %vm6444, %v6288, %v6508
  %v6573 = vsel %vm6445, %v6293, %v6509
  %v6574 = vsel %vm6446, %v6296, %v6510
  %v6575 = vsel %vm6447, %v6301, %v6511
  %v6576 = vsel %vm6448, %v6304, %v6512
  %v6577 = vsel %vm6449, %v6309, %v6513
  %v6578 = vsel %vm6450, %v6312, %v6514
  %v6579 = vsel %vm6451, %v6317, %v6515
  %v6580 = vsel %vm6452, %v6320, %v6516
  %v6581 = vsel %vm6453, %v6325, %v6517
  %v6582 = vsel %vm6454, %v6328, %v6518
  %v6583 = vsel %vm6455, %v6333, %v6519
  %v6584 = vsel %vm6456, %v6336, %v6520
  %v6585 = vsel %vm6457, %v6341, %v6521
  %v6586 = vsel %vm6458, %v6344, %v6522
  %v6587 = vsel %vm6459, %v6349, %v6523
  %v6588 = vsel %vm6460, %v6352, %v6524
  %v6589 = vsel %vm6461, %v6357, %v6525
  %v6590 = vsel %vm6462, %v6360, %v6526
  %v6591 = vsel %vm6463, %v6365, %v6527
  %v6592 = vsel %vm6464, %v6368, %v6528
  %v6593 = vsel %vm6465, %v6373, %v6529
  %v6594 = vsel %vm6466, %v6376, %v6530
  %v6595 = vsel %vm6467, %v6381, %v6531
  %v6596 = vsel %vm6468, %v6384, %v6532
  %v6597 = vsel %vm6469, %v6389, %v6533
  %v6598 = vsel %vm6470, %v6392, %v6534
  %v6599 = vsel %vm6471, %v6397, %v6535
  %v6600 = vsel %vm6472, %v6400, %v6536
  %v6601 = vsel %vm6473, %v6405, %v6537
  %v6602 = vsel %vm6474, %v6408, %v6538
  %vm6603 = vcmask 588800
  %6604 = vst.msk [vmem:[#allocation3] sm:$0xff] %vm6603, 0.0
  %6605 = vst.msk [vmem:[#allocation3 + $0x8] sm:$0xff] %vm6603, 0.0
  %6606 = vst.msk [vmem:[#allocation3 + $0x10] sm:$0xff] %vm6603, 0.0
  %6607 = vst.msk [vmem:[#allocation3 + $0x18] sm:$0xff] %vm6603, 0.0
  %6608 = vst.msk [vmem:[#allocation3 + $0x20] sm:$0xff] %vm6603, 0.0
  %6609 = vst.msk [vmem:[#allocation3 + $0x28] sm:$0xff] %vm6603, 0.0
  %6610 = vst.msk [vmem:[#allocation3 + $0x30] sm:$0xff] %vm6603, 0.0
  %6611 = vst.msk [vmem:[#allocation3 + $0x38] sm:$0xff] %vm6603, 0.0
  %6612 = vst.msk [vmem:[#allocation3 + $0x40] sm:$0xff] %vm6603, 0.0
  %6613 = vst.msk [vmem:[#allocation3 + $0x48] sm:$0xff] %vm6603, 0.0
  %6614 = vst.msk [vmem:[#allocation3 + $0x50] sm:$0xff] %vm6603, 0.0
  %6615 = vst.msk [vmem:[#allocation3 + $0x58] sm:$0xff] %vm6603, 0.0
  %6616 = vst.msk [vmem:[#allocation3 + $0x60] sm:$0xff] %vm6603, 0.0
  %6617 = vst.msk [vmem:[#allocation3 + $0x68] sm:$0xff] %vm6603, 0.0
  %6618 = vst.msk [vmem:[#allocation3 + $0x70] sm:$0xff] %vm6603, 0.0
  %6619 = vst.msk [vmem:[#allocation3 + $0x78] sm:$0xff] %vm6603, 0.0
  %6620 = vst.msk [vmem:[#allocation3 + $0x80] sm:$0xff] %vm6603, 0.0
  %6621 = vst.msk [vmem:[#allocation3 + $0x88] sm:$0xff] %vm6603, 0.0
  %6622 = vst.msk [vmem:[#allocation3 + $0x90] sm:$0xff] %vm6603, 0.0
  %6623 = vst.msk [vmem:[#allocation3 + $0x98] sm:$0xff] %vm6603, 0.0
  %6624 = vst.msk [vmem:[#allocation3 + $0xa0] sm:$0xff] %vm6603, 0.0
  %6625 = vst.msk [vmem:[#allocation3 + $0xa8] sm:$0xff] %vm6603, 0.0
  %6626 = vst.msk [vmem:[#allocation3 + $0xb0] sm:$0xff] %vm6603, 0.0
  %6627 = vst.msk [vmem:[#allocation3 + $0xb8] sm:$0xff] %vm6603, 0.0
  %6628 = vst.msk [vmem:[#allocation3 + $0xc0] sm:$0xff] %vm6603, 0.0
  %6629 = vst.msk [vmem:[#allocation3 + $0xc8] sm:$0xff] %vm6603, 0.0
  %6630 = vst.msk [vmem:[#allocation3 + $0xd0] sm:$0xff] %vm6603, 0.0
  %6631 = vst.msk [vmem:[#allocation3 + $0xd8] sm:$0xff] %vm6603, 0.0
  %6632 = vst.msk [vmem:[#allocation3 + $0xe0] sm:$0xff] %vm6603, 0.0
  %6633 = vst.msk [vmem:[#allocation3 + $0xe8] sm:$0xff] %vm6603, 0.0
  %6634 = vst.msk [vmem:[#allocation3 + $0xf0] sm:$0xff] %vm6603, 0.0
  %6635 = vst.msk [vmem:[#allocation3 + $0xf8] sm:$0xff] %vm6603, 0.0
  %6636 = vst.msk [vmem:[#allocation3 + $0x100] sm:$0xff] %vm6603, 0.0
  %6637 = vst.msk [vmem:[#allocation3 + $0x108] sm:$0xff] %vm6603, 0.0
  %6638 = vst.msk [vmem:[#allocation3 + $0x110] sm:$0xff] %vm6603, 0.0
  %6639 = vst.msk [vmem:[#allocation3 + $0x118] sm:$0xff] %vm6603, 0.0
  %6640 = vst.msk [vmem:[#allocation3 + $0x120] sm:$0xff] %vm6603, 0.0
  %6641 = vst.msk [vmem:[#allocation3 + $0x128] sm:$0xff] %vm6603, 0.0
  %6642 = vst.msk [vmem:[#allocation3 + $0x130] sm:$0xff] %vm6603, 0.0
  %6643 = vst.msk [vmem:[#allocation3 + $0x138] sm:$0xff] %vm6603, 0.0
  %6644 = vst.msk [vmem:[#allocation3 + $0x140] sm:$0xff] %vm6603, 0.0
  %6645 = vst.msk [vmem:[#allocation3 + $0x148] sm:$0xff] %vm6603, 0.0
  %6646 = vst.msk [vmem:[#allocation3 + $0x150] sm:$0xff] %vm6603, 0.0
  %6647 = vst.msk [vmem:[#allocation3 + $0x158] sm:$0xff] %vm6603, 0.0
  %6648 = vst.msk [vmem:[#allocation3 + $0x160] sm:$0xff] %vm6603, 0.0
  %6649 = vst.msk [vmem:[#allocation3 + $0x168] sm:$0xff] %vm6603, 0.0
  %6650 = vst.msk [vmem:[#allocation3 + $0x170] sm:$0xff] %vm6603, 0.0
  %6651 = vst.msk [vmem:[#allocation3 + $0x178] sm:$0xff] %vm6603, 0.0
  %6652 = vst.msk [vmem:[#allocation3 + $0x180] sm:$0xff] %vm6603, 0.0
  %6653 = vst.msk [vmem:[#allocation3 + $0x188] sm:$0xff] %vm6603, 0.0
  %6654 = vst.msk [vmem:[#allocation3 + $0x190] sm:$0xff] %vm6603, 0.0
  %6655 = vst.msk [vmem:[#allocation3 + $0x198] sm:$0xff] %vm6603, 0.0
  %6656 = vst.msk [vmem:[#allocation3 + $0x1a0] sm:$0xff] %vm6603, 0.0
  %6657 = vst.msk [vmem:[#allocation3 + $0x1a8] sm:$0xff] %vm6603, 0.0
  %6658 = vst.msk [vmem:[#allocation3 + $0x1b0] sm:$0xff] %vm6603, 0.0
  %6659 = vst.msk [vmem:[#allocation3 + $0x1b8] sm:$0xff] %vm6603, 0.0
  %6660 = vst.msk [vmem:[#allocation3 + $0x1c0] sm:$0xff] %vm6603, 0.0
  %6661 = vst.msk [vmem:[#allocation3 + $0x1c8] sm:$0xff] %vm6603, 0.0
  %6662 = vst.msk [vmem:[#allocation3 + $0x1d0] sm:$0xff] %vm6603, 0.0
  %6663 = vst.msk [vmem:[#allocation3 + $0x1d8] sm:$0xff] %vm6603, 0.0
  %6664 = vst.msk [vmem:[#allocation3 + $0x1e0] sm:$0xff] %vm6603, 0.0
  %6665 = vst.msk [vmem:[#allocation3 + $0x1e8] sm:$0xff] %vm6603, 0.0
  %6666 = vst.msk [vmem:[#allocation3 + $0x1f0] sm:$0xff] %vm6603, 0.0
  %6667 = vst.msk [vmem:[#allocation3 + $0x1f8] sm:$0xff] %vm6603, 0.0
  %s6668 = scalar_lea.vmem [#allocation3], 16
  %vm6669 = vcmask 64512
  %6670 = vst.msk [vmem:[%s6668 + $0x1] sm:$0xff] %vm6669, %v6539
  %vm6671 = vcmask 63488
  %6672 = vst.msk [vmem:[%s6668 + $0x9] sm:$0x7f] %vm6671, %v6540
  %6673 = vst.msk [vmem:[%s6668 + $0x11] sm:$0xff] %vm6669, %v6541
  %6674 = vst.msk [vmem:[%s6668 + $0x19] sm:$0x7f] %vm6671, %v6542
  %6675 = vst.msk [vmem:[%s6668 + $0x21] sm:$0xff] %vm6669, %v6543
  %6676 = vst.msk [vmem:[%s6668 + $0x29] sm:$0x7f] %vm6671, %v6544
  %6677 = vst.msk [vmem:[%s6668 + $0x31] sm:$0xff] %vm6669, %v6545
  %6678 = vst.msk [vmem:[%s6668 + $0x39] sm:$0x7f] %vm6671, %v6546
  %6679 = vst.msk [vmem:[%s6668 + $0x41] sm:$0xff] %vm6669, %v6547
  %6680 = vst.msk [vmem:[%s6668 + $0x49] sm:$0x7f] %vm6671, %v6548
  %6681 = vst.msk [vmem:[%s6668 + $0x51] sm:$0xff] %vm6669, %v6549
  %6682 = vst.msk [vmem:[%s6668 + $0x59] sm:$0x7f] %vm6671, %v6550
  %6683 = vst.msk [vmem:[%s6668 + $0x61] sm:$0xff] %vm6669, %v6551
  %6684 = vst.msk [vmem:[%s6668 + $0x69] sm:$0x7f] %vm6671, %v6552
  %6685 = vst.msk [vmem:[%s6668 + $0x71] sm:$0xff] %vm6669, %v6553
  %6686 = vst.msk [vmem:[%s6668 + $0x79] sm:$0x7f] %vm6671, %v6554
  %6687 = vst.msk [vmem:[%s6668 + $0x81] sm:$0xff] %vm6669, %v6555
  %6688 = vst.msk [vmem:[%s6668 + $0x89] sm:$0x7f] %vm6671, %v6556
  %6689 = vst.msk [vmem:[%s6668 + $0x91] sm:$0xff] %vm6669, %v6557
  %6690 = vst.msk [vmem:[%s6668 + $0x99] sm:$0x7f] %vm6671, %v6558
  %6691 = vst.msk [vmem:[%s6668 + $0xa1] sm:$0xff] %vm6669, %v6559
  %6692 = vst.msk [vmem:[%s6668 + $0xa9] sm:$0x7f] %vm6671, %v6560
  %6693 = vst.msk [vmem:[%s6668 + $0xb1] sm:$0xff] %vm6669, %v6561
  %6694 = vst.msk [vmem:[%s6668 + $0xb9] sm:$0x7f] %vm6671, %v6562
  %6695 = vst.msk [vmem:[%s6668 + $0xc1] sm:$0xff] %vm6669, %v6563
  %6696 = vst.msk [vmem:[%s6668 + $0xc9] sm:$0x7f] %vm6671, %v6564
  %6697 = vst.msk [vmem:[%s6668 + $0xd1] sm:$0xff] %vm6669, %v6565
  %6698 = vst.msk [vmem:[%s6668 + $0xd9] sm:$0x7f] %vm6671, %v6566
  %6699 = vst.msk [vmem:[%s6668 + $0xe1] sm:$0xff] %vm6669, %v6567
  %6700 = vst.msk [vmem:[%s6668 + $0xe9] sm:$0x7f] %vm6671, %v6568
  %6701 = vst.msk [vmem:[%s6668 + $0x101] sm:$0xff] %vm6669, %v6571
  %6702 = vst.msk [vmem:[%s6668 + $0x109] sm:$0x7f] %vm6671, %v6572
  %6703 = vst.msk [vmem:[%s6668 + $0x111] sm:$0xff] %vm6669, %v6573
  %6704 = vst.msk [vmem:[%s6668 + $0x119] sm:$0x7f] %vm6671, %v6574
  %6705 = vst.msk [vmem:[%s6668 + $0x121] sm:$0xff] %vm6669, %v6575
  %6706 = vst.msk [vmem:[%s6668 + $0x129] sm:$0x7f] %vm6671, %v6576
  %6707 = vst.msk [vmem:[%s6668 + $0x131] sm:$0xff] %vm6669, %v6577
  %6708 = vst.msk [vmem:[%s6668 + $0x139] sm:$0x7f] %vm6671, %v6578
  %6709 = vst.msk [vmem:[%s6668 + $0x141] sm:$0xff] %vm6669, %v6579
  %6710 = vst.msk [vmem:[%s6668 + $0x149] sm:$0x7f] %vm6671, %v6580
  %6711 = vst.msk [vmem:[%s6668 + $0x151] sm:$0xff] %vm6669, %v6581
  %6712 = vst.msk [vmem:[%s6668 + $0x159] sm:$0x7f] %vm6671, %v6582
  %6713 = vst.msk [vmem:[%s6668 + $0x161] sm:$0xff] %vm6669, %v6583
  %6714 = vst.msk [vmem:[%s6668 + $0x169] sm:$0x7f] %vm6671, %v6584
  %6715 = vst.msk [vmem:[%s6668 + $0x171] sm:$0xff] %vm6669, %v6585
  %6716 = vst.msk [vmem:[%s6668 + $0x179] sm:$0x7f] %vm6671, %v6586
  %6717 = vst.msk [vmem:[%s6668 + $0x181] sm:$0xff] %vm6669, %v6587
  %6718 = vst.msk [vmem:[%s6668 + $0x189] sm:$0x7f] %vm6671, %v6588
  %6719 = vst.msk [vmem:[%s6668 + $0x191] sm:$0xff] %vm6669, %v6589
  %6720 = vst.msk [vmem:[%s6668 + $0x199] sm:$0x7f] %vm6671, %v6590
  %6721 = vst.msk [vmem:[%s6668 + $0x1a1] sm:$0xff] %vm6669, %v6591
  %6722 = vst.msk [vmem:[%s6668 + $0x1a9] sm:$0x7f] %vm6671, %v6592
  %6723 = vst.msk [vmem:[%s6668 + $0x1b1] sm:$0xff] %vm6669, %v6593
  %6724 = vst.msk [vmem:[%s6668 + $0x1b9] sm:$0x7f] %vm6671, %v6594
  %6725 = vst.msk [vmem:[%s6668 + $0x1c1] sm:$0xff] %vm6669, %v6595
  %6726 = vst.msk [vmem:[%s6668 + $0x1c9] sm:$0x7f] %vm6671, %v6596
  %6727 = vst.msk [vmem:[%s6668 + $0x1d1] sm:$0xff] %vm6669, %v6597
  %6728 = vst.msk [vmem:[%s6668 + $0x1d9] sm:$0x7f] %vm6671, %v6598
  %6729 = vst.msk [vmem:[%s6668 + $0x1e1] sm:$0xff] %vm6669, %v6599
  %6730 = vst.msk [vmem:[%s6668 + $0x1e9] sm:$0x7f] %vm6671, %v6600
  %6791 = vrot.lane.b32.xlu0 %v6539, 8
  %v6792 = vpop.permute.xlu0 %6791
  %6793 = vrot.lane.b32.xlu0 %v6540, 8
  %v6794 = vpop.permute.xlu0 %6793
  %6795 = vrot.lane.b32.xlu0 %v6541, 8
  %v6796 = vpop.permute.xlu0 %6795
  %6797 = vrot.lane.b32.xlu0 %v6542, 8
  %v6798 = vpop.permute.xlu0 %6797
  %6799 = vrot.lane.b32.xlu0 %v6543, 8
  %v6800 = vpop.permute.xlu0 %6799
  %6801 = vrot.lane.b32.xlu0 %v6544, 8
  %v6802 = vpop.permute.xlu0 %6801
  %6803 = vrot.lane.b32.xlu0 %v6545, 8
  %v6804 = vpop.permute.xlu0 %6803
  %6805 = vrot.lane.b32.xlu0 %v6546, 8
  %v6806 = vpop.permute.xlu0 %6805
  %6807 = vrot.lane.b32.xlu0 %v6547, 8
  %v6808 = vpop.permute.xlu0 %6807
  %6809 = vrot.lane.b32.xlu0 %v6548, 8
  %v6810 = vpop.permute.xlu0 %6809
  %6811 = vrot.lane.b32.xlu0 %v6549, 8
  %v6812 = vpop.permute.xlu0 %6811
  %6813 = vrot.lane.b32.xlu0 %v6550, 8
  %v6814 = vpop.permute.xlu0 %6813
  %6815 = vrot.lane.b32.xlu0 %v6551, 8
  %v6816 = vpop.permute.xlu0 %6815
  %6817 = vrot.lane.b32.xlu0 %v6552, 8
  %v6818 = vpop.permute.xlu0 %6817
  %6819 = vrot.lane.b32.xlu0 %v6553, 8
  %v6820 = vpop.permute.xlu0 %6819
  %6821 = vrot.lane.b32.xlu0 %v6554, 8
  %v6822 = vpop.permute.xlu0 %6821
  %6823 = vrot.lane.b32.xlu0 %v6555, 8
  %v6824 = vpop.permute.xlu0 %6823
  %6825 = vrot.lane.b32.xlu0 %v6556, 8
  %v6826 = vpop.permute.xlu0 %6825
  %6827 = vrot.lane.b32.xlu0 %v6557, 8
  %v6828 = vpop.permute.xlu0 %6827
  %6829 = vrot.lane.b32.xlu0 %v6558, 8
  %v6830 = vpop.permute.xlu0 %6829
  %6831 = vrot.lane.b32.xlu0 %v6559, 8
  %v6832 = vpop.permute.xlu0 %6831
  %6833 = vrot.lane.b32.xlu0 %v6560, 8
  %v6834 = vpop.permute.xlu0 %6833
  %6835 = vrot.lane.b32.xlu0 %v6561, 8
  %v6836 = vpop.permute.xlu0 %6835
  %6837 = vrot.lane.b32.xlu0 %v6562, 8
  %v6838 = vpop.permute.xlu0 %6837
  %6839 = vrot.lane.b32.xlu0 %v6563, 8
  %v6840 = vpop.permute.xlu0 %6839
  %6841 = vrot.lane.b32.xlu0 %v6564, 8
  %v6842 = vpop.permute.xlu0 %6841
  %6843 = vrot.lane.b32.xlu0 %v6565, 8
  %v6844 = vpop.permute.xlu0 %6843
  %6845 = vrot.lane.b32.xlu0 %v6566, 8
  %v6846 = vpop.permute.xlu0 %6845
  %6847 = vrot.lane.b32.xlu0 %v6567, 8
  %v6848 = vpop.permute.xlu0 %6847
  %6849 = vrot.lane.b32.xlu0 %v6568, 8
  %v6850 = vpop.permute.xlu0 %6849
  %6851 = vrot.lane.b32.xlu0 %v6571, 8
  %v6852 = vpop.permute.xlu0 %6851
  %6853 = vrot.lane.b32.xlu0 %v6572, 8
  %v6854 = vpop.permute.xlu0 %6853
  %6855 = vrot.lane.b32.xlu0 %v6573, 8
  %v6856 = vpop.permute.xlu0 %6855
  %6857 = vrot.lane.b32.xlu0 %v6574, 8
  %v6858 = vpop.permute.xlu0 %6857
  %6859 = vrot.lane.b32.xlu0 %v6575, 8
  %v6860 = vpop.permute.xlu0 %6859
  %6861 = vrot.lane.b32.xlu0 %v6576, 8
  %v6862 = vpop.permute.xlu0 %6861
  %6863 = vrot.lane.b32.xlu0 %v6577, 8
  %v6864 = vpop.permute.xlu0 %6863
  %6865 = vrot.lane.b32.xlu0 %v6578, 8
  %v6866 = vpop.permute.xlu0 %6865
  %6867 = vrot.lane.b32.xlu0 %v6579, 8
  %v6868 = vpop.permute.xlu0 %6867
  %6869 = vrot.lane.b32.xlu0 %v6580, 8
  %v6870 = vpop.permute.xlu0 %6869
  %6871 = vrot.lane.b32.xlu0 %v6581, 8
  %v6872 = vpop.permute.xlu0 %6871
  %6873 = vrot.lane.b32.xlu0 %v6582, 8
  %v6874 = vpop.permute.xlu0 %6873
  %6875 = vrot.lane.b32.xlu0 %v6583, 8
  %v6876 = vpop.permute.xlu0 %6875
  %6877 = vrot.lane.b32.xlu0 %v6584, 8
  %v6878 = vpop.permute.xlu0 %6877
  %6879 = vrot.lane.b32.xlu0 %v6585, 8
  %v6880 = vpop.permute.xlu0 %6879
  %6881 = vrot.lane.b32.xlu0 %v6586, 8
  %v6882 = vpop.permute.xlu0 %6881
  %6883 = vrot.lane.b32.xlu0 %v6587, 8
  %v6884 = vpop.permute.xlu0 %6883
  %6885 = vrot.lane.b32.xlu0 %v6588, 8
  %v6886 = vpop.permute.xlu0 %6885
  %6887 = vrot.lane.b32.xlu0 %v6589, 8
  %v6888 = vpop.permute.xlu0 %6887
  %6889 = vrot.lane.b32.xlu0 %v6590, 8
  %v6890 = vpop.permute.xlu0 %6889
  %6891 = vrot.lane.b32.xlu0 %v6591, 8
  %v6892 = vpop.permute.xlu0 %6891
  %6893 = vrot.lane.b32.xlu0 %v6592, 8
  %v6894 = vpop.permute.xlu0 %6893
  %6895 = vrot.lane.b32.xlu0 %v6593, 8
  %v6896 = vpop.permute.xlu0 %6895
  %6897 = vrot.lane.b32.xlu0 %v6594, 8
  %v6898 = vpop.permute.xlu0 %6897
  %6899 = vrot.lane.b32.xlu0 %v6595, 8
  %v6900 = vpop.permute.xlu0 %6899
  %6901 = vrot.lane.b32.xlu0 %v6596, 8
  %v6902 = vpop.permute.xlu0 %6901
  %6903 = vrot.lane.b32.xlu0 %v6597, 8
  %v6904 = vpop.permute.xlu0 %6903
  %6905 = vrot.lane.b32.xlu0 %v6598, 8
  %v6906 = vpop.permute.xlu0 %6905
  %6907 = vrot.lane.b32.xlu0 %v6599, 8
  %v6908 = vpop.permute.xlu0 %6907
  %6909 = vrot.lane.b32.xlu0 %v6600, 8
  %v6910 = vpop.permute.xlu0 %6909
  %vm6971 = vcmask 130112
  %6972 = vst.msk [vmem:[%s6668] sm:$0xff] %vm6971, %v6792
  %6973 = vst.msk [vmem:[%s6668 + $0x8] sm:$0xff] %vm6971, %v6794
  %6974 = vst.msk [vmem:[%s6668 + $0x10] sm:$0xff] %vm6971, %v6796
  %6975 = vst.msk [vmem:[%s6668 + $0x18] sm:$0xff] %vm6971, %v6798
  %6976 = vst.msk [vmem:[%s6668 + $0x20] sm:$0xff] %vm6971, %v6800
  %6977 = vst.msk [vmem:[%s6668 + $0x28] sm:$0xff] %vm6971, %v6802
  %6978 = vst.msk [vmem:[%s6668 + $0x30] sm:$0xff] %vm6971, %v6804
  %6979 = vst.msk [vmem:[%s6668 + $0x38] sm:$0xff] %vm6971, %v6806
  %6980 = vst.msk [vmem:[%s6668 + $0x40] sm:$0xff] %vm6971, %v6808
  %6981 = vst.msk [vmem:[%s6668 + $0x48] sm:$0xff] %vm6971, %v6810
  %6982 = vst.msk [vmem:[%s6668 + $0x50] sm:$0xff] %vm6971, %v6812
  %6983 = vst.msk [vmem:[%s6668 + $0x58] sm:$0xff] %vm6971, %v6814
  %6984 = vst.msk [vmem:[%s6668 + $0x60] sm:$0xff] %vm6971, %v6816
  %6985 = vst.msk [vmem:[%s6668 + $0x68] sm:$0xff] %vm6971, %v6818
  %6986 = vst.msk [vmem:[%s6668 + $0x70] sm:$0xff] %vm6971, %v6820
  %6987 = vst.msk [vmem:[%s6668 + $0x78] sm:$0xff] %vm6971, %v6822
  %6988 = vst.msk [vmem:[%s6668 + $0x80] sm:$0xff] %vm6971, %v6824
  %6989 = vst.msk [vmem:[%s6668 + $0x88] sm:$0xff] %vm6971, %v6826
  %6990 = vst.msk [vmem:[%s6668 + $0x90] sm:$0xff] %vm6971, %v6828
  %6991 = vst.msk [vmem:[%s6668 + $0x98] sm:$0xff] %vm6971, %v6830
  %6992 = vst.msk [vmem:[%s6668 + $0xa0] sm:$0xff] %vm6971, %v6832
  %6993 = vst.msk [vmem:[%s6668 + $0xa8] sm:$0xff] %vm6971, %v6834
  %6994 = vst.msk [vmem:[%s6668 + $0xb0] sm:$0xff] %vm6971, %v6836
  %6995 = vst.msk [vmem:[%s6668 + $0xb8] sm:$0xff] %vm6971, %v6838
  %6996 = vst.msk [vmem:[%s6668 + $0xc0] sm:$0xff] %vm6971, %v6840
  %6997 = vst.msk [vmem:[%s6668 + $0xc8] sm:$0xff] %vm6971, %v6842
  %6998 = vst.msk [vmem:[%s6668 + $0xd0] sm:$0xff] %vm6971, %v6844
  %6999 = vst.msk [vmem:[%s6668 + $0xd8] sm:$0xff] %vm6971, %v6846
  %7000 = vst.msk [vmem:[%s6668 + $0xe0] sm:$0xff] %vm6971, %v6848
  %7001 = vst.msk [vmem:[%s6668 + $0xe8] sm:$0xff] %vm6971, %v6850
  %7002 = vst.msk [vmem:[%s6668 + $0x100] sm:$0xff] %vm6971, %v6852
  %7003 = vst.msk [vmem:[%s6668 + $0x108] sm:$0xff] %vm6971, %v6854
  %7004 = vst.msk [vmem:[%s6668 + $0x110] sm:$0xff] %vm6971, %v6856
  %7005 = vst.msk [vmem:[%s6668 + $0x118] sm:$0xff] %vm6971, %v6858
  %7006 = vst.msk [vmem:[%s6668 + $0x120] sm:$0xff] %vm6971, %v6860
  %7007 = vst.msk [vmem:[%s6668 + $0x128] sm:$0xff] %vm6971, %v6862
  %7008 = vst.msk [vmem:[%s6668 + $0x130] sm:$0xff] %vm6971, %v6864
  %7009 = vst.msk [vmem:[%s6668 + $0x138] sm:$0xff] %vm6971, %v6866
  %7010 = vst.msk [vmem:[%s6668 + $0x140] sm:$0xff] %vm6971, %v6868
  %7011 = vst.msk [vmem:[%s6668 + $0x148] sm:$0xff] %vm6971, %v6870
  %7012 = vst.msk [vmem:[%s6668 + $0x150] sm:$0xff] %vm6971, %v6872
  %7013 = vst.msk [vmem:[%s6668 + $0x158] sm:$0xff] %vm6971, %v6874
  %7014 = vst.msk [vmem:[%s6668 + $0x160] sm:$0xff] %vm6971, %v6876
  %7015 = vst.msk [vmem:[%s6668 + $0x168] sm:$0xff] %vm6971, %v6878
  %7016 = vst.msk [vmem:[%s6668 + $0x170] sm:$0xff] %vm6971, %v6880
  %7017 = vst.msk [vmem:[%s6668 + $0x178] sm:$0xff] %vm6971, %v6882
  %7018 = vst.msk [vmem:[%s6668 + $0x180] sm:$0xff] %vm6971, %v6884
  %7019 = vst.msk [vmem:[%s6668 + $0x188] sm:$0xff] %vm6971, %v6886
  %7020 = vst.msk [vmem:[%s6668 + $0x190] sm:$0xff] %vm6971, %v6888
  %7021 = vst.msk [vmem:[%s6668 + $0x198] sm:$0xff] %vm6971, %v6890
  %7022 = vst.msk [vmem:[%s6668 + $0x1a0] sm:$0xff] %vm6971, %v6892
  %7023 = vst.msk [vmem:[%s6668 + $0x1a8] sm:$0xff] %vm6971, %v6894
  %7024 = vst.msk [vmem:[%s6668 + $0x1b0] sm:$0xff] %vm6971, %v6896
  %7025 = vst.msk [vmem:[%s6668 + $0x1b8] sm:$0xff] %vm6971, %v6898
  %7026 = vst.msk [vmem:[%s6668 + $0x1c0] sm:$0xff] %vm6971, %v6900
  %7027 = vst.msk [vmem:[%s6668 + $0x1c8] sm:$0xff] %vm6971, %v6902
  %7028 = vst.msk [vmem:[%s6668 + $0x1d0] sm:$0xff] %vm6971, %v6904
  %7029 = vst.msk [vmem:[%s6668 + $0x1d8] sm:$0xff] %vm6971, %v6906
  %7030 = vst.msk [vmem:[%s6668 + $0x1e0] sm:$0xff] %vm6971, %v6908
  %7031 = vst.msk [vmem:[%s6668 + $0x1e8] sm:$0xff] %vm6971, %v6910
  %7032 = vrot.lane.b32.xlu0 %v6539, 16
  %v7033 = vpop.permute.xlu0 %7032
  %7034 = vrot.lane.b32.xlu0 %v6540, 16
  %v7035 = vpop.permute.xlu0 %7034
  %7036 = vrot.lane.b32.xlu0 %v6541, 16
  %v7037 = vpop.permute.xlu0 %7036
  %7038 = vrot.lane.b32.xlu0 %v6542, 16
  %v7039 = vpop.permute.xlu0 %7038
  %7040 = vrot.lane.b32.xlu0 %v6543, 16
  %v7041 = vpop.permute.xlu0 %7040
  %7042 = vrot.lane.b32.xlu0 %v6544, 16
  %v7043 = vpop.permute.xlu0 %7042
  %7044 = vrot.lane.b32.xlu0 %v6545, 16
  %v7045 = vpop.permute.xlu0 %7044
  %7046 = vrot.lane.b32.xlu0 %v6546, 16
  %v7047 = vpop.permute.xlu0 %7046
  %7048 = vrot.lane.b32.xlu0 %v6547, 16
  %v7049 = vpop.permute.xlu0 %7048
  %7050 = vrot.lane.b32.xlu0 %v6548, 16
  %v7051 = vpop.permute.xlu0 %7050
  %7052 = vrot.lane.b32.xlu0 %v6549, 16
  %v7053 = vpop.permute.xlu0 %7052
  %7054 = vrot.lane.b32.xlu0 %v6550, 16
  %v7055 = vpop.permute.xlu0 %7054
  %7056 = vrot.lane.b32.xlu0 %v6551, 16
  %v7057 = vpop.permute.xlu0 %7056
  %7058 = vrot.lane.b32.xlu0 %v6552, 16
  %v7059 = vpop.permute.xlu0 %7058
  %7060 = vrot.lane.b32.xlu0 %v6553, 16
  %v7061 = vpop.permute.xlu0 %7060
  %7062 = vrot.lane.b32.xlu0 %v6554, 16
  %v7063 = vpop.permute.xlu0 %7062
  %7064 = vrot.lane.b32.xlu0 %v6555, 16
  %v7065 = vpop.permute.xlu0 %7064
  %7066 = vrot.lane.b32.xlu0 %v6556, 16
  %v7067 = vpop.permute.xlu0 %7066
  %7068 = vrot.lane.b32.xlu0 %v6557, 16
  %v7069 = vpop.permute.xlu0 %7068
  %7070 = vrot.lane.b32.xlu0 %v6558, 16
  %v7071 = vpop.permute.xlu0 %7070
  %7072 = vrot.lane.b32.xlu0 %v6559, 16
  %v7073 = vpop.permute.xlu0 %7072
  %7074 = vrot.lane.b32.xlu0 %v6560, 16
  %v7075 = vpop.permute.xlu0 %7074
  %7076 = vrot.lane.b32.xlu0 %v6561, 16
  %v7077 = vpop.permute.xlu0 %7076
  %7078 = vrot.lane.b32.xlu0 %v6562, 16
  %v7079 = vpop.permute.xlu0 %7078
  %7080 = vrot.lane.b32.xlu0 %v6563, 16
  %v7081 = vpop.permute.xlu0 %7080
  %7082 = vrot.lane.b32.xlu0 %v6564, 16
  %v7083 = vpop.permute.xlu0 %7082
  %7084 = vrot.lane.b32.xlu0 %v6565, 16
  %v7085 = vpop.permute.xlu0 %7084
  %7086 = vrot.lane.b32.xlu0 %v6566, 16
  %v7087 = vpop.permute.xlu0 %7086
  %7088 = vrot.lane.b32.xlu0 %v6567, 16
  %v7089 = vpop.permute.xlu0 %7088
  %7090 = vrot.lane.b32.xlu0 %v6568, 16
  %v7091 = vpop.permute.xlu0 %7090
  %7092 = vrot.lane.b32.xlu0 %v6571, 16
  %v7093 = vpop.permute.xlu0 %7092
  %7094 = vrot.lane.b32.xlu0 %v6572, 16
  %v7095 = vpop.permute.xlu0 %7094
  %7096 = vrot.lane.b32.xlu0 %v6573, 16
  %v7097 = vpop.permute.xlu0 %7096
  %7098 = vrot.lane.b32.xlu0 %v6574, 16
  %v7099 = vpop.permute.xlu0 %7098
  %7100 = vrot.lane.b32.xlu0 %v6575, 16
  %v7101 = vpop.permute.xlu0 %7100
  %7102 = vrot.lane.b32.xlu0 %v6576, 16
  %v7103 = vpop.permute.xlu0 %7102
  %7104 = vrot.lane.b32.xlu0 %v6577, 16
  %v7105 = vpop.permute.xlu0 %7104
  %7106 = vrot.lane.b32.xlu0 %v6578, 16
  %v7107 = vpop.permute.xlu0 %7106
  %7108 = vrot.lane.b32.xlu0 %v6579, 16
  %v7109 = vpop.permute.xlu0 %7108
  %7110 = vrot.lane.b32.xlu0 %v6580, 16
  %v7111 = vpop.permute.xlu0 %7110
  %7112 = vrot.lane.b32.xlu0 %v6581, 16
  %v7113 = vpop.permute.xlu0 %7112
  %7114 = vrot.lane.b32.xlu0 %v6582, 16
  %v7115 = vpop.permute.xlu0 %7114
  %7116 = vrot.lane.b32.xlu0 %v6583, 16
  %v7117 = vpop.permute.xlu0 %7116
  %7118 = vrot.lane.b32.xlu0 %v6584, 16
  %v7119 = vpop.permute.xlu0 %7118
  %7120 = vrot.lane.b32.xlu0 %v6585, 16
  %v7121 = vpop.permute.xlu0 %7120
  %7122 = vrot.lane.b32.xlu0 %v6586, 16
  %v7123 = vpop.permute.xlu0 %7122
  %7124 = vrot.lane.b32.xlu0 %v6587, 16
  %v7125 = vpop.permute.xlu0 %7124
  %7126 = vrot.lane.b32.xlu0 %v6588, 16
  %v7127 = vpop.permute.xlu0 %7126
  %7128 = vrot.lane.b32.xlu0 %v6589, 16
  %v7129 = vpop.permute.xlu0 %7128
  %7130 = vrot.lane.b32.xlu0 %v6590, 16
  %v7131 = vpop.permute.xlu0 %7130
  %7132 = vrot.lane.b32.xlu0 %v6591, 16
  %v7133 = vpop.permute.xlu0 %7132
  %7134 = vrot.lane.b32.xlu0 %v6592, 16
  %v7135 = vpop.permute.xlu0 %7134
  %7136 = vrot.lane.b32.xlu0 %v6593, 16
  %v7137 = vpop.permute.xlu0 %7136
  %7138 = vrot.lane.b32.xlu0 %v6594, 16
  %v7139 = vpop.permute.xlu0 %7138
  %7140 = vrot.lane.b32.xlu0 %v6595, 16
  %v7141 = vpop.permute.xlu0 %7140
  %7142 = vrot.lane.b32.xlu0 %v6596, 16
  %v7143 = vpop.permute.xlu0 %7142
  %7144 = vrot.lane.b32.xlu0 %v6597, 16
  %v7145 = vpop.permute.xlu0 %7144
  %7146 = vrot.lane.b32.xlu0 %v6598, 16
  %v7147 = vpop.permute.xlu0 %7146
  %7148 = vrot.lane.b32.xlu0 %v6599, 16
  %v7149 = vpop.permute.xlu0 %7148
  %7150 = vrot.lane.b32.xlu0 %v6600, 16
  %v7151 = vpop.permute.xlu0 %7150
  %vm7212 = vcmask 195713
  %7213 = vst.msk [vmem:[%s6668 - $0x1] sm:$0xfe] %vm7212, %v7033
  %vm7214 = vcmask 195712
  %7215 = vst.msk [vmem:[%s6668 + $0x7] sm:$0xff] %vm7214, %v7035
  %7216 = vst.msk [vmem:[%s6668 + $0xf] sm:$0xfe] %vm7212, %v7037
  %7217 = vst.msk [vmem:[%s6668 + $0x17] sm:$0xff] %vm7214, %v7039
  %7218 = vst.msk [vmem:[%s6668 + $0x1f] sm:$0xfe] %vm7212, %v7041
  %7219 = vst.msk [vmem:[%s6668 + $0x27] sm:$0xff] %vm7214, %v7043
  %7220 = vst.msk [vmem:[%s6668 + $0x2f] sm:$0xfe] %vm7212, %v7045
  %7221 = vst.msk [vmem:[%s6668 + $0x37] sm:$0xff] %vm7214, %v7047
  %7222 = vst.msk [vmem:[%s6668 + $0x3f] sm:$0xfe] %vm7212, %v7049
  %7223 = vst.msk [vmem:[%s6668 + $0x47] sm:$0xff] %vm7214, %v7051
  %7224 = vst.msk [vmem:[%s6668 + $0x4f] sm:$0xfe] %vm7212, %v7053
  %7225 = vst.msk [vmem:[%s6668 + $0x57] sm:$0xff] %vm7214, %v7055
  %7226 = vst.msk [vmem:[%s6668 + $0x5f] sm:$0xfe] %vm7212, %v7057
  %7227 = vst.msk [vmem:[%s6668 + $0x67] sm:$0xff] %vm7214, %v7059
  %7228 = vst.msk [vmem:[%s6668 + $0x6f] sm:$0xfe] %vm7212, %v7061
  %7229 = vst.msk [vmem:[%s6668 + $0x77] sm:$0xff] %vm7214, %v7063
  %7230 = vst.msk [vmem:[%s6668 + $0x7f] sm:$0xfe] %vm7212, %v7065
  %7231 = vst.msk [vmem:[%s6668 + $0x87] sm:$0xff] %vm7214, %v7067
  %7232 = vst.msk [vmem:[%s6668 + $0x8f] sm:$0xfe] %vm7212, %v7069
  %7233 = vst.msk [vmem:[%s6668 + $0x97] sm:$0xff] %vm7214, %v7071
  %7234 = vst.msk [vmem:[%s6668 + $0x9f] sm:$0xfe] %vm7212, %v7073
  %7235 = vst.msk [vmem:[%s6668 + $0xa7] sm:$0xff] %vm7214, %v7075
  %7236 = vst.msk [vmem:[%s6668 + $0xaf] sm:$0xfe] %vm7212, %v7077
  %7237 = vst.msk [vmem:[%s6668 + $0xb7] sm:$0xff] %vm7214, %v7079
  %7238 = vst.msk [vmem:[%s6668 + $0xbf] sm:$0xfe] %vm7212, %v7081
  %7239 = vst.msk [vmem:[%s6668 + $0xc7] sm:$0xff] %vm7214, %v7083
  %7240 = vst.msk [vmem:[%s6668 + $0xcf] sm:$0xfe] %vm7212, %v7085
  %7241 = vst.msk [vmem:[%s6668 + $0xd7] sm:$0xff] %vm7214, %v7087
  %7242 = vst.msk [vmem:[%s6668 + $0xdf] sm:$0xfe] %vm7212, %v7089
  %7243 = vst.msk [vmem:[%s6668 + $0xe7] sm:$0xff] %vm7214, %v7091
  %7244 = vst.msk [vmem:[%s6668 + $0xff] sm:$0xfe] %vm7212, %v7093
  %7245 = vst.msk [vmem:[%s6668 + $0x107] sm:$0xff] %vm7214, %v7095
  %7246 = vst.msk [vmem:[%s6668 + $0x10f] sm:$0xfe] %vm7212, %v7097
  %7247 = vst.msk [vmem:[%s6668 + $0x117] sm:$0xff] %vm7214, %v7099
  %7248 = vst.msk [vmem:[%s6668 + $0x11f] sm:$0xfe] %vm7212, %v7101
  %7249 = vst.msk [vmem:[%s6668 + $0x127] sm:$0xff] %vm7214, %v7103
  %7250 = vst.msk [vmem:[%s6668 + $0x12f] sm:$0xfe] %vm7212, %v7105
  %7251 = vst.msk [vmem:[%s6668 + $0x137] sm:$0xff] %vm7214, %v7107
  %7252 = vst.msk [vmem:[%s6668 + $0x13f] sm:$0xfe] %vm7212, %v7109
  %7253 = vst.msk [vmem:[%s6668 + $0x147] sm:$0xff] %vm7214, %v7111
  %7254 = vst.msk [vmem:[%s6668 + $0x14f] sm:$0xfe] %vm7212, %v7113
  %7255 = vst.msk [vmem:[%s6668 + $0x157] sm:$0xff] %vm7214, %v7115
  %7256 = vst.msk [vmem:[%s6668 + $0x15f] sm:$0xfe] %vm7212, %v7117
  %7257 = vst.msk [vmem:[%s6668 + $0x167] sm:$0xff] %vm7214, %v7119
  %7258 = vst.msk [vmem:[%s6668 + $0x16f] sm:$0xfe] %vm7212, %v7121
  %7259 = vst.msk [vmem:[%s6668 + $0x177] sm:$0xff] %vm7214, %v7123
  %7260 = vst.msk [vmem:[%s6668 + $0x17f] sm:$0xfe] %vm7212, %v7125
  %7261 = vst.msk [vmem:[%s6668 + $0x187] sm:$0xff] %vm7214, %v7127
  %7262 = vst.msk [vmem:[%s6668 + $0x18f] sm:$0xfe] %vm7212, %v7129
  %7263 = vst.msk [vmem:[%s6668 + $0x197] sm:$0xff] %vm7214, %v7131
  %7264 = vst.msk [vmem:[%s6668 + $0x19f] sm:$0xfe] %vm7212, %v7133
  %7265 = vst.msk [vmem:[%s6668 + $0x1a7] sm:$0xff] %vm7214, %v7135
  %7266 = vst.msk [vmem:[%s6668 + $0x1af] sm:$0xfe] %vm7212, %v7137
  %7267 = vst.msk [vmem:[%s6668 + $0x1b7] sm:$0xff] %vm7214, %v7139
  %7268 = vst.msk [vmem:[%s6668 + $0x1bf] sm:$0xfe] %vm7212, %v7141
  %7269 = vst.msk [vmem:[%s6668 + $0x1c7] sm:$0xff] %vm7214, %v7143
  %7270 = vst.msk [vmem:[%s6668 + $0x1cf] sm:$0xfe] %vm7212, %v7145
  %7271 = vst.msk [vmem:[%s6668 + $0x1d7] sm:$0xff] %vm7214, %v7147
  %7272 = vst.msk [vmem:[%s6668 + $0x1df] sm:$0xfe] %vm7212, %v7149
  %7273 = vst.msk [vmem:[%s6668 + $0x1e7] sm:$0xff] %vm7214, %v7151
  %7278 = vrot.lane.b32.xlu0 %v6539, 24
  %v7279 = vpop.permute.xlu0 %7278
  %7280 = vrot.lane.b32.xlu0 %v6540, 24
  %v7281 = vpop.permute.xlu0 %7280
  %7282 = vrot.lane.b32.xlu0 %v6541, 24
  %v7283 = vpop.permute.xlu0 %7282
  %7284 = vrot.lane.b32.xlu0 %v6542, 24
  %v7285 = vpop.permute.xlu0 %7284
  %7286 = vrot.lane.b32.xlu0 %v6543, 24
  %v7287 = vpop.permute.xlu0 %7286
  %7288 = vrot.lane.b32.xlu0 %v6544, 24
  %v7289 = vpop.permute.xlu0 %7288
  %7290 = vrot.lane.b32.xlu0 %v6545, 24
  %v7291 = vpop.permute.xlu0 %7290
  %7292 = vrot.lane.b32.xlu0 %v6546, 24
  %v7293 = vpop.permute.xlu0 %7292
  %7294 = vrot.lane.b32.xlu0 %v6547, 24
  %v7295 = vpop.permute.xlu0 %7294
  %7296 = vrot.lane.b32.xlu0 %v6548, 24
  %v7297 = vpop.permute.xlu0 %7296
  %7298 = vrot.lane.b32.xlu0 %v6549, 24
  %v7299 = vpop.permute.xlu0 %7298
  %7300 = vrot.lane.b32.xlu0 %v6550, 24
  %v7301 = vpop.permute.xlu0 %7300
  %7302 = vrot.lane.b32.xlu0 %v6551, 24
  %v7303 = vpop.permute.xlu0 %7302
  %7304 = vrot.lane.b32.xlu0 %v6552, 24
  %v7305 = vpop.permute.xlu0 %7304
  %7306 = vrot.lane.b32.xlu0 %v6553, 24
  %v7307 = vpop.permute.xlu0 %7306
  %7308 = vrot.lane.b32.xlu0 %v6554, 24
  %v7309 = vpop.permute.xlu0 %7308
  %7310 = vrot.lane.b32.xlu0 %v6555, 24
  %v7311 = vpop.permute.xlu0 %7310
  %7312 = vrot.lane.b32.xlu0 %v6556, 24
  %v7313 = vpop.permute.xlu0 %7312
  %7314 = vrot.lane.b32.xlu0 %v6557, 24
  %v7315 = vpop.permute.xlu0 %7314
  %7316 = vrot.lane.b32.xlu0 %v6558, 24
  %v7317 = vpop.permute.xlu0 %7316
  %7318 = vrot.lane.b32.xlu0 %v6559, 24
  %v7319 = vpop.permute.xlu0 %7318
  %7320 = vrot.lane.b32.xlu0 %v6560, 24
  %v7321 = vpop.permute.xlu0 %7320
  %7322 = vrot.lane.b32.xlu0 %v6561, 24
  %v7323 = vpop.permute.xlu0 %7322
  %7324 = vrot.lane.b32.xlu0 %v6562, 24
  %v7325 = vpop.permute.xlu0 %7324
  %7326 = vrot.lane.b32.xlu0 %v6563, 24
  %v7327 = vpop.permute.xlu0 %7326
  %7328 = vrot.lane.b32.xlu0 %v6564, 24
  %v7329 = vpop.permute.xlu0 %7328
  %7330 = vrot.lane.b32.xlu0 %v6565, 24
  %v7331 = vpop.permute.xlu0 %7330
  %7332 = vrot.lane.b32.xlu0 %v6566, 24
  %v7333 = vpop.permute.xlu0 %7332
  %7334 = vrot.lane.b32.xlu0 %v6567, 24
  %v7335 = vpop.permute.xlu0 %7334
  %7336 = vrot.lane.b32.xlu0 %v6568, 24
  %v7337 = vpop.permute.xlu0 %7336
  %7338 = vrot.lane.b32.xlu0 %v6569, 24
  %v7339 = vpop.permute.xlu0 %7338
  %7340 = vrot.lane.b32.xlu0 %v6570, 24
  %v7341 = vpop.permute.xlu0 %7340
  %7342 = vrot.lane.b32.xlu0 %v6571, 24
  %v7343 = vpop.permute.xlu0 %7342
  %7344 = vrot.lane.b32.xlu0 %v6572, 24
  %v7345 = vpop.permute.xlu0 %7344
  %7346 = vrot.lane.b32.xlu0 %v6573, 24
  %v7347 = vpop.permute.xlu0 %7346
  %7348 = vrot.lane.b32.xlu0 %v6574, 24
  %v7349 = vpop.permute.xlu0 %7348
  %7350 = vrot.lane.b32.xlu0 %v6575, 24
  %v7351 = vpop.permute.xlu0 %7350
  %7352 = vrot.lane.b32.xlu0 %v6576, 24
  %v7353 = vpop.permute.xlu0 %7352
  %7354 = vrot.lane.b32.xlu0 %v6577, 24
  %v7355 = vpop.permute.xlu0 %7354
  %7356 = vrot.lane.b32.xlu0 %v6578, 24
  %v7357 = vpop.permute.xlu0 %7356
  %7358 = vrot.lane.b32.xlu0 %v6579, 24
  %v7359 = vpop.permute.xlu0 %7358
  %7360 = vrot.lane.b32.xlu0 %v6580, 24
  %v7361 = vpop.permute.xlu0 %7360
  %7362 = vrot.lane.b32.xlu0 %v6581, 24
  %v7363 = vpop.permute.xlu0 %7362
  %7364 = vrot.lane.b32.xlu0 %v6582, 24
  %v7365 = vpop.permute.xlu0 %7364
  %7366 = vrot.lane.b32.xlu0 %v6583, 24
  %v7367 = vpop.permute.xlu0 %7366
  %7368 = vrot.lane.b32.xlu0 %v6584, 24
  %v7369 = vpop.permute.xlu0 %7368
  %7370 = vrot.lane.b32.xlu0 %v6585, 24
  %v7371 = vpop.permute.xlu0 %7370
  %7372 = vrot.lane.b32.xlu0 %v6586, 24
  %v7373 = vpop.permute.xlu0 %7372
  %7374 = vrot.lane.b32.xlu0 %v6587, 24
  %v7375 = vpop.permute.xlu0 %7374
  %7376 = vrot.lane.b32.xlu0 %v6588, 24
  %v7377 = vpop.permute.xlu0 %7376
  %7378 = vrot.lane.b32.xlu0 %v6589, 24
  %v7379 = vpop.permute.xlu0 %7378
  %7380 = vrot.lane.b32.xlu0 %v6590, 24
  %v7381 = vpop.permute.xlu0 %7380
  %7382 = vrot.lane.b32.xlu0 %v6591, 24
  %v7383 = vpop.permute.xlu0 %7382
  %7384 = vrot.lane.b32.xlu0 %v6592, 24
  %v7385 = vpop.permute.xlu0 %7384
  %7386 = vrot.lane.b32.xlu0 %v6593, 24
  %v7387 = vpop.permute.xlu0 %7386
  %7388 = vrot.lane.b32.xlu0 %v6594, 24
  %v7389 = vpop.permute.xlu0 %7388
  %7390 = vrot.lane.b32.xlu0 %v6595, 24
  %v7391 = vpop.permute.xlu0 %7390
  %7392 = vrot.lane.b32.xlu0 %v6596, 24
  %v7393 = vpop.permute.xlu0 %7392
  %7394 = vrot.lane.b32.xlu0 %v6597, 24
  %v7395 = vpop.permute.xlu0 %7394
  %7396 = vrot.lane.b32.xlu0 %v6598, 24
  %v7397 = vpop.permute.xlu0 %7396
  %7398 = vrot.lane.b32.xlu0 %v6599, 24
  %v7399 = vpop.permute.xlu0 %7398
  %7400 = vrot.lane.b32.xlu0 %v6600, 24
  %v7401 = vpop.permute.xlu0 %7400
  %7402 = vrot.lane.b32.xlu0 %v6601, 24
  %v7403 = vpop.permute.xlu0 %7402
  %7404 = vrot.lane.b32.xlu0 %v6602, 24
  %v7405 = vpop.permute.xlu0 %7404
  %vm7470 = vcmask 261312
  %7471 = vst.msk [vmem:[#allocation3 + $0x1] sm:$0xff] %vm7470, %v7279
  %vm7472 = vcmask 260288
  %7473 = vst.msk [vmem:[#allocation3 + $0x9] sm:$0x7f] %vm7472, %v7281
  %7474 = vst.msk [vmem:[#allocation3 + $0x11] sm:$0xff] %vm7470, %v7283
  %7475 = vst.msk [vmem:[#allocation3 + $0x19] sm:$0x7f] %vm7472, %v7285
  %7476 = vst.msk [vmem:[#allocation3 + $0x21] sm:$0xff] %vm7470, %v7287
  %7477 = vst.msk [vmem:[#allocation3 + $0x29] sm:$0x7f] %vm7472, %v7289
  %7478 = vst.msk [vmem:[#allocation3 + $0x31] sm:$0xff] %vm7470, %v7291
  %7479 = vst.msk [vmem:[#allocation3 + $0x39] sm:$0x7f] %vm7472, %v7293
  %7480 = vst.msk [vmem:[#allocation3 + $0x41] sm:$0xff] %vm7470, %v7295
  %7481 = vst.msk [vmem:[#allocation3 + $0x49] sm:$0x7f] %vm7472, %v7297
  %7482 = vst.msk [vmem:[#allocation3 + $0x51] sm:$0xff] %vm7470, %v7299
  %7483 = vst.msk [vmem:[#allocation3 + $0x59] sm:$0x7f] %vm7472, %v7301
  %7484 = vst.msk [vmem:[#allocation3 + $0x61] sm:$0xff] %vm7470, %v7303
  %7485 = vst.msk [vmem:[#allocation3 + $0x69] sm:$0x7f] %vm7472, %v7305
  %7486 = vst.msk [vmem:[#allocation3 + $0x71] sm:$0xff] %vm7470, %v7307
  %7487 = vst.msk [vmem:[#allocation3 + $0x79] sm:$0x7f] %vm7472, %v7309
  %7488 = vst.msk [vmem:[#allocation3 + $0x81] sm:$0xff] %vm7470, %v7311
  %7489 = vst.msk [vmem:[#allocation3 + $0x89] sm:$0x7f] %vm7472, %v7313
  %7490 = vst.msk [vmem:[#allocation3 + $0x91] sm:$0xff] %vm7470, %v7315
  %7491 = vst.msk [vmem:[#allocation3 + $0x99] sm:$0x7f] %vm7472, %v7317
  %7492 = vst.msk [vmem:[#allocation3 + $0xa1] sm:$0xff] %vm7470, %v7319
  %7493 = vst.msk [vmem:[#allocation3 + $0xa9] sm:$0x7f] %vm7472, %v7321
  %7494 = vst.msk [vmem:[#allocation3 + $0xb1] sm:$0xff] %vm7470, %v7323
  %7495 = vst.msk [vmem:[#allocation3 + $0xb9] sm:$0x7f] %vm7472, %v7325
  %7496 = vst.msk [vmem:[#allocation3 + $0xc1] sm:$0xff] %vm7470, %v7327
  %7497 = vst.msk [vmem:[#allocation3 + $0xc9] sm:$0x7f] %vm7472, %v7329
  %7498 = vst.msk [vmem:[#allocation3 + $0xd1] sm:$0xff] %vm7470, %v7331
  %7499 = vst.msk [vmem:[#allocation3 + $0xd9] sm:$0x7f] %vm7472, %v7333
  %7500 = vst.msk [vmem:[#allocation3 + $0xe1] sm:$0xff] %vm7470, %v7335
  %7501 = vst.msk [vmem:[#allocation3 + $0xe9] sm:$0x7f] %vm7472, %v7337
  %7502 = vst.msk [vmem:[#allocation3 + $0xf1] sm:$0xff] %vm7470, %v7339
  %7503 = vst.msk [vmem:[#allocation3 + $0xf9] sm:$0x7f] %vm7472, %v7341
  %7504 = vst.msk [vmem:[#allocation3 + $0x101] sm:$0xff] %vm7470, %v7343
  %7505 = vst.msk [vmem:[#allocation3 + $0x109] sm:$0x7f] %vm7472, %v7345
  %7506 = vst.msk [vmem:[#allocation3 + $0x111] sm:$0xff] %vm7470, %v7347
  %7507 = vst.msk [vmem:[#allocation3 + $0x119] sm:$0x7f] %vm7472, %v7349
  %7508 = vst.msk [vmem:[#allocation3 + $0x121] sm:$0xff] %vm7470, %v7351
  %7509 = vst.msk [vmem:[#allocation3 + $0x129] sm:$0x7f] %vm7472, %v7353
  %7510 = vst.msk [vmem:[#allocation3 + $0x131] sm:$0xff] %vm7470, %v7355
  %7511 = vst.msk [vmem:[#allocation3 + $0x139] sm:$0x7f] %vm7472, %v7357
  %7512 = vst.msk [vmem:[#allocation3 + $0x141] sm:$0xff] %vm7470, %v7359
  %7513 = vst.msk [vmem:[#allocation3 + $0x149] sm:$0x7f] %vm7472, %v7361
  %7514 = vst.msk [vmem:[#allocation3 + $0x151] sm:$0xff] %vm7470, %v7363
  %7515 = vst.msk [vmem:[#allocation3 + $0x159] sm:$0x7f] %vm7472, %v7365
  %7516 = vst.msk [vmem:[#allocation3 + $0x161] sm:$0xff] %vm7470, %v7367
  %7517 = vst.msk [vmem:[#allocation3 + $0x169] sm:$0x7f] %vm7472, %v7369
  %7518 = vst.msk [vmem:[#allocation3 + $0x171] sm:$0xff] %vm7470, %v7371
  %7519 = vst.msk [vmem:[#allocation3 + $0x179] sm:$0x7f] %vm7472, %v7373
  %7520 = vst.msk [vmem:[#allocation3 + $0x181] sm:$0xff] %vm7470, %v7375
  %7521 = vst.msk [vmem:[#allocation3 + $0x189] sm:$0x7f] %vm7472, %v7377
  %7522 = vst.msk [vmem:[#allocation3 + $0x191] sm:$0xff] %vm7470, %v7379
  %7523 = vst.msk [vmem:[#allocation3 + $0x199] sm:$0x7f] %vm7472, %v7381
  %7524 = vst.msk [vmem:[#allocation3 + $0x1a1] sm:$0xff] %vm7470, %v7383
  %7525 = vst.msk [vmem:[#allocation3 + $0x1a9] sm:$0x7f] %vm7472, %v7385
  %7526 = vst.msk [vmem:[#allocation3 + $0x1b1] sm:$0xff] %vm7470, %v7387
  %7527 = vst.msk [vmem:[#allocation3 + $0x1b9] sm:$0x7f] %vm7472, %v7389
  %7528 = vst.msk [vmem:[#allocation3 + $0x1c1] sm:$0xff] %vm7470, %v7391
  %7529 = vst.msk [vmem:[#allocation3 + $0x1c9] sm:$0x7f] %vm7472, %v7393
  %7530 = vst.msk [vmem:[#allocation3 + $0x1d1] sm:$0xff] %vm7470, %v7395
  %7531 = vst.msk [vmem:[#allocation3 + $0x1d9] sm:$0x7f] %vm7472, %v7397
  %7532 = vst.msk [vmem:[#allocation3 + $0x1e1] sm:$0xff] %vm7470, %v7399
  %7533 = vst.msk [vmem:[#allocation3 + $0x1e9] sm:$0x7f] %vm7472, %v7401
  %7534 = vst.msk [vmem:[#allocation3 + $0x1f1] sm:$0xff] %vm7470, %v7403
  %7535 = vst.msk [vmem:[#allocation3 + $0x1f9] sm:$0x7f] %vm7472, %v7405
  %7536 = vrot.lane.b32.xlu0 %v6539, 32
  %v7537 = vpop.permute.xlu0 %7536
  %7538 = vrot.lane.b32.xlu0 %v6540, 32
  %v7539 = vpop.permute.xlu0 %7538
  %7540 = vrot.lane.b32.xlu0 %v6541, 32
  %v7541 = vpop.permute.xlu0 %7540
  %7542 = vrot.lane.b32.xlu0 %v6542, 32
  %v7543 = vpop.permute.xlu0 %7542
  %7544 = vrot.lane.b32.xlu0 %v6543, 32
  %v7545 = vpop.permute.xlu0 %7544
  %7546 = vrot.lane.b32.xlu0 %v6544, 32
  %v7547 = vpop.permute.xlu0 %7546
  %7548 = vrot.lane.b32.xlu0 %v6545, 32
  %v7549 = vpop.permute.xlu0 %7548
  %7550 = vrot.lane.b32.xlu0 %v6546, 32
  %v7551 = vpop.permute.xlu0 %7550
  %7552 = vrot.lane.b32.xlu0 %v6547, 32
  %v7553 = vpop.permute.xlu0 %7552
  %7554 = vrot.lane.b32.xlu0 %v6548, 32
  %v7555 = vpop.permute.xlu0 %7554
  %7556 = vrot.lane.b32.xlu0 %v6549, 32
  %v7557 = vpop.permute.xlu0 %7556
  %7558 = vrot.lane.b32.xlu0 %v6550, 32
  %v7559 = vpop.permute.xlu0 %7558
  %7560 = vrot.lane.b32.xlu0 %v6551, 32
  %v7561 = vpop.permute.xlu0 %7560
  %7562 = vrot.lane.b32.xlu0 %v6552, 32
  %v7563 = vpop.permute.xlu0 %7562
  %7564 = vrot.lane.b32.xlu0 %v6553, 32
  %v7565 = vpop.permute.xlu0 %7564
  %7566 = vrot.lane.b32.xlu0 %v6554, 32
  %v7567 = vpop.permute.xlu0 %7566
  %7568 = vrot.lane.b32.xlu0 %v6555, 32
  %v7569 = vpop.permute.xlu0 %7568
  %7570 = vrot.lane.b32.xlu0 %v6556, 32
  %v7571 = vpop.permute.xlu0 %7570
  %7572 = vrot.lane.b32.xlu0 %v6557, 32
  %v7573 = vpop.permute.xlu0 %7572
  %7574 = vrot.lane.b32.xlu0 %v6558, 32
  %v7575 = vpop.permute.xlu0 %7574
  %7576 = vrot.lane.b32.xlu0 %v6559, 32
  %v7577 = vpop.permute.xlu0 %7576
  %7578 = vrot.lane.b32.xlu0 %v6560, 32
  %v7579 = vpop.permute.xlu0 %7578
  %7580 = vrot.lane.b32.xlu0 %v6561, 32
  %v7581 = vpop.permute.xlu0 %7580
  %7582 = vrot.lane.b32.xlu0 %v6562, 32
  %v7583 = vpop.permute.xlu0 %7582
  %7584 = vrot.lane.b32.xlu0 %v6563, 32
  %v7585 = vpop.permute.xlu0 %7584
  %7586 = vrot.lane.b32.xlu0 %v6564, 32
  %v7587 = vpop.permute.xlu0 %7586
  %7588 = vrot.lane.b32.xlu0 %v6565, 32
  %v7589 = vpop.permute.xlu0 %7588
  %7590 = vrot.lane.b32.xlu0 %v6566, 32
  %v7591 = vpop.permute.xlu0 %7590
  %7592 = vrot.lane.b32.xlu0 %v6567, 32
  %v7593 = vpop.permute.xlu0 %7592
  %7594 = vrot.lane.b32.xlu0 %v6568, 32
  %v7595 = vpop.permute.xlu0 %7594
  %7596 = vrot.lane.b32.xlu0 %v6569, 32
  %v7597 = vpop.permute.xlu0 %7596
  %7598 = vrot.lane.b32.xlu0 %v6570, 32
  %v7599 = vpop.permute.xlu0 %7598
  %7600 = vrot.lane.b32.xlu0 %v6571, 32
  %v7601 = vpop.permute.xlu0 %7600
  %7602 = vrot.lane.b32.xlu0 %v6572, 32
  %v7603 = vpop.permute.xlu0 %7602
  %7604 = vrot.lane.b32.xlu0 %v6573, 32
  %v7605 = vpop.permute.xlu0 %7604
  %7606 = vrot.lane.b32.xlu0 %v6574, 32
  %v7607 = vpop.permute.xlu0 %7606
  %7608 = vrot.lane.b32.xlu0 %v6575, 32
  %v7609 = vpop.permute.xlu0 %7608
  %7610 = vrot.lane.b32.xlu0 %v6576, 32
  %v7611 = vpop.permute.xlu0 %7610
  %7612 = vrot.lane.b32.xlu0 %v6577, 32
  %v7613 = vpop.permute.xlu0 %7612
  %7614 = vrot.lane.b32.xlu0 %v6578, 32
  %v7615 = vpop.permute.xlu0 %7614
  %7616 = vrot.lane.b32.xlu0 %v6579, 32
  %v7617 = vpop.permute.xlu0 %7616
  %7618 = vrot.lane.b32.xlu0 %v6580, 32
  %v7619 = vpop.permute.xlu0 %7618
  %7620 = vrot.lane.b32.xlu0 %v6581, 32
  %v7621 = vpop.permute.xlu0 %7620
  %7622 = vrot.lane.b32.xlu0 %v6582, 32
  %v7623 = vpop.permute.xlu0 %7622
  %7624 = vrot.lane.b32.xlu0 %v6583, 32
  %v7625 = vpop.permute.xlu0 %7624
  %7626 = vrot.lane.b32.xlu0 %v6584, 32
  %v7627 = vpop.permute.xlu0 %7626
  %7628 = vrot.lane.b32.xlu0 %v6585, 32
  %v7629 = vpop.permute.xlu0 %7628
  %7630 = vrot.lane.b32.xlu0 %v6586, 32
  %v7631 = vpop.permute.xlu0 %7630
  %7632 = vrot.lane.b32.xlu0 %v6587, 32
  %v7633 = vpop.permute.xlu0 %7632
  %7634 = vrot.lane.b32.xlu0 %v6588, 32
  %v7635 = vpop.permute.xlu0 %7634
  %7636 = vrot.lane.b32.xlu0 %v6589, 32
  %v7637 = vpop.permute.xlu0 %7636
  %7638 = vrot.lane.b32.xlu0 %v6590, 32
  %v7639 = vpop.permute.xlu0 %7638
  %7640 = vrot.lane.b32.xlu0 %v6591, 32
  %v7641 = vpop.permute.xlu0 %7640
  %7642 = vrot.lane.b32.xlu0 %v6592, 32
  %v7643 = vpop.permute.xlu0 %7642
  %7644 = vrot.lane.b32.xlu0 %v6593, 32
  %v7645 = vpop.permute.xlu0 %7644
  %7646 = vrot.lane.b32.xlu0 %v6594, 32
  %v7647 = vpop.permute.xlu0 %7646
  %7648 = vrot.lane.b32.xlu0 %v6595, 32
  %v7649 = vpop.permute.xlu0 %7648
  %7650 = vrot.lane.b32.xlu0 %v6596, 32
  %v7651 = vpop.permute.xlu0 %7650
  %7652 = vrot.lane.b32.xlu0 %v6597, 32
  %v7653 = vpop.permute.xlu0 %7652
  %7654 = vrot.lane.b32.xlu0 %v6598, 32
  %v7655 = vpop.permute.xlu0 %7654
  %7656 = vrot.lane.b32.xlu0 %v6599, 32
  %v7657 = vpop.permute.xlu0 %7656
  %7658 = vrot.lane.b32.xlu0 %v6600, 32
  %v7659 = vpop.permute.xlu0 %7658
  %7660 = vrot.lane.b32.xlu0 %v6601, 32
  %v7661 = vpop.permute.xlu0 %7660
  %7662 = vrot.lane.b32.xlu0 %v6602, 32
  %v7663 = vpop.permute.xlu0 %7662
  %vm7728 = vcmask 326912
  %7729 = vst.msk [vmem:[#allocation3] sm:$0xff] %vm7728, %v7537
  %7730 = vst.msk [vmem:[#allocation3 + $0x8] sm:$0xff] %vm7728, %v7539
  %7731 = vst.msk [vmem:[#allocation3 + $0x10] sm:$0xff] %vm7728, %v7541
  %7732 = vst.msk [vmem:[#allocation3 + $0x18] sm:$0xff] %vm7728, %v7543
  %7733 = vst.msk [vmem:[#allocation3 + $0x20] sm:$0xff] %vm7728, %v7545
  %7734 = vst.msk [vmem:[#allocation3 + $0x28] sm:$0xff] %vm7728, %v7547
  %7735 = vst.msk [vmem:[#allocation3 + $0x30] sm:$0xff] %vm7728, %v7549
  %7736 = vst.msk [vmem:[#allocation3 + $0x38] sm:$0xff] %vm7728, %v7551
  %7737 = vst.msk [vmem:[#allocation3 + $0x40] sm:$0xff] %vm7728, %v7553
  %7738 = vst.msk [vmem:[#allocation3 + $0x48] sm:$0xff] %vm7728, %v7555
  %7739 = vst.msk [vmem:[#allocation3 + $0x50] sm:$0xff] %vm7728, %v7557
  %7740 = vst.msk [vmem:[#allocation3 + $0x58] sm:$0xff] %vm7728, %v7559
  %7741 = vst.msk [vmem:[#allocation3 + $0x60] sm:$0xff] %vm7728, %v7561
  %7742 = vst.msk [vmem:[#allocation3 + $0x68] sm:$0xff] %vm7728, %v7563
  %7743 = vst.msk [vmem:[#allocation3 + $0x70] sm:$0xff] %vm7728, %v7565
  %7744 = vst.msk [vmem:[#allocation3 + $0x78] sm:$0xff] %vm7728, %v7567
  %7745 = vst.msk [vmem:[#allocation3 + $0x80] sm:$0xff] %vm7728, %v7569
  %7746 = vst.msk [vmem:[#allocation3 + $0x88] sm:$0xff] %vm7728, %v7571
  %7747 = vst.msk [vmem:[#allocation3 + $0x90] sm:$0xff] %vm7728, %v7573
  %7748 = vst.msk [vmem:[#allocation3 + $0x98] sm:$0xff] %vm7728, %v7575
  %7749 = vst.msk [vmem:[#allocation3 + $0xa0] sm:$0xff] %vm7728, %v7577
  %7750 = vst.msk [vmem:[#allocation3 + $0xa8] sm:$0xff] %vm7728, %v7579
  %7751 = vst.msk [vmem:[#allocation3 + $0xb0] sm:$0xff] %vm7728, %v7581
  %7752 = vst.msk [vmem:[#allocation3 + $0xb8] sm:$0xff] %vm7728, %v7583
  %7753 = vst.msk [vmem:[#allocation3 + $0xc0] sm:$0xff] %vm7728, %v7585
  %7754 = vst.msk [vmem:[#allocation3 + $0xc8] sm:$0xff] %vm7728, %v7587
  %7755 = vst.msk [vmem:[#allocation3 + $0xd0] sm:$0xff] %vm7728, %v7589
  %7756 = vst.msk [vmem:[#allocation3 + $0xd8] sm:$0xff] %vm7728, %v7591
  %7757 = vst.msk [vmem:[#allocation3 + $0xe0] sm:$0xff] %vm7728, %v7593
  %7758 = vst.msk [vmem:[#allocation3 + $0xe8] sm:$0xff] %vm7728, %v7595
  %7759 = vst.msk [vmem:[#allocation3 + $0xf0] sm:$0xff] %vm7728, %v7597
  %7760 = vst.msk [vmem:[#allocation3 + $0xf8] sm:$0xff] %vm7728, %v7599
  %7761 = vst.msk [vmem:[#allocation3 + $0x100] sm:$0xff] %vm7728, %v7601
  %7762 = vst.msk [vmem:[#allocation3 + $0x108] sm:$0xff] %vm7728, %v7603
  %7763 = vst.msk [vmem:[#allocation3 + $0x110] sm:$0xff] %vm7728, %v7605
  %7764 = vst.msk [vmem:[#allocation3 + $0x118] sm:$0xff] %vm7728, %v7607
  %7765 = vst.msk [vmem:[#allocation3 + $0x120] sm:$0xff] %vm7728, %v7609
  %7766 = vst.msk [vmem:[#allocation3 + $0x128] sm:$0xff] %vm7728, %v7611
  %7767 = vst.msk [vmem:[#allocation3 + $0x130] sm:$0xff] %vm7728, %v7613
  %7768 = vst.msk [vmem:[#allocation3 + $0x138] sm:$0xff] %vm7728, %v7615
  %7769 = vst.msk [vmem:[#allocation3 + $0x140] sm:$0xff] %vm7728, %v7617
  %7770 = vst.msk [vmem:[#allocation3 + $0x148] sm:$0xff] %vm7728, %v7619
  %7771 = vst.msk [vmem:[#allocation3 + $0x150] sm:$0xff] %vm7728, %v7621
  %7772 = vst.msk [vmem:[#allocation3 + $0x158] sm:$0xff] %vm7728, %v7623
  %7773 = vst.msk [vmem:[#allocation3 + $0x160] sm:$0xff] %vm7728, %v7625
  %7774 = vst.msk [vmem:[#allocation3 + $0x168] sm:$0xff] %vm7728, %v7627
  %7775 = vst.msk [vmem:[#allocation3 + $0x170] sm:$0xff] %vm7728, %v7629
  %7776 = vst.msk [vmem:[#allocation3 + $0x178] sm:$0xff] %vm7728, %v7631
  %7777 = vst.msk [vmem:[#allocation3 + $0x180] sm:$0xff] %vm7728, %v7633
  %7778 = vst.msk [vmem:[#allocation3 + $0x188] sm:$0xff] %vm7728, %v7635
  %7779 = vst.msk [vmem:[#allocation3 + $0x190] sm:$0xff] %vm7728, %v7637
  %7780 = vst.msk [vmem:[#allocation3 + $0x198] sm:$0xff] %vm7728, %v7639
  %7781 = vst.msk [vmem:[#allocation3 + $0x1a0] sm:$0xff] %vm7728, %v7641
  %7782 = vst.msk [vmem:[#allocation3 + $0x1a8] sm:$0xff] %vm7728, %v7643
  %7783 = vst.msk [vmem:[#allocation3 + $0x1b0] sm:$0xff] %vm7728, %v7645
  %7784 = vst.msk [vmem:[#allocation3 + $0x1b8] sm:$0xff] %vm7728, %v7647
  %7785 = vst.msk [vmem:[#allocation3 + $0x1c0] sm:$0xff] %vm7728, %v7649
  %7786 = vst.msk [vmem:[#allocation3 + $0x1c8] sm:$0xff] %vm7728, %v7651
  %7787 = vst.msk [vmem:[#allocation3 + $0x1d0] sm:$0xff] %vm7728, %v7653
  %7788 = vst.msk [vmem:[#allocation3 + $0x1d8] sm:$0xff] %vm7728, %v7655
  %7789 = vst.msk [vmem:[#allocation3 + $0x1e0] sm:$0xff] %vm7728, %v7657
  %7790 = vst.msk [vmem:[#allocation3 + $0x1e8] sm:$0xff] %vm7728, %v7659
  %7791 = vst.msk [vmem:[#allocation3 + $0x1f0] sm:$0xff] %vm7728, %v7661
  %7792 = vst.msk [vmem:[#allocation3 + $0x1f8] sm:$0xff] %vm7728, %v7663
  %7793 = vrot.lane.b32.xlu0 %v6539, 40
  %v7794 = vpop.permute.xlu0 %7793
  %7795 = vrot.lane.b32.xlu0 %v6540, 40
  %v7796 = vpop.permute.xlu0 %7795
  %7797 = vrot.lane.b32.xlu0 %v6541, 40
  %v7798 = vpop.permute.xlu0 %7797
  %7799 = vrot.lane.b32.xlu0 %v6542, 40
  %v7800 = vpop.permute.xlu0 %7799
  %7801 = vrot.lane.b32.xlu0 %v6543, 40
  %v7802 = vpop.permute.xlu0 %7801
  %7803 = vrot.lane.b32.xlu0 %v6544, 40
  %v7804 = vpop.permute.xlu0 %7803
  %7805 = vrot.lane.b32.xlu0 %v6545, 40
  %v7806 = vpop.permute.xlu0 %7805
  %7807 = vrot.lane.b32.xlu0 %v6546, 40
  %v7808 = vpop.permute.xlu0 %7807
  %7809 = vrot.lane.b32.xlu0 %v6547, 40
  %v7810 = vpop.permute.xlu0 %7809
  %7811 = vrot.lane.b32.xlu0 %v6548, 40
  %v7812 = vpop.permute.xlu0 %7811
  %7813 = vrot.lane.b32.xlu0 %v6549, 40
  %v7814 = vpop.permute.xlu0 %7813
  %7815 = vrot.lane.b32.xlu0 %v6550, 40
  %v7816 = vpop.permute.xlu0 %7815
  %7817 = vrot.lane.b32.xlu0 %v6551, 40
  %v7818 = vpop.permute.xlu0 %7817
  %7819 = vrot.lane.b32.xlu0 %v6552, 40
  %v7820 = vpop.permute.xlu0 %7819
  %7821 = vrot.lane.b32.xlu0 %v6553, 40
  %v7822 = vpop.permute.xlu0 %7821
  %7823 = vrot.lane.b32.xlu0 %v6554, 40
  %v7824 = vpop.permute.xlu0 %7823
  %7825 = vrot.lane.b32.xlu0 %v6555, 40
  %v7826 = vpop.permute.xlu0 %7825
  %7827 = vrot.lane.b32.xlu0 %v6556, 40
  %v7828 = vpop.permute.xlu0 %7827
  %7829 = vrot.lane.b32.xlu0 %v6557, 40
  %v7830 = vpop.permute.xlu0 %7829
  %7831 = vrot.lane.b32.xlu0 %v6558, 40
  %v7832 = vpop.permute.xlu0 %7831
  %7833 = vrot.lane.b32.xlu0 %v6559, 40
  %v7834 = vpop.permute.xlu0 %7833
  %7835 = vrot.lane.b32.xlu0 %v6560, 40
  %v7836 = vpop.permute.xlu0 %7835
  %7837 = vrot.lane.b32.xlu0 %v6561, 40
  %v7838 = vpop.permute.xlu0 %7837
  %7839 = vrot.lane.b32.xlu0 %v6562, 40
  %v7840 = vpop.permute.xlu0 %7839
  %7841 = vrot.lane.b32.xlu0 %v6563, 40
  %v7842 = vpop.permute.xlu0 %7841
  %7843 = vrot.lane.b32.xlu0 %v6564, 40
  %v7844 = vpop.permute.xlu0 %7843
  %7845 = vrot.lane.b32.xlu0 %v6565, 40
  %v7846 = vpop.permute.xlu0 %7845
  %7847 = vrot.lane.b32.xlu0 %v6566, 40
  %v7848 = vpop.permute.xlu0 %7847
  %7849 = vrot.lane.b32.xlu0 %v6567, 40
  %v7850 = vpop.permute.xlu0 %7849
  %7851 = vrot.lane.b32.xlu0 %v6568, 40
  %v7852 = vpop.permute.xlu0 %7851
  %7853 = vrot.lane.b32.xlu0 %v6569, 40
  %v7854 = vpop.permute.xlu0 %7853
  %7855 = vrot.lane.b32.xlu0 %v6570, 40
  %v7856 = vpop.permute.xlu0 %7855
  %7857 = vrot.lane.b32.xlu0 %v6571, 40
  %v7858 = vpop.permute.xlu0 %7857
  %7859 = vrot.lane.b32.xlu0 %v6572, 40
  %v7860 = vpop.permute.xlu0 %7859
  %7861 = vrot.lane.b32.xlu0 %v6573, 40
  %v7862 = vpop.permute.xlu0 %7861
  %7863 = vrot.lane.b32.xlu0 %v6574, 40
  %v7864 = vpop.permute.xlu0 %7863
  %7865 = vrot.lane.b32.xlu0 %v6575, 40
  %v7866 = vpop.permute.xlu0 %7865
  %7867 = vrot.lane.b32.xlu0 %v6576, 40
  %v7868 = vpop.permute.xlu0 %7867
  %7869 = vrot.lane.b32.xlu0 %v6577, 40
  %v7870 = vpop.permute.xlu0 %7869
  %7871 = vrot.lane.b32.xlu0 %v6578, 40
  %v7872 = vpop.permute.xlu0 %7871
  %7873 = vrot.lane.b32.xlu0 %v6579, 40
  %v7874 = vpop.permute.xlu0 %7873
  %7875 = vrot.lane.b32.xlu0 %v6580, 40
  %v7876 = vpop.permute.xlu0 %7875
  %7877 = vrot.lane.b32.xlu0 %v6581, 40
  %v7878 = vpop.permute.xlu0 %7877
  %7879 = vrot.lane.b32.xlu0 %v6582, 40
  %v7880 = vpop.permute.xlu0 %7879
  %7881 = vrot.lane.b32.xlu0 %v6583, 40
  %v7882 = vpop.permute.xlu0 %7881
  %7883 = vrot.lane.b32.xlu0 %v6584, 40
  %v7884 = vpop.permute.xlu0 %7883
  %7885 = vrot.lane.b32.xlu0 %v6585, 40
  %v7886 = vpop.permute.xlu0 %7885
  %7887 = vrot.lane.b32.xlu0 %v6586, 40
  %v7888 = vpop.permute.xlu0 %7887
  %7889 = vrot.lane.b32.xlu0 %v6587, 40
  %v7890 = vpop.permute.xlu0 %7889
  %7891 = vrot.lane.b32.xlu0 %v6588, 40
  %v7892 = vpop.permute.xlu0 %7891
  %7893 = vrot.lane.b32.xlu0 %v6589, 40
  %v7894 = vpop.permute.xlu0 %7893
  %7895 = vrot.lane.b32.xlu0 %v6590, 40
  %v7896 = vpop.permute.xlu0 %7895
  %7897 = vrot.lane.b32.xlu0 %v6591, 40
  %v7898 = vpop.permute.xlu0 %7897
  %7899 = vrot.lane.b32.xlu0 %v6592, 40
  %v7900 = vpop.permute.xlu0 %7899
  %7901 = vrot.lane.b32.xlu0 %v6593, 40
  %v7902 = vpop.permute.xlu0 %7901
  %7903 = vrot.lane.b32.xlu0 %v6594, 40
  %v7904 = vpop.permute.xlu0 %7903
  %7905 = vrot.lane.b32.xlu0 %v6595, 40
  %v7906 = vpop.permute.xlu0 %7905
  %7907 = vrot.lane.b32.xlu0 %v6596, 40
  %v7908 = vpop.permute.xlu0 %7907
  %7909 = vrot.lane.b32.xlu0 %v6597, 40
  %v7910 = vpop.permute.xlu0 %7909
  %7911 = vrot.lane.b32.xlu0 %v6598, 40
  %v7912 = vpop.permute.xlu0 %7911
  %7913 = vrot.lane.b32.xlu0 %v6599, 40
  %v7914 = vpop.permute.xlu0 %7913
  %7915 = vrot.lane.b32.xlu0 %v6600, 40
  %v7916 = vpop.permute.xlu0 %7915
  %7917 = vrot.lane.b32.xlu0 %v6601, 40
  %v7918 = vpop.permute.xlu0 %7917
  %7919 = vrot.lane.b32.xlu0 %v6602, 40
  %v7920 = vpop.permute.xlu0 %7919
  %vm7985 = vcmask 392513
  %7986 = vst.msk [vmem:[#allocation3 - $0x1] sm:$0xfe] %vm7985, %v7794
  %vm7987 = vcmask 392512
  %7988 = vst.msk [vmem:[#allocation3 + $0x7] sm:$0xff] %vm7987, %v7796
  %7989 = vst.msk [vmem:[#allocation3 + $0xf] sm:$0xfe] %vm7985, %v7798
  %7990 = vst.msk [vmem:[#allocation3 + $0x17] sm:$0xff] %vm7987, %v7800
  %7991 = vst.msk [vmem:[#allocation3 + $0x1f] sm:$0xfe] %vm7985, %v7802
  %7992 = vst.msk [vmem:[#allocation3 + $0x27] sm:$0xff] %vm7987, %v7804
  %7993 = vst.msk [vmem:[#allocation3 + $0x2f] sm:$0xfe] %vm7985, %v7806
  %7994 = vst.msk [vmem:[#allocation3 + $0x37] sm:$0xff] %vm7987, %v7808
  %7995 = vst.msk [vmem:[#allocation3 + $0x3f] sm:$0xfe] %vm7985, %v7810
  %7996 = vst.msk [vmem:[#allocation3 + $0x47] sm:$0xff] %vm7987, %v7812
  %7997 = vst.msk [vmem:[#allocation3 + $0x4f] sm:$0xfe] %vm7985, %v7814
  %7998 = vst.msk [vmem:[#allocation3 + $0x57] sm:$0xff] %vm7987, %v7816
  %7999 = vst.msk [vmem:[#allocation3 + $0x5f] sm:$0xfe] %vm7985, %v7818
  %8000 = vst.msk [vmem:[#allocation3 + $0x67] sm:$0xff] %vm7987, %v7820
  %8001 = vst.msk [vmem:[#allocation3 + $0x6f] sm:$0xfe] %vm7985, %v7822
  %8002 = vst.msk [vmem:[#allocation3 + $0x77] sm:$0xff] %vm7987, %v7824
  %8003 = vst.msk [vmem:[#allocation3 + $0x7f] sm:$0xfe] %vm7985, %v7826
  %8004 = vst.msk [vmem:[#allocation3 + $0x87] sm:$0xff] %vm7987, %v7828
  %8005 = vst.msk [vmem:[#allocation3 + $0x8f] sm:$0xfe] %vm7985, %v7830
  %8006 = vst.msk [vmem:[#allocation3 + $0x97] sm:$0xff] %vm7987, %v7832
  %8007 = vst.msk [vmem:[#allocation3 + $0x9f] sm:$0xfe] %vm7985, %v7834
  %8008 = vst.msk [vmem:[#allocation3 + $0xa7] sm:$0xff] %vm7987, %v7836
  %8009 = vst.msk [vmem:[#allocation3 + $0xaf] sm:$0xfe] %vm7985, %v7838
  %8010 = vst.msk [vmem:[#allocation3 + $0xb7] sm:$0xff] %vm7987, %v7840
  %8011 = vst.msk [vmem:[#allocation3 + $0xbf] sm:$0xfe] %vm7985, %v7842
  %8012 = vst.msk [vmem:[#allocation3 + $0xc7] sm:$0xff] %vm7987, %v7844
  %8013 = vst.msk [vmem:[#allocation3 + $0xcf] sm:$0xfe] %vm7985, %v7846
  %8014 = vst.msk [vmem:[#allocation3 + $0xd7] sm:$0xff] %vm7987, %v7848
  %8015 = vst.msk [vmem:[#allocation3 + $0xdf] sm:$0xfe] %vm7985, %v7850
  %8016 = vst.msk [vmem:[#allocation3 + $0xe7] sm:$0xff] %vm7987, %v7852
  %8017 = vst.msk [vmem:[#allocation3 + $0xef] sm:$0xfe] %vm7985, %v7854
  %8018 = vst.msk [vmem:[#allocation3 + $0xf7] sm:$0xff] %vm7987, %v7856
  %8019 = vst.msk [vmem:[#allocation3 + $0xff] sm:$0xfe] %vm7985, %v7858
  %8020 = vst.msk [vmem:[#allocation3 + $0x107] sm:$0xff] %vm7987, %v7860
  %8021 = vst.msk [vmem:[#allocation3 + $0x10f] sm:$0xfe] %vm7985, %v7862
  %8022 = vst.msk [vmem:[#allocation3 + $0x117] sm:$0xff] %vm7987, %v7864
  %8023 = vst.msk [vmem:[#allocation3 + $0x11f] sm:$0xfe] %vm7985, %v7866
  %8024 = vst.msk [vmem:[#allocation3 + $0x127] sm:$0xff] %vm7987, %v7868
  %8025 = vst.msk [vmem:[#allocation3 + $0x12f] sm:$0xfe] %vm7985, %v7870
  %8026 = vst.msk [vmem:[#allocation3 + $0x137] sm:$0xff] %vm7987, %v7872
  %8027 = vst.msk [vmem:[#allocation3 + $0x13f] sm:$0xfe] %vm7985, %v7874
  %8028 = vst.msk [vmem:[#allocation3 + $0x147] sm:$0xff] %vm7987, %v7876
  %8029 = vst.msk [vmem:[#allocation3 + $0x14f] sm:$0xfe] %vm7985, %v7878
  %8030 = vst.msk [vmem:[#allocation3 + $0x157] sm:$0xff] %vm7987, %v7880
  %8031 = vst.msk [vmem:[#allocation3 + $0x15f] sm:$0xfe] %vm7985, %v7882
  %8032 = vst.msk [vmem:[#allocation3 + $0x167] sm:$0xff] %vm7987, %v7884
  %8033 = vst.msk [vmem:[#allocation3 + $0x16f] sm:$0xfe] %vm7985, %v7886
  %8034 = vst.msk [vmem:[#allocation3 + $0x177] sm:$0xff] %vm7987, %v7888
  %8035 = vst.msk [vmem:[#allocation3 + $0x17f] sm:$0xfe] %vm7985, %v7890
  %8036 = vst.msk [vmem:[#allocation3 + $0x187] sm:$0xff] %vm7987, %v7892
  %8037 = vst.msk [vmem:[#allocation3 + $0x18f] sm:$0xfe] %vm7985, %v7894
  %8038 = vst.msk [vmem:[#allocation3 + $0x197] sm:$0xff] %vm7987, %v7896
  %8039 = vst.msk [vmem:[#allocation3 + $0x19f] sm:$0xfe] %vm7985, %v7898
  %8040 = vst.msk [vmem:[#allocation3 + $0x1a7] sm:$0xff] %vm7987, %v7900
  %8041 = vst.msk [vmem:[#allocation3 + $0x1af] sm:$0xfe] %vm7985, %v7902
  %8042 = vst.msk [vmem:[#allocation3 + $0x1b7] sm:$0xff] %vm7987, %v7904
  %8043 = vst.msk [vmem:[#allocation3 + $0x1bf] sm:$0xfe] %vm7985, %v7906
  %8044 = vst.msk [vmem:[#allocation3 + $0x1c7] sm:$0xff] %vm7987, %v7908
  %8045 = vst.msk [vmem:[#allocation3 + $0x1cf] sm:$0xfe] %vm7985, %v7910
  %8046 = vst.msk [vmem:[#allocation3 + $0x1d7] sm:$0xff] %vm7987, %v7912
  %8047 = vst.msk [vmem:[#allocation3 + $0x1df] sm:$0xfe] %vm7985, %v7914
  %8048 = vst.msk [vmem:[#allocation3 + $0x1e7] sm:$0xff] %vm7987, %v7916
  %8049 = vst.msk [vmem:[#allocation3 + $0x1ef] sm:$0xfe] %vm7985, %v7918
  %8050 = vst.msk [vmem:[#allocation3 + $0x1f7] sm:$0xff] %vm7987, %v7920
  %8051 = vrot.lane.b32.xlu0 %v6541, 48
  %v8052 = vpop.permute.xlu0 %8051
  %8053 = vrot.lane.b32.xlu0 %v6542, 48
  %v8054 = vpop.permute.xlu0 %8053
  %8055 = vrot.lane.b32.xlu0 %v6543, 48
  %v8056 = vpop.permute.xlu0 %8055
  %8057 = vrot.lane.b32.xlu0 %v6544, 48
  %v8058 = vpop.permute.xlu0 %8057
  %8059 = vrot.lane.b32.xlu0 %v6545, 48
  %v8060 = vpop.permute.xlu0 %8059
  %8061 = vrot.lane.b32.xlu0 %v6546, 48
  %v8062 = vpop.permute.xlu0 %8061
  %8063 = vrot.lane.b32.xlu0 %v6547, 48
  %v8064 = vpop.permute.xlu0 %8063
  %8065 = vrot.lane.b32.xlu0 %v6548, 48
  %v8066 = vpop.permute.xlu0 %8065
  %8067 = vrot.lane.b32.xlu0 %v6549, 48
  %v8068 = vpop.permute.xlu0 %8067
  %8069 = vrot.lane.b32.xlu0 %v6550, 48
  %v8070 = vpop.permute.xlu0 %8069
  %8071 = vrot.lane.b32.xlu0 %v6551, 48
  %v8072 = vpop.permute.xlu0 %8071
  %8073 = vrot.lane.b32.xlu0 %v6552, 48
  %v8074 = vpop.permute.xlu0 %8073
  %8075 = vrot.lane.b32.xlu0 %v6553, 48
  %v8076 = vpop.permute.xlu0 %8075
  %8077 = vrot.lane.b32.xlu0 %v6554, 48
  %v8078 = vpop.permute.xlu0 %8077
  %8079 = vrot.lane.b32.xlu0 %v6555, 48
  %v8080 = vpop.permute.xlu0 %8079
  %8081 = vrot.lane.b32.xlu0 %v6556, 48
  %v8082 = vpop.permute.xlu0 %8081
  %8083 = vrot.lane.b32.xlu0 %v6557, 48
  %v8084 = vpop.permute.xlu0 %8083
  %8085 = vrot.lane.b32.xlu0 %v6558, 48
  %v8086 = vpop.permute.xlu0 %8085
  %8087 = vrot.lane.b32.xlu0 %v6559, 48
  %v8088 = vpop.permute.xlu0 %8087
  %8089 = vrot.lane.b32.xlu0 %v6560, 48
  %v8090 = vpop.permute.xlu0 %8089
  %8091 = vrot.lane.b32.xlu0 %v6561, 48
  %v8092 = vpop.permute.xlu0 %8091
  %8093 = vrot.lane.b32.xlu0 %v6562, 48
  %v8094 = vpop.permute.xlu0 %8093
  %8095 = vrot.lane.b32.xlu0 %v6563, 48
  %v8096 = vpop.permute.xlu0 %8095
  %8097 = vrot.lane.b32.xlu0 %v6564, 48
  %v8098 = vpop.permute.xlu0 %8097
  %8099 = vrot.lane.b32.xlu0 %v6565, 48
  %v8100 = vpop.permute.xlu0 %8099
  %8101 = vrot.lane.b32.xlu0 %v6566, 48
  %v8102 = vpop.permute.xlu0 %8101
  %8103 = vrot.lane.b32.xlu0 %v6567, 48
  %v8104 = vpop.permute.xlu0 %8103
  %8105 = vrot.lane.b32.xlu0 %v6568, 48
  %v8106 = vpop.permute.xlu0 %8105
  %8107 = vrot.lane.b32.xlu0 %v6569, 48
  %v8108 = vpop.permute.xlu0 %8107
  %8109 = vrot.lane.b32.xlu0 %v6570, 48
  %v8110 = vpop.permute.xlu0 %8109
  %8111 = vrot.lane.b32.xlu0 %v6573, 48
  %v8112 = vpop.permute.xlu0 %8111
  %8113 = vrot.lane.b32.xlu0 %v6574, 48
  %v8114 = vpop.permute.xlu0 %8113
  %8115 = vrot.lane.b32.xlu0 %v6575, 48
  %v8116 = vpop.permute.xlu0 %8115
  %8117 = vrot.lane.b32.xlu0 %v6576, 48
  %v8118 = vpop.permute.xlu0 %8117
  %8119 = vrot.lane.b32.xlu0 %v6577, 48
  %v8120 = vpop.permute.xlu0 %8119
  %8121 = vrot.lane.b32.xlu0 %v6578, 48
  %v8122 = vpop.permute.xlu0 %8121
  %8123 = vrot.lane.b32.xlu0 %v6579, 48
  %v8124 = vpop.permute.xlu0 %8123
  %8125 = vrot.lane.b32.xlu0 %v6580, 48
  %v8126 = vpop.permute.xlu0 %8125
  %8127 = vrot.lane.b32.xlu0 %v6581, 48
  %v8128 = vpop.permute.xlu0 %8127
  %8129 = vrot.lane.b32.xlu0 %v6582, 48
  %v8130 = vpop.permute.xlu0 %8129
  %8131 = vrot.lane.b32.xlu0 %v6583, 48
  %v8132 = vpop.permute.xlu0 %8131
  %8133 = vrot.lane.b32.xlu0 %v6584, 48
  %v8134 = vpop.permute.xlu0 %8133
  %8135 = vrot.lane.b32.xlu0 %v6585, 48
  %v8136 = vpop.permute.xlu0 %8135
  %8137 = vrot.lane.b32.xlu0 %v6586, 48
  %v8138 = vpop.permute.xlu0 %8137
  %8139 = vrot.lane.b32.xlu0 %v6587, 48
  %v8140 = vpop.permute.xlu0 %8139
  %8141 = vrot.lane.b32.xlu0 %v6588, 48
  %v8142 = vpop.permute.xlu0 %8141
  %8143 = vrot.lane.b32.xlu0 %v6589, 48
  %v8144 = vpop.permute.xlu0 %8143
  %8145 = vrot.lane.b32.xlu0 %v6590, 48
  %v8146 = vpop.permute.xlu0 %8145
  %8147 = vrot.lane.b32.xlu0 %v6591, 48
  %v8148 = vpop.permute.xlu0 %8147
  %8149 = vrot.lane.b32.xlu0 %v6592, 48
  %v8150 = vpop.permute.xlu0 %8149
  %8151 = vrot.lane.b32.xlu0 %v6593, 48
  %v8152 = vpop.permute.xlu0 %8151
  %8153 = vrot.lane.b32.xlu0 %v6594, 48
  %v8154 = vpop.permute.xlu0 %8153
  %8155 = vrot.lane.b32.xlu0 %v6595, 48
  %v8156 = vpop.permute.xlu0 %8155
  %8157 = vrot.lane.b32.xlu0 %v6596, 48
  %v8158 = vpop.permute.xlu0 %8157
  %8159 = vrot.lane.b32.xlu0 %v6597, 48
  %v8160 = vpop.permute.xlu0 %8159
  %8161 = vrot.lane.b32.xlu0 %v6598, 48
  %v8162 = vpop.permute.xlu0 %8161
  %8163 = vrot.lane.b32.xlu0 %v6599, 48
  %v8164 = vpop.permute.xlu0 %8163
  %8165 = vrot.lane.b32.xlu0 %v6600, 48
  %v8166 = vpop.permute.xlu0 %8165
  %8167 = vrot.lane.b32.xlu0 %v6601, 48
  %v8168 = vpop.permute.xlu0 %8167
  %8169 = vrot.lane.b32.xlu0 %v6602, 48
  %v8170 = vpop.permute.xlu0 %8169
  %vm8231 = vcmask 458112
  %8232 = vst.msk [vmem:[#allocation3 + $0x1] sm:$0xff] %vm8231, %v8052
  %vm8233 = vcmask 457088
  %8234 = vst.msk [vmem:[#allocation3 + $0x9] sm:$0x7f] %vm8233, %v8054
  %8235 = vst.msk [vmem:[#allocation3 + $0x11] sm:$0xff] %vm8231, %v8056
  %8236 = vst.msk [vmem:[#allocation3 + $0x19] sm:$0x7f] %vm8233, %v8058
  %8237 = vst.msk [vmem:[#allocation3 + $0x21] sm:$0xff] %vm8231, %v8060
  %8238 = vst.msk [vmem:[#allocation3 + $0x29] sm:$0x7f] %vm8233, %v8062
  %8239 = vst.msk [vmem:[#allocation3 + $0x31] sm:$0xff] %vm8231, %v8064
  %8240 = vst.msk [vmem:[#allocation3 + $0x39] sm:$0x7f] %vm8233, %v8066
  %8241 = vst.msk [vmem:[#allocation3 + $0x41] sm:$0xff] %vm8231, %v8068
  %8242 = vst.msk [vmem:[#allocation3 + $0x49] sm:$0x7f] %vm8233, %v8070
  %8243 = vst.msk [vmem:[#allocation3 + $0x51] sm:$0xff] %vm8231, %v8072
  %8244 = vst.msk [vmem:[#allocation3 + $0x59] sm:$0x7f] %vm8233, %v8074
  %8245 = vst.msk [vmem:[#allocation3 + $0x61] sm:$0xff] %vm8231, %v8076
  %8246 = vst.msk [vmem:[#allocation3 + $0x69] sm:$0x7f] %vm8233, %v8078
  %8247 = vst.msk [vmem:[#allocation3 + $0x71] sm:$0xff] %vm8231, %v8080
  %8248 = vst.msk [vmem:[#allocation3 + $0x79] sm:$0x7f] %vm8233, %v8082
  %8249 = vst.msk [vmem:[#allocation3 + $0x81] sm:$0xff] %vm8231, %v8084
  %8250 = vst.msk [vmem:[#allocation3 + $0x89] sm:$0x7f] %vm8233, %v8086
  %8251 = vst.msk [vmem:[#allocation3 + $0x91] sm:$0xff] %vm8231, %v8088
  %8252 = vst.msk [vmem:[#allocation3 + $0x99] sm:$0x7f] %vm8233, %v8090
  %8253 = vst.msk [vmem:[#allocation3 + $0xa1] sm:$0xff] %vm8231, %v8092
  %8254 = vst.msk [vmem:[#allocation3 + $0xa9] sm:$0x7f] %vm8233, %v8094
  %8255 = vst.msk [vmem:[#allocation3 + $0xb1] sm:$0xff] %vm8231, %v8096
  %8256 = vst.msk [vmem:[#allocation3 + $0xb9] sm:$0x7f] %vm8233, %v8098
  %8257 = vst.msk [vmem:[#allocation3 + $0xc1] sm:$0xff] %vm8231, %v8100
  %8258 = vst.msk [vmem:[#allocation3 + $0xc9] sm:$0x7f] %vm8233, %v8102
  %8259 = vst.msk [vmem:[#allocation3 + $0xd1] sm:$0xff] %vm8231, %v8104
  %8260 = vst.msk [vmem:[#allocation3 + $0xd9] sm:$0x7f] %vm8233, %v8106
  %8261 = vst.msk [vmem:[#allocation3 + $0xe1] sm:$0xff] %vm8231, %v8108
  %8262 = vst.msk [vmem:[#allocation3 + $0xe9] sm:$0x7f] %vm8233, %v8110
  %8263 = vst.msk [vmem:[#allocation3 + $0x101] sm:$0xff] %vm8231, %v8112
  %8264 = vst.msk [vmem:[#allocation3 + $0x109] sm:$0x7f] %vm8233, %v8114
  %8265 = vst.msk [vmem:[#allocation3 + $0x111] sm:$0xff] %vm8231, %v8116
  %8266 = vst.msk [vmem:[#allocation3 + $0x119] sm:$0x7f] %vm8233, %v8118
  %8267 = vst.msk [vmem:[#allocation3 + $0x121] sm:$0xff] %vm8231, %v8120
  %8268 = vst.msk [vmem:[#allocation3 + $0x129] sm:$0x7f] %vm8233, %v8122
  %8269 = vst.msk [vmem:[#allocation3 + $0x131] sm:$0xff] %vm8231, %v8124
  %8270 = vst.msk [vmem:[#allocation3 + $0x139] sm:$0x7f] %vm8233, %v8126
  %8271 = vst.msk [vmem:[#allocation3 + $0x141] sm:$0xff] %vm8231, %v8128
  %8272 = vst.msk [vmem:[#allocation3 + $0x149] sm:$0x7f] %vm8233, %v8130
  %8273 = vst.msk [vmem:[#allocation3 + $0x151] sm:$0xff] %vm8231, %v8132
  %8274 = vst.msk [vmem:[#allocation3 + $0x159] sm:$0x7f] %vm8233, %v8134
  %8275 = vst.msk [vmem:[#allocation3 + $0x161] sm:$0xff] %vm8231, %v8136
  %8276 = vst.msk [vmem:[#allocation3 + $0x169] sm:$0x7f] %vm8233, %v8138
  %8277 = vst.msk [vmem:[#allocation3 + $0x171] sm:$0xff] %vm8231, %v8140
  %8278 = vst.msk [vmem:[#allocation3 + $0x179] sm:$0x7f] %vm8233, %v8142
  %8279 = vst.msk [vmem:[#allocation3 + $0x181] sm:$0xff] %vm8231, %v8144
  %8280 = vst.msk [vmem:[#allocation3 + $0x189] sm:$0x7f] %vm8233, %v8146
  %8281 = vst.msk [vmem:[#allocation3 + $0x191] sm:$0xff] %vm8231, %v8148
  %8282 = vst.msk [vmem:[#allocation3 + $0x199] sm:$0x7f] %vm8233, %v8150
  %8283 = vst.msk [vmem:[#allocation3 + $0x1a1] sm:$0xff] %vm8231, %v8152
  %8284 = vst.msk [vmem:[#allocation3 + $0x1a9] sm:$0x7f] %vm8233, %v8154
  %8285 = vst.msk [vmem:[#allocation3 + $0x1b1] sm:$0xff] %vm8231, %v8156
  %8286 = vst.msk [vmem:[#allocation3 + $0x1b9] sm:$0x7f] %vm8233, %v8158
  %8287 = vst.msk [vmem:[#allocation3 + $0x1c1] sm:$0xff] %vm8231, %v8160
  %8288 = vst.msk [vmem:[#allocation3 + $0x1c9] sm:$0x7f] %vm8233, %v8162
  %8289 = vst.msk [vmem:[#allocation3 + $0x1d1] sm:$0xff] %vm8231, %v8164
  %8290 = vst.msk [vmem:[#allocation3 + $0x1d9] sm:$0x7f] %vm8233, %v8166
  %8291 = vst.msk [vmem:[#allocation3 + $0x1e1] sm:$0xff] %vm8231, %v8168
  %8292 = vst.msk [vmem:[#allocation3 + $0x1e9] sm:$0x7f] %vm8233, %v8170
  %8293 = vrot.lane.b32.xlu0 %v6541, 56
  %v8294 = vpop.permute.xlu0 %8293
  %8295 = vrot.lane.b32.xlu0 %v6542, 56
  %v8296 = vpop.permute.xlu0 %8295
  %8297 = vrot.lane.b32.xlu0 %v6543, 56
  %v8298 = vpop.permute.xlu0 %8297
  %8299 = vrot.lane.b32.xlu0 %v6544, 56
  %v8300 = vpop.permute.xlu0 %8299
  %8301 = vrot.lane.b32.xlu0 %v6545, 56
  %v8302 = vpop.permute.xlu0 %8301
  %8303 = vrot.lane.b32.xlu0 %v6546, 56
  %v8304 = vpop.permute.xlu0 %8303
  %8305 = vrot.lane.b32.xlu0 %v6547, 56
  %v8306 = vpop.permute.xlu0 %8305
  %8307 = vrot.lane.b32.xlu0 %v6548, 56
  %v8308 = vpop.permute.xlu0 %8307
  %8309 = vrot.lane.b32.xlu0 %v6549, 56
  %v8310 = vpop.permute.xlu0 %8309
  %8311 = vrot.lane.b32.xlu0 %v6550, 56
  %v8312 = vpop.permute.xlu0 %8311
  %8313 = vrot.lane.b32.xlu0 %v6551, 56
  %v8314 = vpop.permute.xlu0 %8313
  %8315 = vrot.lane.b32.xlu0 %v6552, 56
  %v8316 = vpop.permute.xlu0 %8315
  %8317 = vrot.lane.b32.xlu0 %v6553, 56
  %v8318 = vpop.permute.xlu0 %8317
  %8319 = vrot.lane.b32.xlu0 %v6554, 56
  %v8320 = vpop.permute.xlu0 %8319
  %8321 = vrot.lane.b32.xlu0 %v6555, 56
  %v8322 = vpop.permute.xlu0 %8321
  %8323 = vrot.lane.b32.xlu0 %v6556, 56
  %v8324 = vpop.permute.xlu0 %8323
  %8325 = vrot.lane.b32.xlu0 %v6557, 56
  %v8326 = vpop.permute.xlu0 %8325
  %8327 = vrot.lane.b32.xlu0 %v6558, 56
  %v8328 = vpop.permute.xlu0 %8327
  %8329 = vrot.lane.b32.xlu0 %v6559, 56
  %v8330 = vpop.permute.xlu0 %8329
  %8331 = vrot.lane.b32.xlu0 %v6560, 56
  %v8332 = vpop.permute.xlu0 %8331
  %8333 = vrot.lane.b32.xlu0 %v6561, 56
  %v8334 = vpop.permute.xlu0 %8333
  %8335 = vrot.lane.b32.xlu0 %v6562, 56
  %v8336 = vpop.permute.xlu0 %8335
  %8337 = vrot.lane.b32.xlu0 %v6563, 56
  %v8338 = vpop.permute.xlu0 %8337
  %8339 = vrot.lane.b32.xlu0 %v6564, 56
  %v8340 = vpop.permute.xlu0 %8339
  %8341 = vrot.lane.b32.xlu0 %v6565, 56
  %v8342 = vpop.permute.xlu0 %8341
  %8343 = vrot.lane.b32.xlu0 %v6566, 56
  %v8344 = vpop.permute.xlu0 %8343
  %8345 = vrot.lane.b32.xlu0 %v6567, 56
  %v8346 = vpop.permute.xlu0 %8345
  %8347 = vrot.lane.b32.xlu0 %v6568, 56
  %v8348 = vpop.permute.xlu0 %8347
  %8349 = vrot.lane.b32.xlu0 %v6569, 56
  %v8350 = vpop.permute.xlu0 %8349
  %8351 = vrot.lane.b32.xlu0 %v6570, 56
  %v8352 = vpop.permute.xlu0 %8351
  %8353 = vrot.lane.b32.xlu0 %v6573, 56
  %v8354 = vpop.permute.xlu0 %8353
  %8355 = vrot.lane.b32.xlu0 %v6574, 56
  %v8356 = vpop.permute.xlu0 %8355
  %8357 = vrot.lane.b32.xlu0 %v6575, 56
  %v8358 = vpop.permute.xlu0 %8357
  %8359 = vrot.lane.b32.xlu0 %v6576, 56
  %v8360 = vpop.permute.xlu0 %8359
  %8361 = vrot.lane.b32.xlu0 %v6577, 56
  %v8362 = vpop.permute.xlu0 %8361
  %8363 = vrot.lane.b32.xlu0 %v6578, 56
  %v8364 = vpop.permute.xlu0 %8363
  %8365 = vrot.lane.b32.xlu0 %v6579, 56
  %v8366 = vpop.permute.xlu0 %8365
  %8367 = vrot.lane.b32.xlu0 %v6580, 56
  %v8368 = vpop.permute.xlu0 %8367
  %8369 = vrot.lane.b32.xlu0 %v6581, 56
  %v8370 = vpop.permute.xlu0 %8369
  %8371 = vrot.lane.b32.xlu0 %v6582, 56
  %v8372 = vpop.permute.xlu0 %8371
  %8373 = vrot.lane.b32.xlu0 %v6583, 56
  %v8374 = vpop.permute.xlu0 %8373
  %8375 = vrot.lane.b32.xlu0 %v6584, 56
  %v8376 = vpop.permute.xlu0 %8375
  %8377 = vrot.lane.b32.xlu0 %v6585, 56
  %v8378 = vpop.permute.xlu0 %8377
  %8379 = vrot.lane.b32.xlu0 %v6586, 56
  %v8380 = vpop.permute.xlu0 %8379
  %8381 = vrot.lane.b32.xlu0 %v6587, 56
  %v8382 = vpop.permute.xlu0 %8381
  %8383 = vrot.lane.b32.xlu0 %v6588, 56
  %v8384 = vpop.permute.xlu0 %8383
  %8385 = vrot.lane.b32.xlu0 %v6589, 56
  %v8386 = vpop.permute.xlu0 %8385
  %8387 = vrot.lane.b32.xlu0 %v6590, 56
  %v8388 = vpop.permute.xlu0 %8387
  %8389 = vrot.lane.b32.xlu0 %v6591, 56
  %v8390 = vpop.permute.xlu0 %8389
  %8391 = vrot.lane.b32.xlu0 %v6592, 56
  %v8392 = vpop.permute.xlu0 %8391
  %8393 = vrot.lane.b32.xlu0 %v6593, 56
  %v8394 = vpop.permute.xlu0 %8393
  %8395 = vrot.lane.b32.xlu0 %v6594, 56
  %v8396 = vpop.permute.xlu0 %8395
  %8397 = vrot.lane.b32.xlu0 %v6595, 56
  %v8398 = vpop.permute.xlu0 %8397
  %8399 = vrot.lane.b32.xlu0 %v6596, 56
  %v8400 = vpop.permute.xlu0 %8399
  %8401 = vrot.lane.b32.xlu0 %v6597, 56
  %v8402 = vpop.permute.xlu0 %8401
  %8403 = vrot.lane.b32.xlu0 %v6598, 56
  %v8404 = vpop.permute.xlu0 %8403
  %8405 = vrot.lane.b32.xlu0 %v6599, 56
  %v8406 = vpop.permute.xlu0 %8405
  %8407 = vrot.lane.b32.xlu0 %v6600, 56
  %v8408 = vpop.permute.xlu0 %8407
  %8409 = vrot.lane.b32.xlu0 %v6601, 56
  %v8410 = vpop.permute.xlu0 %8409
  %8411 = vrot.lane.b32.xlu0 %v6602, 56
  %v8412 = vpop.permute.xlu0 %8411
  %vm8473 = vcmask 523712
  %8474 = vst.msk [vmem:[#allocation3] sm:$0xff] %vm8473, %v8294
  %8475 = vst.msk [vmem:[#allocation3 + $0x8] sm:$0xff] %vm8473, %v8296
  %8476 = vst.msk [vmem:[#allocation3 + $0x10] sm:$0xff] %vm8473, %v8298
  %8477 = vst.msk [vmem:[#allocation3 + $0x18] sm:$0xff] %vm8473, %v8300
  %8478 = vst.msk [vmem:[#allocation3 + $0x20] sm:$0xff] %vm8473, %v8302
  %8479 = vst.msk [vmem:[#allocation3 + $0x28] sm:$0xff] %vm8473, %v8304
  %8480 = vst.msk [vmem:[#allocation3 + $0x30] sm:$0xff] %vm8473, %v8306
  %8481 = vst.msk [vmem:[#allocation3 + $0x38] sm:$0xff] %vm8473, %v8308
  %8482 = vst.msk [vmem:[#allocation3 + $0x40] sm:$0xff] %vm8473, %v8310
  %8483 = vst.msk [vmem:[#allocation3 + $0x48] sm:$0xff] %vm8473, %v8312
  %8484 = vst.msk [vmem:[#allocation3 + $0x50] sm:$0xff] %vm8473, %v8314
  %8485 = vst.msk [vmem:[#allocation3 + $0x58] sm:$0xff] %vm8473, %v8316
  %8486 = vst.msk [vmem:[#allocation3 + $0x60] sm:$0xff] %vm8473, %v8318
  %8487 = vst.msk [vmem:[#allocation3 + $0x68] sm:$0xff] %vm8473, %v8320
  %8488 = vst.msk [vmem:[#allocation3 + $0x70] sm:$0xff] %vm8473, %v8322
  %8489 = vst.msk [vmem:[#allocation3 + $0x78] sm:$0xff] %vm8473, %v8324
  %8490 = vst.msk [vmem:[#allocation3 + $0x80] sm:$0xff] %vm8473, %v8326
  %8491 = vst.msk [vmem:[#allocation3 + $0x88] sm:$0xff] %vm8473, %v8328
  %8492 = vst.msk [vmem:[#allocation3 + $0x90] sm:$0xff] %vm8473, %v8330
  %8493 = vst.msk [vmem:[#allocation3 + $0x98] sm:$0xff] %vm8473, %v8332
  %8494 = vst.msk [vmem:[#allocation3 + $0xa0] sm:$0xff] %vm8473, %v8334
  %8495 = vst.msk [vmem:[#allocation3 + $0xa8] sm:$0xff] %vm8473, %v8336
  %8496 = vst.msk [vmem:[#allocation3 + $0xb0] sm:$0xff] %vm8473, %v8338
  %8497 = vst.msk [vmem:[#allocation3 + $0xb8] sm:$0xff] %vm8473, %v8340
  %8498 = vst.msk [vmem:[#allocation3 + $0xc0] sm:$0xff] %vm8473, %v8342
  %8499 = vst.msk [vmem:[#allocation3 + $0xc8] sm:$0xff] %vm8473, %v8344
  %8500 = vst.msk [vmem:[#allocation3 + $0xd0] sm:$0xff] %vm8473, %v8346
  %8501 = vst.msk [vmem:[#allocation3 + $0xd8] sm:$0xff] %vm8473, %v8348
  %8502 = vst.msk [vmem:[#allocation3 + $0xe0] sm:$0xff] %vm8473, %v8350
  %8503 = vst.msk [vmem:[#allocation3 + $0xe8] sm:$0xff] %vm8473, %v8352
  %8504 = vst.msk [vmem:[#allocation3 + $0x100] sm:$0xff] %vm8473, %v8354
  %8505 = vst.msk [vmem:[#allocation3 + $0x108] sm:$0xff] %vm8473, %v8356
  %8506 = vst.msk [vmem:[#allocation3 + $0x110] sm:$0xff] %vm8473, %v8358
  %8507 = vst.msk [vmem:[#allocation3 + $0x118] sm:$0xff] %vm8473, %v8360
  %8508 = vst.msk [vmem:[#allocation3 + $0x120] sm:$0xff] %vm8473, %v8362
  %8509 = vst.msk [vmem:[#allocation3 + $0x128] sm:$0xff] %vm8473, %v8364
  %8510 = vst.msk [vmem:[#allocation3 + $0x130] sm:$0xff] %vm8473, %v8366
  %8511 = vst.msk [vmem:[#allocation3 + $0x138] sm:$0xff] %vm8473, %v8368
  %8512 = vst.msk [vmem:[#allocation3 + $0x140] sm:$0xff] %vm8473, %v8370
  %8513 = vst.msk [vmem:[#allocation3 + $0x148] sm:$0xff] %vm8473, %v8372
  %8514 = vst.msk [vmem:[#allocation3 + $0x150] sm:$0xff] %vm8473, %v8374
  %8515 = vst.msk [vmem:[#allocation3 + $0x158] sm:$0xff] %vm8473, %v8376
  %8516 = vst.msk [vmem:[#allocation3 + $0x160] sm:$0xff] %vm8473, %v8378
  %8517 = vst.msk [vmem:[#allocation3 + $0x168] sm:$0xff] %vm8473, %v8380
  %8518 = vst.msk [vmem:[#allocation3 + $0x170] sm:$0xff] %vm8473, %v8382
  %8519 = vst.msk [vmem:[#allocation3 + $0x178] sm:$0xff] %vm8473, %v8384
  %8520 = vst.msk [vmem:[#allocation3 + $0x180] sm:$0xff] %vm8473, %v8386
  %8521 = vst.msk [vmem:[#allocation3 + $0x188] sm:$0xff] %vm8473, %v8388
  %8522 = vst.msk [vmem:[#allocation3 + $0x190] sm:$0xff] %vm8473, %v8390
  %8523 = vst.msk [vmem:[#allocation3 + $0x198] sm:$0xff] %vm8473, %v8392
  %8524 = vst.msk [vmem:[#allocation3 + $0x1a0] sm:$0xff] %vm8473, %v8394
  %8525 = vst.msk [vmem:[#allocation3 + $0x1a8] sm:$0xff] %vm8473, %v8396
  %8526 = vst.msk [vmem:[#allocation3 + $0x1b0] sm:$0xff] %vm8473, %v8398
  %8527 = vst.msk [vmem:[#allocation3 + $0x1b8] sm:$0xff] %vm8473, %v8400
  %8528 = vst.msk [vmem:[#allocation3 + $0x1c0] sm:$0xff] %vm8473, %v8402
  %8529 = vst.msk [vmem:[#allocation3 + $0x1c8] sm:$0xff] %vm8473, %v8404
  %8530 = vst.msk [vmem:[#allocation3 + $0x1d0] sm:$0xff] %vm8473, %v8406
  %8531 = vst.msk [vmem:[#allocation3 + $0x1d8] sm:$0xff] %vm8473, %v8408
  %8532 = vst.msk [vmem:[#allocation3 + $0x1e0] sm:$0xff] %vm8473, %v8410
  %8533 = vst.msk [vmem:[#allocation3 + $0x1e8] sm:$0xff] %vm8473, %v8412
  %8534 = vrot.lane.b32.xlu0 %v6541, 64
  %v8535 = vpop.permute.xlu0 %8534
  %8536 = vrot.lane.b32.xlu0 %v6542, 64
  %v8537 = vpop.permute.xlu0 %8536
  %8538 = vrot.lane.b32.xlu0 %v6543, 64
  %v8539 = vpop.permute.xlu0 %8538
  %8540 = vrot.lane.b32.xlu0 %v6544, 64
  %v8541 = vpop.permute.xlu0 %8540
  %8542 = vrot.lane.b32.xlu0 %v6545, 64
  %v8543 = vpop.permute.xlu0 %8542
  %8544 = vrot.lane.b32.xlu0 %v6546, 64
  %v8545 = vpop.permute.xlu0 %8544
  %8546 = vrot.lane.b32.xlu0 %v6547, 64
  %v8547 = vpop.permute.xlu0 %8546
  %8548 = vrot.lane.b32.xlu0 %v6548, 64
  %v8549 = vpop.permute.xlu0 %8548
  %8550 = vrot.lane.b32.xlu0 %v6549, 64
  %v8551 = vpop.permute.xlu0 %8550
  %8552 = vrot.lane.b32.xlu0 %v6550, 64
  %v8553 = vpop.permute.xlu0 %8552
  %8554 = vrot.lane.b32.xlu0 %v6551, 64
  %v8555 = vpop.permute.xlu0 %8554
  %8556 = vrot.lane.b32.xlu0 %v6552, 64
  %v8557 = vpop.permute.xlu0 %8556
  %8558 = vrot.lane.b32.xlu0 %v6553, 64
  %v8559 = vpop.permute.xlu0 %8558
  %8560 = vrot.lane.b32.xlu0 %v6554, 64
  %v8561 = vpop.permute.xlu0 %8560
  %8562 = vrot.lane.b32.xlu0 %v6555, 64
  %v8563 = vpop.permute.xlu0 %8562
  %8564 = vrot.lane.b32.xlu0 %v6556, 64
  %v8565 = vpop.permute.xlu0 %8564
  %8566 = vrot.lane.b32.xlu0 %v6557, 64
  %v8567 = vpop.permute.xlu0 %8566
  %8568 = vrot.lane.b32.xlu0 %v6558, 64
  %v8569 = vpop.permute.xlu0 %8568
  %8570 = vrot.lane.b32.xlu0 %v6559, 64
  %v8571 = vpop.permute.xlu0 %8570
  %8572 = vrot.lane.b32.xlu0 %v6560, 64
  %v8573 = vpop.permute.xlu0 %8572
  %8574 = vrot.lane.b32.xlu0 %v6561, 64
  %v8575 = vpop.permute.xlu0 %8574
  %8576 = vrot.lane.b32.xlu0 %v6562, 64
  %v8577 = vpop.permute.xlu0 %8576
  %8578 = vrot.lane.b32.xlu0 %v6563, 64
  %v8579 = vpop.permute.xlu0 %8578
  %8580 = vrot.lane.b32.xlu0 %v6564, 64
  %v8581 = vpop.permute.xlu0 %8580
  %8582 = vrot.lane.b32.xlu0 %v6565, 64
  %v8583 = vpop.permute.xlu0 %8582
  %8584 = vrot.lane.b32.xlu0 %v6566, 64
  %v8585 = vpop.permute.xlu0 %8584
  %8586 = vrot.lane.b32.xlu0 %v6567, 64
  %v8587 = vpop.permute.xlu0 %8586
  %8588 = vrot.lane.b32.xlu0 %v6568, 64
  %v8589 = vpop.permute.xlu0 %8588
  %8590 = vrot.lane.b32.xlu0 %v6569, 64
  %v8591 = vpop.permute.xlu0 %8590
  %8592 = vrot.lane.b32.xlu0 %v6570, 64
  %v8593 = vpop.permute.xlu0 %8592
  %8594 = vrot.lane.b32.xlu0 %v6573, 64
  %v8595 = vpop.permute.xlu0 %8594
  %8596 = vrot.lane.b32.xlu0 %v6574, 64
  %v8597 = vpop.permute.xlu0 %8596
  %8598 = vrot.lane.b32.xlu0 %v6575, 64
  %v8599 = vpop.permute.xlu0 %8598
  %8600 = vrot.lane.b32.xlu0 %v6576, 64
  %v8601 = vpop.permute.xlu0 %8600
  %8602 = vrot.lane.b32.xlu0 %v6577, 64
  %v8603 = vpop.permute.xlu0 %8602
  %8604 = vrot.lane.b32.xlu0 %v6578, 64
  %v8605 = vpop.permute.xlu0 %8604
  %8606 = vrot.lane.b32.xlu0 %v6579, 64
  %v8607 = vpop.permute.xlu0 %8606
  %8608 = vrot.lane.b32.xlu0 %v6580, 64
  %v8609 = vpop.permute.xlu0 %8608
  %8610 = vrot.lane.b32.xlu0 %v6581, 64
  %v8611 = vpop.permute.xlu0 %8610
  %8612 = vrot.lane.b32.xlu0 %v6582, 64
  %v8613 = vpop.permute.xlu0 %8612
  %8614 = vrot.lane.b32.xlu0 %v6583, 64
  %v8615 = vpop.permute.xlu0 %8614
  %8616 = vrot.lane.b32.xlu0 %v6584, 64
  %v8617 = vpop.permute.xlu0 %8616
  %8618 = vrot.lane.b32.xlu0 %v6585, 64
  %v8619 = vpop.permute.xlu0 %8618
  %8620 = vrot.lane.b32.xlu0 %v6586, 64
  %v8621 = vpop.permute.xlu0 %8620
  %8622 = vrot.lane.b32.xlu0 %v6587, 64
  %v8623 = vpop.permute.xlu0 %8622
  %8624 = vrot.lane.b32.xlu0 %v6588, 64
  %v8625 = vpop.permute.xlu0 %8624
  %8626 = vrot.lane.b32.xlu0 %v6589, 64
  %v8627 = vpop.permute.xlu0 %8626
  %8628 = vrot.lane.b32.xlu0 %v6590, 64
  %v8629 = vpop.permute.xlu0 %8628
  %8630 = vrot.lane.b32.xlu0 %v6591, 64
  %v8631 = vpop.permute.xlu0 %8630
  %8632 = vrot.lane.b32.xlu0 %v6592, 64
  %v8633 = vpop.permute.xlu0 %8632
  %8634 = vrot.lane.b32.xlu0 %v6593, 64
  %v8635 = vpop.permute.xlu0 %8634
  %8636 = vrot.lane.b32.xlu0 %v6594, 64
  %v8637 = vpop.permute.xlu0 %8636
  %8638 = vrot.lane.b32.xlu0 %v6595, 64
  %v8639 = vpop.permute.xlu0 %8638
  %8640 = vrot.lane.b32.xlu0 %v6596, 64
  %v8641 = vpop.permute.xlu0 %8640
  %8642 = vrot.lane.b32.xlu0 %v6597, 64
  %v8643 = vpop.permute.xlu0 %8642
  %8644 = vrot.lane.b32.xlu0 %v6598, 64
  %v8645 = vpop.permute.xlu0 %8644
  %8646 = vrot.lane.b32.xlu0 %v6599, 64
  %v8647 = vpop.permute.xlu0 %8646
  %8648 = vrot.lane.b32.xlu0 %v6600, 64
  %v8649 = vpop.permute.xlu0 %8648
  %8650 = vrot.lane.b32.xlu0 %v6601, 64
  %v8651 = vpop.permute.xlu0 %8650
  %8652 = vrot.lane.b32.xlu0 %v6602, 64
  %v8653 = vpop.permute.xlu0 %8652
  %vm8714 = vcmask 589313
  %8715 = vst.msk [vmem:[#allocation3 - $0x1] sm:$0xfe] %vm8714, %v8535
  %vm8716 = vcmask 589312
  %8717 = vst.msk [vmem:[#allocation3 + $0x7] sm:$0xff] %vm8716, %v8537
  %8718 = vst.msk [vmem:[#allocation3 + $0xf] sm:$0xfe] %vm8714, %v8539
  %8719 = vst.msk [vmem:[#allocation3 + $0x17] sm:$0xff] %vm8716, %v8541
  %8720 = vst.msk [vmem:[#allocation3 + $0x1f] sm:$0xfe] %vm8714, %v8543
  %8721 = vst.msk [vmem:[#allocation3 + $0x27] sm:$0xff] %vm8716, %v8545
  %8722 = vst.msk [vmem:[#allocation3 + $0x2f] sm:$0xfe] %vm8714, %v8547
  %8723 = vst.msk [vmem:[#allocation3 + $0x37] sm:$0xff] %vm8716, %v8549
  %8724 = vst.msk [vmem:[#allocation3 + $0x3f] sm:$0xfe] %vm8714, %v8551
  %8725 = vst.msk [vmem:[#allocation3 + $0x47] sm:$0xff] %vm8716, %v8553
  %8726 = vst.msk [vmem:[#allocation3 + $0x4f] sm:$0xfe] %vm8714, %v8555
  %8727 = vst.msk [vmem:[#allocation3 + $0x57] sm:$0xff] %vm8716, %v8557
  %8728 = vst.msk [vmem:[#allocation3 + $0x5f] sm:$0xfe] %vm8714, %v8559
  %8729 = vst.msk [vmem:[#allocation3 + $0x67] sm:$0xff] %vm8716, %v8561
  %8730 = vst.msk [vmem:[#allocation3 + $0x6f] sm:$0xfe] %vm8714, %v8563
  %8731 = vst.msk [vmem:[#allocation3 + $0x77] sm:$0xff] %vm8716, %v8565
  %8732 = vst.msk [vmem:[#allocation3 + $0x7f] sm:$0xfe] %vm8714, %v8567
  %8733 = vst.msk [vmem:[#allocation3 + $0x87] sm:$0xff] %vm8716, %v8569
  %8734 = vst.msk [vmem:[#allocation3 + $0x8f] sm:$0xfe] %vm8714, %v8571
  %8735 = vst.msk [vmem:[#allocation3 + $0x97] sm:$0xff] %vm8716, %v8573
  %8736 = vst.msk [vmem:[#allocation3 + $0x9f] sm:$0xfe] %vm8714, %v8575
  %8737 = vst.msk [vmem:[#allocation3 + $0xa7] sm:$0xff] %vm8716, %v8577
  %8738 = vst.msk [vmem:[#allocation3 + $0xaf] sm:$0xfe] %vm8714, %v8579
  %8739 = vst.msk [vmem:[#allocation3 + $0xb7] sm:$0xff] %vm8716, %v8581
  %8740 = vst.msk [vmem:[#allocation3 + $0xbf] sm:$0xfe] %vm8714, %v8583
  %8741 = vst.msk [vmem:[#allocation3 + $0xc7] sm:$0xff] %vm8716, %v8585
  %8742 = vst.msk [vmem:[#allocation3 + $0xcf] sm:$0xfe] %vm8714, %v8587
  %8743 = vst.msk [vmem:[#allocation3 + $0xd7] sm:$0xff] %vm8716, %v8589
  %8744 = vst.msk [vmem:[#allocation3 + $0xdf] sm:$0xfe] %vm8714, %v8591
  %8745 = vst.msk [vmem:[#allocation3 + $0xe7] sm:$0xff] %vm8716, %v8593
  %8746 = vst.msk [vmem:[#allocation3 + $0xff] sm:$0xfe] %vm8714, %v8595
  %8747 = vst.msk [vmem:[#allocation3 + $0x107] sm:$0xff] %vm8716, %v8597
  %8748 = vst.msk [vmem:[#allocation3 + $0x10f] sm:$0xfe] %vm8714, %v8599
  %8749 = vst.msk [vmem:[#allocation3 + $0x117] sm:$0xff] %vm8716, %v8601
  %8750 = vst.msk [vmem:[#allocation3 + $0x11f] sm:$0xfe] %vm8714, %v8603
  %8751 = vst.msk [vmem:[#allocation3 + $0x127] sm:$0xff] %vm8716, %v8605
  %8752 = vst.msk [vmem:[#allocation3 + $0x12f] sm:$0xfe] %vm8714, %v8607
  %8753 = vst.msk [vmem:[#allocation3 + $0x137] sm:$0xff] %vm8716, %v8609
  %8754 = vst.msk [vmem:[#allocation3 + $0x13f] sm:$0xfe] %vm8714, %v8611
  %8755 = vst.msk [vmem:[#allocation3 + $0x147] sm:$0xff] %vm8716, %v8613
  %8756 = vst.msk [vmem:[#allocation3 + $0x14f] sm:$0xfe] %vm8714, %v8615
  %8757 = vst.msk [vmem:[#allocation3 + $0x157] sm:$0xff] %vm8716, %v8617
  %8758 = vst.msk [vmem:[#allocation3 + $0x15f] sm:$0xfe] %vm8714, %v8619
  %8759 = vst.msk [vmem:[#allocation3 + $0x167] sm:$0xff] %vm8716, %v8621
  %8760 = vst.msk [vmem:[#allocation3 + $0x16f] sm:$0xfe] %vm8714, %v8623
  %8761 = vst.msk [vmem:[#allocation3 + $0x177] sm:$0xff] %vm8716, %v8625
  %8762 = vst.msk [vmem:[#allocation3 + $0x17f] sm:$0xfe] %vm8714, %v8627
  %8763 = vst.msk [vmem:[#allocation3 + $0x187] sm:$0xff] %vm8716, %v8629
  %8764 = vst.msk [vmem:[#allocation3 + $0x18f] sm:$0xfe] %vm8714, %v8631
  %8765 = vst.msk [vmem:[#allocation3 + $0x197] sm:$0xff] %vm8716, %v8633
  %8766 = vst.msk [vmem:[#allocation3 + $0x19f] sm:$0xfe] %vm8714, %v8635
  %8767 = vst.msk [vmem:[#allocation3 + $0x1a7] sm:$0xff] %vm8716, %v8637
  %8768 = vst.msk [vmem:[#allocation3 + $0x1af] sm:$0xfe] %vm8714, %v8639
  %8769 = vst.msk [vmem:[#allocation3 + $0x1b7] sm:$0xff] %vm8716, %v8641
  %8770 = vst.msk [vmem:[#allocation3 + $0x1bf] sm:$0xfe] %vm8714, %v8643
  %8771 = vst.msk [vmem:[#allocation3 + $0x1c7] sm:$0xff] %vm8716, %v8645
  %8772 = vst.msk [vmem:[#allocation3 + $0x1cf] sm:$0xfe] %vm8714, %v8647
  %8773 = vst.msk [vmem:[#allocation3 + $0x1d7] sm:$0xff] %vm8716, %v8649
  %8774 = vst.msk [vmem:[#allocation3 + $0x1df] sm:$0xfe] %vm8714, %v8651
  %8775 = vst.msk [vmem:[#allocation3 + $0x1e7] sm:$0xff] %vm8716, %v8653
  %v8776 = vld [vmem:[#allocation3] sm:$0xff]
  %v8777 = vld [vmem:[#allocation3 + $0x8] sm:$0xff]
  %v8778 = vld [vmem:[#allocation3 + $0x10] sm:$0xff]
  %v8779 = vld [vmem:[#allocation3 + $0x18] sm:$0xff]
  %v8780 = vld [vmem:[#allocation3 + $0x20] sm:$0xff]
  %v8781 = vld [vmem:[#allocation3 + $0x28] sm:$0xff]
  %v8782 = vld [vmem:[#allocation3 + $0x30] sm:$0xff]
  %v8783 = vld [vmem:[#allocation3 + $0x38] sm:$0xff]
  %v8784 = vld [vmem:[#allocation3 + $0x40] sm:$0xff]
  %v8785 = vld [vmem:[#allocation3 + $0x48] sm:$0xff]
  %v8786 = vld [vmem:[#allocation3 + $0x50] sm:$0xff]
  %v8787 = vld [vmem:[#allocation3 + $0x58] sm:$0xff]
  %v8788 = vld [vmem:[#allocation3 + $0x60] sm:$0xff]
  %v8789 = vld [vmem:[#allocation3 + $0x68] sm:$0xff]
  %v8790 = vld [vmem:[#allocation3 + $0x70] sm:$0xff]
  %v8791 = vld [vmem:[#allocation3 + $0x78] sm:$0xff]
  %v8792 = vld [vmem:[#allocation3 + $0x80] sm:$0xff]
  %v8793 = vld [vmem:[#allocation3 + $0x88] sm:$0xff]
  %v8794 = vld [vmem:[#allocation3 + $0x90] sm:$0xff]
  %v8795 = vld [vmem:[#allocation3 + $0x98] sm:$0xff]
  %v8796 = vld [vmem:[#allocation3 + $0xa0] sm:$0xff]
  %v8797 = vld [vmem:[#allocation3 + $0xa8] sm:$0xff]
  %v8798 = vld [vmem:[#allocation3 + $0xb0] sm:$0xff]
  %v8799 = vld [vmem:[#allocation3 + $0xb8] sm:$0xff]
  %v8800 = vld [vmem:[#allocation3 + $0xc0] sm:$0xff]
  %v8801 = vld [vmem:[#allocation3 + $0xc8] sm:$0xff]
  %v8802 = vld [vmem:[#allocation3 + $0xd0] sm:$0xff]
  %v8803 = vld [vmem:[#allocation3 + $0xd8] sm:$0xff]
  %v8804 = vld [vmem:[#allocation3 + $0xe0] sm:$0xff]
  %v8805 = vld [vmem:[#allocation3 + $0xe8] sm:$0xff]
  %v8806 = vld [vmem:[#allocation3 + $0xf0] sm:$0xff]
  %v8807 = vld [vmem:[#allocation3 + $0xf8] sm:$0xff]
  %v8808 = vld [vmem:[#allocation3 + $0x100] sm:$0xff]
  %v8809 = vld [vmem:[#allocation3 + $0x108] sm:$0xff]
  %v8810 = vld [vmem:[#allocation3 + $0x110] sm:$0xff]
  %v8811 = vld [vmem:[#allocation3 + $0x118] sm:$0xff]
  %v8812 = vld [vmem:[#allocation3 + $0x120] sm:$0xff]
  %v8813 = vld [vmem:[#allocation3 + $0x128] sm:$0xff]
  %v8814 = vld [vmem:[#allocation3 + $0x130] sm:$0xff]
  %v8815 = vld [vmem:[#allocation3 + $0x138] sm:$0xff]
  %v8816 = vld [vmem:[#allocation3 + $0x140] sm:$0xff]
  %v8817 = vld [vmem:[#allocation3 + $0x148] sm:$0xff]
  %v8818 = vld [vmem:[#allocation3 + $0x150] sm:$0xff]
  %v8819 = vld [vmem:[#allocation3 + $0x158] sm:$0xff]
  %v8820 = vld [vmem:[#allocation3 + $0x160] sm:$0xff]
  %v8821 = vld [vmem:[#allocation3 + $0x168] sm:$0xff]
  %v8822 = vld [vmem:[#allocation3 + $0x170] sm:$0xff]
  %v8823 = vld [vmem:[#allocation3 + $0x178] sm:$0xff]
  %v8824 = vld [vmem:[#allocation3 + $0x180] sm:$0xff]
  %v8825 = vld [vmem:[#allocation3 + $0x188] sm:$0xff]
  %v8826 = vld [vmem:[#allocation3 + $0x190] sm:$0xff]
  %v8827 = vld [vmem:[#allocation3 + $0x198] sm:$0xff]
  %v8828 = vld [vmem:[#allocation3 + $0x1a0] sm:$0xff]
  %v8829 = vld [vmem:[#allocation3 + $0x1a8] sm:$0xff]
  %v8830 = vld [vmem:[#allocation3 + $0x1b0] sm:$0xff]
  %v8831 = vld [vmem:[#allocation3 + $0x1b8] sm:$0xff]
  %v8832 = vld [vmem:[#allocation3 + $0x1c0] sm:$0xff]
  %v8833 = vld [vmem:[#allocation3 + $0x1c8] sm:$0xff]
  %v8834 = vld [vmem:[#allocation3 + $0x1d0] sm:$0xff]
  %v8835 = vld [vmem:[#allocation3 + $0x1d8] sm:$0xff]
  %v8836 = vld [vmem:[#allocation3 + $0x1e0] sm:$0xff]
  %v8837 = vld [vmem:[#allocation3 + $0x1e8] sm:$0xff]
  %v8838 = vld [vmem:[#allocation3 + $0x1f0] sm:$0xff]
  %v8839 = vld [vmem:[#allocation3 + $0x1f8] sm:$0xff]
  %v8840 = vpack.c.bf16 %v8777, %v8776
  %v8841 = vpack.c.bf16 %v8779, %v8778
  %v8842 = vpack.c.bf16 %v8781, %v8780
  %v8843 = vpack.c.bf16 %v8783, %v8782
  %v8844 = vpack.c.bf16 %v8785, %v8784
  %v8845 = vpack.c.bf16 %v8787, %v8786
  %v8846 = vpack.c.bf16 %v8789, %v8788
  %v8847 = vpack.c.bf16 %v8791, %v8790
  %v8848 = vpack.c.bf16 %v8793, %v8792
  %v8849 = vpack.c.bf16 %v8795, %v8794
  %v8850 = vpack.c.bf16 %v8797, %v8796
  %v8851 = vpack.c.bf16 %v8799, %v8798
  %v8852 = vpack.c.bf16 %v8801, %v8800
  %v8853 = vpack.c.bf16 %v8803, %v8802
  %v8854 = vpack.c.bf16 %v8805, %v8804
  %v8855 = vpack.c.bf16 %v8807, %v8806
  %v8856 = vpack.c.bf16 %v8809, %v8808
  %v8857 = vpack.c.bf16 %v8811, %v8810
  %v8858 = vpack.c.bf16 %v8813, %v8812
  %v8859 = vpack.c.bf16 %v8815, %v8814
  %v8860 = vpack.c.bf16 %v8817, %v8816
  %v8861 = vpack.c.bf16 %v8819, %v8818
  %v8862 = vpack.c.bf16 %v8821, %v8820
  %v8863 = vpack.c.bf16 %v8823, %v8822
  %v8864 = vpack.c.bf16 %v8825, %v8824
  %v8865 = vpack.c.bf16 %v8827, %v8826
  %v8866 = vpack.c.bf16 %v8829, %v8828
  %v8867 = vpack.c.bf16 %v8831, %v8830
  %v8868 = vpack.c.bf16 %v8833, %v8832
  %v8869 = vpack.c.bf16 %v8835, %v8834
  %v8870 = vpack.c.bf16 %v8837, %v8836
  %v8871 = vpack.c.bf16 %v8839, %v8838
  %v8872 = vld [vmem:[%s3] sm:$0xf]
  %v8873 = vld [vmem:[%s3 + $0x4] sm:$0xf]
  %v8874 = vld [vmem:[%s3 + $0x8] sm:$0xf]
  %v8875 = vld [vmem:[%s3 + $0xc] sm:$0xf]
  %v8876 = vld [vmem:[%s3 + $0x10] sm:$0xf]
  %v8877 = vld [vmem:[%s3 + $0x14] sm:$0xf]
  %v8878 = vld [vmem:[%s3 + $0x18] sm:$0xf]
  %v8879 = vld [vmem:[%s3 + $0x1c] sm:$0xf]
  %v8880 = vld [vmem:[%s3 + $0x20] sm:$0xf]
  %v8881 = vld [vmem:[%s4] sm:$0x1]
  %v8883 = vlaneseq
  %v8884 = vshrl.u32 %v8883, 7
  %v8885 = vsub.s32 0, %v8884
  %v8886 = vrot.slane %v8881, %v8885
  %v8897 = vunpack.c.l.b16 %v8872
  %v8898 = vunpack.c.l.b16 %v8873
  %v8899 = vunpack.c.l.b16 %v8874
  %v8900 = vunpack.c.l.b16 %v8875
  %v8901 = vunpack.c.l.b16 %v8876
  %v8902 = vunpack.c.l.b16 %v8877
  %v8903 = vunpack.c.l.b16 %v8878
  %v8904 = vunpack.c.l.b16 %v8879
  %v8905 = vunpack.c.l.b16 %v8880
  %v8906 = vpack.c.b16 %v8898, %v8897
  %v8907 = vpack.c.b16 %v8900, %v8899
  %v8908 = vpack.c.b16 %v8902, %v8901
  %v8909 = vpack.c.b16 %v8904, %v8903
  %v8910 = vpack.c.b16 %v8905, %v8905
  %v8916 = vsel %vm6603, %v8840, 0
  %v8919 = vsel %vm6603, %v8841, 0
  %v8922 = vsel %vm6603, %v8842, 0
  %v8925 = vsel %vm6603, %v8843, 0
  %v8928 = vsel %vm6603, %v8844, 0
  %v8931 = vsel %vm6603, %v8845, 0
  %v8934 = vsel %vm6603, %v8846, 0
  %v8937 = vsel %vm6603, %v8847, 0
  %v8940 = vsel %vm6603, %v8848, 0
  %v8943 = vsel %vm6603, %v8849, 0
  %v8946 = vsel %vm6603, %v8850, 0
  %v8949 = vsel %vm6603, %v8851, 0
  %v8952 = vsel %vm6603, %v8852, 0
  %v8955 = vsel %vm6603, %v8853, 0
  %v8958 = vsel %vm6603, %v8854, 0
  %v8961 = vsel %vm6603, %v8855, 0
  %v8964 = vsel %vm6603, %v8856, 0
  %v8967 = vsel %vm6603, %v8857, 0
  %v8970 = vsel %vm6603, %v8858, 0
  %v8973 = vsel %vm6603, %v8859, 0
  %v8976 = vsel %vm6603, %v8860, 0
  %v8979 = vsel %vm6603, %v8861, 0
  %v8982 = vsel %vm6603, %v8862, 0
  %v8985 = vsel %vm6603, %v8863, 0
  %v8988 = vsel %vm6603, %v8864, 0
  %v8991 = vsel %vm6603, %v8865, 0
  %v8994 = vsel %vm6603, %v8866, 0
  %v8997 = vsel %vm6603, %v8867, 0
  %v9000 = vsel %vm6603, %v8868, 0
  %v9003 = vsel %vm6603, %v8869, 0
  %v9006 = vsel %vm6603, %v8870, 0
  %v9009 = vsel %vm6603, %v8871, 0
  %vm9011 = vcmask 1043456
  %v9013 = vsel %vm9011, %v8910, 0
  %9015 = vmatprep.subr.bf16.mxu0 0
  %9016 = vmatpush1.bf16.msra.mxu0 0
  %9017 = vmatprep.subr.bf16.mxu0 0
  %9018 = vmatpush1.bf16.msra.mxu0 0
  %9019 = vmatprep.subr.bf16.mxu0 0
  %9020 = vmatpush1.bf16.msra.mxu0 0
  %9021 = vmatprep.subr.bf16.mxu0 0
  %9022 = vmatpush1.bf16.msra.mxu0 %v9013
  %9023 = vmatprep.subr.bf16.mxu0 0
  %9024 = vmatpush1.bf16.msra.mxu0 %v8909
  %9025 = vmatprep.subr.bf16.mxu0 0
  %9026 = vmatpush1.bf16.msra.mxu0 %v8908
  %9027 = vmatprep.subr.bf16.mxu0 0
  %9028 = vmatpush1.bf16.msra.mxu0 %v8907
  %9029 = vmatprep.subr.bf16.mxu0 0
  %9030 = vmatpush1.bf16.msra.mxu0 %v8906
  %9031 = vmatprep.subr.bf16.mxu0 0
  %9032 = vmatpush2.bf16.msra.mxu0 0
  %9033 = vmatprep.subr.bf16.mxu0 0
  %9034 = vmatpush2.bf16.msra.mxu0 0
  %9035 = vmatprep.subr.bf16.mxu0 0
  %9036 = vmatpush2.bf16.msra.mxu0 0
  %9037 = vmatprep.subr.bf16.mxu0 0
  %9038 = vmatpush2.bf16.msra.mxu0 0
  %9039 = vmatprep.subr.bf16.mxu0 0
  %9040 = vmatpush2.bf16.msra.mxu0 0
  %9041 = vmatprep.subr.bf16.mxu0 0
  %9042 = vmatpush2.bf16.msra.mxu0 0
  %9043 = vmatprep.subr.bf16.mxu0 0
  %9044 = vmatpush2.bf16.msra.mxu0 0
  %9045 = vmatprep.subr.bf16.mxu0 0
  %9046 = vmatpush2.bf16.msra.mxu0 0
  %9047 = vmatprep.mubr.bf16.mxu0 0
  %9048 = vmatmul.mubr.bf16.gmra.mxu0 %v8916
  %v9049 = vpop.f32.mrf.mxu0
  %v9050 = vadd.f32 %v8886, %v9049
  %v9051 = vpop.f32.mrf.mxu0
  %v9052 = vpop.f32.mrf.mxu0
  %v9053 = vadd.f32 %v8886, %v9052
  %v9054 = vpop.f32.mrf.mxu0
  %9055 = vmatprep.mubr.bf16.mxu0 0
  %9056 = vmatmul.mubr.bf16.gmra.mxu0 %v8919
  %v9057 = vpop.f32.mrf.mxu0
  %v9058 = vadd.f32 %v8886, %v9057
  %v9059 = vpop.f32.mrf.mxu0
  %v9060 = vpop.f32.mrf.mxu0
  %v9061 = vadd.f32 %v8886, %v9060
  %v9062 = vpop.f32.mrf.mxu0
  %9063 = vmatprep.mubr.bf16.mxu0 0
  %9064 = vmatmul.mubr.bf16.gmra.mxu0 %v8922
  %v9065 = vpop.f32.mrf.mxu0
  %v9066 = vadd.f32 %v8886, %v9065
  %v9067 = vpop.f32.mrf.mxu0
  %v9068 = vpop.f32.mrf.mxu0
  %v9069 = vadd.f32 %v8886, %v9068
  %v9070 = vpop.f32.mrf.mxu0
  %9071 = vmatprep.mubr.bf16.mxu0 0
  %9072 = vmatmul.mubr.bf16.gmra.mxu0 %v8925
  %v9073 = vpop.f32.mrf.mxu0
  %v9074 = vadd.f32 %v8886, %v9073
  %v9075 = vpop.f32.mrf.mxu0
  %v9076 = vpop.f32.mrf.mxu0
  %v9077 = vadd.f32 %v8886, %v9076
  %v9078 = vpop.f32.mrf.mxu0
  %9079 = vmatprep.mubr.bf16.mxu0 0
  %9080 = vmatmul.mubr.bf16.gmra.mxu0 %v8928
  %v9081 = vpop.f32.mrf.mxu0
  %v9082 = vadd.f32 %v8886, %v9081
  %v9083 = vpop.f32.mrf.mxu0
  %v9084 = vpop.f32.mrf.mxu0
  %v9085 = vadd.f32 %v8886, %v9084
  %v9086 = vpop.f32.mrf.mxu0
  %9087 = vmatprep.mubr.bf16.mxu0 0
  %9088 = vmatmul.mubr.bf16.gmra.mxu0 %v8931
  %v9089 = vpop.f32.mrf.mxu0
  %v9090 = vadd.f32 %v8886, %v9089
  %v9091 = vpop.f32.mrf.mxu0
  %v9092 = vpop.f32.mrf.mxu0
  %v9093 = vadd.f32 %v8886, %v9092
  %v9094 = vpop.f32.mrf.mxu0
  %9095 = vmatprep.mubr.bf16.mxu0 0
  %9096 = vmatmul.mubr.bf16.gmra.mxu0 %v8934
  %v9097 = vpop.f32.mrf.mxu0
  %v9098 = vadd.f32 %v8886, %v9097
  %v9099 = vpop.f32.mrf.mxu0
  %v9100 = vpop.f32.mrf.mxu0
  %v9101 = vadd.f32 %v8886, %v9100
  %v9102 = vpop.f32.mrf.mxu0
  %9103 = vmatprep.mubr.bf16.mxu0 0
  %9104 = vmatmul.mubr.bf16.gmra.mxu0 %v8937
  %v9105 = vpop.f32.mrf.mxu0
  %v9106 = vadd.f32 %v8886, %v9105
  %v9107 = vpop.f32.mrf.mxu0
  %v9108 = vpop.f32.mrf.mxu0
  %v9109 = vadd.f32 %v8886, %v9108
  %v9110 = vpop.f32.mrf.mxu0
  %9111 = vmatprep.mubr.bf16.mxu0 0
  %9112 = vmatmul.mubr.bf16.gmra.mxu0 %v8940
  %v9113 = vpop.f32.mrf.mxu0
  %v9114 = vadd.f32 %v8886, %v9113
  %v9115 = vpop.f32.mrf.mxu0
  %v9116 = vpop.f32.mrf.mxu0
  %v9117 = vadd.f32 %v8886, %v9116
  %v9118 = vpop.f32.mrf.mxu0
  %9119 = vmatprep.mubr.bf16.mxu0 0
  %9120 = vmatmul.mubr.bf16.gmra.mxu0 %v8943
  %v9121 = vpop.f32.mrf.mxu0
  %v9122 = vadd.f32 %v8886, %v9121
  %v9123 = vpop.f32.mrf.mxu0
  %v9124 = vpop.f32.mrf.mxu0
  %v9125 = vadd.f32 %v8886, %v9124
  %v9126 = vpop.f32.mrf.mxu0
  %9127 = vmatprep.mubr.bf16.mxu0 0
  %9128 = vmatmul.mubr.bf16.gmra.mxu0 %v8946
  %v9129 = vpop.f32.mrf.mxu0
  %v9130 = vadd.f32 %v8886, %v9129
  %v9131 = vpop.f32.mrf.mxu0
  %v9132 = vpop.f32.mrf.mxu0
  %v9133 = vadd.f32 %v8886, %v9132
  %v9134 = vpop.f32.mrf.mxu0
  %9135 = vmatprep.mubr.bf16.mxu0 0
  %9136 = vmatmul.mubr.bf16.gmra.mxu0 %v8949
  %v9137 = vpop.f32.mrf.mxu0
  %v9138 = vadd.f32 %v8886, %v9137
  %v9139 = vpop.f32.mrf.mxu0
  %v9140 = vpop.f32.mrf.mxu0
  %v9141 = vadd.f32 %v8886, %v9140
  %v9142 = vpop.f32.mrf.mxu0
  %9143 = vmatprep.mubr.bf16.mxu0 0
  %9144 = vmatmul.mubr.bf16.gmra.mxu0 %v8952
  %v9145 = vpop.f32.mrf.mxu0
  %v9146 = vadd.f32 %v8886, %v9145
  %v9147 = vpop.f32.mrf.mxu0
  %v9148 = vpop.f32.mrf.mxu0
  %v9149 = vadd.f32 %v8886, %v9148
  %v9150 = vpop.f32.mrf.mxu0
  %9151 = vmatprep.mubr.bf16.mxu0 0
  %9152 = vmatmul.mubr.bf16.gmra.mxu0 %v8955
  %v9153 = vpop.f32.mrf.mxu0
  %v9154 = vadd.f32 %v8886, %v9153
  %v9155 = vpop.f32.mrf.mxu0
  %v9156 = vpop.f32.mrf.mxu0
  %v9157 = vadd.f32 %v8886, %v9156
  %v9158 = vpop.f32.mrf.mxu0
  %9159 = vmatprep.mubr.bf16.mxu0 0
  %9160 = vmatmul.mubr.bf16.gmra.mxu0 %v8958
  %v9161 = vpop.f32.mrf.mxu0
  %v9162 = vadd.f32 %v8886, %v9161
  %v9163 = vpop.f32.mrf.mxu0
  %v9164 = vpop.f32.mrf.mxu0
  %v9165 = vadd.f32 %v8886, %v9164
  %v9166 = vpop.f32.mrf.mxu0
  %9167 = vmatprep.mubr.bf16.mxu0 0
  %9168 = vmatmul.mubr.bf16.gmra.mxu0 %v8961
  %v9169 = vpop.f32.mrf.mxu0
  %v9170 = vadd.f32 %v8886, %v9169
  %v9171 = vpop.f32.mrf.mxu0
  %v9172 = vpop.f32.mrf.mxu0
  %v9173 = vadd.f32 %v8886, %v9172
  %v9174 = vpop.f32.mrf.mxu0
  %9175 = vmatprep.mubr.bf16.mxu0 0
  %9176 = vmatmul.mubr.bf16.gmra.mxu0 %v8964
  %v9177 = vpop.f32.mrf.mxu0
  %v9178 = vadd.f32 %v8886, %v9177
  %v9179 = vpop.f32.mrf.mxu0
  %v9180 = vpop.f32.mrf.mxu0
  %v9181 = vadd.f32 %v8886, %v9180
  %v9182 = vpop.f32.mrf.mxu0
  %9183 = vmatprep.mubr.bf16.mxu0 0
  %9184 = vmatmul.mubr.bf16.gmra.mxu0 %v8967
  %v9185 = vpop.f32.mrf.mxu0
  %v9186 = vadd.f32 %v8886, %v9185
  %v9187 = vpop.f32.mrf.mxu0
  %v9188 = vpop.f32.mrf.mxu0
  %v9189 = vadd.f32 %v8886, %v9188
  %v9190 = vpop.f32.mrf.mxu0
  %9191 = vmatprep.mubr.bf16.mxu0 0
  %9192 = vmatmul.mubr.bf16.gmra.mxu0 %v8970
  %v9193 = vpop.f32.mrf.mxu0
  %v9194 = vadd.f32 %v8886, %v9193
  %v9195 = vpop.f32.mrf.mxu0
  %v9196 = vpop.f32.mrf.mxu0
  %v9197 = vadd.f32 %v8886, %v9196
  %v9198 = vpop.f32.mrf.mxu0
  %9199 = vmatprep.mubr.bf16.mxu0 0
  %9200 = vmatmul.mubr.bf16.gmra.mxu0 %v8973
  %v9201 = vpop.f32.mrf.mxu0
  %v9202 = vadd.f32 %v8886, %v9201
  %v9203 = vpop.f32.mrf.mxu0
  %v9204 = vpop.f32.mrf.mxu0
  %v9205 = vadd.f32 %v8886, %v9204
  %v9206 = vpop.f32.mrf.mxu0
  %9207 = vmatprep.mubr.bf16.mxu0 0
  %9208 = vmatmul.mubr.bf16.gmra.mxu0 %v8976
  %v9209 = vpop.f32.mrf.mxu0
  %v9210 = vadd.f32 %v8886, %v9209
  %v9211 = vpop.f32.mrf.mxu0
  %v9212 = vpop.f32.mrf.mxu0
  %v9213 = vadd.f32 %v8886, %v9212
  %v9214 = vpop.f32.mrf.mxu0
  %9215 = vmatprep.mubr.bf16.mxu0 0
  %9216 = vmatmul.mubr.bf16.gmra.mxu0 %v8979
  %v9217 = vpop.f32.mrf.mxu0
  %v9218 = vadd.f32 %v8886, %v9217
  %v9219 = vpop.f32.mrf.mxu0
  %v9220 = vpop.f32.mrf.mxu0
  %v9221 = vadd.f32 %v8886, %v9220
  %v9222 = vpop.f32.mrf.mxu0
  %9223 = vmatprep.mubr.bf16.mxu0 0
  %9224 = vmatmul.mubr.bf16.gmra.mxu0 %v8982
  %v9225 = vpop.f32.mrf.mxu0
  %v9226 = vadd.f32 %v8886, %v9225
  %v9227 = vpop.f32.mrf.mxu0
  %v9228 = vpop.f32.mrf.mxu0
  %v9229 = vadd.f32 %v8886, %v9228
  %v9230 = vpop.f32.mrf.mxu0
  %9231 = vmatprep.mubr.bf16.mxu0 0
  %9232 = vmatmul.mubr.bf16.gmra.mxu0 %v8985
  %v9233 = vpop.f32.mrf.mxu0
  %v9234 = vadd.f32 %v8886, %v9233
  %v9235 = vpop.f32.mrf.mxu0
  %v9236 = vpop.f32.mrf.mxu0
  %v9237 = vadd.f32 %v8886, %v9236
  %v9238 = vpop.f32.mrf.mxu0
  %9239 = vmatprep.mubr.bf16.mxu0 0
  %9240 = vmatmul.mubr.bf16.gmra.mxu0 %v8988
  %v9241 = vpop.f32.mrf.mxu0
  %v9242 = vadd.f32 %v8886, %v9241
  %v9243 = vpop.f32.mrf.mxu0
  %v9244 = vpop.f32.mrf.mxu0
  %v9245 = vadd.f32 %v8886, %v9244
  %v9246 = vpop.f32.mrf.mxu0
  %9247 = vmatprep.mubr.bf16.mxu0 0
  %9248 = vmatmul.mubr.bf16.gmra.mxu0 %v8991
  %v9249 = vpop.f32.mrf.mxu0
  %v9250 = vadd.f32 %v8886, %v9249
  %v9251 = vpop.f32.mrf.mxu0
  %v9252 = vpop.f32.mrf.mxu0
  %v9253 = vadd.f32 %v8886, %v9252
  %v9254 = vpop.f32.mrf.mxu0
  %9255 = vmatprep.mubr.bf16.mxu0 0
  %9256 = vmatmul.mubr.bf16.gmra.mxu0 %v8994
  %v9257 = vpop.f32.mrf.mxu0
  %v9258 = vadd.f32 %v8886, %v9257
  %v9259 = vpop.f32.mrf.mxu0
  %v9260 = vpop.f32.mrf.mxu0
  %v9261 = vadd.f32 %v8886, %v9260
  %v9262 = vpop.f32.mrf.mxu0
  %9263 = vmatprep.mubr.bf16.mxu0 0
  %9264 = vmatmul.mubr.bf16.gmra.mxu0 %v8997
  %v9265 = vpop.f32.mrf.mxu0
  %v9266 = vadd.f32 %v8886, %v9265
  %v9267 = vpop.f32.mrf.mxu0
  %v9268 = vpop.f32.mrf.mxu0
  %v9269 = vadd.f32 %v8886, %v9268
  %v9270 = vpop.f32.mrf.mxu0
  %9271 = vmatprep.mubr.bf16.mxu0 0
  %9272 = vmatmul.mubr.bf16.gmra.mxu0 %v9000
  %v9273 = vpop.f32.mrf.mxu0
  %v9274 = vadd.f32 %v8886, %v9273
  %v9275 = vpop.f32.mrf.mxu0
  %v9276 = vpop.f32.mrf.mxu0
  %v9277 = vadd.f32 %v8886, %v9276
  %v9278 = vpop.f32.mrf.mxu0
  %9279 = vmatprep.mubr.bf16.mxu0 0
  %9280 = vmatmul.mubr.bf16.gmra.mxu0 %v9003
  %v9281 = vpop.f32.mrf.mxu0
  %v9282 = vadd.f32 %v8886, %v9281
  %v9283 = vpop.f32.mrf.mxu0
  %v9284 = vpop.f32.mrf.mxu0
  %v9285 = vadd.f32 %v8886, %v9284
  %v9286 = vpop.f32.mrf.mxu0
  %9287 = vmatprep.mubr.bf16.mxu0 0
  %9288 = vmatmul.mubr.bf16.gmra.mxu0 %v9006
  %v9289 = vpop.f32.mrf.mxu0
  %v9290 = vadd.f32 %v8886, %v9289
  %v9291 = vpop.f32.mrf.mxu0
  %v9292 = vpop.f32.mrf.mxu0
  %v9293 = vadd.f32 %v8886, %v9292
  %v9294 = vpop.f32.mrf.mxu0
  %9295 = vmatprep.mubr.bf16.mxu0 0
  %9296 = vmatmul.mubr.bf16.gmra.mxu0 %v9009
  %v9297 = vpop.f32.mrf.mxu0
  %v9298 = vadd.f32 %v8886, %v9297
  %v9299 = vpop.f32.mrf.mxu0
  %v9300 = vpop.f32.mrf.mxu0
  %v9301 = vadd.f32 %v8886, %v9300
  %v9302 = vpop.f32.mrf.mxu0
  %9303 = vdwg.mxu0
  %v9368 = vcombine.high %v9050, %v9050
  %v9370 = vunpack.c.l.s4 1983009808
  %v9371 = vunpack.c.0.s8 %v9370
  %v9372 = vlaneseq
  %v9373 = vshrl.u32 %v9372, 7
  %v9374 = vsub.s32 %v9371, %v9373
  %v9375 = vrot.slane %v9050, %v9374
  %v9377 = vunpack.c.l.s4 1983009808
  %v9378 = vunpack.c.0.s8 %v9377
  %v9379 = vlaneseq
  %v9380 = vshrl.u32 %v9379, 7
  %v9381 = vsub.s32 %v9378, %v9380
  %v9382 = vrot.slane %v9368, %v9381
  %v9383 = vcombine.high %v9375, %v9375
  %v9384 = vcombine.high %v9382, %v9382
  %v9385 = vcombine.high %v9053, %v9053
  %v9387 = vunpack.c.l.s4 1983009808
  %v9388 = vunpack.c.0.s8 %v9387
  %v9389 = vlaneseq
  %v9390 = vshrl.u32 %v9389, 7
  %v9391 = vsub.s32 %v9388, %v9390
  %v9392 = vrot.slane %v9053, %v9391
  %v9394 = vunpack.c.l.s4 1983009808
  %v9395 = vunpack.c.0.s8 %v9394
  %v9396 = vlaneseq
  %v9397 = vshrl.u32 %v9396, 7
  %v9398 = vsub.s32 %v9395, %v9397
  %v9399 = vrot.slane %v9385, %v9398
  %v9400 = vcombine.high %v9392, %v9392
  %v9401 = vcombine.high %v9399, %v9399
  %v9402 = vcombine.high %v9058, %v9058
  %v9404 = vunpack.c.l.s4 1983009808
  %v9405 = vunpack.c.0.s8 %v9404
  %v9406 = vlaneseq
  %v9407 = vshrl.u32 %v9406, 7
  %v9408 = vsub.s32 %v9405, %v9407
  %v9409 = vrot.slane %v9058, %v9408
  %v9411 = vunpack.c.l.s4 1983009808
  %v9412 = vunpack.c.0.s8 %v9411
  %v9413 = vlaneseq
  %v9414 = vshrl.u32 %v9413, 7
  %v9415 = vsub.s32 %v9412, %v9414
  %v9416 = vrot.slane %v9402, %v9415
  %v9417 = vcombine.high %v9409, %v9409
  %v9418 = vcombine.high %v9416, %v9416
  %v9419 = vcombine.high %v9061, %v9061
  %v9421 = vunpack.c.l.s4 1983009808
  %v9422 = vunpack.c.0.s8 %v9421
  %v9423 = vlaneseq
  %v9424 = vshrl.u32 %v9423, 7
  %v9425 = vsub.s32 %v9422, %v9424
  %v9426 = vrot.slane %v9061, %v9425
  %v9428 = vunpack.c.l.s4 1983009808
  %v9429 = vunpack.c.0.s8 %v9428
  %v9430 = vlaneseq
  %v9431 = vshrl.u32 %v9430, 7
  %v9432 = vsub.s32 %v9429, %v9431
  %v9433 = vrot.slane %v9419, %v9432
  %v9434 = vcombine.high %v9426, %v9426
  %v9435 = vcombine.high %v9433, %v9433
  %v9436 = vcombine.high %v9066, %v9066
  %v9438 = vunpack.c.l.s4 1983009808
  %v9439 = vunpack.c.0.s8 %v9438
  %v9440 = vlaneseq
  %v9441 = vshrl.u32 %v9440, 7
  %v9442 = vsub.s32 %v9439, %v9441
  %v9443 = vrot.slane %v9066, %v9442
  %v9445 = vunpack.c.l.s4 1983009808
  %v9446 = vunpack.c.0.s8 %v9445
  %v9447 = vlaneseq
  %v9448 = vshrl.u32 %v9447, 7
  %v9449 = vsub.s32 %v9446, %v9448
  %v9450 = vrot.slane %v9436, %v9449
  %v9451 = vcombine.high %v9443, %v9443
  %v9452 = vcombine.high %v9450, %v9450
  %v9453 = vcombine.high %v9069, %v9069
  %v9455 = vunpack.c.l.s4 1983009808
  %v9456 = vunpack.c.0.s8 %v9455
  %v9457 = vlaneseq
  %v9458 = vshrl.u32 %v9457, 7
  %v9459 = vsub.s32 %v9456, %v9458
  %v9460 = vrot.slane %v9069, %v9459
  %v9462 = vunpack.c.l.s4 1983009808
  %v9463 = vunpack.c.0.s8 %v9462
  %v9464 = vlaneseq
  %v9465 = vshrl.u32 %v9464, 7
  %v9466 = vsub.s32 %v9463, %v9465
  %v9467 = vrot.slane %v9453, %v9466
  %v9468 = vcombine.high %v9460, %v9460
  %v9469 = vcombine.high %v9467, %v9467
  %v9470 = vcombine.high %v9074, %v9074
  %v9472 = vunpack.c.l.s4 1983009808
  %v9473 = vunpack.c.0.s8 %v9472
  %v9474 = vlaneseq
  %v9475 = vshrl.u32 %v9474, 7
  %v9476 = vsub.s32 %v9473, %v9475
  %v9477 = vrot.slane %v9074, %v9476
  %v9479 = vunpack.c.l.s4 1983009808
  %v9480 = vunpack.c.0.s8 %v9479
  %v9481 = vlaneseq
  %v9482 = vshrl.u32 %v9481, 7
  %v9483 = vsub.s32 %v9480, %v9482
  %v9484 = vrot.slane %v9470, %v9483
  %v9485 = vcombine.high %v9477, %v9477
  %v9486 = vcombine.high %v9484, %v9484
  %v9487 = vcombine.high %v9077, %v9077
  %v9489 = vunpack.c.l.s4 1983009808
  %v9490 = vunpack.c.0.s8 %v9489
  %v9491 = vlaneseq
  %v9492 = vshrl.u32 %v9491, 7
  %v9493 = vsub.s32 %v9490, %v9492
  %v9494 = vrot.slane %v9077, %v9493
  %v9496 = vunpack.c.l.s4 1983009808
  %v9497 = vunpack.c.0.s8 %v9496
  %v9498 = vlaneseq
  %v9499 = vshrl.u32 %v9498, 7
  %v9500 = vsub.s32 %v9497, %v9499
  %v9501 = vrot.slane %v9487, %v9500
  %v9502 = vcombine.high %v9494, %v9494
  %v9503 = vcombine.high %v9501, %v9501
  %v9504 = vcombine.high %v9082, %v9082
  %v9506 = vunpack.c.l.s4 1983009808
  %v9507 = vunpack.c.0.s8 %v9506
  %v9508 = vlaneseq
  %v9509 = vshrl.u32 %v9508, 7
  %v9510 = vsub.s32 %v9507, %v9509
  %v9511 = vrot.slane %v9082, %v9510
  %v9513 = vunpack.c.l.s4 1983009808
  %v9514 = vunpack.c.0.s8 %v9513
  %v9515 = vlaneseq
  %v9516 = vshrl.u32 %v9515, 7
  %v9517 = vsub.s32 %v9514, %v9516
  %v9518 = vrot.slane %v9504, %v9517
  %v9519 = vcombine.high %v9511, %v9511
  %v9520 = vcombine.high %v9518, %v9518
  %v9521 = vcombine.high %v9085, %v9085
  %v9523 = vunpack.c.l.s4 1983009808
  %v9524 = vunpack.c.0.s8 %v9523
  %v9525 = vlaneseq
  %v9526 = vshrl.u32 %v9525, 7
  %v9527 = vsub.s32 %v9524, %v9526
  %v9528 = vrot.slane %v9085, %v9527
  %v9530 = vunpack.c.l.s4 1983009808
  %v9531 = vunpack.c.0.s8 %v9530
  %v9532 = vlaneseq
  %v9533 = vshrl.u32 %v9532, 7
  %v9534 = vsub.s32 %v9531, %v9533
  %v9535 = vrot.slane %v9521, %v9534
  %v9536 = vcombine.high %v9528, %v9528
  %v9537 = vcombine.high %v9535, %v9535
  %v9538 = vcombine.high %v9090, %v9090
  %v9540 = vunpack.c.l.s4 1983009808
  %v9541 = vunpack.c.0.s8 %v9540
  %v9542 = vlaneseq
  %v9543 = vshrl.u32 %v9542, 7
  %v9544 = vsub.s32 %v9541, %v9543
  %v9545 = vrot.slane %v9090, %v9544
  %v9547 = vunpack.c.l.s4 1983009808
  %v9548 = vunpack.c.0.s8 %v9547
  %v9549 = vlaneseq
  %v9550 = vshrl.u32 %v9549, 7
  %v9551 = vsub.s32 %v9548, %v9550
  %v9552 = vrot.slane %v9538, %v9551
  %v9553 = vcombine.high %v9545, %v9545
  %v9554 = vcombine.high %v9552, %v9552
  %v9555 = vcombine.high %v9093, %v9093
  %v9557 = vunpack.c.l.s4 1983009808
  %v9558 = vunpack.c.0.s8 %v9557
  %v9559 = vlaneseq
  %v9560 = vshrl.u32 %v9559, 7
  %v9561 = vsub.s32 %v9558, %v9560
  %v9562 = vrot.slane %v9093, %v9561
  %v9564 = vunpack.c.l.s4 1983009808
  %v9565 = vunpack.c.0.s8 %v9564
  %v9566 = vlaneseq
  %v9567 = vshrl.u32 %v9566, 7
  %v9568 = vsub.s32 %v9565, %v9567
  %v9569 = vrot.slane %v9555, %v9568
  %v9570 = vcombine.high %v9562, %v9562
  %v9571 = vcombine.high %v9569, %v9569
  %v9572 = vcombine.high %v9098, %v9098
  %v9574 = vunpack.c.l.s4 1983009808
  %v9575 = vunpack.c.0.s8 %v9574
  %v9576 = vlaneseq
  %v9577 = vshrl.u32 %v9576, 7
  %v9578 = vsub.s32 %v9575, %v9577
  %v9579 = vrot.slane %v9098, %v9578
  %v9581 = vunpack.c.l.s4 1983009808
  %v9582 = vunpack.c.0.s8 %v9581
  %v9583 = vlaneseq
  %v9584 = vshrl.u32 %v9583, 7
  %v9585 = vsub.s32 %v9582, %v9584
  %v9586 = vrot.slane %v9572, %v9585
  %v9587 = vcombine.high %v9579, %v9579
  %v9588 = vcombine.high %v9586, %v9586
  %v9589 = vcombine.high %v9101, %v9101
  %v9591 = vunpack.c.l.s4 1983009808
  %v9592 = vunpack.c.0.s8 %v9591
  %v9593 = vlaneseq
  %v9594 = vshrl.u32 %v9593, 7
  %v9595 = vsub.s32 %v9592, %v9594
  %v9596 = vrot.slane %v9101, %v9595
  %v9598 = vunpack.c.l.s4 1983009808
  %v9599 = vunpack.c.0.s8 %v9598
  %v9600 = vlaneseq
  %v9601 = vshrl.u32 %v9600, 7
  %v9602 = vsub.s32 %v9599, %v9601
  %v9603 = vrot.slane %v9589, %v9602
  %v9604 = vcombine.high %v9596, %v9596
  %v9605 = vcombine.high %v9603, %v9603
  %v9606 = vcombine.high %v9106, %v9106
  %v9608 = vunpack.c.l.s4 1983009808
  %v9609 = vunpack.c.0.s8 %v9608
  %v9610 = vlaneseq
  %v9611 = vshrl.u32 %v9610, 7
  %v9612 = vsub.s32 %v9609, %v9611
  %v9613 = vrot.slane %v9106, %v9612
  %v9615 = vunpack.c.l.s4 1983009808
  %v9616 = vunpack.c.0.s8 %v9615
  %v9617 = vlaneseq
  %v9618 = vshrl.u32 %v9617, 7
  %v9619 = vsub.s32 %v9616, %v9618
  %v9620 = vrot.slane %v9606, %v9619
  %v9621 = vcombine.high %v9613, %v9613
  %v9622 = vcombine.high %v9620, %v9620
  %v9623 = vcombine.high %v9109, %v9109
  %v9625 = vunpack.c.l.s4 1983009808
  %v9626 = vunpack.c.0.s8 %v9625
  %v9627 = vlaneseq
  %v9628 = vshrl.u32 %v9627, 7
  %v9629 = vsub.s32 %v9626, %v9628
  %v9630 = vrot.slane %v9109, %v9629
  %v9632 = vunpack.c.l.s4 1983009808
  %v9633 = vunpack.c.0.s8 %v9632
  %v9634 = vlaneseq
  %v9635 = vshrl.u32 %v9634, 7
  %v9636 = vsub.s32 %v9633, %v9635
  %v9637 = vrot.slane %v9623, %v9636
  %v9638 = vcombine.high %v9630, %v9630
  %v9639 = vcombine.high %v9637, %v9637
  %v9640 = vcombine.high %v9114, %v9114
  %v9642 = vunpack.c.l.s4 1983009808
  %v9643 = vunpack.c.0.s8 %v9642
  %v9644 = vlaneseq
  %v9645 = vshrl.u32 %v9644, 7
  %v9646 = vsub.s32 %v9643, %v9645
  %v9647 = vrot.slane %v9114, %v9646
  %v9649 = vunpack.c.l.s4 1983009808
  %v9650 = vunpack.c.0.s8 %v9649
  %v9651 = vlaneseq
  %v9652 = vshrl.u32 %v9651, 7
  %v9653 = vsub.s32 %v9650, %v9652
  %v9654 = vrot.slane %v9640, %v9653
  %v9655 = vcombine.high %v9647, %v9647
  %v9656 = vcombine.high %v9654, %v9654
  %v9657 = vcombine.high %v9117, %v9117
  %v9659 = vunpack.c.l.s4 1983009808
  %v9660 = vunpack.c.0.s8 %v9659
  %v9661 = vlaneseq
  %v9662 = vshrl.u32 %v9661, 7
  %v9663 = vsub.s32 %v9660, %v9662
  %v9664 = vrot.slane %v9117, %v9663
  %v9666 = vunpack.c.l.s4 1983009808
  %v9667 = vunpack.c.0.s8 %v9666
  %v9668 = vlaneseq
  %v9669 = vshrl.u32 %v9668, 7
  %v9670 = vsub.s32 %v9667, %v9669
  %v9671 = vrot.slane %v9657, %v9670
  %v9672 = vcombine.high %v9664, %v9664
  %v9673 = vcombine.high %v9671, %v9671
  %v9674 = vcombine.high %v9122, %v9122
  %v9676 = vunpack.c.l.s4 1983009808
  %v9677 = vunpack.c.0.s8 %v9676
  %v9678 = vlaneseq
  %v9679 = vshrl.u32 %v9678, 7
  %v9680 = vsub.s32 %v9677, %v9679
  %v9681 = vrot.slane %v9122, %v9680
  %v9683 = vunpack.c.l.s4 1983009808
  %v9684 = vunpack.c.0.s8 %v9683
  %v9685 = vlaneseq
  %v9686 = vshrl.u32 %v9685, 7
  %v9687 = vsub.s32 %v9684, %v9686
  %v9688 = vrot.slane %v9674, %v9687
  %v9689 = vcombine.high %v9681, %v9681
  %v9690 = vcombine.high %v9688, %v9688
  %v9691 = vcombine.high %v9125, %v9125
  %v9693 = vunpack.c.l.s4 1983009808
  %v9694 = vunpack.c.0.s8 %v9693
  %v9695 = vlaneseq
  %v9696 = vshrl.u32 %v9695, 7
  %v9697 = vsub.s32 %v9694, %v9696
  %v9698 = vrot.slane %v9125, %v9697
  %v9700 = vunpack.c.l.s4 1983009808
  %v9701 = vunpack.c.0.s8 %v9700
  %v9702 = vlaneseq
  %v9703 = vshrl.u32 %v9702, 7
  %v9704 = vsub.s32 %v9701, %v9703
  %v9705 = vrot.slane %v9691, %v9704
  %v9706 = vcombine.high %v9698, %v9698
  %v9707 = vcombine.high %v9705, %v9705
  %v9708 = vcombine.high %v9130, %v9130
  %v9710 = vunpack.c.l.s4 1983009808
  %v9711 = vunpack.c.0.s8 %v9710
  %v9712 = vlaneseq
  %v9713 = vshrl.u32 %v9712, 7
  %v9714 = vsub.s32 %v9711, %v9713
  %v9715 = vrot.slane %v9130, %v9714
  %v9717 = vunpack.c.l.s4 1983009808
  %v9718 = vunpack.c.0.s8 %v9717
  %v9719 = vlaneseq
  %v9720 = vshrl.u32 %v9719, 7
  %v9721 = vsub.s32 %v9718, %v9720
  %v9722 = vrot.slane %v9708, %v9721
  %v9723 = vcombine.high %v9715, %v9715
  %v9724 = vcombine.high %v9722, %v9722
  %v9725 = vcombine.high %v9133, %v9133
  %v9727 = vunpack.c.l.s4 1983009808
  %v9728 = vunpack.c.0.s8 %v9727
  %v9729 = vlaneseq
  %v9730 = vshrl.u32 %v9729, 7
  %v9731 = vsub.s32 %v9728, %v9730
  %v9732 = vrot.slane %v9133, %v9731
  %v9734 = vunpack.c.l.s4 1983009808
  %v9735 = vunpack.c.0.s8 %v9734
  %v9736 = vlaneseq
  %v9737 = vshrl.u32 %v9736, 7
  %v9738 = vsub.s32 %v9735, %v9737
  %v9739 = vrot.slane %v9725, %v9738
  %v9740 = vcombine.high %v9732, %v9732
  %v9741 = vcombine.high %v9739, %v9739
  %v9742 = vcombine.high %v9138, %v9138
  %v9744 = vunpack.c.l.s4 1983009808
  %v9745 = vunpack.c.0.s8 %v9744
  %v9746 = vlaneseq
  %v9747 = vshrl.u32 %v9746, 7
  %v9748 = vsub.s32 %v9745, %v9747
  %v9749 = vrot.slane %v9138, %v9748
  %v9751 = vunpack.c.l.s4 1983009808
  %v9752 = vunpack.c.0.s8 %v9751
  %v9753 = vlaneseq
  %v9754 = vshrl.u32 %v9753, 7
  %v9755 = vsub.s32 %v9752, %v9754
  %v9756 = vrot.slane %v9742, %v9755
  %v9757 = vcombine.high %v9749, %v9749
  %v9758 = vcombine.high %v9756, %v9756
  %v9759 = vcombine.high %v9141, %v9141
  %v9761 = vunpack.c.l.s4 1983009808
  %v9762 = vunpack.c.0.s8 %v9761
  %v9763 = vlaneseq
  %v9764 = vshrl.u32 %v9763, 7
  %v9765 = vsub.s32 %v9762, %v9764
  %v9766 = vrot.slane %v9141, %v9765
  %v9768 = vunpack.c.l.s4 1983009808
  %v9769 = vunpack.c.0.s8 %v9768
  %v9770 = vlaneseq
  %v9771 = vshrl.u32 %v9770, 7
  %v9772 = vsub.s32 %v9769, %v9771
  %v9773 = vrot.slane %v9759, %v9772
  %v9774 = vcombine.high %v9766, %v9766
  %v9775 = vcombine.high %v9773, %v9773
  %v9776 = vcombine.high %v9146, %v9146
  %v9778 = vunpack.c.l.s4 1983009808
  %v9779 = vunpack.c.0.s8 %v9778
  %v9780 = vlaneseq
  %v9781 = vshrl.u32 %v9780, 7
  %v9782 = vsub.s32 %v9779, %v9781
  %v9783 = vrot.slane %v9146, %v9782
  %v9785 = vunpack.c.l.s4 1983009808
  %v9786 = vunpack.c.0.s8 %v9785
  %v9787 = vlaneseq
  %v9788 = vshrl.u32 %v9787, 7
  %v9789 = vsub.s32 %v9786, %v9788
  %v9790 = vrot.slane %v9776, %v9789
  %v9791 = vcombine.high %v9783, %v9783
  %v9792 = vcombine.high %v9790, %v9790
  %v9793 = vcombine.high %v9149, %v9149
  %v9795 = vunpack.c.l.s4 1983009808
  %v9796 = vunpack.c.0.s8 %v9795
  %v9797 = vlaneseq
  %v9798 = vshrl.u32 %v9797, 7
  %v9799 = vsub.s32 %v9796, %v9798
  %v9800 = vrot.slane %v9149, %v9799
  %v9802 = vunpack.c.l.s4 1983009808
  %v9803 = vunpack.c.0.s8 %v9802
  %v9804 = vlaneseq
  %v9805 = vshrl.u32 %v9804, 7
  %v9806 = vsub.s32 %v9803, %v9805
  %v9807 = vrot.slane %v9793, %v9806
  %v9808 = vcombine.high %v9800, %v9800
  %v9809 = vcombine.high %v9807, %v9807
  %v9810 = vcombine.high %v9154, %v9154
  %v9812 = vunpack.c.l.s4 1983009808
  %v9813 = vunpack.c.0.s8 %v9812
  %v9814 = vlaneseq
  %v9815 = vshrl.u32 %v9814, 7
  %v9816 = vsub.s32 %v9813, %v9815
  %v9817 = vrot.slane %v9154, %v9816
  %v9819 = vunpack.c.l.s4 1983009808
  %v9820 = vunpack.c.0.s8 %v9819
  %v9821 = vlaneseq
  %v9822 = vshrl.u32 %v9821, 7
  %v9823 = vsub.s32 %v9820, %v9822
  %v9824 = vrot.slane %v9810, %v9823
  %v9825 = vcombine.high %v9817, %v9817
  %v9826 = vcombine.high %v9824, %v9824
  %v9827 = vcombine.high %v9157, %v9157
  %v9829 = vunpack.c.l.s4 1983009808
  %v9830 = vunpack.c.0.s8 %v9829
  %v9831 = vlaneseq
  %v9832 = vshrl.u32 %v9831, 7
  %v9833 = vsub.s32 %v9830, %v9832
  %v9834 = vrot.slane %v9157, %v9833
  %v9836 = vunpack.c.l.s4 1983009808
  %v9837 = vunpack.c.0.s8 %v9836
  %v9838 = vlaneseq
  %v9839 = vshrl.u32 %v9838, 7
  %v9840 = vsub.s32 %v9837, %v9839
  %v9841 = vrot.slane %v9827, %v9840
  %v9842 = vcombine.high %v9834, %v9834
  %v9843 = vcombine.high %v9841, %v9841
  %v9844 = vcombine.high %v9162, %v9162
  %v9846 = vunpack.c.l.s4 1983009808
  %v9847 = vunpack.c.0.s8 %v9846
  %v9848 = vlaneseq
  %v9849 = vshrl.u32 %v9848, 7
  %v9850 = vsub.s32 %v9847, %v9849
  %v9851 = vrot.slane %v9162, %v9850
  %v9853 = vunpack.c.l.s4 1983009808
  %v9854 = vunpack.c.0.s8 %v9853
  %v9855 = vlaneseq
  %v9856 = vshrl.u32 %v9855, 7
  %v9857 = vsub.s32 %v9854, %v9856
  %v9858 = vrot.slane %v9844, %v9857
  %v9859 = vcombine.high %v9851, %v9851
  %v9860 = vcombine.high %v9858, %v9858
  %v9861 = vcombine.high %v9165, %v9165
  %v9863 = vunpack.c.l.s4 1983009808
  %v9864 = vunpack.c.0.s8 %v9863
  %v9865 = vlaneseq
  %v9866 = vshrl.u32 %v9865, 7
  %v9867 = vsub.s32 %v9864, %v9866
  %v9868 = vrot.slane %v9165, %v9867
  %v9870 = vunpack.c.l.s4 1983009808
  %v9871 = vunpack.c.0.s8 %v9870
  %v9872 = vlaneseq
  %v9873 = vshrl.u32 %v9872, 7
  %v9874 = vsub.s32 %v9871, %v9873
  %v9875 = vrot.slane %v9861, %v9874
  %v9876 = vcombine.high %v9868, %v9868
  %v9877 = vcombine.high %v9875, %v9875
  %v9878 = vcombine.high %v9170, %v9170
  %v9880 = vunpack.c.l.s4 1983009808
  %v9881 = vunpack.c.0.s8 %v9880
  %v9882 = vlaneseq
  %v9883 = vshrl.u32 %v9882, 7
  %v9884 = vsub.s32 %v9881, %v9883
  %v9885 = vrot.slane %v9170, %v9884
  %v9887 = vunpack.c.l.s4 1983009808
  %v9888 = vunpack.c.0.s8 %v9887
  %v9889 = vlaneseq
  %v9890 = vshrl.u32 %v9889, 7
  %v9891 = vsub.s32 %v9888, %v9890
  %v9892 = vrot.slane %v9878, %v9891
  %v9893 = vcombine.high %v9885, %v9885
  %v9894 = vcombine.high %v9892, %v9892
  %v9895 = vcombine.high %v9173, %v9173
  %v9897 = vunpack.c.l.s4 1983009808
  %v9898 = vunpack.c.0.s8 %v9897
  %v9899 = vlaneseq
  %v9900 = vshrl.u32 %v9899, 7
  %v9901 = vsub.s32 %v9898, %v9900
  %v9902 = vrot.slane %v9173, %v9901
  %v9904 = vunpack.c.l.s4 1983009808
  %v9905 = vunpack.c.0.s8 %v9904
  %v9906 = vlaneseq
  %v9907 = vshrl.u32 %v9906, 7
  %v9908 = vsub.s32 %v9905, %v9907
  %v9909 = vrot.slane %v9895, %v9908
  %v9910 = vcombine.high %v9902, %v9902
  %v9911 = vcombine.high %v9909, %v9909
  %v9912 = vcombine.high %v9178, %v9178
  %v9914 = vunpack.c.l.s4 1983009808
  %v9915 = vunpack.c.0.s8 %v9914
  %v9916 = vlaneseq
  %v9917 = vshrl.u32 %v9916, 7
  %v9918 = vsub.s32 %v9915, %v9917
  %v9919 = vrot.slane %v9178, %v9918
  %v9921 = vunpack.c.l.s4 1983009808
  %v9922 = vunpack.c.0.s8 %v9921
  %v9923 = vlaneseq
  %v9924 = vshrl.u32 %v9923, 7
  %v9925 = vsub.s32 %v9922, %v9924
  %v9926 = vrot.slane %v9912, %v9925
  %v9927 = vcombine.high %v9919, %v9919
  %v9928 = vcombine.high %v9926, %v9926
  %v9929 = vcombine.high %v9181, %v9181
  %v9931 = vunpack.c.l.s4 1983009808
  %v9932 = vunpack.c.0.s8 %v9931
  %v9933 = vlaneseq
  %v9934 = vshrl.u32 %v9933, 7
  %v9935 = vsub.s32 %v9932, %v9934
  %v9936 = vrot.slane %v9181, %v9935
  %v9938 = vunpack.c.l.s4 1983009808
  %v9939 = vunpack.c.0.s8 %v9938
  %v9940 = vlaneseq
  %v9941 = vshrl.u32 %v9940, 7
  %v9942 = vsub.s32 %v9939, %v9941
  %v9943 = vrot.slane %v9929, %v9942
  %v9944 = vcombine.high %v9936, %v9936
  %v9945 = vcombine.high %v9943, %v9943
  %v9946 = vcombine.high %v9186, %v9186
  %v9948 = vunpack.c.l.s4 1983009808
  %v9949 = vunpack.c.0.s8 %v9948
  %v9950 = vlaneseq
  %v9951 = vshrl.u32 %v9950, 7
  %v9952 = vsub.s32 %v9949, %v9951
  %v9953 = vrot.slane %v9186, %v9952
  %v9955 = vunpack.c.l.s4 1983009808
  %v9956 = vunpack.c.0.s8 %v9955
  %v9957 = vlaneseq
  %v9958 = vshrl.u32 %v9957, 7
  %v9959 = vsub.s32 %v9956, %v9958
  %v9960 = vrot.slane %v9946, %v9959
  %v9961 = vcombine.high %v9953, %v9953
  %v9962 = vcombine.high %v9960, %v9960
  %v9963 = vcombine.high %v9189, %v9189
  %v9965 = vunpack.c.l.s4 1983009808
  %v9966 = vunpack.c.0.s8 %v9965
  %v9967 = vlaneseq
  %v9968 = vshrl.u32 %v9967, 7
  %v9969 = vsub.s32 %v9966, %v9968
  %v9970 = vrot.slane %v9189, %v9969
  %v9972 = vunpack.c.l.s4 1983009808
  %v9973 = vunpack.c.0.s8 %v9972
  %v9974 = vlaneseq
  %v9975 = vshrl.u32 %v9974, 7
  %v9976 = vsub.s32 %v9973, %v9975
  %v9977 = vrot.slane %v9963, %v9976
  %v9978 = vcombine.high %v9970, %v9970
  %v9979 = vcombine.high %v9977, %v9977
  %v9980 = vcombine.high %v9194, %v9194
  %v9982 = vunpack.c.l.s4 1983009808
  %v9983 = vunpack.c.0.s8 %v9982
  %v9984 = vlaneseq
  %v9985 = vshrl.u32 %v9984, 7
  %v9986 = vsub.s32 %v9983, %v9985
  %v9987 = vrot.slane %v9194, %v9986
  %v9989 = vunpack.c.l.s4 1983009808
  %v9990 = vunpack.c.0.s8 %v9989
  %v9991 = vlaneseq
  %v9992 = vshrl.u32 %v9991, 7
  %v9993 = vsub.s32 %v9990, %v9992
  %v9994 = vrot.slane %v9980, %v9993
  %v9995 = vcombine.high %v9987, %v9987
  %v9996 = vcombine.high %v9994, %v9994
  %v9997 = vcombine.high %v9197, %v9197
  %v9999 = vunpack.c.l.s4 1983009808
  %v10000 = vunpack.c.0.s8 %v9999
  %v10001 = vlaneseq
  %v10002 = vshrl.u32 %v10001, 7
  %v10003 = vsub.s32 %v10000, %v10002
  %v10004 = vrot.slane %v9197, %v10003
  %v10006 = vunpack.c.l.s4 1983009808
  %v10007 = vunpack.c.0.s8 %v10006
  %v10008 = vlaneseq
  %v10009 = vshrl.u32 %v10008, 7
  %v10010 = vsub.s32 %v10007, %v10009
  %v10011 = vrot.slane %v9997, %v10010
  %v10012 = vcombine.high %v10004, %v10004
  %v10013 = vcombine.high %v10011, %v10011
  %v10014 = vcombine.high %v9202, %v9202
  %v10016 = vunpack.c.l.s4 1983009808
  %v10017 = vunpack.c.0.s8 %v10016
  %v10018 = vlaneseq
  %v10019 = vshrl.u32 %v10018, 7
  %v10020 = vsub.s32 %v10017, %v10019
  %v10021 = vrot.slane %v9202, %v10020
  %v10023 = vunpack.c.l.s4 1983009808
  %v10024 = vunpack.c.0.s8 %v10023
  %v10025 = vlaneseq
  %v10026 = vshrl.u32 %v10025, 7
  %v10027 = vsub.s32 %v10024, %v10026
  %v10028 = vrot.slane %v10014, %v10027
  %v10029 = vcombine.high %v10021, %v10021
  %v10030 = vcombine.high %v10028, %v10028
  %v10031 = vcombine.high %v9205, %v9205
  %v10033 = vunpack.c.l.s4 1983009808
  %v10034 = vunpack.c.0.s8 %v10033
  %v10035 = vlaneseq
  %v10036 = vshrl.u32 %v10035, 7
  %v10037 = vsub.s32 %v10034, %v10036
  %v10038 = vrot.slane %v9205, %v10037
  %v10040 = vunpack.c.l.s4 1983009808
  %v10041 = vunpack.c.0.s8 %v10040
  %v10042 = vlaneseq
  %v10043 = vshrl.u32 %v10042, 7
  %v10044 = vsub.s32 %v10041, %v10043
  %v10045 = vrot.slane %v10031, %v10044
  %v10046 = vcombine.high %v10038, %v10038
  %v10047 = vcombine.high %v10045, %v10045
  %v10048 = vcombine.high %v9210, %v9210
  %v10050 = vunpack.c.l.s4 1983009808
  %v10051 = vunpack.c.0.s8 %v10050
  %v10052 = vlaneseq
  %v10053 = vshrl.u32 %v10052, 7
  %v10054 = vsub.s32 %v10051, %v10053
  %v10055 = vrot.slane %v9210, %v10054
  %v10057 = vunpack.c.l.s4 1983009808
  %v10058 = vunpack.c.0.s8 %v10057
  %v10059 = vlaneseq
  %v10060 = vshrl.u32 %v10059, 7
  %v10061 = vsub.s32 %v10058, %v10060
  %v10062 = vrot.slane %v10048, %v10061
  %v10063 = vcombine.high %v10055, %v10055
  %v10064 = vcombine.high %v10062, %v10062
  %v10065 = vcombine.high %v9213, %v9213
  %v10067 = vunpack.c.l.s4 1983009808
  %v10068 = vunpack.c.0.s8 %v10067
  %v10069 = vlaneseq
  %v10070 = vshrl.u32 %v10069, 7
  %v10071 = vsub.s32 %v10068, %v10070
  %v10072 = vrot.slane %v9213, %v10071
  %v10074 = vunpack.c.l.s4 1983009808
  %v10075 = vunpack.c.0.s8 %v10074
  %v10076 = vlaneseq
  %v10077 = vshrl.u32 %v10076, 7
  %v10078 = vsub.s32 %v10075, %v10077
  %v10079 = vrot.slane %v10065, %v10078
  %v10080 = vcombine.high %v10072, %v10072
  %v10081 = vcombine.high %v10079, %v10079
  %v10082 = vcombine.high %v9218, %v9218
  %v10084 = vunpack.c.l.s4 1983009808
  %v10085 = vunpack.c.0.s8 %v10084
  %v10086 = vlaneseq
  %v10087 = vshrl.u32 %v10086, 7
  %v10088 = vsub.s32 %v10085, %v10087
  %v10089 = vrot.slane %v9218, %v10088
  %v10091 = vunpack.c.l.s4 1983009808
  %v10092 = vunpack.c.0.s8 %v10091
  %v10093 = vlaneseq
  %v10094 = vshrl.u32 %v10093, 7
  %v10095 = vsub.s32 %v10092, %v10094
  %v10096 = vrot.slane %v10082, %v10095
  %v10097 = vcombine.high %v10089, %v10089
  %v10098 = vcombine.high %v10096, %v10096
  %v10099 = vcombine.high %v9221, %v9221
  %v10101 = vunpack.c.l.s4 1983009808
  %v10102 = vunpack.c.0.s8 %v10101
  %v10103 = vlaneseq
  %v10104 = vshrl.u32 %v10103, 7
  %v10105 = vsub.s32 %v10102, %v10104
  %v10106 = vrot.slane %v9221, %v10105
  %v10108 = vunpack.c.l.s4 1983009808
  %v10109 = vunpack.c.0.s8 %v10108
  %v10110 = vlaneseq
  %v10111 = vshrl.u32 %v10110, 7
  %v10112 = vsub.s32 %v10109, %v10111
  %v10113 = vrot.slane %v10099, %v10112
  %v10114 = vcombine.high %v10106, %v10106
  %v10115 = vcombine.high %v10113, %v10113
  %v10116 = vcombine.high %v9226, %v9226
  %v10118 = vunpack.c.l.s4 1983009808
  %v10119 = vunpack.c.0.s8 %v10118
  %v10120 = vlaneseq
  %v10121 = vshrl.u32 %v10120, 7
  %v10122 = vsub.s32 %v10119, %v10121
  %v10123 = vrot.slane %v9226, %v10122
  %v10125 = vunpack.c.l.s4 1983009808
  %v10126 = vunpack.c.0.s8 %v10125
  %v10127 = vlaneseq
  %v10128 = vshrl.u32 %v10127, 7
  %v10129 = vsub.s32 %v10126, %v10128
  %v10130 = vrot.slane %v10116, %v10129
  %v10131 = vcombine.high %v10123, %v10123
  %v10132 = vcombine.high %v10130, %v10130
  %v10133 = vcombine.high %v9229, %v9229
  %v10135 = vunpack.c.l.s4 1983009808
  %v10136 = vunpack.c.0.s8 %v10135
  %v10137 = vlaneseq
  %v10138 = vshrl.u32 %v10137, 7
  %v10139 = vsub.s32 %v10136, %v10138
  %v10140 = vrot.slane %v9229, %v10139
  %v10142 = vunpack.c.l.s4 1983009808
  %v10143 = vunpack.c.0.s8 %v10142
  %v10144 = vlaneseq
  %v10145 = vshrl.u32 %v10144, 7
  %v10146 = vsub.s32 %v10143, %v10145
  %v10147 = vrot.slane %v10133, %v10146
  %v10148 = vcombine.high %v10140, %v10140
  %v10149 = vcombine.high %v10147, %v10147
  %v10150 = vcombine.high %v9234, %v9234
  %v10152 = vunpack.c.l.s4 1983009808
  %v10153 = vunpack.c.0.s8 %v10152
  %v10154 = vlaneseq
  %v10155 = vshrl.u32 %v10154, 7
  %v10156 = vsub.s32 %v10153, %v10155
  %v10157 = vrot.slane %v9234, %v10156
  %v10159 = vunpack.c.l.s4 1983009808
  %v10160 = vunpack.c.0.s8 %v10159
  %v10161 = vlaneseq
  %v10162 = vshrl.u32 %v10161, 7
  %v10163 = vsub.s32 %v10160, %v10162
  %v10164 = vrot.slane %v10150, %v10163
  %v10165 = vcombine.high %v10157, %v10157
  %v10166 = vcombine.high %v10164, %v10164
  %v10167 = vcombine.high %v9237, %v9237
  %v10169 = vunpack.c.l.s4 1983009808
  %v10170 = vunpack.c.0.s8 %v10169
  %v10171 = vlaneseq
  %v10172 = vshrl.u32 %v10171, 7
  %v10173 = vsub.s32 %v10170, %v10172
  %v10174 = vrot.slane %v9237, %v10173
  %v10176 = vunpack.c.l.s4 1983009808
  %v10177 = vunpack.c.0.s8 %v10176
  %v10178 = vlaneseq
  %v10179 = vshrl.u32 %v10178, 7
  %v10180 = vsub.s32 %v10177, %v10179
  %v10181 = vrot.slane %v10167, %v10180
  %v10182 = vcombine.high %v10174, %v10174
  %v10183 = vcombine.high %v10181, %v10181
  %v10184 = vcombine.high %v9242, %v9242
  %v10186 = vunpack.c.l.s4 1983009808
  %v10187 = vunpack.c.0.s8 %v10186
  %v10188 = vlaneseq
  %v10189 = vshrl.u32 %v10188, 7
  %v10190 = vsub.s32 %v10187, %v10189
  %v10191 = vrot.slane %v9242, %v10190
  %v10193 = vunpack.c.l.s4 1983009808
  %v10194 = vunpack.c.0.s8 %v10193
  %v10195 = vlaneseq
  %v10196 = vshrl.u32 %v10195, 7
  %v10197 = vsub.s32 %v10194, %v10196
  %v10198 = vrot.slane %v10184, %v10197
  %v10199 = vcombine.high %v10191, %v10191
  %v10200 = vcombine.high %v10198, %v10198
  %v10201 = vcombine.high %v9245, %v9245
  %v10203 = vunpack.c.l.s4 1983009808
  %v10204 = vunpack.c.0.s8 %v10203
  %v10205 = vlaneseq
  %v10206 = vshrl.u32 %v10205, 7
  %v10207 = vsub.s32 %v10204, %v10206
  %v10208 = vrot.slane %v9245, %v10207
  %v10210 = vunpack.c.l.s4 1983009808
  %v10211 = vunpack.c.0.s8 %v10210
  %v10212 = vlaneseq
  %v10213 = vshrl.u32 %v10212, 7
  %v10214 = vsub.s32 %v10211, %v10213
  %v10215 = vrot.slane %v10201, %v10214
  %v10216 = vcombine.high %v10208, %v10208
  %v10217 = vcombine.high %v10215, %v10215
  %v10218 = vcombine.high %v9250, %v9250
  %v10220 = vunpack.c.l.s4 1983009808
  %v10221 = vunpack.c.0.s8 %v10220
  %v10222 = vlaneseq
  %v10223 = vshrl.u32 %v10222, 7
  %v10224 = vsub.s32 %v10221, %v10223
  %v10225 = vrot.slane %v9250, %v10224
  %v10227 = vunpack.c.l.s4 1983009808
  %v10228 = vunpack.c.0.s8 %v10227
  %v10229 = vlaneseq
  %v10230 = vshrl.u32 %v10229, 7
  %v10231 = vsub.s32 %v10228, %v10230
  %v10232 = vrot.slane %v10218, %v10231
  %v10233 = vcombine.high %v10225, %v10225
  %v10234 = vcombine.high %v10232, %v10232
  %v10235 = vcombine.high %v9253, %v9253
  %v10237 = vunpack.c.l.s4 1983009808
  %v10238 = vunpack.c.0.s8 %v10237
  %v10239 = vlaneseq
  %v10240 = vshrl.u32 %v10239, 7
  %v10241 = vsub.s32 %v10238, %v10240
  %v10242 = vrot.slane %v9253, %v10241
  %v10244 = vunpack.c.l.s4 1983009808
  %v10245 = vunpack.c.0.s8 %v10244
  %v10246 = vlaneseq
  %v10247 = vshrl.u32 %v10246, 7
  %v10248 = vsub.s32 %v10245, %v10247
  %v10249 = vrot.slane %v10235, %v10248
  %v10250 = vcombine.high %v10242, %v10242
  %v10251 = vcombine.high %v10249, %v10249
  %v10252 = vcombine.high %v9258, %v9258
  %v10254 = vunpack.c.l.s4 1983009808
  %v10255 = vunpack.c.0.s8 %v10254
  %v10256 = vlaneseq
  %v10257 = vshrl.u32 %v10256, 7
  %v10258 = vsub.s32 %v10255, %v10257
  %v10259 = vrot.slane %v9258, %v10258
  %v10261 = vunpack.c.l.s4 1983009808
  %v10262 = vunpack.c.0.s8 %v10261
  %v10263 = vlaneseq
  %v10264 = vshrl.u32 %v10263, 7
  %v10265 = vsub.s32 %v10262, %v10264
  %v10266 = vrot.slane %v10252, %v10265
  %v10267 = vcombine.high %v10259, %v10259
  %v10268 = vcombine.high %v10266, %v10266
  %v10269 = vcombine.high %v9261, %v9261
  %v10271 = vunpack.c.l.s4 1983009808
  %v10272 = vunpack.c.0.s8 %v10271
  %v10273 = vlaneseq
  %v10274 = vshrl.u32 %v10273, 7
  %v10275 = vsub.s32 %v10272, %v10274
  %v10276 = vrot.slane %v9261, %v10275
  %v10278 = vunpack.c.l.s4 1983009808
  %v10279 = vunpack.c.0.s8 %v10278
  %v10280 = vlaneseq
  %v10281 = vshrl.u32 %v10280, 7
  %v10282 = vsub.s32 %v10279, %v10281
  %v10283 = vrot.slane %v10269, %v10282
  %v10284 = vcombine.high %v10276, %v10276
  %v10285 = vcombine.high %v10283, %v10283
  %v10286 = vcombine.high %v9266, %v9266
  %v10288 = vunpack.c.l.s4 1983009808
  %v10289 = vunpack.c.0.s8 %v10288
  %v10290 = vlaneseq
  %v10291 = vshrl.u32 %v10290, 7
  %v10292 = vsub.s32 %v10289, %v10291
  %v10293 = vrot.slane %v9266, %v10292
  %v10295 = vunpack.c.l.s4 1983009808
  %v10296 = vunpack.c.0.s8 %v10295
  %v10297 = vlaneseq
  %v10298 = vshrl.u32 %v10297, 7
  %v10299 = vsub.s32 %v10296, %v10298
  %v10300 = vrot.slane %v10286, %v10299
  %v10301 = vcombine.high %v10293, %v10293
  %v10302 = vcombine.high %v10300, %v10300
  %v10303 = vcombine.high %v9269, %v9269
  %v10305 = vunpack.c.l.s4 1983009808
  %v10306 = vunpack.c.0.s8 %v10305
  %v10307 = vlaneseq
  %v10308 = vshrl.u32 %v10307, 7
  %v10309 = vsub.s32 %v10306, %v10308
  %v10310 = vrot.slane %v9269, %v10309
  %v10312 = vunpack.c.l.s4 1983009808
  %v10313 = vunpack.c.0.s8 %v10312
  %v10314 = vlaneseq
  %v10315 = vshrl.u32 %v10314, 7
  %v10316 = vsub.s32 %v10313, %v10315
  %v10317 = vrot.slane %v10303, %v10316
  %v10318 = vcombine.high %v10310, %v10310
  %v10319 = vcombine.high %v10317, %v10317
  %v10320 = vcombine.high %v9274, %v9274
  %v10322 = vunpack.c.l.s4 1983009808
  %v10323 = vunpack.c.0.s8 %v10322
  %v10324 = vlaneseq
  %v10325 = vshrl.u32 %v10324, 7
  %v10326 = vsub.s32 %v10323, %v10325
  %v10327 = vrot.slane %v9274, %v10326
  %v10329 = vunpack.c.l.s4 1983009808
  %v10330 = vunpack.c.0.s8 %v10329
  %v10331 = vlaneseq
  %v10332 = vshrl.u32 %v10331, 7
  %v10333 = vsub.s32 %v10330, %v10332
  %v10334 = vrot.slane %v10320, %v10333
  %v10335 = vcombine.high %v10327, %v10327
  %v10336 = vcombine.high %v10334, %v10334
  %v10337 = vcombine.high %v9277, %v9277
  %v10339 = vunpack.c.l.s4 1983009808
  %v10340 = vunpack.c.0.s8 %v10339
  %v10341 = vlaneseq
  %v10342 = vshrl.u32 %v10341, 7
  %v10343 = vsub.s32 %v10340, %v10342
  %v10344 = vrot.slane %v9277, %v10343
  %v10346 = vunpack.c.l.s4 1983009808
  %v10347 = vunpack.c.0.s8 %v10346
  %v10348 = vlaneseq
  %v10349 = vshrl.u32 %v10348, 7
  %v10350 = vsub.s32 %v10347, %v10349
  %v10351 = vrot.slane %v10337, %v10350
  %v10352 = vcombine.high %v10344, %v10344
  %v10353 = vcombine.high %v10351, %v10351
  %v10354 = vcombine.high %v9282, %v9282
  %v10356 = vunpack.c.l.s4 1983009808
  %v10357 = vunpack.c.0.s8 %v10356
  %v10358 = vlaneseq
  %v10359 = vshrl.u32 %v10358, 7
  %v10360 = vsub.s32 %v10357, %v10359
  %v10361 = vrot.slane %v9282, %v10360
  %v10363 = vunpack.c.l.s4 1983009808
  %v10364 = vunpack.c.0.s8 %v10363
  %v10365 = vlaneseq
  %v10366 = vshrl.u32 %v10365, 7
  %v10367 = vsub.s32 %v10364, %v10366
  %v10368 = vrot.slane %v10354, %v10367
  %v10369 = vcombine.high %v10361, %v10361
  %v10370 = vcombine.high %v10368, %v10368
  %v10371 = vcombine.high %v9285, %v9285
  %v10373 = vunpack.c.l.s4 1983009808
  %v10374 = vunpack.c.0.s8 %v10373
  %v10375 = vlaneseq
  %v10376 = vshrl.u32 %v10375, 7
  %v10377 = vsub.s32 %v10374, %v10376
  %v10378 = vrot.slane %v9285, %v10377
  %v10380 = vunpack.c.l.s4 1983009808
  %v10381 = vunpack.c.0.s8 %v10380
  %v10382 = vlaneseq
  %v10383 = vshrl.u32 %v10382, 7
  %v10384 = vsub.s32 %v10381, %v10383
  %v10385 = vrot.slane %v10371, %v10384
  %v10386 = vcombine.high %v10378, %v10378
  %v10387 = vcombine.high %v10385, %v10385
  %v10388 = vcombine.high %v9290, %v9290
  %v10390 = vunpack.c.l.s4 1983009808
  %v10391 = vunpack.c.0.s8 %v10390
  %v10392 = vlaneseq
  %v10393 = vshrl.u32 %v10392, 7
  %v10394 = vsub.s32 %v10391, %v10393
  %v10395 = vrot.slane %v9290, %v10394
  %v10397 = vunpack.c.l.s4 1983009808
  %v10398 = vunpack.c.0.s8 %v10397
  %v10399 = vlaneseq
  %v10400 = vshrl.u32 %v10399, 7
  %v10401 = vsub.s32 %v10398, %v10400
  %v10402 = vrot.slane %v10388, %v10401
  %v10403 = vcombine.high %v10395, %v10395
  %v10404 = vcombine.high %v10402, %v10402
  %v10405 = vcombine.high %v9293, %v9293
  %v10407 = vunpack.c.l.s4 1983009808
  %v10408 = vunpack.c.0.s8 %v10407
  %v10409 = vlaneseq
  %v10410 = vshrl.u32 %v10409, 7
  %v10411 = vsub.s32 %v10408, %v10410
  %v10412 = vrot.slane %v9293, %v10411
  %v10414 = vunpack.c.l.s4 1983009808
  %v10415 = vunpack.c.0.s8 %v10414
  %v10416 = vlaneseq
  %v10417 = vshrl.u32 %v10416, 7
  %v10418 = vsub.s32 %v10415, %v10417
  %v10419 = vrot.slane %v10405, %v10418
  %v10420 = vcombine.high %v10412, %v10412
  %v10421 = vcombine.high %v10419, %v10419
  %v10422 = vcombine.high %v9298, %v9298
  %v10424 = vunpack.c.l.s4 1983009808
  %v10425 = vunpack.c.0.s8 %v10424
  %v10426 = vlaneseq
  %v10427 = vshrl.u32 %v10426, 7
  %v10428 = vsub.s32 %v10425, %v10427
  %v10429 = vrot.slane %v9298, %v10428
  %v10431 = vunpack.c.l.s4 1983009808
  %v10432 = vunpack.c.0.s8 %v10431
  %v10433 = vlaneseq
  %v10434 = vshrl.u32 %v10433, 7
  %v10435 = vsub.s32 %v10432, %v10434
  %v10436 = vrot.slane %v10422, %v10435
  %v10437 = vcombine.high %v10429, %v10429
  %v10438 = vcombine.high %v10436, %v10436
  %v10439 = vcombine.high %v9301, %v9301
  %v10441 = vunpack.c.l.s4 1983009808
  %v10442 = vunpack.c.0.s8 %v10441
  %v10443 = vlaneseq
  %v10444 = vshrl.u32 %v10443, 7
  %v10445 = vsub.s32 %v10442, %v10444
  %v10446 = vrot.slane %v9301, %v10445
  %v10448 = vunpack.c.l.s4 1983009808
  %v10449 = vunpack.c.0.s8 %v10448
  %v10450 = vlaneseq
  %v10451 = vshrl.u32 %v10450, 7
  %v10452 = vsub.s32 %v10449, %v10451
  %v10453 = vrot.slane %v10439, %v10452
  %v10454 = vcombine.high %v10446, %v10446
  %v10455 = vcombine.high %v10453, %v10453
  %v10712 = vrot.slane %v9375, 7
  %v10713 = vrot.slane %v10712, 2
  %v10714 = vrot.slane %v9383, 7
  %v10715 = vrot.slane %v10714, 2
  %v10716 = vrot.slane %v9382, 7
  %v10717 = vrot.slane %v10716, 2
  %v10718 = vrot.slane %v9384, 7
  %v10719 = vrot.slane %v10718, 2
  %v10720 = vrot.slane %v9392, 7
  %v10721 = vrot.slane %v10720, 2
  %v10722 = vrot.slane %v9400, 7
  %v10723 = vrot.slane %v10722, 2
  %v10724 = vrot.slane %v9399, 7
  %v10725 = vrot.slane %v10724, 2
  %v10726 = vrot.slane %v9401, 7
  %v10727 = vrot.slane %v10726, 2
  %v10728 = vrot.slane %v9409, 7
  %v10729 = vrot.slane %v10728, 2
  %v10730 = vrot.slane %v9417, 7
  %v10731 = vrot.slane %v10730, 2
  %v10732 = vrot.slane %v9416, 7
  %v10733 = vrot.slane %v10732, 2
  %v10734 = vrot.slane %v9418, 7
  %v10735 = vrot.slane %v10734, 2
  %v10736 = vrot.slane %v9426, 7
  %v10737 = vrot.slane %v10736, 2
  %v10738 = vrot.slane %v9434, 7
  %v10739 = vrot.slane %v10738, 2
  %v10740 = vrot.slane %v9433, 7
  %v10741 = vrot.slane %v10740, 2
  %v10742 = vrot.slane %v9435, 7
  %v10743 = vrot.slane %v10742, 2
  %v10744 = vrot.slane %v9443, 7
  %v10745 = vrot.slane %v10744, 2
  %v10746 = vrot.slane %v9451, 7
  %v10747 = vrot.slane %v10746, 2
  %v10748 = vrot.slane %v9450, 7
  %v10749 = vrot.slane %v10748, 2
  %v10750 = vrot.slane %v9452, 7
  %v10751 = vrot.slane %v10750, 2
  %v10752 = vrot.slane %v9460, 7
  %v10753 = vrot.slane %v10752, 2
  %v10754 = vrot.slane %v9468, 7
  %v10755 = vrot.slane %v10754, 2
  %v10756 = vrot.slane %v9467, 7
  %v10757 = vrot.slane %v10756, 2
  %v10758 = vrot.slane %v9469, 7
  %v10759 = vrot.slane %v10758, 2
  %v10760 = vrot.slane %v9477, 7
  %v10761 = vrot.slane %v10760, 2
  %v10762 = vrot.slane %v9485, 7
  %v10763 = vrot.slane %v10762, 2
  %v10764 = vrot.slane %v9484, 7
  %v10765 = vrot.slane %v10764, 2
  %v10766 = vrot.slane %v9486, 7
  %v10767 = vrot.slane %v10766, 2
  %v10768 = vrot.slane %v9494, 7
  %v10769 = vrot.slane %v10768, 2
  %v10770 = vrot.slane %v9502, 7
  %v10771 = vrot.slane %v10770, 2
  %v10772 = vrot.slane %v9501, 7
  %v10773 = vrot.slane %v10772, 2
  %v10774 = vrot.slane %v9503, 7
  %v10775 = vrot.slane %v10774, 2
  %v10776 = vrot.slane %v9511, 7
  %v10777 = vrot.slane %v10776, 2
  %v10778 = vrot.slane %v9519, 7
  %v10779 = vrot.slane %v10778, 2
  %v10780 = vrot.slane %v9518, 7
  %v10781 = vrot.slane %v10780, 2
  %v10782 = vrot.slane %v9520, 7
  %v10783 = vrot.slane %v10782, 2
  %v10784 = vrot.slane %v9528, 7
  %v10785 = vrot.slane %v10784, 2
  %v10786 = vrot.slane %v9536, 7
  %v10787 = vrot.slane %v10786, 2
  %v10788 = vrot.slane %v9535, 7
  %v10789 = vrot.slane %v10788, 2
  %v10790 = vrot.slane %v9537, 7
  %v10791 = vrot.slane %v10790, 2
  %v10792 = vrot.slane %v9545, 7
  %v10793 = vrot.slane %v10792, 2
  %v10794 = vrot.slane %v9553, 7
  %v10795 = vrot.slane %v10794, 2
  %v10796 = vrot.slane %v9552, 7
  %v10797 = vrot.slane %v10796, 2
  %v10798 = vrot.slane %v9554, 7
  %v10799 = vrot.slane %v10798, 2
  %v10800 = vrot.slane %v9562, 7
  %v10801 = vrot.slane %v10800, 2
  %v10802 = vrot.slane %v9570, 7
  %v10803 = vrot.slane %v10802, 2
  %v10804 = vrot.slane %v9569, 7
  %v10805 = vrot.slane %v10804, 2
  %v10806 = vrot.slane %v9571, 7
  %v10807 = vrot.slane %v10806, 2
  %v10808 = vrot.slane %v9579, 7
  %v10809 = vrot.slane %v10808, 2
  %v10810 = vrot.slane %v9587, 7
  %v10811 = vrot.slane %v10810, 2
  %v10812 = vrot.slane %v9586, 7
  %v10813 = vrot.slane %v10812, 2
  %v10814 = vrot.slane %v9588, 7
  %v10815 = vrot.slane %v10814, 2
  %v10816 = vrot.slane %v9596, 7
  %v10817 = vrot.slane %v10816, 2
  %v10818 = vrot.slane %v9604, 7
  %v10819 = vrot.slane %v10818, 2
  %v10820 = vrot.slane %v9603, 7
  %v10821 = vrot.slane %v10820, 2
  %v10822 = vrot.slane %v9605, 7
  %v10823 = vrot.slane %v10822, 2
  %v10824 = vrot.slane %v9613, 7
  %v10825 = vrot.slane %v10824, 2
  %v10826 = vrot.slane %v9621, 7
  %v10827 = vrot.slane %v10826, 2
  %v10828 = vrot.slane %v9620, 7
  %v10829 = vrot.slane %v10828, 2
  %v10830 = vrot.slane %v9622, 7
  %v10831 = vrot.slane %v10830, 2
  %v10832 = vrot.slane %v9630, 7
  %v10833 = vrot.slane %v10832, 2
  %v10834 = vrot.slane %v9638, 7
  %v10835 = vrot.slane %v10834, 2
  %v10836 = vrot.slane %v9637, 7
  %v10837 = vrot.slane %v10836, 2
  %v10838 = vrot.slane %v9639, 7
  %v10839 = vrot.slane %v10838, 2
  %v10840 = vrot.slane %v9647, 7
  %v10841 = vrot.slane %v10840, 2
  %v10842 = vrot.slane %v9655, 7
  %v10843 = vrot.slane %v10842, 2
  %v10844 = vrot.slane %v9654, 7
  %v10845 = vrot.slane %v10844, 2
  %v10846 = vrot.slane %v9656, 7
  %v10847 = vrot.slane %v10846, 2
  %v10848 = vrot.slane %v9664, 7
  %v10849 = vrot.slane %v10848, 2
  %v10850 = vrot.slane %v9672, 7
  %v10851 = vrot.slane %v10850, 2
  %v10852 = vrot.slane %v9671, 7
  %v10853 = vrot.slane %v10852, 2
  %v10854 = vrot.slane %v9673, 7
  %v10855 = vrot.slane %v10854, 2
  %v10856 = vrot.slane %v9681, 7
  %v10857 = vrot.slane %v10856, 2
  %v10858 = vrot.slane %v9689, 7
  %v10859 = vrot.slane %v10858, 2
  %v10860 = vrot.slane %v9688, 7
  %v10861 = vrot.slane %v10860, 2
  %v10862 = vrot.slane %v9690, 7
  %v10863 = vrot.slane %v10862, 2
  %v10864 = vrot.slane %v9698, 7
  %v10865 = vrot.slane %v10864, 2
  %v10866 = vrot.slane %v9706, 7
  %v10867 = vrot.slane %v10866, 2
  %v10868 = vrot.slane %v9705, 7
  %v10869 = vrot.slane %v10868, 2
  %v10870 = vrot.slane %v9707, 7
  %v10871 = vrot.slane %v10870, 2
  %v10872 = vrot.slane %v9715, 7
  %v10873 = vrot.slane %v10872, 2
  %v10874 = vrot.slane %v9723, 7
  %v10875 = vrot.slane %v10874, 2
  %v10876 = vrot.slane %v9722, 7
  %v10877 = vrot.slane %v10876, 2
  %v10878 = vrot.slane %v9724, 7
  %v10879 = vrot.slane %v10878, 2
  %v10880 = vrot.slane %v9732, 7
  %v10881 = vrot.slane %v10880, 2
  %v10882 = vrot.slane %v9740, 7
  %v10883 = vrot.slane %v10882, 2
  %v10884 = vrot.slane %v9739, 7
  %v10885 = vrot.slane %v10884, 2
  %v10886 = vrot.slane %v9741, 7
  %v10887 = vrot.slane %v10886, 2
  %v10888 = vrot.slane %v9749, 7
  %v10889 = vrot.slane %v10888, 2
  %v10890 = vrot.slane %v9757, 7
  %v10891 = vrot.slane %v10890, 2
  %v10892 = vrot.slane %v9756, 7
  %v10893 = vrot.slane %v10892, 2
  %v10894 = vrot.slane %v9758, 7
  %v10895 = vrot.slane %v10894, 2
  %v10896 = vrot.slane %v9766, 7
  %v10897 = vrot.slane %v10896, 2
  %v10898 = vrot.slane %v9774, 7
  %v10899 = vrot.slane %v10898, 2
  %v10900 = vrot.slane %v9773, 7
  %v10901 = vrot.slane %v10900, 2
  %v10902 = vrot.slane %v9775, 7
  %v10903 = vrot.slane %v10902, 2
  %v10904 = vrot.slane %v9783, 7
  %v10905 = vrot.slane %v10904, 2
  %v10906 = vrot.slane %v9791, 7
  %v10907 = vrot.slane %v10906, 2
  %v10908 = vrot.slane %v9790, 7
  %v10909 = vrot.slane %v10908, 2
  %v10910 = vrot.slane %v9792, 7
  %v10911 = vrot.slane %v10910, 2
  %v10912 = vrot.slane %v9800, 7
  %v10913 = vrot.slane %v10912, 2
  %v10914 = vrot.slane %v9808, 7
  %v10915 = vrot.slane %v10914, 2
  %v10916 = vrot.slane %v9807, 7
  %v10917 = vrot.slane %v10916, 2
  %v10918 = vrot.slane %v9809, 7
  %v10919 = vrot.slane %v10918, 2
  %v10920 = vrot.slane %v9817, 7
  %v10921 = vrot.slane %v10920, 2
  %v10922 = vrot.slane %v9825, 7
  %v10923 = vrot.slane %v10922, 2
  %v10924 = vrot.slane %v9824, 7
  %v10925 = vrot.slane %v10924, 2
  %v10926 = vrot.slane %v9826, 7
  %v10927 = vrot.slane %v10926, 2
  %v10928 = vrot.slane %v9834, 7
  %v10929 = vrot.slane %v10928, 2
  %v10930 = vrot.slane %v9842, 7
  %v10931 = vrot.slane %v10930, 2
  %v10932 = vrot.slane %v9841, 7
  %v10933 = vrot.slane %v10932, 2
  %v10934 = vrot.slane %v9843, 7
  %v10935 = vrot.slane %v10934, 2
  %v10936 = vrot.slane %v9851, 7
  %v10937 = vrot.slane %v10936, 2
  %v10938 = vrot.slane %v9859, 7
  %v10939 = vrot.slane %v10938, 2
  %v10940 = vrot.slane %v9858, 7
  %v10941 = vrot.slane %v10940, 2
  %v10942 = vrot.slane %v9860, 7
  %v10943 = vrot.slane %v10942, 2
  %v10944 = vrot.slane %v9868, 7
  %v10945 = vrot.slane %v10944, 2
  %v10946 = vrot.slane %v9876, 7
  %v10947 = vrot.slane %v10946, 2
  %v10948 = vrot.slane %v9875, 7
  %v10949 = vrot.slane %v10948, 2
  %v10950 = vrot.slane %v9877, 7
  %v10951 = vrot.slane %v10950, 2
  %v10952 = vrot.slane %v9885, 7
  %v10953 = vrot.slane %v10952, 2
  %v10954 = vrot.slane %v9893, 7
  %v10955 = vrot.slane %v10954, 2
  %v10956 = vrot.slane %v9892, 7
  %v10957 = vrot.slane %v10956, 2
  %v10958 = vrot.slane %v9894, 7
  %v10959 = vrot.slane %v10958, 2
  %v10960 = vrot.slane %v9902, 7
  %v10961 = vrot.slane %v10960, 2
  %v10962 = vrot.slane %v9910, 7
  %v10963 = vrot.slane %v10962, 2
  %v10964 = vrot.slane %v9909, 7
  %v10965 = vrot.slane %v10964, 2
  %v10966 = vrot.slane %v9911, 7
  %v10967 = vrot.slane %v10966, 2
  %v10968 = vrot.slane %v9919, 7
  %v10969 = vrot.slane %v10968, 2
  %v10970 = vrot.slane %v9927, 7
  %v10971 = vrot.slane %v10970, 2
  %v10972 = vrot.slane %v9926, 7
  %v10973 = vrot.slane %v10972, 2
  %v10974 = vrot.slane %v9928, 7
  %v10975 = vrot.slane %v10974, 2
  %v10976 = vrot.slane %v9936, 7
  %v10977 = vrot.slane %v10976, 2
  %v10978 = vrot.slane %v9944, 7
  %v10979 = vrot.slane %v10978, 2
  %v10980 = vrot.slane %v9943, 7
  %v10981 = vrot.slane %v10980, 2
  %v10982 = vrot.slane %v9945, 7
  %v10983 = vrot.slane %v10982, 2
  %v10984 = vrot.slane %v9953, 7
  %v10985 = vrot.slane %v10984, 2
  %v10986 = vrot.slane %v9961, 7
  %v10987 = vrot.slane %v10986, 2
  %v10988 = vrot.slane %v9960, 7
  %v10989 = vrot.slane %v10988, 2
  %v10990 = vrot.slane %v9962, 7
  %v10991 = vrot.slane %v10990, 2
  %v10992 = vrot.slane %v9970, 7
  %v10993 = vrot.slane %v10992, 2
  %v10994 = vrot.slane %v9978, 7
  %v10995 = vrot.slane %v10994, 2
  %v10996 = vrot.slane %v9977, 7
  %v10997 = vrot.slane %v10996, 2
  %v10998 = vrot.slane %v9979, 7
  %v10999 = vrot.slane %v10998, 2
  %v11000 = vrot.slane %v9987, 7
  %v11001 = vrot.slane %v11000, 2
  %v11002 = vrot.slane %v9995, 7
  %v11003 = vrot.slane %v11002, 2
  %v11004 = vrot.slane %v9994, 7
  %v11005 = vrot.slane %v11004, 2
  %v11006 = vrot.slane %v9996, 7
  %v11007 = vrot.slane %v11006, 2
  %v11008 = vrot.slane %v10004, 7
  %v11009 = vrot.slane %v11008, 2
  %v11010 = vrot.slane %v10012, 7
  %v11011 = vrot.slane %v11010, 2
  %v11012 = vrot.slane %v10011, 7
  %v11013 = vrot.slane %v11012, 2
  %v11014 = vrot.slane %v10013, 7
  %v11015 = vrot.slane %v11014, 2
  %v11016 = vrot.slane %v10021, 7
  %v11017 = vrot.slane %v11016, 2
  %v11018 = vrot.slane %v10029, 7
  %v11019 = vrot.slane %v11018, 2
  %v11020 = vrot.slane %v10028, 7
  %v11021 = vrot.slane %v11020, 2
  %v11022 = vrot.slane %v10030, 7
  %v11023 = vrot.slane %v11022, 2
  %v11024 = vrot.slane %v10038, 7
  %v11025 = vrot.slane %v11024, 2
  %v11026 = vrot.slane %v10046, 7
  %v11027 = vrot.slane %v11026, 2
  %v11028 = vrot.slane %v10045, 7
  %v11029 = vrot.slane %v11028, 2
  %v11030 = vrot.slane %v10047, 7
  %v11031 = vrot.slane %v11030, 2
  %v11032 = vrot.slane %v10055, 7
  %v11033 = vrot.slane %v11032, 2
  %v11034 = vrot.slane %v10063, 7
  %v11035 = vrot.slane %v11034, 2
  %v11036 = vrot.slane %v10062, 7
  %v11037 = vrot.slane %v11036, 2
  %v11038 = vrot.slane %v10064, 7
  %v11039 = vrot.slane %v11038, 2
  %v11040 = vrot.slane %v10072, 7
  %v11041 = vrot.slane %v11040, 2
  %v11042 = vrot.slane %v10080, 7
  %v11043 = vrot.slane %v11042, 2
  %v11044 = vrot.slane %v10079, 7
  %v11045 = vrot.slane %v11044, 2
  %v11046 = vrot.slane %v10081, 7
  %v11047 = vrot.slane %v11046, 2
  %v11048 = vrot.slane %v10089, 7
  %v11049 = vrot.slane %v11048, 2
  %v11050 = vrot.slane %v10097, 7
  %v11051 = vrot.slane %v11050, 2
  %v11052 = vrot.slane %v10096, 7
  %v11053 = vrot.slane %v11052, 2
  %v11054 = vrot.slane %v10098, 7
  %v11055 = vrot.slane %v11054, 2
  %v11056 = vrot.slane %v10106, 7
  %v11057 = vrot.slane %v11056, 2
  %v11058 = vrot.slane %v10114, 7
  %v11059 = vrot.slane %v11058, 2
  %v11060 = vrot.slane %v10113, 7
  %v11061 = vrot.slane %v11060, 2
  %v11062 = vrot.slane %v10115, 7
  %v11063 = vrot.slane %v11062, 2
  %v11064 = vrot.slane %v10123, 7
  %v11065 = vrot.slane %v11064, 2
  %v11066 = vrot.slane %v10131, 7
  %v11067 = vrot.slane %v11066, 2
  %v11068 = vrot.slane %v10130, 7
  %v11069 = vrot.slane %v11068, 2
  %v11070 = vrot.slane %v10132, 7
  %v11071 = vrot.slane %v11070, 2
  %v11072 = vrot.slane %v10140, 7
  %v11073 = vrot.slane %v11072, 2
  %v11074 = vrot.slane %v10148, 7
  %v11075 = vrot.slane %v11074, 2
  %v11076 = vrot.slane %v10147, 7
  %v11077 = vrot.slane %v11076, 2
  %v11078 = vrot.slane %v10149, 7
  %v11079 = vrot.slane %v11078, 2
  %v11080 = vrot.slane %v10157, 7
  %v11081 = vrot.slane %v11080, 2
  %v11082 = vrot.slane %v10165, 7
  %v11083 = vrot.slane %v11082, 2
  %v11084 = vrot.slane %v10164, 7
  %v11085 = vrot.slane %v11084, 2
  %v11086 = vrot.slane %v10166, 7
  %v11087 = vrot.slane %v11086, 2
  %v11088 = vrot.slane %v10174, 7
  %v11089 = vrot.slane %v11088, 2
  %v11090 = vrot.slane %v10182, 7
  %v11091 = vrot.slane %v11090, 2
  %v11092 = vrot.slane %v10181, 7
  %v11093 = vrot.slane %v11092, 2
  %v11094 = vrot.slane %v10183, 7
  %v11095 = vrot.slane %v11094, 2
  %v11096 = vrot.slane %v10191, 7
  %v11097 = vrot.slane %v11096, 2
  %v11098 = vrot.slane %v10199, 7
  %v11099 = vrot.slane %v11098, 2
  %v11100 = vrot.slane %v10198, 7
  %v11101 = vrot.slane %v11100, 2
  %v11102 = vrot.slane %v10200, 7
  %v11103 = vrot.slane %v11102, 2
  %v11104 = vrot.slane %v10208, 7
  %v11105 = vrot.slane %v11104, 2
  %v11106 = vrot.slane %v10216, 7
  %v11107 = vrot.slane %v11106, 2
  %v11108 = vrot.slane %v10215, 7
  %v11109 = vrot.slane %v11108, 2
  %v11110 = vrot.slane %v10217, 7
  %v11111 = vrot.slane %v11110, 2
  %v11112 = vrot.slane %v10225, 7
  %v11113 = vrot.slane %v11112, 2
  %v11114 = vrot.slane %v10233, 7
  %v11115 = vrot.slane %v11114, 2
  %v11116 = vrot.slane %v10232, 7
  %v11117 = vrot.slane %v11116, 2
  %v11118 = vrot.slane %v10234, 7
  %v11119 = vrot.slane %v11118, 2
  %v11120 = vrot.slane %v10242, 7
  %v11121 = vrot.slane %v11120, 2
  %v11122 = vrot.slane %v10250, 7
  %v11123 = vrot.slane %v11122, 2
  %v11124 = vrot.slane %v10249, 7
  %v11125 = vrot.slane %v11124, 2
  %v11126 = vrot.slane %v10251, 7
  %v11127 = vrot.slane %v11126, 2
  %v11128 = vrot.slane %v10259, 7
  %v11129 = vrot.slane %v11128, 2
  %v11130 = vrot.slane %v10267, 7
  %v11131 = vrot.slane %v11130, 2
  %v11132 = vrot.slane %v10266, 7
  %v11133 = vrot.slane %v11132, 2
  %v11134 = vrot.slane %v10268, 7
  %v11135 = vrot.slane %v11134, 2
  %v11136 = vrot.slane %v10276, 7
  %v11137 = vrot.slane %v11136, 2
  %v11138 = vrot.slane %v10284, 7
  %v11139 = vrot.slane %v11138, 2
  %v11140 = vrot.slane %v10283, 7
  %v11141 = vrot.slane %v11140, 2
  %v11142 = vrot.slane %v10285, 7
  %v11143 = vrot.slane %v11142, 2
  %v11144 = vrot.slane %v10293, 7
  %v11145 = vrot.slane %v11144, 2
  %v11146 = vrot.slane %v10301, 7
  %v11147 = vrot.slane %v11146, 2
  %v11148 = vrot.slane %v10300, 7
  %v11149 = vrot.slane %v11148, 2
  %v11150 = vrot.slane %v10302, 7
  %v11151 = vrot.slane %v11150, 2
  %v11152 = vrot.slane %v10310, 7
  %v11153 = vrot.slane %v11152, 2
  %v11154 = vrot.slane %v10318, 7
  %v11155 = vrot.slane %v11154, 2
  %v11156 = vrot.slane %v10317, 7
  %v11157 = vrot.slane %v11156, 2
  %v11158 = vrot.slane %v10319, 7
  %v11159 = vrot.slane %v11158, 2
  %v11160 = vrot.slane %v10327, 7
  %v11161 = vrot.slane %v11160, 2
  %v11162 = vrot.slane %v10335, 7
  %v11163 = vrot.slane %v11162, 2
  %v11164 = vrot.slane %v10334, 7
  %v11165 = vrot.slane %v11164, 2
  %v11166 = vrot.slane %v10336, 7
  %v11167 = vrot.slane %v11166, 2
  %v11168 = vrot.slane %v10344, 7
  %v11169 = vrot.slane %v11168, 2
  %v11170 = vrot.slane %v10352, 7
  %v11171 = vrot.slane %v11170, 2
  %v11172 = vrot.slane %v10351, 7
  %v11173 = vrot.slane %v11172, 2
  %v11174 = vrot.slane %v10353, 7
  %v11175 = vrot.slane %v11174, 2
  %v11176 = vrot.slane %v10361, 7
  %v11177 = vrot.slane %v11176, 2
  %v11178 = vrot.slane %v10369, 7
  %v11179 = vrot.slane %v11178, 2
  %v11180 = vrot.slane %v10368, 7
  %v11181 = vrot.slane %v11180, 2
  %v11182 = vrot.slane %v10370, 7
  %v11183 = vrot.slane %v11182, 2
  %v11184 = vrot.slane %v10378, 7
  %v11185 = vrot.slane %v11184, 2
  %v11186 = vrot.slane %v10386, 7
  %v11187 = vrot.slane %v11186, 2
  %v11188 = vrot.slane %v10385, 7
  %v11189 = vrot.slane %v11188, 2
  %v11190 = vrot.slane %v10387, 7
  %v11191 = vrot.slane %v11190, 2
  %v11192 = vrot.slane %v10395, 7
  %v11193 = vrot.slane %v11192, 2
  %v11194 = vrot.slane %v10403, 7
  %v11195 = vrot.slane %v11194, 2
  %v11196 = vrot.slane %v10402, 7
  %v11197 = vrot.slane %v11196, 2
  %v11198 = vrot.slane %v10404, 7
  %v11199 = vrot.slane %v11198, 2
  %v11200 = vrot.slane %v10412, 7
  %v11201 = vrot.slane %v11200, 2
  %v11202 = vrot.slane %v10420, 7
  %v11203 = vrot.slane %v11202, 2
  %v11204 = vrot.slane %v10419, 7
  %v11205 = vrot.slane %v11204, 2
  %v11206 = vrot.slane %v10421, 7
  %v11207 = vrot.slane %v11206, 2
  %v11208 = vrot.slane %v10429, 7
  %v11209 = vrot.slane %v11208, 2
  %v11210 = vrot.slane %v10437, 7
  %v11211 = vrot.slane %v11210, 2
  %v11212 = vrot.slane %v10436, 7
  %v11213 = vrot.slane %v11212, 2
  %v11214 = vrot.slane %v10438, 7
  %v11215 = vrot.slane %v11214, 2
  %v11216 = vrot.slane %v10446, 7
  %v11217 = vrot.slane %v11216, 2
  %v11218 = vrot.slane %v10454, 7
  %v11219 = vrot.slane %v11218, 2
  %v11220 = vrot.slane %v10453, 7
  %v11221 = vrot.slane %v11220, 2
  %v11222 = vrot.slane %v10455, 7
  %v11223 = vrot.slane %v11222, 2
  %v11480 = vadd.f32 %v9375, %v10713
  %v11481 = vadd.f32 %v9383, %v10715
  %v11482 = vadd.f32 %v9382, %v10717
  %v11483 = vadd.f32 %v9384, %v10719
  %v11484 = vadd.f32 %v9392, %v10721
  %v11485 = vadd.f32 %v9400, %v10723
  %v11486 = vadd.f32 %v9399, %v10725
  %v11487 = vadd.f32 %v9401, %v10727
  %v11488 = vadd.f32 %v9409, %v10729
  %v11489 = vadd.f32 %v9417, %v10731
  %v11490 = vadd.f32 %v9416, %v10733
  %v11491 = vadd.f32 %v9418, %v10735
  %v11492 = vadd.f32 %v9426, %v10737
  %v11493 = vadd.f32 %v9434, %v10739
  %v11494 = vadd.f32 %v9433, %v10741
  %v11495 = vadd.f32 %v9435, %v10743
  %v11496 = vadd.f32 %v9443, %v10745
  %v11497 = vadd.f32 %v9451, %v10747
  %v11498 = vadd.f32 %v9450, %v10749
  %v11499 = vadd.f32 %v9452, %v10751
  %v11500 = vadd.f32 %v9460, %v10753
  %v11501 = vadd.f32 %v9468, %v10755
  %v11502 = vadd.f32 %v9467, %v10757
  %v11503 = vadd.f32 %v9469, %v10759
  %v11504 = vadd.f32 %v9477, %v10761
  %v11505 = vadd.f32 %v9485, %v10763
  %v11506 = vadd.f32 %v9484, %v10765
  %v11507 = vadd.f32 %v9486, %v10767
  %v11508 = vadd.f32 %v9494, %v10769
  %v11509 = vadd.f32 %v9502, %v10771
  %v11510 = vadd.f32 %v9501, %v10773
  %v11511 = vadd.f32 %v9503, %v10775
  %v11512 = vadd.f32 %v9511, %v10777
  %v11513 = vadd.f32 %v9519, %v10779
  %v11514 = vadd.f32 %v9518, %v10781
  %v11515 = vadd.f32 %v9520, %v10783
  %v11516 = vadd.f32 %v9528, %v10785
  %v11517 = vadd.f32 %v9536, %v10787
  %v11518 = vadd.f32 %v9535, %v10789
  %v11519 = vadd.f32 %v9537, %v10791
  %v11520 = vadd.f32 %v9545, %v10793
  %v11521 = vadd.f32 %v9553, %v10795
  %v11522 = vadd.f32 %v9552, %v10797
  %v11523 = vadd.f32 %v9554, %v10799
  %v11524 = vadd.f32 %v9562, %v10801
  %v11525 = vadd.f32 %v9570, %v10803
  %v11526 = vadd.f32 %v9569, %v10805
  %v11527 = vadd.f32 %v9571, %v10807
  %v11528 = vadd.f32 %v9579, %v10809
  %v11529 = vadd.f32 %v9587, %v10811
  %v11530 = vadd.f32 %v9586, %v10813
  %v11531 = vadd.f32 %v9588, %v10815
  %v11532 = vadd.f32 %v9596, %v10817
  %v11533 = vadd.f32 %v9604, %v10819
  %v11534 = vadd.f32 %v9603, %v10821
  %v11535 = vadd.f32 %v9605, %v10823
  %v11536 = vadd.f32 %v9613, %v10825
  %v11537 = vadd.f32 %v9621, %v10827
  %v11538 = vadd.f32 %v9620, %v10829
  %v11539 = vadd.f32 %v9622, %v10831
  %v11540 = vadd.f32 %v9630, %v10833
  %v11541 = vadd.f32 %v9638, %v10835
  %v11542 = vadd.f32 %v9637, %v10837
  %v11543 = vadd.f32 %v9639, %v10839
  %v11544 = vadd.f32 %v9647, %v10841
  %v11545 = vadd.f32 %v9655, %v10843
  %v11546 = vadd.f32 %v9654, %v10845
  %v11547 = vadd.f32 %v9656, %v10847
  %v11548 = vadd.f32 %v9664, %v10849
  %v11549 = vadd.f32 %v9672, %v10851
  %v11550 = vadd.f32 %v9671, %v10853
  %v11551 = vadd.f32 %v9673, %v10855
  %v11552 = vadd.f32 %v9681, %v10857
  %v11553 = vadd.f32 %v9689, %v10859
  %v11554 = vadd.f32 %v9688, %v10861
  %v11555 = vadd.f32 %v9690, %v10863
  %v11556 = vadd.f32 %v9698, %v10865
  %v11557 = vadd.f32 %v9706, %v10867
  %v11558 = vadd.f32 %v9705, %v10869
  %v11559 = vadd.f32 %v9707, %v10871
  %v11560 = vadd.f32 %v9715, %v10873
  %v11561 = vadd.f32 %v9723, %v10875
  %v11562 = vadd.f32 %v9722, %v10877
  %v11563 = vadd.f32 %v9724, %v10879
  %v11564 = vadd.f32 %v9732, %v10881
  %v11565 = vadd.f32 %v9740, %v10883
  %v11566 = vadd.f32 %v9739, %v10885
  %v11567 = vadd.f32 %v9741, %v10887
  %v11568 = vadd.f32 %v9749, %v10889
  %v11569 = vadd.f32 %v9757, %v10891
  %v11570 = vadd.f32 %v9756, %v10893
  %v11571 = vadd.f32 %v9758, %v10895
  %v11572 = vadd.f32 %v9766, %v10897
  %v11573 = vadd.f32 %v9774, %v10899
  %v11574 = vadd.f32 %v9773, %v10901
  %v11575 = vadd.f32 %v9775, %v10903
  %v11576 = vadd.f32 %v9783, %v10905
  %v11577 = vadd.f32 %v9791, %v10907
  %v11578 = vadd.f32 %v9790, %v10909
  %v11579 = vadd.f32 %v9792, %v10911
  %v11580 = vadd.f32 %v9800, %v10913
  %v11581 = vadd.f32 %v9808, %v10915
  %v11582 = vadd.f32 %v9807, %v10917
  %v11583 = vadd.f32 %v9809, %v10919
  %v11584 = vadd.f32 %v9817, %v10921
  %v11585 = vadd.f32 %v9825, %v10923
  %v11586 = vadd.f32 %v9824, %v10925
  %v11587 = vadd.f32 %v9826, %v10927
  %v11588 = vadd.f32 %v9834, %v10929
  %v11589 = vadd.f32 %v9842, %v10931
  %v11590 = vadd.f32 %v9841, %v10933
  %v11591 = vadd.f32 %v9843, %v10935
  %v11592 = vadd.f32 %v9851, %v10937
  %v11593 = vadd.f32 %v9859, %v10939
  %v11594 = vadd.f32 %v9858, %v10941
  %v11595 = vadd.f32 %v9860, %v10943
  %v11596 = vadd.f32 %v9868, %v10945
  %v11597 = vadd.f32 %v9876, %v10947
  %v11598 = vadd.f32 %v9875, %v10949
  %v11599 = vadd.f32 %v9877, %v10951
  %v11600 = vadd.f32 %v9885, %v10953
  %v11601 = vadd.f32 %v9893, %v10955
  %v11602 = vadd.f32 %v9892, %v10957
  %v11603 = vadd.f32 %v9894, %v10959
  %v11604 = vadd.f32 %v9902, %v10961
  %v11605 = vadd.f32 %v9910, %v10963
  %v11606 = vadd.f32 %v9909, %v10965
  %v11607 = vadd.f32 %v9911, %v10967
  %v11608 = vadd.f32 %v9919, %v10969
  %v11609 = vadd.f32 %v9927, %v10971
  %v11610 = vadd.f32 %v9926, %v10973
  %v11611 = vadd.f32 %v9928, %v10975
  %v11612 = vadd.f32 %v9936, %v10977
  %v11613 = vadd.f32 %v9944, %v10979
  %v11614 = vadd.f32 %v9943, %v10981
  %v11615 = vadd.f32 %v9945, %v10983
  %v11616 = vadd.f32 %v9953, %v10985
  %v11617 = vadd.f32 %v9961, %v10987
  %v11618 = vadd.f32 %v9960, %v10989
  %v11619 = vadd.f32 %v9962, %v10991
  %v11620 = vadd.f32 %v9970, %v10993
  %v11621 = vadd.f32 %v9978, %v10995
  %v11622 = vadd.f32 %v9977, %v10997
  %v11623 = vadd.f32 %v9979, %v10999
  %v11624 = vadd.f32 %v9987, %v11001
  %v11625 = vadd.f32 %v9995, %v11003
  %v11626 = vadd.f32 %v9994, %v11005
  %v11627 = vadd.f32 %v9996, %v11007
  %v11628 = vadd.f32 %v10004, %v11009
  %v11629 = vadd.f32 %v10012, %v11011
  %v11630 = vadd.f32 %v10011, %v11013
  %v11631 = vadd.f32 %v10013, %v11015
  %v11632 = vadd.f32 %v10021, %v11017
  %v11633 = vadd.f32 %v10029, %v11019
  %v11634 = vadd.f32 %v10028, %v11021
  %v11635 = vadd.f32 %v10030, %v11023
  %v11636 = vadd.f32 %v10038, %v11025
  %v11637 = vadd.f32 %v10046, %v11027
  %v11638 = vadd.f32 %v10045, %v11029
  %v11639 = vadd.f32 %v10047, %v11031
  %v11640 = vadd.f32 %v10055, %v11033
  %v11641 = vadd.f32 %v10063, %v11035
  %v11642 = vadd.f32 %v10062, %v11037
  %v11643 = vadd.f32 %v10064, %v11039
  %v11644 = vadd.f32 %v10072, %v11041
  %v11645 = vadd.f32 %v10080, %v11043
  %v11646 = vadd.f32 %v10079, %v11045
  %v11647 = vadd.f32 %v10081, %v11047
  %v11648 = vadd.f32 %v10089, %v11049
  %v11649 = vadd.f32 %v10097, %v11051
  %v11650 = vadd.f32 %v10096, %v11053
  %v11651 = vadd.f32 %v10098, %v11055
  %v11652 = vadd.f32 %v10106, %v11057
  %v11653 = vadd.f32 %v10114, %v11059
  %v11654 = vadd.f32 %v10113, %v11061
  %v11655 = vadd.f32 %v10115, %v11063
  %v11656 = vadd.f32 %v10123, %v11065
  %v11657 = vadd.f32 %v10131, %v11067
  %v11658 = vadd.f32 %v10130, %v11069
  %v11659 = vadd.f32 %v10132, %v11071
  %v11660 = vadd.f32 %v10140, %v11073
  %v11661 = vadd.f32 %v10148, %v11075
  %v11662 = vadd.f32 %v10147, %v11077
  %v11663 = vadd.f32 %v10149, %v11079
  %v11664 = vadd.f32 %v10157, %v11081
  %v11665 = vadd.f32 %v10165, %v11083
  %v11666 = vadd.f32 %v10164, %v11085
  %v11667 = vadd.f32 %v10166, %v11087
  %v11668 = vadd.f32 %v10174, %v11089
  %v11669 = vadd.f32 %v10182, %v11091
  %v11670 = vadd.f32 %v10181, %v11093
  %v11671 = vadd.f32 %v10183, %v11095
  %v11672 = vadd.f32 %v10191, %v11097
  %v11673 = vadd.f32 %v10199, %v11099
  %v11674 = vadd.f32 %v10198, %v11101
  %v11675 = vadd.f32 %v10200, %v11103
  %v11676 = vadd.f32 %v10208, %v11105
  %v11677 = vadd.f32 %v10216, %v11107
  %v11678 = vadd.f32 %v10215, %v11109
  %v11679 = vadd.f32 %v10217, %v11111
  %v11680 = vadd.f32 %v10225, %v11113
  %v11681 = vadd.f32 %v10233, %v11115
  %v11682 = vadd.f32 %v10232, %v11117
  %v11683 = vadd.f32 %v10234, %v11119
  %v11684 = vadd.f32 %v10242, %v11121
  %v11685 = vadd.f32 %v10250, %v11123
  %v11686 = vadd.f32 %v10249, %v11125
  %v11687 = vadd.f32 %v10251, %v11127
  %v11688 = vadd.f32 %v10259, %v11129
  %v11689 = vadd.f32 %v10267, %v11131
  %v11690 = vadd.f32 %v10266, %v11133
  %v11691 = vadd.f32 %v10268, %v11135
  %v11692 = vadd.f32 %v10276, %v11137
  %v11693 = vadd.f32 %v10284, %v11139
  %v11694 = vadd.f32 %v10283, %v11141
  %v11695 = vadd.f32 %v10285, %v11143
  %v11696 = vadd.f32 %v10293, %v11145
  %v11697 = vadd.f32 %v10301, %v11147
  %v11698 = vadd.f32 %v10300, %v11149
  %v11699 = vadd.f32 %v10302, %v11151
  %v11700 = vadd.f32 %v10310, %v11153
  %v11701 = vadd.f32 %v10318, %v11155
  %v11702 = vadd.f32 %v10317, %v11157
  %v11703 = vadd.f32 %v10319, %v11159
  %v11704 = vadd.f32 %v10327, %v11161
  %v11705 = vadd.f32 %v10335, %v11163
  %v11706 = vadd.f32 %v10334, %v11165
  %v11707 = vadd.f32 %v10336, %v11167
  %v11708 = vadd.f32 %v10344, %v11169
  %v11709 = vadd.f32 %v10352, %v11171
  %v11710 = vadd.f32 %v10351, %v11173
  %v11711 = vadd.f32 %v10353, %v11175
  %v11712 = vadd.f32 %v10361, %v11177
  %v11713 = vadd.f32 %v10369, %v11179
  %v11714 = vadd.f32 %v10368, %v11181
  %v11715 = vadd.f32 %v10370, %v11183
  %v11716 = vadd.f32 %v10378, %v11185
  %v11717 = vadd.f32 %v10386, %v11187
  %v11718 = vadd.f32 %v10385, %v11189
  %v11719 = vadd.f32 %v10387, %v11191
  %v11720 = vadd.f32 %v10395, %v11193
  %v11721 = vadd.f32 %v10403, %v11195
  %v11722 = vadd.f32 %v10402, %v11197
  %v11723 = vadd.f32 %v10404, %v11199
  %v11724 = vadd.f32 %v10412, %v11201
  %v11725 = vadd.f32 %v10420, %v11203
  %v11726 = vadd.f32 %v10419, %v11205
  %v11727 = vadd.f32 %v10421, %v11207
  %v11728 = vadd.f32 %v10429, %v11209
  %v11729 = vadd.f32 %v10437, %v11211
  %v11730 = vadd.f32 %v10436, %v11213
  %v11731 = vadd.f32 %v10438, %v11215
  %v11732 = vadd.f32 %v10446, %v11217
  %v11733 = vadd.f32 %v10454, %v11219
  %v11734 = vadd.f32 %v10453, %v11221
  %v11735 = vadd.f32 %v10455, %v11223
  %v11736 = vadd.f32 %v11480, %v11488
  %v11737 = vadd.f32 %v11481, %v11489
  %v11738 = vadd.f32 %v11482, %v11490
  %v11739 = vadd.f32 %v11483, %v11491
  %v11740 = vadd.f32 %v11484, %v11492
  %v11741 = vadd.f32 %v11485, %v11493
  %v11742 = vadd.f32 %v11486, %v11494
  %v11743 = vadd.f32 %v11487, %v11495
  %v11744 = vadd.f32 %v11496, %v11504
  %v11745 = vadd.f32 %v11497, %v11505
  %v11746 = vadd.f32 %v11498, %v11506
  %v11747 = vadd.f32 %v11499, %v11507
  %v11748 = vadd.f32 %v11500, %v11508
  %v11749 = vadd.f32 %v11501, %v11509
  %v11750 = vadd.f32 %v11502, %v11510
  %v11751 = vadd.f32 %v11503, %v11511
  %v11752 = vadd.f32 %v11512, %v11520
  %v11753 = vadd.f32 %v11513, %v11521
  %v11754 = vadd.f32 %v11514, %v11522
  %v11755 = vadd.f32 %v11515, %v11523
  %v11756 = vadd.f32 %v11516, %v11524
  %v11757 = vadd.f32 %v11517, %v11525
  %v11758 = vadd.f32 %v11518, %v11526
  %v11759 = vadd.f32 %v11519, %v11527
  %v11760 = vadd.f32 %v11528, %v11536
  %v11761 = vadd.f32 %v11529, %v11537
  %v11762 = vadd.f32 %v11530, %v11538
  %v11763 = vadd.f32 %v11531, %v11539
  %v11764 = vadd.f32 %v11532, %v11540
  %v11765 = vadd.f32 %v11533, %v11541
  %v11766 = vadd.f32 %v11534, %v11542
  %v11767 = vadd.f32 %v11535, %v11543
  %v11768 = vadd.f32 %v11544, %v11552
  %v11769 = vadd.f32 %v11545, %v11553
  %v11770 = vadd.f32 %v11546, %v11554
  %v11771 = vadd.f32 %v11547, %v11555
  %v11772 = vadd.f32 %v11548, %v11556
  %v11773 = vadd.f32 %v11549, %v11557
  %v11774 = vadd.f32 %v11550, %v11558
  %v11775 = vadd.f32 %v11551, %v11559
  %v11776 = vadd.f32 %v11560, %v11568
  %v11777 = vadd.f32 %v11561, %v11569
  %v11778 = vadd.f32 %v11562, %v11570
  %v11779 = vadd.f32 %v11563, %v11571
  %v11780 = vadd.f32 %v11564, %v11572
  %v11781 = vadd.f32 %v11565, %v11573
  %v11782 = vadd.f32 %v11566, %v11574
  %v11783 = vadd.f32 %v11567, %v11575
  %v11784 = vadd.f32 %v11576, %v11584
  %v11785 = vadd.f32 %v11577, %v11585
  %v11786 = vadd.f32 %v11578, %v11586
  %v11787 = vadd.f32 %v11579, %v11587
  %v11788 = vadd.f32 %v11580, %v11588
  %v11789 = vadd.f32 %v11581, %v11589
  %v11790 = vadd.f32 %v11582, %v11590
  %v11791 = vadd.f32 %v11583, %v11591
  %v11792 = vadd.f32 %v11592, %v11600
  %v11793 = vadd.f32 %v11593, %v11601
  %v11794 = vadd.f32 %v11594, %v11602
  %v11795 = vadd.f32 %v11595, %v11603
  %v11796 = vadd.f32 %v11596, %v11604
  %v11797 = vadd.f32 %v11597, %v11605
  %v11798 = vadd.f32 %v11598, %v11606
  %v11799 = vadd.f32 %v11599, %v11607
  %v11800 = vadd.f32 %v11608, %v11616
  %v11801 = vadd.f32 %v11609, %v11617
  %v11802 = vadd.f32 %v11610, %v11618
  %v11803 = vadd.f32 %v11611, %v11619
  %v11804 = vadd.f32 %v11612, %v11620
  %v11805 = vadd.f32 %v11613, %v11621
  %v11806 = vadd.f32 %v11614, %v11622
  %v11807 = vadd.f32 %v11615, %v11623
  %v11808 = vadd.f32 %v11624, %v11632
  %v11809 = vadd.f32 %v11625, %v11633
  %v11810 = vadd.f32 %v11626, %v11634
  %v11811 = vadd.f32 %v11627, %v11635
  %v11812 = vadd.f32 %v11628, %v11636
  %v11813 = vadd.f32 %v11629, %v11637
  %v11814 = vadd.f32 %v11630, %v11638
  %v11815 = vadd.f32 %v11631, %v11639
  %v11816 = vadd.f32 %v11640, %v11648
  %v11817 = vadd.f32 %v11641, %v11649
  %v11818 = vadd.f32 %v11642, %v11650
  %v11819 = vadd.f32 %v11643, %v11651
  %v11820 = vadd.f32 %v11644, %v11652
  %v11821 = vadd.f32 %v11645, %v11653
  %v11822 = vadd.f32 %v11646, %v11654
  %v11823 = vadd.f32 %v11647, %v11655
  %v11824 = vadd.f32 %v11656, %v11664
  %v11825 = vadd.f32 %v11657, %v11665
  %v11826 = vadd.f32 %v11658, %v11666
  %v11827 = vadd.f32 %v11659, %v11667
  %v11828 = vadd.f32 %v11660, %v11668
  %v11829 = vadd.f32 %v11661, %v11669
  %v11830 = vadd.f32 %v11662, %v11670
  %v11831 = vadd.f32 %v11663, %v11671
  %v11832 = vadd.f32 %v11672, %v11680
  %v11833 = vadd.f32 %v11673, %v11681
  %v11834 = vadd.f32 %v11674, %v11682
  %v11835 = vadd.f32 %v11675, %v11683
  %v11836 = vadd.f32 %v11676, %v11684
  %v11837 = vadd.f32 %v11677, %v11685
  %v11838 = vadd.f32 %v11678, %v11686
  %v11839 = vadd.f32 %v11679, %v11687
  %v11840 = vadd.f32 %v11688, %v11696
  %v11841 = vadd.f32 %v11689, %v11697
  %v11842 = vadd.f32 %v11690, %v11698
  %v11843 = vadd.f32 %v11691, %v11699
  %v11844 = vadd.f32 %v11692, %v11700
  %v11845 = vadd.f32 %v11693, %v11701
  %v11846 = vadd.f32 %v11694, %v11702
  %v11847 = vadd.f32 %v11695, %v11703
  %v11848 = vadd.f32 %v11704, %v11712
  %v11849 = vadd.f32 %v11705, %v11713
  %v11850 = vadd.f32 %v11706, %v11714
  %v11851 = vadd.f32 %v11707, %v11715
  %v11852 = vadd.f32 %v11708, %v11716
  %v11853 = vadd.f32 %v11709, %v11717
  %v11854 = vadd.f32 %v11710, %v11718
  %v11855 = vadd.f32 %v11711, %v11719
  %v11856 = vadd.f32 %v11720, %v11728
  %v11857 = vadd.f32 %v11721, %v11729
  %v11858 = vadd.f32 %v11722, %v11730
  %v11859 = vadd.f32 %v11723, %v11731
  %v11860 = vadd.f32 %v11724, %v11732
  %v11861 = vadd.f32 %v11725, %v11733
  %v11862 = vadd.f32 %v11726, %v11734
  %v11863 = vadd.f32 %v11727, %v11735
  %v11864 = vmul.f32 %v11736, 0.25
  %v11865 = vmul.f32 %v11737, 0.25
  %v11866 = vmul.f32 %v11738, 0.25
  %v11867 = vmul.f32 %v11739, 0.25
  %v11868 = vmul.f32 %v11740, 0.25
  %v11869 = vmul.f32 %v11741, 0.25
  %v11870 = vmul.f32 %v11742, 0.25
  %v11871 = vmul.f32 %v11743, 0.25
  %v11872 = vmul.f32 %v11744, 0.25
  %v11873 = vmul.f32 %v11745, 0.25
  %v11874 = vmul.f32 %v11746, 0.25
  %v11875 = vmul.f32 %v11747, 0.25
  %v11876 = vmul.f32 %v11748, 0.25
  %v11877 = vmul.f32 %v11749, 0.25
  %v11878 = vmul.f32 %v11750, 0.25
  %v11879 = vmul.f32 %v11751, 0.25
  %v11880 = vmul.f32 %v11752, 0.25
  %v11881 = vmul.f32 %v11753, 0.25
  %v11882 = vmul.f32 %v11754, 0.25
  %v11883 = vmul.f32 %v11755, 0.25
  %v11884 = vmul.f32 %v11756, 0.25
  %v11885 = vmul.f32 %v11757, 0.25
  %v11886 = vmul.f32 %v11758, 0.25
  %v11887 = vmul.f32 %v11759, 0.25
  %v11888 = vmul.f32 %v11760, 0.25
  %v11889 = vmul.f32 %v11761, 0.25
  %v11890 = vmul.f32 %v11762, 0.25
  %v11891 = vmul.f32 %v11763, 0.25
  %v11892 = vmul.f32 %v11764, 0.25
  %v11893 = vmul.f32 %v11765, 0.25
  %v11894 = vmul.f32 %v11766, 0.25
  %v11895 = vmul.f32 %v11767, 0.25
  %v11896 = vmul.f32 %v11768, 0.25
  %v11897 = vmul.f32 %v11769, 0.25
  %v11898 = vmul.f32 %v11770, 0.25
  %v11899 = vmul.f32 %v11771, 0.25
  %v11900 = vmul.f32 %v11772, 0.25
  %v11901 = vmul.f32 %v11773, 0.25
  %v11902 = vmul.f32 %v11774, 0.25
  %v11903 = vmul.f32 %v11775, 0.25
  %v11904 = vmul.f32 %v11776, 0.25
  %v11905 = vmul.f32 %v11777, 0.25
  %v11906 = vmul.f32 %v11778, 0.25
  %v11907 = vmul.f32 %v11779, 0.25
  %v11908 = vmul.f32 %v11780, 0.25
  %v11909 = vmul.f32 %v11781, 0.25
  %v11910 = vmul.f32 %v11782, 0.25
  %v11911 = vmul.f32 %v11783, 0.25
  %v11912 = vmul.f32 %v11784, 0.25
  %v11913 = vmul.f32 %v11785, 0.25
  %v11914 = vmul.f32 %v11786, 0.25
  %v11915 = vmul.f32 %v11787, 0.25
  %v11916 = vmul.f32 %v11788, 0.25
  %v11917 = vmul.f32 %v11789, 0.25
  %v11918 = vmul.f32 %v11790, 0.25
  %v11919 = vmul.f32 %v11791, 0.25
  %v11920 = vmul.f32 %v11792, 0.25
  %v11921 = vmul.f32 %v11793, 0.25
  %v11922 = vmul.f32 %v11794, 0.25
  %v11923 = vmul.f32 %v11795, 0.25
  %v11924 = vmul.f32 %v11796, 0.25
  %v11925 = vmul.f32 %v11797, 0.25
  %v11926 = vmul.f32 %v11798, 0.25
  %v11927 = vmul.f32 %v11799, 0.25
  %v11928 = vmul.f32 %v11800, 0.25
  %v11929 = vmul.f32 %v11801, 0.25
  %v11930 = vmul.f32 %v11802, 0.25
  %v11931 = vmul.f32 %v11803, 0.25
  %v11932 = vmul.f32 %v11804, 0.25
  %v11933 = vmul.f32 %v11805, 0.25
  %v11934 = vmul.f32 %v11806, 0.25
  %v11935 = vmul.f32 %v11807, 0.25
  %v11936 = vmul.f32 %v11808, 0.25
  %v11937 = vmul.f32 %v11809, 0.25
  %v11938 = vmul.f32 %v11810, 0.25
  %v11939 = vmul.f32 %v11811, 0.25
  %v11940 = vmul.f32 %v11812, 0.25
  %v11941 = vmul.f32 %v11813, 0.25
  %v11942 = vmul.f32 %v11814, 0.25
  %v11943 = vmul.f32 %v11815, 0.25
  %v11944 = vmul.f32 %v11816, 0.25
  %v11945 = vmul.f32 %v11817, 0.25
  %v11946 = vmul.f32 %v11818, 0.25
  %v11947 = vmul.f32 %v11819, 0.25
  %v11948 = vmul.f32 %v11820, 0.25
  %v11949 = vmul.f32 %v11821, 0.25
  %v11950 = vmul.f32 %v11822, 0.25
  %v11951 = vmul.f32 %v11823, 0.25
  %v11952 = vmul.f32 %v11824, 0.25
  %v11953 = vmul.f32 %v11825, 0.25
  %v11954 = vmul.f32 %v11826, 0.25
  %v11955 = vmul.f32 %v11827, 0.25
  %v11956 = vmul.f32 %v11828, 0.25
  %v11957 = vmul.f32 %v11829, 0.25
  %v11958 = vmul.f32 %v11830, 0.25
  %v11959 = vmul.f32 %v11831, 0.25
  %v11960 = vmul.f32 %v11832, 0.25
  %v11961 = vmul.f32 %v11833, 0.25
  %v11962 = vmul.f32 %v11834, 0.25
  %v11963 = vmul.f32 %v11835, 0.25
  %v11964 = vmul.f32 %v11836, 0.25
  %v11965 = vmul.f32 %v11837, 0.25
  %v11966 = vmul.f32 %v11838, 0.25
  %v11967 = vmul.f32 %v11839, 0.25
  %v11968 = vmul.f32 %v11840, 0.25
  %v11969 = vmul.f32 %v11841, 0.25
  %v11970 = vmul.f32 %v11842, 0.25
  %v11971 = vmul.f32 %v11843, 0.25
  %v11972 = vmul.f32 %v11844, 0.25
  %v11973 = vmul.f32 %v11845, 0.25
  %v11974 = vmul.f32 %v11846, 0.25
  %v11975 = vmul.f32 %v11847, 0.25
  %v11976 = vmul.f32 %v11848, 0.25
  %v11977 = vmul.f32 %v11849, 0.25
  %v11978 = vmul.f32 %v11850, 0.25
  %v11979 = vmul.f32 %v11851, 0.25
  %v11980 = vmul.f32 %v11852, 0.25
  %v11981 = vmul.f32 %v11853, 0.25
  %v11982 = vmul.f32 %v11854, 0.25
  %v11983 = vmul.f32 %v11855, 0.25
  %v11984 = vmul.f32 %v11856, 0.25
  %v11985 = vmul.f32 %v11857, 0.25
  %v11986 = vmul.f32 %v11858, 0.25
  %v11987 = vmul.f32 %v11859, 0.25
  %v11988 = vmul.f32 %v11860, 0.25
  %v11989 = vmul.f32 %v11861, 0.25
  %v11990 = vmul.f32 %v11862, 0.25
  %v11991 = vmul.f32 %v11863, 0.25
  %v12120 = vlaneseq
  %v12121 = vshrl.u32 %v12120, 7
  %v12122 = vsub.s32 0, %v12121
  %v12123 = vrot.slane %v11864, %v12122
  %v12124 = vlaneseq
  %v12125 = vshrl.u32 %v12124, 7
  %v12126 = vsub.s32 0, %v12125
  %v12127 = vrot.slane %v11865, %v12126
  %v12128 = vlaneseq
  %v12129 = vshrl.u32 %v12128, 7
  %v12130 = vsub.s32 0, %v12129
  %v12131 = vrot.slane %v11866, %v12130
  %v12132 = vlaneseq
  %v12133 = vshrl.u32 %v12132, 7
  %v12134 = vsub.s32 0, %v12133
  %v12135 = vrot.slane %v11867, %v12134
  %v12136 = vlaneseq
  %v12137 = vshrl.u32 %v12136, 7
  %v12138 = vsub.s32 0, %v12137
  %v12139 = vrot.slane %v11868, %v12138
  %v12140 = vlaneseq
  %v12141 = vshrl.u32 %v12140, 7
  %v12142 = vsub.s32 0, %v12141
  %v12143 = vrot.slane %v11869, %v12142
  %v12144 = vlaneseq
  %v12145 = vshrl.u32 %v12144, 7
  %v12146 = vsub.s32 0, %v12145
  %v12147 = vrot.slane %v11870, %v12146
  %v12148 = vlaneseq
  %v12149 = vshrl.u32 %v12148, 7
  %v12150 = vsub.s32 0, %v12149
  %v12151 = vrot.slane %v11871, %v12150
  %v12152 = vlaneseq
  %v12153 = vshrl.u32 %v12152, 7
  %v12154 = vsub.s32 0, %v12153
  %v12155 = vrot.slane %v11872, %v12154
  %v12156 = vlaneseq
  %v12157 = vshrl.u32 %v12156, 7
  %v12158 = vsub.s32 0, %v12157
  %v12159 = vrot.slane %v11873, %v12158
  %v12160 = vlaneseq
  %v12161 = vshrl.u32 %v12160, 7
  %v12162 = vsub.s32 0, %v12161
  %v12163 = vrot.slane %v11874, %v12162
  %v12164 = vlaneseq
  %v12165 = vshrl.u32 %v12164, 7
  %v12166 = vsub.s32 0, %v12165
  %v12167 = vrot.slane %v11875, %v12166
  %v12168 = vlaneseq
  %v12169 = vshrl.u32 %v12168, 7
  %v12170 = vsub.s32 0, %v12169
  %v12171 = vrot.slane %v11876, %v12170
  %v12172 = vlaneseq
  %v12173 = vshrl.u32 %v12172, 7
  %v12174 = vsub.s32 0, %v12173
  %v12175 = vrot.slane %v11877, %v12174
  %v12176 = vlaneseq
  %v12177 = vshrl.u32 %v12176, 7
  %v12178 = vsub.s32 0, %v12177
  %v12179 = vrot.slane %v11878, %v12178
  %v12180 = vlaneseq
  %v12181 = vshrl.u32 %v12180, 7
  %v12182 = vsub.s32 0, %v12181
  %v12183 = vrot.slane %v11879, %v12182
  %v12184 = vlaneseq
  %v12185 = vshrl.u32 %v12184, 7
  %v12186 = vsub.s32 0, %v12185
  %v12187 = vrot.slane %v11880, %v12186
  %v12188 = vlaneseq
  %v12189 = vshrl.u32 %v12188, 7
  %v12190 = vsub.s32 0, %v12189
  %v12191 = vrot.slane %v11881, %v12190
  %v12192 = vlaneseq
  %v12193 = vshrl.u32 %v12192, 7
  %v12194 = vsub.s32 0, %v12193
  %v12195 = vrot.slane %v11882, %v12194
  %v12196 = vlaneseq
  %v12197 = vshrl.u32 %v12196, 7
  %v12198 = vsub.s32 0, %v12197
  %v12199 = vrot.slane %v11883, %v12198
  %v12200 = vlaneseq
  %v12201 = vshrl.u32 %v12200, 7
  %v12202 = vsub.s32 0, %v12201
  %v12203 = vrot.slane %v11884, %v12202
  %v12204 = vlaneseq
  %v12205 = vshrl.u32 %v12204, 7
  %v12206 = vsub.s32 0, %v12205
  %v12207 = vrot.slane %v11885, %v12206
  %v12208 = vlaneseq
  %v12209 = vshrl.u32 %v12208, 7
  %v12210 = vsub.s32 0, %v12209
  %v12211 = vrot.slane %v11886, %v12210
  %v12212 = vlaneseq
  %v12213 = vshrl.u32 %v12212, 7
  %v12214 = vsub.s32 0, %v12213
  %v12215 = vrot.slane %v11887, %v12214
  %v12216 = vlaneseq
  %v12217 = vshrl.u32 %v12216, 7
  %v12218 = vsub.s32 0, %v12217
  %v12219 = vrot.slane %v11888, %v12218
  %v12220 = vlaneseq
  %v12221 = vshrl.u32 %v12220, 7
  %v12222 = vsub.s32 0, %v12221
  %v12223 = vrot.slane %v11889, %v12222
  %v12224 = vlaneseq
  %v12225 = vshrl.u32 %v12224, 7
  %v12226 = vsub.s32 0, %v12225
  %v12227 = vrot.slane %v11890, %v12226
  %v12228 = vlaneseq
  %v12229 = vshrl.u32 %v12228, 7
  %v12230 = vsub.s32 0, %v12229
  %v12231 = vrot.slane %v11891, %v12230
  %v12232 = vlaneseq
  %v12233 = vshrl.u32 %v12232, 7
  %v12234 = vsub.s32 0, %v12233
  %v12235 = vrot.slane %v11892, %v12234
  %v12236 = vlaneseq
  %v12237 = vshrl.u32 %v12236, 7
  %v12238 = vsub.s32 0, %v12237
  %v12239 = vrot.slane %v11893, %v12238
  %v12240 = vlaneseq
  %v12241 = vshrl.u32 %v12240, 7
  %v12242 = vsub.s32 0, %v12241
  %v12243 = vrot.slane %v11894, %v12242
  %v12244 = vlaneseq
  %v12245 = vshrl.u32 %v12244, 7
  %v12246 = vsub.s32 0, %v12245
  %v12247 = vrot.slane %v11895, %v12246
  %v12248 = vlaneseq
  %v12249 = vshrl.u32 %v12248, 7
  %v12250 = vsub.s32 0, %v12249
  %v12251 = vrot.slane %v11896, %v12250
  %v12252 = vlaneseq
  %v12253 = vshrl.u32 %v12252, 7
  %v12254 = vsub.s32 0, %v12253
  %v12255 = vrot.slane %v11897, %v12254
  %v12256 = vlaneseq
  %v12257 = vshrl.u32 %v12256, 7
  %v12258 = vsub.s32 0, %v12257
  %v12259 = vrot.slane %v11898, %v12258
  %v12260 = vlaneseq
  %v12261 = vshrl.u32 %v12260, 7
  %v12262 = vsub.s32 0, %v12261
  %v12263 = vrot.slane %v11899, %v12262
  %v12264 = vlaneseq
  %v12265 = vshrl.u32 %v12264, 7
  %v12266 = vsub.s32 0, %v12265
  %v12267 = vrot.slane %v11900, %v12266
  %v12268 = vlaneseq
  %v12269 = vshrl.u32 %v12268, 7
  %v12270 = vsub.s32 0, %v12269
  %v12271 = vrot.slane %v11901, %v12270
  %v12272 = vlaneseq
  %v12273 = vshrl.u32 %v12272, 7
  %v12274 = vsub.s32 0, %v12273
  %v12275 = vrot.slane %v11902, %v12274
  %v12276 = vlaneseq
  %v12277 = vshrl.u32 %v12276, 7
  %v12278 = vsub.s32 0, %v12277
  %v12279 = vrot.slane %v11903, %v12278
  %v12280 = vlaneseq
  %v12281 = vshrl.u32 %v12280, 7
  %v12282 = vsub.s32 0, %v12281
  %v12283 = vrot.slane %v11904, %v12282
  %v12284 = vlaneseq
  %v12285 = vshrl.u32 %v12284, 7
  %v12286 = vsub.s32 0, %v12285
  %v12287 = vrot.slane %v11905, %v12286
  %v12288 = vlaneseq
  %v12289 = vshrl.u32 %v12288, 7
  %v12290 = vsub.s32 0, %v12289
  %v12291 = vrot.slane %v11906, %v12290
  %v12292 = vlaneseq
  %v12293 = vshrl.u32 %v12292, 7
  %v12294 = vsub.s32 0, %v12293
  %v12295 = vrot.slane %v11907, %v12294
  %v12296 = vlaneseq
  %v12297 = vshrl.u32 %v12296, 7
  %v12298 = vsub.s32 0, %v12297
  %v12299 = vrot.slane %v11908, %v12298
  %v12300 = vlaneseq
  %v12301 = vshrl.u32 %v12300, 7
  %v12302 = vsub.s32 0, %v12301
  %v12303 = vrot.slane %v11909, %v12302
  %v12304 = vlaneseq
  %v12305 = vshrl.u32 %v12304, 7
  %v12306 = vsub.s32 0, %v12305
  %v12307 = vrot.slane %v11910, %v12306
  %v12308 = vlaneseq
  %v12309 = vshrl.u32 %v12308, 7
  %v12310 = vsub.s32 0, %v12309
  %v12311 = vrot.slane %v11911, %v12310
  %v12312 = vlaneseq
  %v12313 = vshrl.u32 %v12312, 7
  %v12314 = vsub.s32 0, %v12313
  %v12315 = vrot.slane %v11912, %v12314
  %v12316 = vlaneseq
  %v12317 = vshrl.u32 %v12316, 7
  %v12318 = vsub.s32 0, %v12317
  %v12319 = vrot.slane %v11913, %v12318
  %v12320 = vlaneseq
  %v12321 = vshrl.u32 %v12320, 7
  %v12322 = vsub.s32 0, %v12321
  %v12323 = vrot.slane %v11914, %v12322
  %v12324 = vlaneseq
  %v12325 = vshrl.u32 %v12324, 7
  %v12326 = vsub.s32 0, %v12325
  %v12327 = vrot.slane %v11915, %v12326
  %v12328 = vlaneseq
  %v12329 = vshrl.u32 %v12328, 7
  %v12330 = vsub.s32 0, %v12329
  %v12331 = vrot.slane %v11916, %v12330
  %v12332 = vlaneseq
  %v12333 = vshrl.u32 %v12332, 7
  %v12334 = vsub.s32 0, %v12333
  %v12335 = vrot.slane %v11917, %v12334
  %v12336 = vlaneseq
  %v12337 = vshrl.u32 %v12336, 7
  %v12338 = vsub.s32 0, %v12337
  %v12339 = vrot.slane %v11918, %v12338
  %v12340 = vlaneseq
  %v12341 = vshrl.u32 %v12340, 7
  %v12342 = vsub.s32 0, %v12341
  %v12343 = vrot.slane %v11919, %v12342
  %v12344 = vlaneseq
  %v12345 = vshrl.u32 %v12344, 7
  %v12346 = vsub.s32 0, %v12345
  %v12347 = vrot.slane %v11920, %v12346
  %v12348 = vlaneseq
  %v12349 = vshrl.u32 %v12348, 7
  %v12350 = vsub.s32 0, %v12349
  %v12351 = vrot.slane %v11921, %v12350
  %v12352 = vlaneseq
  %v12353 = vshrl.u32 %v12352, 7
  %v12354 = vsub.s32 0, %v12353
  %v12355 = vrot.slane %v11922, %v12354
  %v12356 = vlaneseq
  %v12357 = vshrl.u32 %v12356, 7
  %v12358 = vsub.s32 0, %v12357
  %v12359 = vrot.slane %v11923, %v12358
  %v12360 = vlaneseq
  %v12361 = vshrl.u32 %v12360, 7
  %v12362 = vsub.s32 0, %v12361
  %v12363 = vrot.slane %v11924, %v12362
  %v12364 = vlaneseq
  %v12365 = vshrl.u32 %v12364, 7
  %v12366 = vsub.s32 0, %v12365
  %v12367 = vrot.slane %v11925, %v12366
  %v12368 = vlaneseq
  %v12369 = vshrl.u32 %v12368, 7
  %v12370 = vsub.s32 0, %v12369
  %v12371 = vrot.slane %v11926, %v12370
  %v12372 = vlaneseq
  %v12373 = vshrl.u32 %v12372, 7
  %v12374 = vsub.s32 0, %v12373
  %v12375 = vrot.slane %v11927, %v12374
  %v12376 = vlaneseq
  %v12377 = vshrl.u32 %v12376, 7
  %v12378 = vsub.s32 0, %v12377
  %v12379 = vrot.slane %v11928, %v12378
  %v12380 = vlaneseq
  %v12381 = vshrl.u32 %v12380, 7
  %v12382 = vsub.s32 0, %v12381
  %v12383 = vrot.slane %v11929, %v12382
  %v12384 = vlaneseq
  %v12385 = vshrl.u32 %v12384, 7
  %v12386 = vsub.s32 0, %v12385
  %v12387 = vrot.slane %v11930, %v12386
  %v12388 = vlaneseq
  %v12389 = vshrl.u32 %v12388, 7
  %v12390 = vsub.s32 0, %v12389
  %v12391 = vrot.slane %v11931, %v12390
  %v12392 = vlaneseq
  %v12393 = vshrl.u32 %v12392, 7
  %v12394 = vsub.s32 0, %v12393
  %v12395 = vrot.slane %v11932, %v12394
  %v12396 = vlaneseq
  %v12397 = vshrl.u32 %v12396, 7
  %v12398 = vsub.s32 0, %v12397
  %v12399 = vrot.slane %v11933, %v12398
  %v12400 = vlaneseq
  %v12401 = vshrl.u32 %v12400, 7
  %v12402 = vsub.s32 0, %v12401
  %v12403 = vrot.slane %v11934, %v12402
  %v12404 = vlaneseq
  %v12405 = vshrl.u32 %v12404, 7
  %v12406 = vsub.s32 0, %v12405
  %v12407 = vrot.slane %v11935, %v12406
  %v12408 = vlaneseq
  %v12409 = vshrl.u32 %v12408, 7
  %v12410 = vsub.s32 0, %v12409
  %v12411 = vrot.slane %v11936, %v12410
  %v12412 = vlaneseq
  %v12413 = vshrl.u32 %v12412, 7
  %v12414 = vsub.s32 0, %v12413
  %v12415 = vrot.slane %v11937, %v12414
  %v12416 = vlaneseq
  %v12417 = vshrl.u32 %v12416, 7
  %v12418 = vsub.s32 0, %v12417
  %v12419 = vrot.slane %v11938, %v12418
  %v12420 = vlaneseq
  %v12421 = vshrl.u32 %v12420, 7
  %v12422 = vsub.s32 0, %v12421
  %v12423 = vrot.slane %v11939, %v12422
  %v12424 = vlaneseq
  %v12425 = vshrl.u32 %v12424, 7
  %v12426 = vsub.s32 0, %v12425
  %v12427 = vrot.slane %v11940, %v12426
  %v12428 = vlaneseq
  %v12429 = vshrl.u32 %v12428, 7
  %v12430 = vsub.s32 0, %v12429
  %v12431 = vrot.slane %v11941, %v12430
  %v12432 = vlaneseq
  %v12433 = vshrl.u32 %v12432, 7
  %v12434 = vsub.s32 0, %v12433
  %v12435 = vrot.slane %v11942, %v12434
  %v12436 = vlaneseq
  %v12437 = vshrl.u32 %v12436, 7
  %v12438 = vsub.s32 0, %v12437
  %v12439 = vrot.slane %v11943, %v12438
  %v12440 = vlaneseq
  %v12441 = vshrl.u32 %v12440, 7
  %v12442 = vsub.s32 0, %v12441
  %v12443 = vrot.slane %v11944, %v12442
  %v12444 = vlaneseq
  %v12445 = vshrl.u32 %v12444, 7
  %v12446 = vsub.s32 0, %v12445
  %v12447 = vrot.slane %v11945, %v12446
  %v12448 = vlaneseq
  %v12449 = vshrl.u32 %v12448, 7
  %v12450 = vsub.s32 0, %v12449
  %v12451 = vrot.slane %v11946, %v12450
  %v12452 = vlaneseq
  %v12453 = vshrl.u32 %v12452, 7
  %v12454 = vsub.s32 0, %v12453
  %v12455 = vrot.slane %v11947, %v12454
  %v12456 = vlaneseq
  %v12457 = vshrl.u32 %v12456, 7
  %v12458 = vsub.s32 0, %v12457
  %v12459 = vrot.slane %v11948, %v12458
  %v12460 = vlaneseq
  %v12461 = vshrl.u32 %v12460, 7
  %v12462 = vsub.s32 0, %v12461
  %v12463 = vrot.slane %v11949, %v12462
  %v12464 = vlaneseq
  %v12465 = vshrl.u32 %v12464, 7
  %v12466 = vsub.s32 0, %v12465
  %v12467 = vrot.slane %v11950, %v12466
  %v12468 = vlaneseq
  %v12469 = vshrl.u32 %v12468, 7
  %v12470 = vsub.s32 0, %v12469
  %v12471 = vrot.slane %v11951, %v12470
  %v12472 = vlaneseq
  %v12473 = vshrl.u32 %v12472, 7
  %v12474 = vsub.s32 0, %v12473
  %v12475 = vrot.slane %v11952, %v12474
  %v12476 = vlaneseq
  %v12477 = vshrl.u32 %v12476, 7
  %v12478 = vsub.s32 0, %v12477
  %v12479 = vrot.slane %v11953, %v12478
  %v12480 = vlaneseq
  %v12481 = vshrl.u32 %v12480, 7
  %v12482 = vsub.s32 0, %v12481
  %v12483 = vrot.slane %v11954, %v12482
  %v12484 = vlaneseq
  %v12485 = vshrl.u32 %v12484, 7
  %v12486 = vsub.s32 0, %v12485
  %v12487 = vrot.slane %v11955, %v12486
  %v12488 = vlaneseq
  %v12489 = vshrl.u32 %v12488, 7
  %v12490 = vsub.s32 0, %v12489
  %v12491 = vrot.slane %v11956, %v12490
  %v12492 = vlaneseq
  %v12493 = vshrl.u32 %v12492, 7
  %v12494 = vsub.s32 0, %v12493
  %v12495 = vrot.slane %v11957, %v12494
  %v12496 = vlaneseq
  %v12497 = vshrl.u32 %v12496, 7
  %v12498 = vsub.s32 0, %v12497
  %v12499 = vrot.slane %v11958, %v12498
  %v12500 = vlaneseq
  %v12501 = vshrl.u32 %v12500, 7
  %v12502 = vsub.s32 0, %v12501
  %v12503 = vrot.slane %v11959, %v12502
  %v12504 = vlaneseq
  %v12505 = vshrl.u32 %v12504, 7
  %v12506 = vsub.s32 0, %v12505
  %v12507 = vrot.slane %v11960, %v12506
  %v12508 = vlaneseq
  %v12509 = vshrl.u32 %v12508, 7
  %v12510 = vsub.s32 0, %v12509
  %v12511 = vrot.slane %v11961, %v12510
  %v12512 = vlaneseq
  %v12513 = vshrl.u32 %v12512, 7
  %v12514 = vsub.s32 0, %v12513
  %v12515 = vrot.slane %v11962, %v12514
  %v12516 = vlaneseq
  %v12517 = vshrl.u32 %v12516, 7
  %v12518 = vsub.s32 0, %v12517
  %v12519 = vrot.slane %v11963, %v12518
  %v12520 = vlaneseq
  %v12521 = vshrl.u32 %v12520, 7
  %v12522 = vsub.s32 0, %v12521
  %v12523 = vrot.slane %v11964, %v12522
  %v12524 = vlaneseq
  %v12525 = vshrl.u32 %v12524, 7
  %v12526 = vsub.s32 0, %v12525
  %v12527 = vrot.slane %v11965, %v12526
  %v12528 = vlaneseq
  %v12529 = vshrl.u32 %v12528, 7
  %v12530 = vsub.s32 0, %v12529
  %v12531 = vrot.slane %v11966, %v12530
  %v12532 = vlaneseq
  %v12533 = vshrl.u32 %v12532, 7
  %v12534 = vsub.s32 0, %v12533
  %v12535 = vrot.slane %v11967, %v12534
  %v12536 = vlaneseq
  %v12537 = vshrl.u32 %v12536, 7
  %v12538 = vsub.s32 0, %v12537
  %v12539 = vrot.slane %v11968, %v12538
  %v12540 = vlaneseq
  %v12541 = vshrl.u32 %v12540, 7
  %v12542 = vsub.s32 0, %v12541
  %v12543 = vrot.slane %v11969, %v12542
  %v12544 = vlaneseq
  %v12545 = vshrl.u32 %v12544, 7
  %v12546 = vsub.s32 0, %v12545
  %v12547 = vrot.slane %v11970, %v12546
  %v12548 = vlaneseq
  %v12549 = vshrl.u32 %v12548, 7
  %v12550 = vsub.s32 0, %v12549
  %v12551 = vrot.slane %v11971, %v12550
  %v12552 = vlaneseq
  %v12553 = vshrl.u32 %v12552, 7
  %v12554 = vsub.s32 0, %v12553
  %v12555 = vrot.slane %v11972, %v12554
  %v12556 = vlaneseq
  %v12557 = vshrl.u32 %v12556, 7
  %v12558 = vsub.s32 0, %v12557
  %v12559 = vrot.slane %v11973, %v12558
  %v12560 = vlaneseq
  %v12561 = vshrl.u32 %v12560, 7
  %v12562 = vsub.s32 0, %v12561
  %v12563 = vrot.slane %v11974, %v12562
  %v12564 = vlaneseq
  %v12565 = vshrl.u32 %v12564, 7
  %v12566 = vsub.s32 0, %v12565
  %v12567 = vrot.slane %v11975, %v12566
  %v12568 = vlaneseq
  %v12569 = vshrl.u32 %v12568, 7
  %v12570 = vsub.s32 0, %v12569
  %v12571 = vrot.slane %v11976, %v12570
  %v12572 = vlaneseq
  %v12573 = vshrl.u32 %v12572, 7
  %v12574 = vsub.s32 0, %v12573
  %v12575 = vrot.slane %v11977, %v12574
  %v12576 = vlaneseq
  %v12577 = vshrl.u32 %v12576, 7
  %v12578 = vsub.s32 0, %v12577
  %v12579 = vrot.slane %v11978, %v12578
  %v12580 = vlaneseq
  %v12581 = vshrl.u32 %v12580, 7
  %v12582 = vsub.s32 0, %v12581
  %v12583 = vrot.slane %v11979, %v12582
  %v12584 = vlaneseq
  %v12585 = vshrl.u32 %v12584, 7
  %v12586 = vsub.s32 0, %v12585
  %v12587 = vrot.slane %v11980, %v12586
  %v12588 = vlaneseq
  %v12589 = vshrl.u32 %v12588, 7
  %v12590 = vsub.s32 0, %v12589
  %v12591 = vrot.slane %v11981, %v12590
  %v12592 = vlaneseq
  %v12593 = vshrl.u32 %v12592, 7
  %v12594 = vsub.s32 0, %v12593
  %v12595 = vrot.slane %v11982, %v12594
  %v12596 = vlaneseq
  %v12597 = vshrl.u32 %v12596, 7
  %v12598 = vsub.s32 0, %v12597
  %v12599 = vrot.slane %v11983, %v12598
  %v12600 = vlaneseq
  %v12601 = vshrl.u32 %v12600, 7
  %v12602 = vsub.s32 0, %v12601
  %v12603 = vrot.slane %v11984, %v12602
  %v12604 = vlaneseq
  %v12605 = vshrl.u32 %v12604, 7
  %v12606 = vsub.s32 0, %v12605
  %v12607 = vrot.slane %v11985, %v12606
  %v12608 = vlaneseq
  %v12609 = vshrl.u32 %v12608, 7
  %v12610 = vsub.s32 0, %v12609
  %v12611 = vrot.slane %v11986, %v12610
  %v12612 = vlaneseq
  %v12613 = vshrl.u32 %v12612, 7
  %v12614 = vsub.s32 0, %v12613
  %v12615 = vrot.slane %v11987, %v12614
  %v12616 = vlaneseq
  %v12617 = vshrl.u32 %v12616, 7
  %v12618 = vsub.s32 0, %v12617
  %v12619 = vrot.slane %v11988, %v12618
  %v12620 = vlaneseq
  %v12621 = vshrl.u32 %v12620, 7
  %v12622 = vsub.s32 0, %v12621
  %v12623 = vrot.slane %v11989, %v12622
  %v12624 = vlaneseq
  %v12625 = vshrl.u32 %v12624, 7
  %v12626 = vsub.s32 0, %v12625
  %v12627 = vrot.slane %v11990, %v12626
  %v12628 = vlaneseq
  %v12629 = vshrl.u32 %v12628, 7
  %v12630 = vsub.s32 0, %v12629
  %v12631 = vrot.slane %v11991, %v12630
  %v12632 = vsel %vm3172, %v12127, %v12123
  %v12633 = vsel %vm3175, %v12131, %v12632
  %v12634 = vsel %vm3178, %v12135, %v12633
  %v12635 = vsel %vm3181, %v12139, %v12634
  %v12636 = vsel %vm3184, %v12143, %v12635
  %v12637 = vsel %vm3187, %v12147, %v12636
  %v12638 = vsel %vm3190, %v12151, %v12637
  %v12639 = vsel %vm3172, %v12159, %v12155
  %v12640 = vsel %vm3175, %v12163, %v12639
  %v12641 = vsel %vm3178, %v12167, %v12640
  %v12642 = vsel %vm3181, %v12171, %v12641
  %v12643 = vsel %vm3184, %v12175, %v12642
  %v12644 = vsel %vm3187, %v12179, %v12643
  %v12645 = vsel %vm3190, %v12183, %v12644
  %v12646 = vsel %vm3172, %v12191, %v12187
  %v12647 = vsel %vm3175, %v12195, %v12646
  %v12648 = vsel %vm3178, %v12199, %v12647
  %v12649 = vsel %vm3181, %v12203, %v12648
  %v12650 = vsel %vm3184, %v12207, %v12649
  %v12651 = vsel %vm3187, %v12211, %v12650
  %v12652 = vsel %vm3190, %v12215, %v12651
  %v12653 = vsel %vm3172, %v12223, %v12219
  %v12654 = vsel %vm3175, %v12227, %v12653
  %v12655 = vsel %vm3178, %v12231, %v12654
  %v12656 = vsel %vm3181, %v12235, %v12655
  %v12657 = vsel %vm3184, %v12239, %v12656
  %v12658 = vsel %vm3187, %v12243, %v12657
  %v12659 = vsel %vm3190, %v12247, %v12658
  %v12660 = vsel %vm3172, %v12255, %v12251
  %v12661 = vsel %vm3175, %v12259, %v12660
  %v12662 = vsel %vm3178, %v12263, %v12661
  %v12663 = vsel %vm3181, %v12267, %v12662
  %v12664 = vsel %vm3184, %v12271, %v12663
  %v12665 = vsel %vm3187, %v12275, %v12664
  %v12666 = vsel %vm3190, %v12279, %v12665
  %v12667 = vsel %vm3172, %v12287, %v12283
  %v12668 = vsel %vm3175, %v12291, %v12667
  %v12669 = vsel %vm3178, %v12295, %v12668
  %v12670 = vsel %vm3181, %v12299, %v12669
  %v12671 = vsel %vm3184, %v12303, %v12670
  %v12672 = vsel %vm3187, %v12307, %v12671
  %v12673 = vsel %vm3190, %v12311, %v12672
  %v12674 = vsel %vm3172, %v12319, %v12315
  %v12675 = vsel %vm3175, %v12323, %v12674
  %v12676 = vsel %vm3178, %v12327, %v12675
  %v12677 = vsel %vm3181, %v12331, %v12676
  %v12678 = vsel %vm3184, %v12335, %v12677
  %v12679 = vsel %vm3187, %v12339, %v12678
  %v12680 = vsel %vm3190, %v12343, %v12679
  %v12681 = vsel %vm3172, %v12351, %v12347
  %v12682 = vsel %vm3175, %v12355, %v12681
  %v12683 = vsel %vm3178, %v12359, %v12682
  %v12684 = vsel %vm3181, %v12363, %v12683
  %v12685 = vsel %vm3184, %v12367, %v12684
  %v12686 = vsel %vm3187, %v12371, %v12685
  %v12687 = vsel %vm3190, %v12375, %v12686
  %v12688 = vsel %vm3172, %v12383, %v12379
  %v12689 = vsel %vm3175, %v12387, %v12688
  %v12690 = vsel %vm3178, %v12391, %v12689
  %v12691 = vsel %vm3181, %v12395, %v12690
  %v12692 = vsel %vm3184, %v12399, %v12691
  %v12693 = vsel %vm3187, %v12403, %v12692
  %v12694 = vsel %vm3190, %v12407, %v12693
  %v12695 = vsel %vm3172, %v12415, %v12411
  %v12696 = vsel %vm3175, %v12419, %v12695
  %v12697 = vsel %vm3178, %v12423, %v12696
  %v12698 = vsel %vm3181, %v12427, %v12697
  %v12699 = vsel %vm3184, %v12431, %v12698
  %v12700 = vsel %vm3187, %v12435, %v12699
  %v12701 = vsel %vm3190, %v12439, %v12700
  %v12702 = vsel %vm3172, %v12447, %v12443
  %v12703 = vsel %vm3175, %v12451, %v12702
  %v12704 = vsel %vm3178, %v12455, %v12703
  %v12705 = vsel %vm3181, %v12459, %v12704
  %v12706 = vsel %vm3184, %v12463, %v12705
  %v12707 = vsel %vm3187, %v12467, %v12706
  %v12708 = vsel %vm3190, %v12471, %v12707
  %v12709 = vsel %vm3172, %v12479, %v12475
  %v12710 = vsel %vm3175, %v12483, %v12709
  %v12711 = vsel %vm3178, %v12487, %v12710
  %v12712 = vsel %vm3181, %v12491, %v12711
  %v12713 = vsel %vm3184, %v12495, %v12712
  %v12714 = vsel %vm3187, %v12499, %v12713
  %v12715 = vsel %vm3190, %v12503, %v12714
  %v12716 = vsel %vm3172, %v12511, %v12507
  %v12717 = vsel %vm3175, %v12515, %v12716
  %v12718 = vsel %vm3178, %v12519, %v12717
  %v12719 = vsel %vm3181, %v12523, %v12718
  %v12720 = vsel %vm3184, %v12527, %v12719
  %v12721 = vsel %vm3187, %v12531, %v12720
  %v12722 = vsel %vm3190, %v12535, %v12721
  %v12723 = vsel %vm3172, %v12543, %v12539
  %v12724 = vsel %vm3175, %v12547, %v12723
  %v12725 = vsel %vm3178, %v12551, %v12724
  %v12726 = vsel %vm3181, %v12555, %v12725
  %v12727 = vsel %vm3184, %v12559, %v12726
  %v12728 = vsel %vm3187, %v12563, %v12727
  %v12729 = vsel %vm3190, %v12567, %v12728
  %v12730 = vsel %vm3172, %v12575, %v12571
  %v12731 = vsel %vm3175, %v12579, %v12730
  %v12732 = vsel %vm3178, %v12583, %v12731
  %v12733 = vsel %vm3181, %v12587, %v12732
  %v12734 = vsel %vm3184, %v12591, %v12733
  %v12735 = vsel %vm3187, %v12595, %v12734
  %v12736 = vsel %vm3190, %v12599, %v12735
  %v12737 = vsel %vm3172, %v12607, %v12603
  %v12738 = vsel %vm3175, %v12611, %v12737
  %v12739 = vsel %vm3178, %v12615, %v12738
  %v12740 = vsel %vm3181, %v12619, %v12739
  %v12741 = vsel %vm3184, %v12623, %v12740
  %v12742 = vsel %vm3187, %v12627, %v12741
  %v12743 = vsel %vm3190, %v12631, %v12742
  %v12760 = vadd.f32 %v3474, %v12638
  %v12761 = vadd.f32 %v3477, %v12645
  %v12762 = vadd.f32 %v3482, %v12652
  %v12763 = vadd.f32 %v3485, %v12659
  %v12764 = vadd.f32 %v3490, %v12666
  %v12765 = vadd.f32 %v3493, %v12673
  %v12766 = vadd.f32 %v3498, %v12680
  %v12767 = vadd.f32 %v3501, %v12687
  %v12768 = vadd.f32 %v3506, %v12694
  %v12769 = vadd.f32 %v3509, %v12701
  %v12770 = vadd.f32 %v3514, %v12708
  %v12771 = vadd.f32 %v3517, %v12715
  %v12772 = vadd.f32 %v3522, %v12722
  %v12773 = vadd.f32 %v3525, %v12729
  %v12774 = vadd.f32 %v3530, %v12736
  %v12775 = vadd.f32 %v3533, %v12743
  %12776 = vst.msk [vmem:[%s7] sm:$0xff] %vm6669, %v12760
  %12777 = vst.msk [vmem:[%s7 + $0x8] sm:$0xff] %vm6669, %v12761
  %12778 = vst.msk [vmem:[%s7 + $0x10] sm:$0xff] %vm6669, %v12762
  %12779 = vst.msk [vmem:[%s7 + $0x18] sm:$0xff] %vm6669, %v12763
  %12780 = vst.msk [vmem:[%s7 + $0x20] sm:$0xff] %vm6669, %v12764
  %12781 = vst.msk [vmem:[%s7 + $0x28] sm:$0xff] %vm6669, %v12765
  %12782 = vst.msk [vmem:[%s7 + $0x30] sm:$0xff] %vm6669, %v12766
  %12783 = vst.msk [vmem:[%s7 + $0x38] sm:$0xff] %vm6669, %v12767
  %12784 = vst.msk [vmem:[%s7 + $0x40] sm:$0xff] %vm6669, %v12768
  %12785 = vst.msk [vmem:[%s7 + $0x48] sm:$0xff] %vm6669, %v12769
  %12786 = vst.msk [vmem:[%s7 + $0x50] sm:$0xff] %vm6669, %v12770
  %12787 = vst.msk [vmem:[%s7 + $0x58] sm:$0xff] %vm6669, %v12771
  %12788 = vst.msk [vmem:[%s7 + $0x60] sm:$0xff] %vm6669, %v12772
  %12789 = vst.msk [vmem:[%s7 + $0x68] sm:$0xff] %vm6669, %v12773
  %12790 = vst.msk [vmem:[%s7 + $0x70] sm:$0xff] %vm6669, %v12774
  %12791 = vst.msk [vmem:[%s7 + $0x78] sm:$0xff] %vm6669, %v12775
  // Predicated region
  $region30: #{resblk_pallas.1} parent=0 // pred_check
    _
  $region31: #{resblk_pallas.1} parent=0 // pred_check_branch
    %12793 = sbr.rel (0) target = $region33
  $region32: #{resblk_pallas.1} parent=0 // pred_region
    _
  $region33: #{resblk_pallas.1} parent=0 // pred_fallthru
    _
  // Predicated region
  $region34: #{resblk_pallas.1} parent=0 // pred_check
    _
  $region35: #{resblk_pallas.1} parent=0 // pred_check_branch
    %12795 = sbr.rel (0) target = $region37
  $region36: #{resblk_pallas.1} parent=0 // pred_region
    _
  $region37: #{resblk_pallas.1} parent=0 // pred_fallthru
    _

</llo_original>
